<compile_context>
chip_gen: v7x
topology: tpu7x:2x2x1
jax: 0.10.0
libtpu: 0.0.40
codegen_flags: <defaults>
</compile_context>

<pallas_src>
import functools

import jax
import jax.numpy as jnp
from jax.experimental import pallas as pl
from jax.experimental.pallas import tpu as pltpu


# ----------------------------- fused kernel ---------------------------------

def _smile_kernel(x_ref,
                  w1_ref, b1_ref, w2_ref, b2_ref, w3_ref, b3_ref,
                  w4_ref, b4_ref, wfc_ref, bfc_ref,
                  o_ref,
                  p1_ref, p2_ref, p3_ref, p4_ref,
                  *, bblk, h, w):
    """Whole SmileDetector forward for one batch chunk, resident in VMEM.

    x_ref  : (bblk, h, w, 3) bf16 NHWC input chunk
    wN_ref : (9*Cin, Cout) bf16 conv weights, K ordered (dh, dw, cin)
    bN_ref : (1, Cout) f32 conv bias
    wfc_ref: (1, 256) f32 ; bfc_ref: (1, 1) f32
    o_ref  : (bblk, 1) f32 sigmoid probabilities
    pN_ref : (bblk, Hl+2, Wl+2, Cin) bf16 zero-haloed VMEM scratch per layer
    """

    def conv3x3_relu(x, pad_ref, w_ref, b_ref, hc, wc, cin, cout):
        # x: (bblk, hc, wc, cin) bf16 -> conv3x3(pad=1) + bias + ReLU
        # returns (bblk*hc*wc, cout) f32.
        m = bblk * hc * wc
        pad_ref[...] = jnp.zeros_like(pad_ref)           # zero halo (tiny)
        pad_ref[:, 1:hc + 1, 1:wc + 1, :] = x            # interior copy (in VMEM)
        # One sublane-shifted load per dw; dh shifts are leading-dim slices
        # of the already-loaded slab (cheap vreg selection).
        shifted = [pad_ref[:, :, dw:dw + wc, :] for dw in range(3)]
        taps = [shifted[dw][:, dh:dh + hc, :, :]
                for dh in range(3) for dw in range(3)]   # (dh, dw)-major order
        col = jnp.concatenate(taps, axis=-1)             # in-VMEM im2col
        col = col.reshape(m, 9 * cin)                    # (M, 9*Cin)
        y = jnp.dot(col, w_ref[...], preferred_element_type=jnp.float32)
        return jnp.maximum(y + b_ref[...], 0.0)          # bias + ReLU in f32

    def maxpool2(y, hc, wc, c):
        # y: (bblk*hc*wc, c) f32 -> 2x2 / stride-2 max pool -> bf16 NHWC.
        y = y.reshape(bblk, hc // 2, 2 * wc, c)          # rows (2i, 2i+1) side by side
        y = jnp.maximum(y[:, :, :wc, :], y[:, :, wc:, :])        # pool over H
        y = y.reshape(bblk, hc // 2, wc // 2, 2, c)
        y = jnp.maximum(y[:, :, :, 0, :], y[:, :, :, 1, :])      # pool over W
        return y.astype(jnp.bfloat16)

    # conv1(3->32) + ReLU + pool  -> (bblk, h/2, w/2, 32)
    a = maxpool2(conv3x3_relu(x_ref[...], p1_ref, w1_ref, b1_ref, h, w, 3, 32),
                 h, w, 32)
    # TODO(synk): nn.Dropout(0.5) after pool1/pool2 is identity in eval mode;
    # training-mode dropout (in-kernel PRNG) is not implemented.
    # conv2(32->64) + ReLU + pool -> (bblk, h/4, w/4, 64)
    a = maxpool2(conv3x3_relu(a, p2_ref, w2_ref, b2_ref, h // 2, w // 2, 32, 64),
                 h // 2, w // 2, 64)
    # conv3(64->128) + ReLU + pool -> (bblk, h/8, w/8, 128)
    a = maxpool2(conv3x3_relu(a, p3_ref, w3_ref, b3_ref, h // 4, w // 4, 64, 128),
                 h // 4, w // 4, 128)
    # conv4(128->256) + ReLU -> (bblk*(h/8)*(w/8), 256)
    y4 = conv3x3_relu(a, p4_ref, w4_ref, b4_ref, h // 8, w // 8, 128, 256)

    # AdaptiveAvgPool2d(1) -> Flatten -> Linear(256, 1) -> Sigmoid.
    sp = (h // 8) * (w // 8)
    pooled = jnp.sum(y4.reshape(bblk, sp, 256), axis=1) * (1.0 / sp)      # (bblk, 256)
    # Linear(256,1) as VPU multiply + lane reduction (N=1 MXU matmul is wasteful).
    logits = jnp.sum(pooled * wfc_ref[...], axis=-1, keepdims=True) + bfc_ref[...]
    o_ref[...] = 1.0 / (1.0 + jnp.exp(-logits))                           # sigmoid


# ----------------------------- wrapper ---------------------------------------

def _pick_block_b(batch, cap=8):
    """Batch-chunk size. Output block sublane dim must be a multiple of 8 or
    the full batch, so use the whole batch when small / not divisible by 8."""
    if batch <= cap or batch % 8:
        return batch
    return 8


def smile_detector_forward(params, x_nchw):
    """Mirrors SmileDetector.forward; x_nchw: (B, 3, H, W) f32 -> (B, 1) probs."""
    batch, cin, h, w = x_nchw.shape
    assert cin == 3, "SmileDetector expects 3 input channels"
    assert h % 8 == 0 and w % 8 == 0, "three 2x2 max-pools need H, W divisible by 8"

    # NCHW -> NHWC + bf16 cast: a single tiny fused XLA op feeding the kernel.
    # TODO(synk): doing this 4-D minor-dim permute inside Mosaic would be a
    # multi-step relayout; the one fused transpose+cast in XLA is cheaper.
    x = jnp.transpose(x_nchw, (0, 2, 3, 1)).astype(jnp.bfloat16)

    def prep(wk, bk):
        # HWIO (3,3,Cin,Cout) -> tap-major (9*Cin, Cout) bf16 ; bias (1,Cout) f32.
        # (PyTorch OIHW checkpoints must be permuted to HWIO before this.)
        kh, kw, ci, co = wk.shape
        return (wk.reshape(kh * kw * ci, co).astype(jnp.bfloat16),
                bk.reshape(1, co).astype(jnp.float32))

    w1, b1 = prep(params["w1"], params["b1"])
    w2, b2 = prep(params["w2"], params["b2"])
    w3, b3 = prep(params["w3"], params["b3"])
    w4, b4 = prep(params["w4"], params["b4"])
    wfc = params["w_fc"].reshape(1, -1).astype(jnp.float32)   # (1, 256)
    bfc = params["b_fc"].reshape(1, 1).astype(jnp.float32)    # (1, 1)

    bblk = _pick_block_b(batch)
    kernel = functools.partial(_smile_kernel, bblk=bblk, h=h, w=w)
    full = lambda i: (0, 0)

    grid_spec = pltpu.PrefetchScalarGridSpec(
        num_scalar_prefetch=0,
        grid=(batch // bblk,),
        in_specs=[
            pl.BlockSpec((bblk, h, w, 3), lambda i: (i, 0, 0, 0)),     # input chunk
            pl.BlockSpec((27, 32), full),   pl.BlockSpec((1, 32), full),
            pl.BlockSpec((288, 64), full),  pl.BlockSpec((1, 64), full),
            pl.BlockSpec((576, 128), full), pl.BlockSpec((1, 128), full),
            pl.BlockSpec((1152, 256), full), pl.BlockSpec((1, 256), full),
            pl.BlockSpec((1, 256), full),   pl.BlockSpec((1, 1), full),
        ],
        out_specs=pl.BlockSpec((bblk, 1), lambda i: (i, 0)),
        scratch_shapes=[   # zero-haloed padded activations per conv layer (bf16)
            pltpu.VMEM((bblk, h + 2, w + 2, 3), jnp.bfloat16),
            pltpu.VMEM((bblk, h // 2 + 2, w // 2 + 2, 32), jnp.bfloat16),
            pltpu.VMEM((bblk, h // 4 + 2, w // 4 + 2, 64), jnp.bfloat16),
            pltpu.VMEM((bblk, h // 8 + 2, w // 8 + 2, 128), jnp.bfloat16),
        ],
    )

    return pl.pallas_call(
        kernel,
        out_shape=jax.ShapeDtypeStruct((batch, 1), jnp.float32),
        grid_spec=grid_spec,
        compiler_params=pltpu.CompilerParams(
            dimension_semantics=("parallel",),   # v7x: both TensorCores split the batch
        ),
    )(x, w1, b1, w2, b2, w3, b3, w4, b4, wfc, bfc)


# ----------------------------- params & reference ----------------------------

def init_params(key):
    keys = jax.random.split(key, 5)

    def conv_w(k, cin, cout):                      # HWIO layout
        return (jax.random.normal(k, (3, 3, cin, cout), jnp.float32)
                / jnp.sqrt(9.0 * cin))

    return {
        "w1": conv_w(keys[0], 3, 32),    "b1": jnp.zeros((32,), jnp.float32),
        "w2": conv_w(keys[1], 32, 64),   "b2": jnp.zeros((64,), jnp.float32),
        "w3": conv_w(keys[2], 64, 128),  "b3": jnp.zeros((128,), jnp.float32),
        "w4": conv_w(keys[3], 128, 256), "b4": jnp.zeros((256,), jnp.float32),
        "w_fc": jax.random.normal(keys[4], (256, 1), jnp.float32) / 16.0,
        "b_fc": jnp.zeros((1,), jnp.float32),
    }


def reference_forward(params, x_nchw):
    """Pure-JAX f32 reference of SmileDetector.forward (eval mode)."""
    x = jnp.transpose(x_nchw, (0, 2, 3, 1))       # NHWC f32

    def conv(x, wk, bk):
        y = jax.lax.conv_general_dilated(
            x, wk, window_strides=(1, 1), padding="SAME",
            dimension_numbers=("NHWC", "HWIO", "NHWC"))
        return jax.nn.relu(y + bk)

    def pool(x):
        return jax.lax.reduce_window(x, -jnp.inf, jax.lax.max,
                                     (1, 2, 2, 1), (1, 2, 2, 1), "VALID")

    x = pool(conv(x, params["w1"], params["b1"]))
    x = pool(conv(x, params["w2"], params["b2"]))
    x = pool(conv(x, params["w3"], params["b3"]))
    x = conv(x, params["w4"], params["b4"])
    pooled = jnp.mean(x, axis=(1, 2))             # AdaptiveAvgPool2d(1) + Flatten
    logits = pooled @ params["w_fc"] + params["b_fc"]
    return jax.nn.sigmoid(logits)


# --------------------------------- main ---------------------------------------

if __name__ == "__main__":
    x = jax.random.normal(jax.random.PRNGKey(0), (2, 3, 16, 16), jnp.float32)
    params = init_params(jax.random.PRNGKey(42))

    out = jax.block_until_ready(jax.jit(smile_detector_forward)(params, x))
    ref = jax.block_until_ready(jax.jit(reference_forward)(params, x))

    assert out.shape == (2, 1), out.shape
    assert bool(jnp.all(jnp.isfinite(out)))
    assert bool(jnp.all((out >= 0.0) & (out <= 1.0)))
    # bf16 activations/weights vs. f32 reference: bounded, small drift.
    assert float(jnp.max(jnp.abs(out - ref))) < 5e-2, (out, ref)
    print("KERNEL_OK")
</pallas_src>

<mosaic_0001>
module attributes {stable_mosaic.version = 11 : i64} {
  func.func @_smile_kernel(%arg0: i32, %arg1: memref<2x16x16x3xbf16, #tpu.memory_space<vmem>>, %arg2: memref<27x32xbf16, #tpu.memory_space<vmem>>, %arg3: memref<1x32xf32, #tpu.memory_space<vmem>>, %arg4: memref<288x64xbf16, #tpu.memory_space<vmem>>, %arg5: memref<1x64xf32, #tpu.memory_space<vmem>>, %arg6: memref<576x128xbf16, #tpu.memory_space<vmem>>, %arg7: memref<1x128xf32, #tpu.memory_space<vmem>>, %arg8: memref<1152x256xbf16, #tpu.memory_space<vmem>>, %arg9: memref<1x256xf32, #tpu.memory_space<vmem>>, %arg10: memref<1x256xf32, #tpu.memory_space<vmem>>, %arg11: memref<1x1xf32, #tpu.memory_space<vmem>>, %arg12: memref<2x1xf32, #tpu.memory_space<vmem>>, %arg13: memref<2x18x18x3xbf16, #tpu.memory_space<vmem>>, %arg14: memref<2x10x10x32xbf16, #tpu.memory_space<vmem>>, %arg15: memref<2x6x6x64xbf16, #tpu.memory_space<vmem>>, %arg16: memref<2x4x4x128xbf16, #tpu.memory_space<vmem>>) attributes {dimension_semantics = [#tpu.dimension_semantics<parallel>], iteration_bounds = array<i64: 1>, scalar_prefetch = 0 : i64, scratch_operands = 4 : i64, tpu.core_type = #tpu.core_type<tc>, window_params = [{transform_indices = @transform_0, window_bounds = array<i64: 2, 16, 16, 3>}, {pipeline_mode = #tpu.pipeline_mode<synchronous>, transform_indices = @transform_1, window_bounds = array<i64: 27, 32>}, {pipeline_mode = #tpu.pipeline_mode<synchronous>, transform_indices = @transform_2, window_bounds = array<i64: 1, 32>}, {pipeline_mode = #tpu.pipeline_mode<synchronous>, transform_indices = @transform_3, window_bounds = array<i64: 288, 64>}, {pipeline_mode = #tpu.pipeline_mode<synchronous>, transform_indices = @transform_4, window_bounds = array<i64: 1, 64>}, {pipeline_mode = #tpu.pipeline_mode<synchronous>, transform_indices = @transform_5, window_bounds = array<i64: 576, 128>}, {pipeline_mode = #tpu.pipeline_mode<synchronous>, transform_indices = @transform_6, window_bounds = array<i64: 1, 128>}, {pipeline_mode = #tpu.pipeline_mode<synchronous>, transform_indices = @transform_7, window_bounds = array<i64: 1152, 256>}, {pipeline_mode = #tpu.pipeline_mode<synchronous>, transform_indices = @transform_8, window_bounds = array<i64: 1, 256>}, {pipeline_mode = #tpu.pipeline_mode<synchronous>, transform_indices = @transform_9, window_bounds = array<i64: 1, 256>}, {pipeline_mode = #tpu.pipeline_mode<synchronous>, transform_indices = @transform_10, window_bounds = array<i64: 1, 1>}, {transform_indices = @transform_11, window_bounds = array<i64: 2, 1>}]} {
    %c0 = arith.constant 0 : index
    %c0_0 = arith.constant 0 : index
    %c0_1 = arith.constant 0 : index
    %c0_2 = arith.constant 0 : index
    %0 = vector.load %arg1[%c0, %c0_0, %c0_1, %c0_2] : memref<2x16x16x3xbf16, #tpu.memory_space<vmem>>, vector<2x16x16x3xbf16>
    %cst = arith.constant 0.000000e+00 : bf16
    %1 = vector.broadcast %cst : bf16 to vector<2x18x18x3xbf16>
    %c0_3 = arith.constant 0 : index
    %c0_4 = arith.constant 0 : index
    %c0_5 = arith.constant 0 : index
    %c0_6 = arith.constant 0 : index
    %2 = vector.load %arg13[%c0_3, %c0_4, %c0_5, %c0_6] : memref<2x18x18x3xbf16, #tpu.memory_space<vmem>>, vector<2x18x18x3xbf16>
    tpu.vector_store %arg13[%c0_3, %c0_4, %c0_5, %c0_6], %1 {strides = array<i32>} : memref<2x18x18x3xbf16, #tpu.memory_space<vmem>>, vector<2x18x18x3xbf16>,
    %c0_7 = arith.constant 0 : index
    %c1 = arith.constant 1 : index
    %c1_8 = arith.constant 1 : index
    %c0_9 = arith.constant 0 : index
    %3 = vector.load %arg13[%c0_7, %c1, %c1_8, %c0_9] : memref<2x18x18x3xbf16, #tpu.memory_space<vmem>>, vector<2x16x16x3xbf16>
    tpu.vector_store %arg13[%c0_7, %c1, %c1_8, %c0_9], %0 {strides = array<i32>} : memref<2x18x18x3xbf16, #tpu.memory_space<vmem>>, vector<2x16x16x3xbf16>,
    %c0_10 = arith.constant 0 : index
    %c0_11 = arith.constant 0 : index
    %c0_12 = arith.constant 0 : index
    %c0_13 = arith.constant 0 : index
    %4 = vector.load %arg13[%c0_10, %c0_11, %c0_12, %c0_13] : memref<2x18x18x3xbf16, #tpu.memory_space<vmem>>, vector<2x18x16x3xbf16>
    %c0_14 = arith.constant 0 : index
    %c0_15 = arith.constant 0 : index
    %c1_16 = arith.constant 1 : index
    %c0_17 = arith.constant 0 : index
    %5 = vector.load %arg13[%c0_14, %c0_15, %c1_16, %c0_17] : memref<2x18x18x3xbf16, #tpu.memory_space<vmem>>, vector<2x18x16x3xbf16>
    %c0_18 = arith.constant 0 : index
    %c0_19 = arith.constant 0 : index
    %c2 = arith.constant 2 : index
    %c0_20 = arith.constant 0 : index
    %6 = vector.load %arg13[%c0_18, %c0_19, %c2, %c0_20] : memref<2x18x18x3xbf16, #tpu.memory_space<vmem>>, vector<2x18x16x3xbf16>
    %7 = vector.extract_strided_slice %4 {offsets = [0, 0, 0, 0], sizes = [2, 16, 16, 3], strides = [1, 1, 1, 1]} : vector<2x18x16x3xbf16> to vector<2x16x16x3xbf16>
    %8 = vector.extract_strided_slice %5 {offsets = [0, 0, 0, 0], sizes = [2, 16, 16, 3], strides = [1, 1, 1, 1]} : vector<2x18x16x3xbf16> to vector<2x16x16x3xbf16>
    %9 = vector.extract_strided_slice %6 {offsets = [0, 0, 0, 0], sizes = [2, 16, 16, 3], strides = [1, 1, 1, 1]} : vector<2x18x16x3xbf16> to vector<2x16x16x3xbf16>
    %10 = vector.extract_strided_slice %4 {offsets = [0, 1, 0, 0], sizes = [2, 16, 16, 3], strides = [1, 1, 1, 1]} : vector<2x18x16x3xbf16> to vector<2x16x16x3xbf16>
    %11 = vector.extract_strided_slice %5 {offsets = [0, 1, 0, 0], sizes = [2, 16, 16, 3], strides = [1, 1, 1, 1]} : vector<2x18x16x3xbf16> to vector<2x16x16x3xbf16>
    %12 = vector.extract_strided_slice %6 {offsets = [0, 1, 0, 0], sizes = [2, 16, 16, 3], strides = [1, 1, 1, 1]} : vector<2x18x16x3xbf16> to vector<2x16x16x3xbf16>
    %13 = vector.extract_strided_slice %4 {offsets = [0, 2, 0, 0], sizes = [2, 16, 16, 3], strides = [1, 1, 1, 1]} : vector<2x18x16x3xbf16> to vector<2x16x16x3xbf16>
    %14 = vector.extract_strided_slice %5 {offsets = [0, 2, 0, 0], sizes = [2, 16, 16, 3], strides = [1, 1, 1, 1]} : vector<2x18x16x3xbf16> to vector<2x16x16x3xbf16>
    %15 = vector.extract_strided_slice %6 {offsets = [0, 2, 0, 0], sizes = [2, 16, 16, 3], strides = [1, 1, 1, 1]} : vector<2x18x16x3xbf16> to vector<2x16x16x3xbf16>
    %16 = tpu.concatenate %7, %8, %9, %10, %11, %12, %13, %14, %15 in 3 : vector<2x16x16x3xbf16>, vector<2x16x16x3xbf16>, vector<2x16x16x3xbf16>, vector<2x16x16x3xbf16>, vector<2x16x16x3xbf16>, vector<2x16x16x3xbf16>, vector<2x16x16x3xbf16>, vector<2x16x16x3xbf16>, vector<2x16x16x3xbf16> -> vector<2x16x16x27xbf16>
    %17 = vector.shape_cast %16 : vector<2x16x16x27xbf16> to vector<512x27xbf16>
    %c0_21 = arith.constant 0 : index
    %c0_22 = arith.constant 0 : index
    %18 = vector.load %arg2[%c0_21, %c0_22] : memref<27x32xbf16, #tpu.memory_space<vmem>>, vector<27x32xbf16>
    %cst_23 = arith.constant dense<0.000000e+00> : vector<512x32xf32>
    %19 = tpu.matmul %17, %18, %cst_23 {dimension_numbers = #tpu.dot_dimension_numbers<[1], [0], [0], [1], [0, 0, 1, 1], [], []>} : vector<512x27xbf16>, vector<27x32xbf16>, vector<512x32xf32> -> vector<512x32xf32>
    %c0_24 = arith.constant 0 : index
    %c0_25 = arith.constant 0 : index
    %20 = vector.load %arg3[%c0_24, %c0_25] : memref<1x32xf32, #tpu.memory_space<vmem>>, vector<1x32xf32>
    %21 = vector.broadcast %20 : vector<1x32xf32> to vector<512x32xf32>
    %22 = arith.addf %19, %21 : vector<512x32xf32>
    %cst_26 = arith.constant 0.000000e+00 : f32
    %23 = vector.broadcast %cst_26 : f32 to vector<512x32xf32>
    %24 = arith.maximumf %22, %23 : vector<512x32xf32>
    %25 = vector.shape_cast %24 : vector<512x32xf32> to vector<2x8x32x32xf32>
    %26 = vector.extract_strided_slice %25 {offsets = [0, 0, 0, 0], sizes = [2, 8, 16, 32], strides = [1, 1, 1, 1]} : vector<2x8x32x32xf32> to vector<2x8x16x32xf32>
    %27 = vector.extract_strided_slice %25 {offsets = [0, 0, 16, 0], sizes = [2, 8, 16, 32], strides = [1, 1, 1, 1]} : vector<2x8x32x32xf32> to vector<2x8x16x32xf32>
    %28 = arith.maximumf %26, %27 : vector<2x8x16x32xf32>
    %29 = vector.shape_cast %28 : vector<2x8x16x32xf32> to vector<2x8x8x2x32xf32>
    %30 = vector.extract_strided_slice %29 {offsets = [0, 0, 0, 0, 0], sizes = [2, 8, 8, 1, 32], strides = [1, 1, 1, 1, 1]} : vector<2x8x8x2x32xf32> to vector<2x8x8x1x32xf32>
    %31 = vector.shape_cast %30 : vector<2x8x8x1x32xf32> to vector<2x8x8x32xf32>
    %32 = vector.extract_strided_slice %29 {offsets = [0, 0, 0, 1, 0], sizes = [2, 8, 8, 1, 32], strides = [1, 1, 1, 1, 1]} : vector<2x8x8x2x32xf32> to vector<2x8x8x1x32xf32>
    %33 = vector.shape_cast %32 : vector<2x8x8x1x32xf32> to vector<2x8x8x32xf32>
    %34 = arith.maximumf %31, %33 : vector<2x8x8x32xf32>
    %35 = arith.truncf %34 : vector<2x8x8x32xf32> to vector<2x8x8x32xbf16>
    %cst_27 = arith.constant 0.000000e+00 : bf16
    %36 = vector.broadcast %cst_27 : bf16 to vector<2x10x10x32xbf16>
    %c0_28 = arith.constant 0 : index
    %c0_29 = arith.constant 0 : index
    %c0_30 = arith.constant 0 : index
    %c0_31 = arith.constant 0 : index
    %37 = vector.load %arg14[%c0_28, %c0_29, %c0_30, %c0_31] : memref<2x10x10x32xbf16, #tpu.memory_space<vmem>>, vector<2x10x10x32xbf16>
    tpu.vector_store %arg14[%c0_28, %c0_29, %c0_30, %c0_31], %36 {strides = array<i32>} : memref<2x10x10x32xbf16, #tpu.memory_space<vmem>>, vector<2x10x10x32xbf16>,
    %c0_32 = arith.constant 0 : index
    %c1_33 = arith.constant 1 : index
    %c1_34 = arith.constant 1 : index
    %c0_35 = arith.constant 0 : index
    %38 = vector.load %arg14[%c0_32, %c1_33, %c1_34, %c0_35] : memref<2x10x10x32xbf16, #tpu.memory_space<vmem>>, vector<2x8x8x32xbf16>
    tpu.vector_store %arg14[%c0_32, %c1_33, %c1_34, %c0_35], %35 {strides = array<i32>} : memref<2x10x10x32xbf16, #tpu.memory_space<vmem>>, vector<2x8x8x32xbf16>,
    %c0_36 = arith.constant 0 : index
    %c0_37 = arith.constant 0 : index
    %c0_38 = arith.constant 0 : index
    %c0_39 = arith.constant 0 : index
    %39 = vector.load %arg14[%c0_36, %c0_37, %c0_38, %c0_39] : memref<2x10x10x32xbf16, #tpu.memory_space<vmem>>, vector<2x10x8x32xbf16>
    %c0_40 = arith.constant 0 : index
    %c0_41 = arith.constant 0 : index
    %c1_42 = arith.constant 1 : index
    %c0_43 = arith.constant 0 : index
    %40 = vector.load %arg14[%c0_40, %c0_41, %c1_42, %c0_43] : memref<2x10x10x32xbf16, #tpu.memory_space<vmem>>, vector<2x10x8x32xbf16>
    %c0_44 = arith.constant 0 : index
    %c0_45 = arith.constant 0 : index
    %c2_46 = arith.constant 2 : index
    %c0_47 = arith.constant 0 : index
    %41 = vector.load %arg14[%c0_44, %c0_45, %c2_46, %c0_47] : memref<2x10x10x32xbf16, #tpu.memory_space<vmem>>, vector<2x10x8x32xbf16>
    %42 = vector.extract_strided_slice %39 {offsets = [0, 0, 0, 0], sizes = [2, 8, 8, 32], strides = [1, 1, 1, 1]} : vector<2x10x8x32xbf16> to vector<2x8x8x32xbf16>
    %43 = vector.extract_strided_slice %40 {offsets = [0, 0, 0, 0], sizes = [2, 8, 8, 32], strides = [1, 1, 1, 1]} : vector<2x10x8x32xbf16> to vector<2x8x8x32xbf16>
    %44 = vector.extract_strided_slice %41 {offsets = [0, 0, 0, 0], sizes = [2, 8, 8, 32], strides = [1, 1, 1, 1]} : vector<2x10x8x32xbf16> to vector<2x8x8x32xbf16>
    %45 = vector.extract_strided_slice %39 {offsets = [0, 1, 0, 0], sizes = [2, 8, 8, 32], strides = [1, 1, 1, 1]} : vector<2x10x8x32xbf16> to vector<2x8x8x32xbf16>
    %46 = vector.extract_strided_slice %40 {offsets = [0, 1, 0, 0], sizes = [2, 8, 8, 32], strides = [1, 1, 1, 1]} : vector<2x10x8x32xbf16> to vector<2x8x8x32xbf16>
    %47 = vector.extract_strided_slice %41 {offsets = [0, 1, 0, 0], sizes = [2, 8, 8, 32], strides = [1, 1, 1, 1]} : vector<2x10x8x32xbf16> to vector<2x8x8x32xbf16>
    %48 = vector.extract_strided_slice %39 {offsets = [0, 2, 0, 0], sizes = [2, 8, 8, 32], strides = [1, 1, 1, 1]} : vector<2x10x8x32xbf16> to vector<2x8x8x32xbf16>
    %49 = vector.extract_strided_slice %40 {offsets = [0, 2, 0, 0], sizes = [2, 8, 8, 32], strides = [1, 1, 1, 1]} : vector<2x10x8x32xbf16> to vector<2x8x8x32xbf16>
    %50 = vector.extract_strided_slice %41 {offsets = [0, 2, 0, 0], sizes = [2, 8, 8, 32], strides = [1, 1, 1, 1]} : vector<2x10x8x32xbf16> to vector<2x8x8x32xbf16>
    %51 = tpu.concatenate %42, %43, %44, %45, %46, %47, %48, %49, %50 in 3 : vector<2x8x8x32xbf16>, vector<2x8x8x32xbf16>, vector<2x8x8x32xbf16>, vector<2x8x8x32xbf16>, vector<2x8x8x32xbf16>, vector<2x8x8x32xbf16>, vector<2x8x8x32xbf16>, vector<2x8x8x32xbf16>, vector<2x8x8x32xbf16> -> vector<2x8x8x288xbf16>
    %52 = vector.shape_cast %51 : vector<2x8x8x288xbf16> to vector<128x288xbf16>
    %c0_48 = arith.constant 0 : index
    %c0_49 = arith.constant 0 : index
    %53 = vector.load %arg4[%c0_48, %c0_49] : memref<288x64xbf16, #tpu.memory_space<vmem>>, vector<288x64xbf16>
    %cst_50 = arith.constant dense<0.000000e+00> : vector<128x64xf32>
    %54 = tpu.matmul %52, %53, %cst_50 {dimension_numbers = #tpu.dot_dimension_numbers<[1], [0], [0], [1], [0, 0, 1, 1], [], []>} : vector<128x288xbf16>, vector<288x64xbf16>, vector<128x64xf32> -> vector<128x64xf32>
    %c0_51 = arith.constant 0 : index
    %c0_52 = arith.constant 0 : index
    %55 = vector.load %arg5[%c0_51, %c0_52] : memref<1x64xf32, #tpu.memory_space<vmem>>, vector<1x64xf32>
    %56 = vector.broadcast %55 : vector<1x64xf32> to vector<128x64xf32>
    %57 = arith.addf %54, %56 : vector<128x64xf32>
    %cst_53 = arith.constant 0.000000e+00 : f32
    %58 = vector.broadcast %cst_53 : f32 to vector<128x64xf32>
    %59 = arith.maximumf %57, %58 : vector<128x64xf32>
    %60 = vector.shape_cast %59 : vector<128x64xf32> to vector<2x4x16x64xf32>
    %61 = vector.extract_strided_slice %60 {offsets = [0, 0, 0, 0], sizes = [2, 4, 8, 64], strides = [1, 1, 1, 1]} : vector<2x4x16x64xf32> to vector<2x4x8x64xf32>
    %62 = vector.extract_strided_slice %60 {offsets = [0, 0, 8, 0], sizes = [2, 4, 8, 64], strides = [1, 1, 1, 1]} : vector<2x4x16x64xf32> to vector<2x4x8x64xf32>
    %63 = arith.maximumf %61, %62 : vector<2x4x8x64xf32>
    %64 = vector.shape_cast %63 : vector<2x4x8x64xf32> to vector<2x4x4x2x64xf32>
    %65 = vector.extract_strided_slice %64 {offsets = [0, 0, 0, 0, 0], sizes = [2, 4, 4, 1, 64], strides = [1, 1, 1, 1, 1]} : vector<2x4x4x2x64xf32> to vector<2x4x4x1x64xf32>
    %66 = vector.shape_cast %65 : vector<2x4x4x1x64xf32> to vector<2x4x4x64xf32>
    %67 = vector.extract_strided_slice %64 {offsets = [0, 0, 0, 1, 0], sizes = [2, 4, 4, 1, 64], strides = [1, 1, 1, 1, 1]} : vector<2x4x4x2x64xf32> to vector<2x4x4x1x64xf32>
    %68 = vector.shape_cast %67 : vector<2x4x4x1x64xf32> to vector<2x4x4x64xf32>
    %69 = arith.maximumf %66, %68 : vector<2x4x4x64xf32>
    %70 = arith.truncf %69 : vector<2x4x4x64xf32> to vector<2x4x4x64xbf16>
    %cst_54 = arith.constant 0.000000e+00 : bf16
    %71 = vector.broadcast %cst_54 : bf16 to vector<2x6x6x64xbf16>
    %c0_55 = arith.constant 0 : index
    %c0_56 = arith.constant 0 : index
    %c0_57 = arith.constant 0 : index
    %c0_58 = arith.constant 0 : index
    %72 = vector.load %arg15[%c0_55, %c0_56, %c0_57, %c0_58] : memref<2x6x6x64xbf16, #tpu.memory_space<vmem>>, vector<2x6x6x64xbf16>
    tpu.vector_store %arg15[%c0_55, %c0_56, %c0_57, %c0_58], %71 {strides = array<i32>} : memref<2x6x6x64xbf16, #tpu.memory_space<vmem>>, vector<2x6x6x64xbf16>,
    %c0_59 = arith.constant 0 : index
    %c1_60 = arith.constant 1 : index
    %c1_61 = arith.constant 1 : index
    %c0_62 = arith.constant 0 : index
    %73 = vector.load %arg15[%c0_59, %c1_60, %c1_61, %c0_62] : memref<2x6x6x64xbf16, #tpu.memory_space<vmem>>, vector<2x4x4x64xbf16>
    tpu.vector_store %arg15[%c0_59, %c1_60, %c1_61, %c0_62], %70 {strides = array<i32>} : memref<2x6x6x64xbf16, #tpu.memory_space<vmem>>, vector<2x4x4x64xbf16>,
    %c0_63 = arith.constant 0 : index
    %c0_64 = arith.constant 0 : index
    %c0_65 = arith.constant 0 : index
    %c0_66 = arith.constant 0 : index
    %74 = vector.load %arg15[%c0_63, %c0_64, %c0_65, %c0_66] : memref<2x6x6x64xbf16, #tpu.memory_space<vmem>>, vector<2x6x4x64xbf16>
    %c0_67 = arith.constant 0 : index
    %c0_68 = arith.constant 0 : index
    %c1_69 = arith.constant 1 : index
    %c0_70 = arith.constant 0 : index
    %75 = vector.load %arg15[%c0_67, %c0_68, %c1_69, %c0_70] : memref<2x6x6x64xbf16, #tpu.memory_space<vmem>>, vector<2x6x4x64xbf16>
    %c0_71 = arith.constant 0 : index
    %c0_72 = arith.constant 0 : index
    %c2_73 = arith.constant 2 : index
    %c0_74 = arith.constant 0 : index
    %76 = vector.load %arg15[%c0_71, %c0_72, %c2_73, %c0_74] : memref<2x6x6x64xbf16, #tpu.memory_space<vmem>>, vector<2x6x4x64xbf16>
    %77 = vector.extract_strided_slice %74 {offsets = [0, 0, 0, 0], sizes = [2, 4, 4, 64], strides = [1, 1, 1, 1]} : vector<2x6x4x64xbf16> to vector<2x4x4x64xbf16>
    %78 = vector.extract_strided_slice %75 {offsets = [0, 0, 0, 0], sizes = [2, 4, 4, 64], strides = [1, 1, 1, 1]} : vector<2x6x4x64xbf16> to vector<2x4x4x64xbf16>
    %79 = vector.extract_strided_slice %76 {offsets = [0, 0, 0, 0], sizes = [2, 4, 4, 64], strides = [1, 1, 1, 1]} : vector<2x6x4x64xbf16> to vector<2x4x4x64xbf16>
    %80 = vector.extract_strided_slice %74 {offsets = [0, 1, 0, 0], sizes = [2, 4, 4, 64], strides = [1, 1, 1, 1]} : vector<2x6x4x64xbf16> to vector<2x4x4x64xbf16>
    %81 = vector.extract_strided_slice %75 {offsets = [0, 1, 0, 0], sizes = [2, 4, 4, 64], strides = [1, 1, 1, 1]} : vector<2x6x4x64xbf16> to vector<2x4x4x64xbf16>
    %82 = vector.extract_strided_slice %76 {offsets = [0, 1, 0, 0], sizes = [2, 4, 4, 64], strides = [1, 1, 1, 1]} : vector<2x6x4x64xbf16> to vector<2x4x4x64xbf16>
    %83 = vector.extract_strided_slice %74 {offsets = [0, 2, 0, 0], sizes = [2, 4, 4, 64], strides = [1, 1, 1, 1]} : vector<2x6x4x64xbf16> to vector<2x4x4x64xbf16>
    %84 = vector.extract_strided_slice %75 {offsets = [0, 2, 0, 0], sizes = [2, 4, 4, 64], strides = [1, 1, 1, 1]} : vector<2x6x4x64xbf16> to vector<2x4x4x64xbf16>
    %85 = vector.extract_strided_slice %76 {offsets = [0, 2, 0, 0], sizes = [2, 4, 4, 64], strides = [1, 1, 1, 1]} : vector<2x6x4x64xbf16> to vector<2x4x4x64xbf16>
    %86 = tpu.concatenate %77, %78, %79, %80, %81, %82, %83, %84, %85 in 3 : vector<2x4x4x64xbf16>, vector<2x4x4x64xbf16>, vector<2x4x4x64xbf16>, vector<2x4x4x64xbf16>, vector<2x4x4x64xbf16>, vector<2x4x4x64xbf16>, vector<2x4x4x64xbf16>, vector<2x4x4x64xbf16>, vector<2x4x4x64xbf16> -> vector<2x4x4x576xbf16>
    %87 = vector.shape_cast %86 : vector<2x4x4x576xbf16> to vector<32x576xbf16>
    %c0_75 = arith.constant 0 : index
    %c0_76 = arith.constant 0 : index
    %88 = vector.load %arg6[%c0_75, %c0_76] : memref<576x128xbf16, #tpu.memory_space<vmem>>, vector<576x128xbf16>
    %cst_77 = arith.constant dense<0.000000e+00> : vector<32x128xf32>
    %89 = tpu.matmul %87, %88, %cst_77 {dimension_numbers = #tpu.dot_dimension_numbers<[1], [0], [0], [1], [0, 0, 1, 1], [], []>} : vector<32x576xbf16>, vector<576x128xbf16>, vector<32x128xf32> -> vector<32x128xf32>
    %c0_78 = arith.constant 0 : index
    %c0_79 = arith.constant 0 : index
    %90 = vector.load %arg7[%c0_78, %c0_79] : memref<1x128xf32, #tpu.memory_space<vmem>>, vector<1x128xf32>
    %91 = vector.broadcast %90 : vector<1x128xf32> to vector<32x128xf32>
    %92 = arith.addf %89, %91 : vector<32x128xf32>
    %cst_80 = arith.constant 0.000000e+00 : f32
    %93 = vector.broadcast %cst_80 : f32 to vector<32x128xf32>
    %94 = arith.maximumf %92, %93 : vector<32x128xf32>
    %95 = vector.shape_cast %94 : vector<32x128xf32> to vector<2x2x8x128xf32>
    %96 = vector.extract_strided_slice %95 {offsets = [0, 0, 0, 0], sizes = [2, 2, 4, 128], strides = [1, 1, 1, 1]} : vector<2x2x8x128xf32> to vector<2x2x4x128xf32>
    %97 = vector.extract_strided_slice %95 {offsets = [0, 0, 4, 0], sizes = [2, 2, 4, 128], strides = [1, 1, 1, 1]} : vector<2x2x8x128xf32> to vector<2x2x4x128xf32>
    %98 = arith.maximumf %96, %97 : vector<2x2x4x128xf32>
    %99 = vector.shape_cast %98 : vector<2x2x4x128xf32> to vector<2x2x2x2x128xf32>
    %100 = vector.extract_strided_slice %99 {offsets = [0, 0, 0, 0, 0], sizes = [2, 2, 2, 1, 128], strides = [1, 1, 1, 1, 1]} : vector<2x2x2x2x128xf32> to vector<2x2x2x1x128xf32>
    %101 = vector.shape_cast %100 : vector<2x2x2x1x128xf32> to vector<2x2x2x128xf32>
    %102 = vector.extract_strided_slice %99 {offsets = [0, 0, 0, 1, 0], sizes = [2, 2, 2, 1, 128], strides = [1, 1, 1, 1, 1]} : vector<2x2x2x2x128xf32> to vector<2x2x2x1x128xf32>
    %103 = vector.shape_cast %102 : vector<2x2x2x1x128xf32> to vector<2x2x2x128xf32>
    %104 = arith.maximumf %101, %103 : vector<2x2x2x128xf32>
    %105 = arith.truncf %104 : vector<2x2x2x128xf32> to vector<2x2x2x128xbf16>
    %cst_81 = arith.constant 0.000000e+00 : bf16
    %106 = vector.broadcast %cst_81 : bf16 to vector<2x4x4x128xbf16>
    %c0_82 = arith.constant 0 : index
    %c0_83 = arith.constant 0 : index
    %c0_84 = arith.constant 0 : index
    %c0_85 = arith.constant 0 : index
    %107 = vector.load %arg16[%c0_82, %c0_83, %c0_84, %c0_85] : memref<2x4x4x128xbf16, #tpu.memory_space<vmem>>, vector<2x4x4x128xbf16>
    tpu.vector_store %arg16[%c0_82, %c0_83, %c0_84, %c0_85], %106 {strides = array<i32>} : memref<2x4x4x128xbf16, #tpu.memory_space<vmem>>, vector<2x4x4x128xbf16>,
    %c0_86 = arith.constant 0 : index
    %c1_87 = arith.constant 1 : index
    %c1_88 = arith.constant 1 : index
    %c0_89 = arith.constant 0 : index
    %108 = vector.load %arg16[%c0_86, %c1_87, %c1_88, %c0_89] : memref<2x4x4x128xbf16, #tpu.memory_space<vmem>>, vector<2x2x2x128xbf16>
    tpu.vector_store %arg16[%c0_86, %c1_87, %c1_88, %c0_89], %105 {strides = array<i32>} : memref<2x4x4x128xbf16, #tpu.memory_space<vmem>>, vector<2x2x2x128xbf16>,
    %c0_90 = arith.constant 0 : index
    %c0_91 = arith.constant 0 : index
    %c0_92 = arith.constant 0 : index
    %c0_93 = arith.constant 0 : index
    %109 = vector.load %arg16[%c0_90, %c0_91, %c0_92, %c0_93] : memref<2x4x4x128xbf16, #tpu.memory_space<vmem>>, vector<2x4x2x128xbf16>
    %c0_94 = arith.constant 0 : index
    %c0_95 = arith.constant 0 : index
    %c1_96 = arith.constant 1 : index
    %c0_97 = arith.constant 0 : index
    %110 = vector.load %arg16[%c0_94, %c0_95, %c1_96, %c0_97] : memref<2x4x4x128xbf16, #tpu.memory_space<vmem>>, vector<2x4x2x128xbf16>
    %c0_98 = arith.constant 0 : index
    %c0_99 = arith.constant 0 : index
    %c2_100 = arith.constant 2 : index
    %c0_101 = arith.constant 0 : index
    %111 = vector.load %arg16[%c0_98, %c0_99, %c2_100, %c0_101] : memref<2x4x4x128xbf16, #tpu.memory_space<vmem>>, vector<2x4x2x128xbf16>
    %112 = vector.extract_strided_slice %109 {offsets = [0, 0, 0, 0], sizes = [2, 2, 2, 128], strides = [1, 1, 1, 1]} : vector<2x4x2x128xbf16> to vector<2x2x2x128xbf16>
    %113 = vector.extract_strided_slice %110 {offsets = [0, 0, 0, 0], sizes = [2, 2, 2, 128], strides = [1, 1, 1, 1]} : vector<2x4x2x128xbf16> to vector<2x2x2x128xbf16>
    %114 = vector.extract_strided_slice %111 {offsets = [0, 0, 0, 0], sizes = [2, 2, 2, 128], strides = [1, 1, 1, 1]} : vector<2x4x2x128xbf16> to vector<2x2x2x128xbf16>
    %115 = vector.extract_strided_slice %109 {offsets = [0, 1, 0, 0], sizes = [2, 2, 2, 128], strides = [1, 1, 1, 1]} : vector<2x4x2x128xbf16> to vector<2x2x2x128xbf16>
    %116 = vector.extract_strided_slice %110 {offsets = [0, 1, 0, 0], sizes = [2, 2, 2, 128], strides = [1, 1, 1, 1]} : vector<2x4x2x128xbf16> to vector<2x2x2x128xbf16>
    %117 = vector.extract_strided_slice %111 {offsets = [0, 1, 0, 0], sizes = [2, 2, 2, 128], strides = [1, 1, 1, 1]} : vector<2x4x2x128xbf16> to vector<2x2x2x128xbf16>
    %118 = vector.extract_strided_slice %109 {offsets = [0, 2, 0, 0], sizes = [2, 2, 2, 128], strides = [1, 1, 1, 1]} : vector<2x4x2x128xbf16> to vector<2x2x2x128xbf16>
    %119 = vector.extract_strided_slice %110 {offsets = [0, 2, 0, 0], sizes = [2, 2, 2, 128], strides = [1, 1, 1, 1]} : vector<2x4x2x128xbf16> to vector<2x2x2x128xbf16>
    %120 = vector.extract_strided_slice %111 {offsets = [0, 2, 0, 0], sizes = [2, 2, 2, 128], strides = [1, 1, 1, 1]} : vector<2x4x2x128xbf16> to vector<2x2x2x128xbf16>
    %121 = tpu.concatenate %112, %113, %114, %115, %116, %117, %118, %119, %120 in 3 : vector<2x2x2x128xbf16>, vector<2x2x2x128xbf16>, vector<2x2x2x128xbf16>, vector<2x2x2x128xbf16>, vector<2x2x2x128xbf16>, vector<2x2x2x128xbf16>, vector<2x2x2x128xbf16>, vector<2x2x2x128xbf16>, vector<2x2x2x128xbf16> -> vector<2x2x2x1152xbf16>
    %122 = vector.shape_cast %121 : vector<2x2x2x1152xbf16> to vector<8x1152xbf16>
    %c0_102 = arith.constant 0 : index
    %c0_103 = arith.constant 0 : index
    %123 = vector.load %arg8[%c0_102, %c0_103] : memref<1152x256xbf16, #tpu.memory_space<vmem>>, vector<1152x256xbf16>
    %cst_104 = arith.constant dense<0.000000e+00> : vector<8x256xf32>
    %124 = tpu.matmul %122, %123, %cst_104 {dimension_numbers = #tpu.dot_dimension_numbers<[1], [0], [0], [1], [0, 0, 1, 1], [], []>} : vector<8x1152xbf16>, vector<1152x256xbf16>, vector<8x256xf32> -> vector<8x256xf32>
    %c0_105 = arith.constant 0 : index
    %c0_106 = arith.constant 0 : index
    %125 = vector.load %arg9[%c0_105, %c0_106] : memref<1x256xf32, #tpu.memory_space<vmem>>, vector<1x256xf32>
    %126 = vector.broadcast %125 : vector<1x256xf32> to vector<8x256xf32>
    %127 = arith.addf %124, %126 : vector<8x256xf32>
    %cst_107 = arith.constant 0.000000e+00 : f32
    %128 = vector.broadcast %cst_107 : f32 to vector<8x256xf32>
    %129 = arith.maximumf %127, %128 : vector<8x256xf32>
    %130 = vector.shape_cast %129 : vector<8x256xf32> to vector<2x4x256xf32>
    %cst_108 = arith.constant dense<0.000000e+00> : vector<2x256xf32>
    %131 = vector.multi_reduction <add>, %130, %cst_108 [1] : vector<2x4x256xf32> to vector<2x256xf32>
    %cst_109 = arith.constant 2.500000e-01 : f32
    %132 = vector.broadcast %cst_109 : f32 to vector<2x256xf32>
    %133 = arith.mulf %131, %132 : vector<2x256xf32>
    %c0_110 = arith.constant 0 : index
    %c0_111 = arith.constant 0 : index
    %134 = vector.load %arg10[%c0_110, %c0_111] : memref<1x256xf32, #tpu.memory_space<vmem>>, vector<1x256xf32>
    %135 = vector.broadcast %134 : vector<1x256xf32> to vector<2x256xf32>
    %136 = arith.mulf %133, %135 : vector<2x256xf32>
    %cst_112 = arith.constant dense<0.000000e+00> : vector<2xf32>
    %137 = vector.multi_reduction <add>, %136, %cst_112 [1] : vector<2x256xf32> to vector<2xf32>
    %138 = vector.shape_cast %137 : vector<2xf32> to vector<2x1xf32>
    %c0_113 = arith.constant 0 : index
    %c0_114 = arith.constant 0 : index
    %139 = vector.load %arg11[%c0_113, %c0_114] : memref<1x1xf32, #tpu.memory_space<vmem>>, vector<1x1xf32>
    %140 = vector.broadcast %139 : vector<1x1xf32> to vector<2x1xf32>
    %141 = arith.addf %138, %140 : vector<2x1xf32>
    %cst_115 = arith.constant 0.000000e+00 : f32
    %142 = vector.broadcast %cst_115 : f32 to vector<2x1xf32>
    %143 = arith.subf %142, %141 : vector<2x1xf32>
    %144 = math.exp %143 : vector<2x1xf32>
    %cst_116 = arith.constant 1.000000e+00 : f32
    %145 = vector.broadcast %cst_116 : f32 to vector<2x1xf32>
    %146 = arith.addf %145, %144 : vector<2x1xf32>
    %cst_117 = arith.constant 1.000000e+00 : f32
    %147 = vector.broadcast %cst_117 : f32 to vector<2x1xf32>
    %148 = arith.divf %147, %146 : vector<2x1xf32>
    %c0_118 = arith.constant 0 : index
    %c0_119 = arith.constant 0 : index
    %149 = vector.load %arg12[%c0_118, %c0_119] : memref<2x1xf32, #tpu.memory_space<vmem>>, vector<2x1xf32>
    tpu.vector_store %arg12[%c0_118, %c0_119], %148 {strides = array<i32>} : memref<2x1xf32, #tpu.memory_space<vmem>>, vector<2x1xf32>,
    return
  }
  func.func @transform_0(%arg0: i32) -> (i32, i32, i32, i32) {
    %c0_i32 = arith.constant 0 : i32
    %c0_i32_0 = arith.constant 0 : i32
    %c0_i32_1 = arith.constant 0 : i32
    %c0_i32_2 = arith.constant 0 : i32
    return %arg0, %c0_i32, %c0_i32_0, %c0_i32_1 : i32, i32, i32, i32
  }
  func.func @transform_1(%arg0: i32) -> (i32, i32) {
    %c0_i32 = arith.constant 0 : i32
    %c0_i32_0 = arith.constant 0 : i32
    %c0_i32_1 = arith.constant 0 : i32
    return %c0_i32, %c0_i32_0 : i32, i32
  }
  func.func @transform_2(%arg0: i32) -> (i32, i32) {
    %c0_i32 = arith.constant 0 : i32
    %c0_i32_0 = arith.constant 0 : i32
    %c0_i32_1 = arith.constant 0 : i32
    return %c0_i32, %c0_i32_0 : i32, i32
  }
  func.func @transform_3(%arg0: i32) -> (i32, i32) {
    %c0_i32 = arith.constant 0 : i32
    %c0_i32_0 = arith.constant 0 : i32
    %c0_i32_1 = arith.constant 0 : i32
    return %c0_i32, %c0_i32_0 : i32, i32
  }
  func.func @transform_4(%arg0: i32) -> (i32, i32) {
    %c0_i32 = arith.constant 0 : i32
    %c0_i32_0 = arith.constant 0 : i32
    %c0_i32_1 = arith.constant 0 : i32
    return %c0_i32, %c0_i32_0 : i32, i32
  }
  func.func @transform_5(%arg0: i32) -> (i32, i32) {
    %c0_i32 = arith.constant 0 : i32
    %c0_i32_0 = arith.constant 0 : i32
    %c0_i32_1 = arith.constant 0 : i32
    return %c0_i32, %c0_i32_0 : i32, i32
  }
  func.func @transform_6(%arg0: i32) -> (i32, i32) {
    %c0_i32 = arith.constant 0 : i32
    %c0_i32_0 = arith.constant 0 : i32
    %c0_i32_1 = arith.constant 0 : i32
    return %c0_i32, %c0_i32_0 : i32, i32
  }
  func.func @transform_7(%arg0: i32) -> (i32, i32) {
    %c0_i32 = arith.constant 0 : i32
    %c0_i32_0 = arith.constant 0 : i32
    %c0_i32_1 = arith.constant 0 : i32
    return %c0_i32, %c0_i32_0 : i32, i32
  }
  func.func @transform_8(%arg0: i32) -> (i32, i32) {
    %c0_i32 = arith.constant 0 : i32
    %c0_i32_0 = arith.constant 0 : i32
    %c0_i32_1 = arith.constant 0 : i32
    return %c0_i32, %c0_i32_0 : i32, i32
  }
  func.func @transform_9(%arg0: i32) -> (i32, i32) {
    %c0_i32 = arith.constant 0 : i32
    %c0_i32_0 = arith.constant 0 : i32
    %c0_i32_1 = arith.constant 0 : i32
    return %c0_i32, %c0_i32_0 : i32, i32
  }
  func.func @transform_10(%arg0: i32) -> (i32, i32) {
    %c0_i32 = arith.constant 0 : i32
    %c0_i32_0 = arith.constant 0 : i32
    %c0_i32_1 = arith.constant 0 : i32
    return %c0_i32, %c0_i32_0 : i32, i32
  }
  func.func @transform_11(%arg0: i32) -> (i32, i32) {
    %c0_i32 = arith.constant 0 : i32
    %c0_i32_0 = arith.constant 0 : i32
    return %arg0, %c0_i32 : i32, i32
  }
}

</mosaic_0001>

<llo_original>
// kernel: smile_detector_forward.1
$region0: #{smile_detector_forward.1}
  #allocation0 [shape = 'u32[]', space=smem, size = 0x4, offset = 0x4, fixed_abs, tag = 'smem constant byte address 0x4 - core index']
  #allocation1 [shape = 'u32[144,128]{1,0:T(1,128)}', space=vmem, size = 0x12000, scoped, tag = 'internal scratch']
  #allocation2 [shape = 'bf16[2,18,18,3]{3,2,1,0:T(8,128)(2,1)}', space=vmem, size = 0x36000, scoped, tag = 'scratch operand']
  #allocation3 [shape = 'bf16[2,10,10,32]{3,2,1,0:T(8,128)(2,1)}', space=vmem, size = 0x14000, scoped, tag = 'scratch operand']
  #allocation4 [shape = 'bf16[2,6,6,64]{3,2,1,0:T(8,128)(2,1)}', space=vmem, size = 0x6000, scoped, tag = 'scratch operand']
  #allocation5 [shape = 'bf16[2,4,4,128]{3,2,1,0:T(4,128)(2,1)}', space=vmem, size = 0x2000, scoped, tag = 'scratch operand']
  #allocation6 [shape = 'f32[1,1]{1,0:T(1,128)S(1)}', space=vmem, size = 0x200, scoped, tag = 'scoped memory for smile_detector_forward.1']
  %s0 = inlined_call_operand.vmem [shape: bf16[2,16,16,3], index: 0, kind: input, shape index: {}]
  %s1 = inlined_call_operand.vmem [shape: bf16[27,32], index: 1, kind: input, shape index: {}]
  %s2 = inlined_call_operand.vmem [shape: f32[1,32], index: 2, kind: input, shape index: {}]
  %s3 = inlined_call_operand.vmem [shape: bf16[288,64], index: 3, kind: input, shape index: {}]
  %s4 = inlined_call_operand.vmem [shape: f32[1,64], index: 4, kind: input, shape index: {}]
  %s5 = inlined_call_operand.vmem [shape: bf16[576,128], index: 5, kind: input, shape index: {}]
  %s6 = inlined_call_operand.vmem [shape: f32[1,128], index: 6, kind: input, shape index: {}]
  %s7 = inlined_call_operand.vmem [shape: bf16[1152,256], index: 7, kind: input, shape index: {}]
  %s8 = inlined_call_operand.vmem [shape: f32[1,256], index: 8, kind: input, shape index: {}]
  %s9 = inlined_call_operand.vmem [shape: f32[1,256], index: 9, kind: input, shape index: {}]
  %s10 = inlined_call_operand.<no memory space> [shape: f32[1,1], index: 10, kind: input, shape index: {}]
  %s11 = inlined_call_operand.vmem [shape: f32[2,1], index: 11, kind: output, shape index: {}]
  %s12 = sld [smem:[#allocation0]]
  $region54: #{smile_detector_forward.1} parent=0
    _
  %s14 = ssub.s32 1, %s12
  %s15 = scalar_select 0, %s14, %s12
  %v16 = vstv %s10
  %17 = vst [vmem:[#allocation6] sm:$0x1] %v16
  // Predicated region
  $region2: #{smile_detector_forward.1} parent=0 // pred_check
    _
  $region3: #{smile_detector_forward.1} parent=0 // pred_check_branch
    %19 = sbr.rel (0) target = $region5
  $region4: #{smile_detector_forward.1} parent=0 // pred_region
    _
  $region5: #{smile_detector_forward.1} parent=0 // pred_fallthru
    _
  // Predicated region
  $region6: #{smile_detector_forward.1} parent=0 // pred_check
    _
  $region7: #{smile_detector_forward.1} parent=0 // pred_check_branch
    %21 = sbr.rel (0) target = $region9
  $region8: #{smile_detector_forward.1} parent=0 // pred_region
    _
  $region9: #{smile_detector_forward.1} parent=0 // pred_fallthru
    _
  // Predicated region
  $region10: #{smile_detector_forward.1} parent=0 // pred_check
    _
  $region11: #{smile_detector_forward.1} parent=0 // pred_check_branch
    %23 = sbr.rel (0) target = $region13
  $region12: #{smile_detector_forward.1} parent=0 // pred_region
    _
  $region13: #{smile_detector_forward.1} parent=0 // pred_fallthru
    _
  // Predicated region
  $region14: #{smile_detector_forward.1} parent=0 // pred_check
    _
  $region15: #{smile_detector_forward.1} parent=0 // pred_check_branch
    %25 = sbr.rel (0) target = $region17
  $region16: #{smile_detector_forward.1} parent=0 // pred_region
    _
  $region17: #{smile_detector_forward.1} parent=0 // pred_fallthru
    _
  // Predicated region
  $region18: #{smile_detector_forward.1} parent=0 // pred_check
    _
  $region19: #{smile_detector_forward.1} parent=0 // pred_check_branch
    %27 = sbr.rel (0) target = $region21
  $region20: #{smile_detector_forward.1} parent=0 // pred_region
    _
  $region21: #{smile_detector_forward.1} parent=0 // pred_fallthru
    _
  // Predicated region
  $region22: #{smile_detector_forward.1} parent=0 // pred_check
    _
  $region23: #{smile_detector_forward.1} parent=0 // pred_check_branch
    %29 = sbr.rel (0) target = $region25
  $region24: #{smile_detector_forward.1} parent=0 // pred_region
    _
  $region25: #{smile_detector_forward.1} parent=0 // pred_fallthru
    _
  // Predicated region
  $region26: #{smile_detector_forward.1} parent=0 // pred_check
    _
  $region27: #{smile_detector_forward.1} parent=0 // pred_check_branch
    %31 = sbr.rel (0) target = $region29
  $region28: #{smile_detector_forward.1} parent=0 // pred_region
    _
  $region29: #{smile_detector_forward.1} parent=0 // pred_fallthru
    _
  // Predicated region
  $region30: #{smile_detector_forward.1} parent=0 // pred_check
    _
  $region31: #{smile_detector_forward.1} parent=0 // pred_check_branch
    %33 = sbr.rel (0) target = $region33
  $region32: #{smile_detector_forward.1} parent=0 // pred_region
    _
  $region33: #{smile_detector_forward.1} parent=0 // pred_fallthru
    _
  // Predicated region
  $region34: #{smile_detector_forward.1} parent=0 // pred_check
    _
  $region35: #{smile_detector_forward.1} parent=0 // pred_check_branch
    %35 = sbr.rel (0) target = $region37
  $region36: #{smile_detector_forward.1} parent=0 // pred_region
    _
  $region37: #{smile_detector_forward.1} parent=0 // pred_fallthru
    _
  // Predicated region
  $region38: #{smile_detector_forward.1} parent=0 // pred_check
    _
  $region39: #{smile_detector_forward.1} parent=0 // pred_check_branch
    %37 = sbr.rel (0) target = $region41
  $region40: #{smile_detector_forward.1} parent=0 // pred_region
    _
  $region41: #{smile_detector_forward.1} parent=0 // pred_fallthru
    _
  // Predicated region
  $region42: #{smile_detector_forward.1} parent=0 // pred_check
    _
  $region43: #{smile_detector_forward.1} parent=0 // pred_check_branch
    %39 = sbr.rel (0) target = $region45
  $region44: #{smile_detector_forward.1} parent=0 // pred_region
    _
  $region45: #{smile_detector_forward.1} parent=0 // pred_fallthru
    _
  %v41 = vld [vmem:[%s0] sm:$0xf]
  %v42 = vld [vmem:[%s0 + $0x4] sm:$0xf]
  %v43 = vld [vmem:[%s0 + $0x8] sm:$0xf]
  %v44 = vld [vmem:[%s0 + $0xc] sm:$0xf]
  %v45 = vld [vmem:[%s0 + $0x10] sm:$0xf]
  %v46 = vld [vmem:[%s0 + $0x14] sm:$0xf]
  %v47 = vld [vmem:[%s0 + $0x18] sm:$0xf]
  %v48 = vld [vmem:[%s0 + $0x1c] sm:$0xf]
  %v49 = vld [vmem:[%s0 + $0x20] sm:$0xf]
  %v50 = vld [vmem:[%s0 + $0x24] sm:$0xf]
  %v51 = vld [vmem:[%s0 + $0x28] sm:$0xf]
  %v52 = vld [vmem:[%s0 + $0x2c] sm:$0xf]
  %v53 = vld [vmem:[%s0 + $0x30] sm:$0xf]
  %v54 = vld [vmem:[%s0 + $0x34] sm:$0xf]
  %v55 = vld [vmem:[%s0 + $0x38] sm:$0xf]
  %v56 = vld [vmem:[%s0 + $0x3c] sm:$0xf]
  %v57 = vld [vmem:[%s0 + $0x40] sm:$0xf]
  %v58 = vld [vmem:[%s0 + $0x44] sm:$0xf]
  %v59 = vld [vmem:[%s0 + $0x48] sm:$0xf]
  %v60 = vld [vmem:[%s0 + $0x4c] sm:$0xf]
  %v61 = vld [vmem:[%s0 + $0x50] sm:$0xf]
  %v62 = vld [vmem:[%s0 + $0x54] sm:$0xf]
  %v63 = vld [vmem:[%s0 + $0x58] sm:$0xf]
  %v64 = vld [vmem:[%s0 + $0x5c] sm:$0xf]
  %v65 = vld [vmem:[%s0 + $0x60] sm:$0xf]
  %v66 = vld [vmem:[%s0 + $0x64] sm:$0xf]
  %v67 = vld [vmem:[%s0 + $0x68] sm:$0xf]
  %v68 = vld [vmem:[%s0 + $0x6c] sm:$0xf]
  %v69 = vld [vmem:[%s0 + $0x70] sm:$0xf]
  %v70 = vld [vmem:[%s0 + $0x74] sm:$0xf]
  %v71 = vld [vmem:[%s0 + $0x78] sm:$0xf]
  %v72 = vld [vmem:[%s0 + $0x7c] sm:$0xf]
  %v73 = vld [vmem:[%s0 + $0x80] sm:$0xf]
  %v74 = vld [vmem:[%s0 + $0x84] sm:$0xf]
  %v75 = vld [vmem:[%s0 + $0x88] sm:$0xf]
  %v76 = vld [vmem:[%s0 + $0x8c] sm:$0xf]
  %v77 = vld [vmem:[%s0 + $0x90] sm:$0xf]
  %v78 = vld [vmem:[%s0 + $0x94] sm:$0xf]
  %v79 = vld [vmem:[%s0 + $0x98] sm:$0xf]
  %v80 = vld [vmem:[%s0 + $0x9c] sm:$0xf]
  %v81 = vld [vmem:[%s0 + $0xa0] sm:$0xf]
  %v82 = vld [vmem:[%s0 + $0xa4] sm:$0xf]
  %v83 = vld [vmem:[%s0 + $0xa8] sm:$0xf]
  %v84 = vld [vmem:[%s0 + $0xac] sm:$0xf]
  %v85 = vld [vmem:[%s0 + $0xb0] sm:$0xf]
  %v86 = vld [vmem:[%s0 + $0xb4] sm:$0xf]
  %v87 = vld [vmem:[%s0 + $0xb8] sm:$0xf]
  %v88 = vld [vmem:[%s0 + $0xbc] sm:$0xf]
  %v89 = vld [vmem:[%s0 + $0xc0] sm:$0xf]
  %v90 = vld [vmem:[%s0 + $0xc4] sm:$0xf]
  %v91 = vld [vmem:[%s0 + $0xc8] sm:$0xf]
  %v92 = vld [vmem:[%s0 + $0xcc] sm:$0xf]
  %v93 = vld [vmem:[%s0 + $0xd0] sm:$0xf]
  %v94 = vld [vmem:[%s0 + $0xd4] sm:$0xf]
  %v95 = vld [vmem:[%s0 + $0xd8] sm:$0xf]
  %v96 = vld [vmem:[%s0 + $0xdc] sm:$0xf]
  %v97 = vld [vmem:[%s0 + $0xe0] sm:$0xf]
  %v98 = vld [vmem:[%s0 + $0xe4] sm:$0xf]
  %v99 = vld [vmem:[%s0 + $0xe8] sm:$0xf]
  %v100 = vld [vmem:[%s0 + $0xec] sm:$0xf]
  %v101 = vld [vmem:[%s0 + $0xf0] sm:$0xf]
  %v102 = vld [vmem:[%s0 + $0xf4] sm:$0xf]
  %v103 = vld [vmem:[%s0 + $0xf8] sm:$0xf]
  %v104 = vld [vmem:[%s0 + $0xfc] sm:$0xf]
  %vm105 = vcmask 19456
  %106 = vst.msk [vmem:[#allocation2] sm:$0xf] %vm105, 0
  %107 = vst.msk [vmem:[#allocation2 + $0x4] sm:$0xf] %vm105, 0
  %vm108 = vcmask 16384
  %109 = vst.msk [vmem:[#allocation2 + $0x8] sm:$0x1] %vm108, 0
  %110 = vst.msk [vmem:[#allocation2 + $0xc] sm:$0xf] %vm105, 0
  %111 = vst.msk [vmem:[#allocation2 + $0x10] sm:$0xf] %vm105, 0
  %112 = vst.msk [vmem:[#allocation2 + $0x14] sm:$0x1] %vm108, 0
  %113 = vst.msk [vmem:[#allocation2 + $0x18] sm:$0xf] %vm105, 0
  %114 = vst.msk [vmem:[#allocation2 + $0x1c] sm:$0xf] %vm105, 0
  %115 = vst.msk [vmem:[#allocation2 + $0x20] sm:$0x1] %vm108, 0
  %116 = vst.msk [vmem:[#allocation2 + $0x24] sm:$0xf] %vm105, 0
  %117 = vst.msk [vmem:[#allocation2 + $0x28] sm:$0xf] %vm105, 0
  %118 = vst.msk [vmem:[#allocation2 + $0x2c] sm:$0x1] %vm108, 0
  %119 = vst.msk [vmem:[#allocation2 + $0x30] sm:$0xf] %vm105, 0
  %120 = vst.msk [vmem:[#allocation2 + $0x34] sm:$0xf] %vm105, 0
  %121 = vst.msk [vmem:[#allocation2 + $0x38] sm:$0x1] %vm108, 0
  %122 = vst.msk [vmem:[#allocation2 + $0x3c] sm:$0xf] %vm105, 0
  %123 = vst.msk [vmem:[#allocation2 + $0x40] sm:$0xf] %vm105, 0
  %124 = vst.msk [vmem:[#allocation2 + $0x44] sm:$0x1] %vm108, 0
  %125 = vst.msk [vmem:[#allocation2 + $0x48] sm:$0xf] %vm105, 0
  %126 = vst.msk [vmem:[#allocation2 + $0x4c] sm:$0xf] %vm105, 0
  %127 = vst.msk [vmem:[#allocation2 + $0x50] sm:$0x1] %vm108, 0
  %128 = vst.msk [vmem:[#allocation2 + $0x54] sm:$0xf] %vm105, 0
  %129 = vst.msk [vmem:[#allocation2 + $0x58] sm:$0xf] %vm105, 0
  %130 = vst.msk [vmem:[#allocation2 + $0x5c] sm:$0x1] %vm108, 0
  %131 = vst.msk [vmem:[#allocation2 + $0x60] sm:$0xf] %vm105, 0
  %132 = vst.msk [vmem:[#allocation2 + $0x64] sm:$0xf] %vm105, 0
  %133 = vst.msk [vmem:[#allocation2 + $0x68] sm:$0x1] %vm108, 0
  %134 = vst.msk [vmem:[#allocation2 + $0x6c] sm:$0xf] %vm105, 0
  %135 = vst.msk [vmem:[#allocation2 + $0x70] sm:$0xf] %vm105, 0
  %136 = vst.msk [vmem:[#allocation2 + $0x74] sm:$0x1] %vm108, 0
  %137 = vst.msk [vmem:[#allocation2 + $0x78] sm:$0xf] %vm105, 0
  %138 = vst.msk [vmem:[#allocation2 + $0x7c] sm:$0xf] %vm105, 0
  %139 = vst.msk [vmem:[#allocation2 + $0x80] sm:$0x1] %vm108, 0
  %140 = vst.msk [vmem:[#allocation2 + $0x84] sm:$0xf] %vm105, 0
  %141 = vst.msk [vmem:[#allocation2 + $0x88] sm:$0xf] %vm105, 0
  %142 = vst.msk [vmem:[#allocation2 + $0x8c] sm:$0x1] %vm108, 0
  %143 = vst.msk [vmem:[#allocation2 + $0x90] sm:$0xf] %vm105, 0
  %144 = vst.msk [vmem:[#allocation2 + $0x94] sm:$0xf] %vm105, 0
  %145 = vst.msk [vmem:[#allocation2 + $0x98] sm:$0x1] %vm108, 0
  %146 = vst.msk [vmem:[#allocation2 + $0x9c] sm:$0xf] %vm105, 0
  %147 = vst.msk [vmem:[#allocation2 + $0xa0] sm:$0xf] %vm105, 0
  %148 = vst.msk [vmem:[#allocation2 + $0xa4] sm:$0x1] %vm108, 0
  %149 = vst.msk [vmem:[#allocation2 + $0xa8] sm:$0xf] %vm105, 0
  %150 = vst.msk [vmem:[#allocation2 + $0xac] sm:$0xf] %vm105, 0
  %151 = vst.msk [vmem:[#allocation2 + $0xb0] sm:$0x1] %vm108, 0
  %152 = vst.msk [vmem:[#allocation2 + $0xb4] sm:$0xf] %vm105, 0
  %153 = vst.msk [vmem:[#allocation2 + $0xb8] sm:$0xf] %vm105, 0
  %154 = vst.msk [vmem:[#allocation2 + $0xbc] sm:$0x1] %vm108, 0
  %155 = vst.msk [vmem:[#allocation2 + $0xc0] sm:$0xf] %vm105, 0
  %156 = vst.msk [vmem:[#allocation2 + $0xc4] sm:$0xf] %vm105, 0
  %157 = vst.msk [vmem:[#allocation2 + $0xc8] sm:$0x1] %vm108, 0
  %158 = vst.msk [vmem:[#allocation2 + $0xcc] sm:$0xf] %vm105, 0
  %159 = vst.msk [vmem:[#allocation2 + $0xd0] sm:$0xf] %vm105, 0
  %160 = vst.msk [vmem:[#allocation2 + $0xd4] sm:$0x1] %vm108, 0
  %161 = vst.msk [vmem:[#allocation2 + $0xd8] sm:$0xf] %vm105, 0
  %162 = vst.msk [vmem:[#allocation2 + $0xdc] sm:$0xf] %vm105, 0
  %163 = vst.msk [vmem:[#allocation2 + $0xe0] sm:$0x1] %vm108, 0
  %164 = vst.msk [vmem:[#allocation2 + $0xe4] sm:$0xf] %vm105, 0
  %165 = vst.msk [vmem:[#allocation2 + $0xe8] sm:$0xf] %vm105, 0
  %166 = vst.msk [vmem:[#allocation2 + $0xec] sm:$0x1] %vm108, 0
  %167 = vst.msk [vmem:[#allocation2 + $0xf0] sm:$0xf] %vm105, 0
  %168 = vst.msk [vmem:[#allocation2 + $0xf4] sm:$0xf] %vm105, 0
  %169 = vst.msk [vmem:[#allocation2 + $0xf8] sm:$0x1] %vm108, 0
  %170 = vst.msk [vmem:[#allocation2 + $0xfc] sm:$0xf] %vm105, 0
  %171 = vst.msk [vmem:[#allocation2 + $0x100] sm:$0xf] %vm105, 0
  %172 = vst.msk [vmem:[#allocation2 + $0x104] sm:$0x1] %vm108, 0
  %173 = vst.msk [vmem:[#allocation2 + $0x108] sm:$0xf] %vm105, 0
  %174 = vst.msk [vmem:[#allocation2 + $0x10c] sm:$0xf] %vm105, 0
  %175 = vst.msk [vmem:[#allocation2 + $0x110] sm:$0x1] %vm108, 0
  %176 = vst.msk [vmem:[#allocation2 + $0x114] sm:$0xf] %vm105, 0
  %177 = vst.msk [vmem:[#allocation2 + $0x118] sm:$0xf] %vm105, 0
  %178 = vst.msk [vmem:[#allocation2 + $0x11c] sm:$0x1] %vm108, 0
  %179 = vst.msk [vmem:[#allocation2 + $0x120] sm:$0xf] %vm105, 0
  %180 = vst.msk [vmem:[#allocation2 + $0x124] sm:$0xf] %vm105, 0
  %181 = vst.msk [vmem:[#allocation2 + $0x128] sm:$0x1] %vm108, 0
  %182 = vst.msk [vmem:[#allocation2 + $0x12c] sm:$0xf] %vm105, 0
  %183 = vst.msk [vmem:[#allocation2 + $0x130] sm:$0xf] %vm105, 0
  %184 = vst.msk [vmem:[#allocation2 + $0x134] sm:$0x1] %vm108, 0
  %185 = vst.msk [vmem:[#allocation2 + $0x138] sm:$0xf] %vm105, 0
  %186 = vst.msk [vmem:[#allocation2 + $0x13c] sm:$0xf] %vm105, 0
  %187 = vst.msk [vmem:[#allocation2 + $0x140] sm:$0x1] %vm108, 0
  %188 = vst.msk [vmem:[#allocation2 + $0x144] sm:$0xf] %vm105, 0
  %189 = vst.msk [vmem:[#allocation2 + $0x148] sm:$0xf] %vm105, 0
  %190 = vst.msk [vmem:[#allocation2 + $0x14c] sm:$0x1] %vm108, 0
  %191 = vst.msk [vmem:[#allocation2 + $0x150] sm:$0xf] %vm105, 0
  %192 = vst.msk [vmem:[#allocation2 + $0x154] sm:$0xf] %vm105, 0
  %193 = vst.msk [vmem:[#allocation2 + $0x158] sm:$0x1] %vm108, 0
  %194 = vst.msk [vmem:[#allocation2 + $0x15c] sm:$0xf] %vm105, 0
  %195 = vst.msk [vmem:[#allocation2 + $0x160] sm:$0xf] %vm105, 0
  %196 = vst.msk [vmem:[#allocation2 + $0x164] sm:$0x1] %vm108, 0
  %197 = vst.msk [vmem:[#allocation2 + $0x168] sm:$0xf] %vm105, 0
  %198 = vst.msk [vmem:[#allocation2 + $0x16c] sm:$0xf] %vm105, 0
  %199 = vst.msk [vmem:[#allocation2 + $0x170] sm:$0x1] %vm108, 0
  %200 = vst.msk [vmem:[#allocation2 + $0x174] sm:$0xf] %vm105, 0
  %201 = vst.msk [vmem:[#allocation2 + $0x178] sm:$0xf] %vm105, 0
  %202 = vst.msk [vmem:[#allocation2 + $0x17c] sm:$0x1] %vm108, 0
  %203 = vst.msk [vmem:[#allocation2 + $0x180] sm:$0xf] %vm105, 0
  %204 = vst.msk [vmem:[#allocation2 + $0x184] sm:$0xf] %vm105, 0
  %205 = vst.msk [vmem:[#allocation2 + $0x188] sm:$0x1] %vm108, 0
  %206 = vst.msk [vmem:[#allocation2 + $0x18c] sm:$0xf] %vm105, 0
  %207 = vst.msk [vmem:[#allocation2 + $0x190] sm:$0xf] %vm105, 0
  %208 = vst.msk [vmem:[#allocation2 + $0x194] sm:$0x1] %vm108, 0
  %209 = vst.msk [vmem:[#allocation2 + $0x198] sm:$0xf] %vm105, 0
  %210 = vst.msk [vmem:[#allocation2 + $0x19c] sm:$0xf] %vm105, 0
  %211 = vst.msk [vmem:[#allocation2 + $0x1a0] sm:$0x1] %vm108, 0
  %212 = vst.msk [vmem:[#allocation2 + $0x1a4] sm:$0xf] %vm105, 0
  %213 = vst.msk [vmem:[#allocation2 + $0x1a8] sm:$0xf] %vm105, 0
  %214 = vst.msk [vmem:[#allocation2 + $0x1ac] sm:$0x1] %vm108, 0
  %vm215 = vsmask.f32 256
  %vm216 = vsmask.f32 4368
  %vm217 = vmor %vm215, %vm216
  %v219 = vshrl.u32 %v41, 16
  %v221 = vrot.slane %v219, 7
  %v222 = vshll.u32 %v41, 16
  %v224 = vor.u32 %v221, %v222
  %v225 = vrot.slane %v221, 4
  %v227 = vshrl.u32 %v42, 16
  %v229 = vrot.slane %v227, 7
  %v230 = vshll.u32 %v42, 16
  %v232 = vor.u32 %v229, %v230
  %v233 = vsel %vm217, %v225, %v232
  %v234 = vrot.slane %v229, 4
  %v236 = vshrl.u32 %v43, 16
  %v238 = vrot.slane %v236, 7
  %v239 = vshll.u32 %v43, 16
  %v241 = vor.u32 %v238, %v239
  %v242 = vrot.slane %v238, 4
  %v244 = vshrl.u32 %v44, 16
  %v246 = vrot.slane %v244, 7
  %v247 = vshll.u32 %v44, 16
  %v249 = vor.u32 %v246, %v247
  %v250 = vsel %vm217, %v242, %v249
  %v251 = vrot.slane %v246, 4
  %v253 = vshrl.u32 %v45, 16
  %v255 = vrot.slane %v253, 7
  %v256 = vshll.u32 %v45, 16
  %v258 = vor.u32 %v255, %v256
  %v259 = vrot.slane %v255, 4
  %v261 = vshrl.u32 %v46, 16
  %v263 = vrot.slane %v261, 7
  %v264 = vshll.u32 %v46, 16
  %v266 = vor.u32 %v263, %v264
  %v267 = vsel %vm217, %v259, %v266
  %v268 = vrot.slane %v263, 4
  %v270 = vshrl.u32 %v47, 16
  %v272 = vrot.slane %v270, 7
  %v273 = vshll.u32 %v47, 16
  %v275 = vor.u32 %v272, %v273
  %v276 = vrot.slane %v272, 4
  %v278 = vshrl.u32 %v48, 16
  %v280 = vrot.slane %v278, 7
  %v281 = vshll.u32 %v48, 16
  %v283 = vor.u32 %v280, %v281
  %v284 = vsel %vm217, %v276, %v283
  %v285 = vrot.slane %v280, 4
  %v287 = vshrl.u32 %v49, 16
  %v289 = vrot.slane %v287, 7
  %v290 = vshll.u32 %v49, 16
  %v292 = vor.u32 %v289, %v290
  %v293 = vrot.slane %v289, 4
  %v295 = vshrl.u32 %v50, 16
  %v297 = vrot.slane %v295, 7
  %v298 = vshll.u32 %v50, 16
  %v300 = vor.u32 %v297, %v298
  %v301 = vsel %vm217, %v293, %v300
  %v302 = vrot.slane %v297, 4
  %v304 = vshrl.u32 %v51, 16
  %v306 = vrot.slane %v304, 7
  %v307 = vshll.u32 %v51, 16
  %v309 = vor.u32 %v306, %v307
  %v310 = vrot.slane %v306, 4
  %v312 = vshrl.u32 %v52, 16
  %v314 = vrot.slane %v312, 7
  %v315 = vshll.u32 %v52, 16
  %v317 = vor.u32 %v314, %v315
  %v318 = vsel %vm217, %v310, %v317
  %v319 = vrot.slane %v314, 4
  %v321 = vshrl.u32 %v53, 16
  %v323 = vrot.slane %v321, 7
  %v324 = vshll.u32 %v53, 16
  %v326 = vor.u32 %v323, %v324
  %v327 = vrot.slane %v323, 4
  %v329 = vshrl.u32 %v54, 16
  %v331 = vrot.slane %v329, 7
  %v332 = vshll.u32 %v54, 16
  %v334 = vor.u32 %v331, %v332
  %v335 = vsel %vm217, %v327, %v334
  %v336 = vrot.slane %v331, 4
  %v338 = vshrl.u32 %v55, 16
  %v340 = vrot.slane %v338, 7
  %v341 = vshll.u32 %v55, 16
  %v343 = vor.u32 %v340, %v341
  %v344 = vrot.slane %v340, 4
  %v346 = vshrl.u32 %v56, 16
  %v348 = vrot.slane %v346, 7
  %v349 = vshll.u32 %v56, 16
  %v351 = vor.u32 %v348, %v349
  %v352 = vsel %vm217, %v344, %v351
  %v353 = vrot.slane %v348, 4
  %v355 = vshrl.u32 %v57, 16
  %v357 = vrot.slane %v355, 7
  %v358 = vshll.u32 %v57, 16
  %v360 = vor.u32 %v357, %v358
  %v361 = vrot.slane %v357, 4
  %v363 = vshrl.u32 %v58, 16
  %v365 = vrot.slane %v363, 7
  %v366 = vshll.u32 %v58, 16
  %v368 = vor.u32 %v365, %v366
  %v369 = vsel %vm217, %v361, %v368
  %v370 = vrot.slane %v365, 4
  %v372 = vshrl.u32 %v59, 16
  %v374 = vrot.slane %v372, 7
  %v375 = vshll.u32 %v59, 16
  %v377 = vor.u32 %v374, %v375
  %v378 = vrot.slane %v374, 4
  %v380 = vshrl.u32 %v60, 16
  %v382 = vrot.slane %v380, 7
  %v383 = vshll.u32 %v60, 16
  %v385 = vor.u32 %v382, %v383
  %v386 = vsel %vm217, %v378, %v385
  %v387 = vrot.slane %v382, 4
  %v389 = vshrl.u32 %v61, 16
  %v391 = vrot.slane %v389, 7
  %v392 = vshll.u32 %v61, 16
  %v394 = vor.u32 %v391, %v392
  %v395 = vrot.slane %v391, 4
  %v397 = vshrl.u32 %v62, 16
  %v399 = vrot.slane %v397, 7
  %v400 = vshll.u32 %v62, 16
  %v402 = vor.u32 %v399, %v400
  %v403 = vsel %vm217, %v395, %v402
  %v404 = vrot.slane %v399, 4
  %v406 = vshrl.u32 %v63, 16
  %v408 = vrot.slane %v406, 7
  %v409 = vshll.u32 %v63, 16
  %v411 = vor.u32 %v408, %v409
  %v412 = vrot.slane %v408, 4
  %v414 = vshrl.u32 %v64, 16
  %v416 = vrot.slane %v414, 7
  %v417 = vshll.u32 %v64, 16
  %v419 = vor.u32 %v416, %v417
  %v420 = vsel %vm217, %v412, %v419
  %v421 = vrot.slane %v416, 4
  %v423 = vshrl.u32 %v65, 16
  %v425 = vrot.slane %v423, 7
  %v426 = vshll.u32 %v65, 16
  %v428 = vor.u32 %v425, %v426
  %v429 = vrot.slane %v425, 4
  %v431 = vshrl.u32 %v66, 16
  %v433 = vrot.slane %v431, 7
  %v434 = vshll.u32 %v66, 16
  %v436 = vor.u32 %v433, %v434
  %v437 = vsel %vm217, %v429, %v436
  %v438 = vrot.slane %v433, 4
  %v440 = vshrl.u32 %v67, 16
  %v442 = vrot.slane %v440, 7
  %v443 = vshll.u32 %v67, 16
  %v445 = vor.u32 %v442, %v443
  %v446 = vrot.slane %v442, 4
  %v448 = vshrl.u32 %v68, 16
  %v450 = vrot.slane %v448, 7
  %v451 = vshll.u32 %v68, 16
  %v453 = vor.u32 %v450, %v451
  %v454 = vsel %vm217, %v446, %v453
  %v455 = vrot.slane %v450, 4
  %v457 = vshrl.u32 %v69, 16
  %v459 = vrot.slane %v457, 7
  %v460 = vshll.u32 %v69, 16
  %v462 = vor.u32 %v459, %v460
  %v463 = vrot.slane %v459, 4
  %v465 = vshrl.u32 %v70, 16
  %v467 = vrot.slane %v465, 7
  %v468 = vshll.u32 %v70, 16
  %v470 = vor.u32 %v467, %v468
  %v471 = vsel %vm217, %v463, %v470
  %v472 = vrot.slane %v467, 4
  %v474 = vshrl.u32 %v71, 16
  %v476 = vrot.slane %v474, 7
  %v477 = vshll.u32 %v71, 16
  %v479 = vor.u32 %v476, %v477
  %v480 = vrot.slane %v476, 4
  %v482 = vshrl.u32 %v72, 16
  %v484 = vrot.slane %v482, 7
  %v485 = vshll.u32 %v72, 16
  %v487 = vor.u32 %v484, %v485
  %v488 = vsel %vm217, %v480, %v487
  %v489 = vrot.slane %v484, 4
  %v491 = vshrl.u32 %v73, 16
  %v493 = vrot.slane %v491, 7
  %v494 = vshll.u32 %v73, 16
  %v496 = vor.u32 %v493, %v494
  %v497 = vrot.slane %v493, 4
  %v499 = vshrl.u32 %v74, 16
  %v501 = vrot.slane %v499, 7
  %v502 = vshll.u32 %v74, 16
  %v504 = vor.u32 %v501, %v502
  %v505 = vsel %vm217, %v497, %v504
  %v506 = vrot.slane %v501, 4
  %v508 = vshrl.u32 %v75, 16
  %v510 = vrot.slane %v508, 7
  %v511 = vshll.u32 %v75, 16
  %v513 = vor.u32 %v510, %v511
  %v514 = vrot.slane %v510, 4
  %v516 = vshrl.u32 %v76, 16
  %v518 = vrot.slane %v516, 7
  %v519 = vshll.u32 %v76, 16
  %v521 = vor.u32 %v518, %v519
  %v522 = vsel %vm217, %v514, %v521
  %v523 = vrot.slane %v518, 4
  %v525 = vshrl.u32 %v77, 16
  %v527 = vrot.slane %v525, 7
  %v528 = vshll.u32 %v77, 16
  %v530 = vor.u32 %v527, %v528
  %v531 = vrot.slane %v527, 4
  %v533 = vshrl.u32 %v78, 16
  %v535 = vrot.slane %v533, 7
  %v536 = vshll.u32 %v78, 16
  %v538 = vor.u32 %v535, %v536
  %v539 = vsel %vm217, %v531, %v538
  %v540 = vrot.slane %v535, 4
  %v542 = vshrl.u32 %v79, 16
  %v544 = vrot.slane %v542, 7
  %v545 = vshll.u32 %v79, 16
  %v547 = vor.u32 %v544, %v545
  %v548 = vrot.slane %v544, 4
  %v550 = vshrl.u32 %v80, 16
  %v552 = vrot.slane %v550, 7
  %v553 = vshll.u32 %v80, 16
  %v555 = vor.u32 %v552, %v553
  %v556 = vsel %vm217, %v548, %v555
  %v557 = vrot.slane %v552, 4
  %v559 = vshrl.u32 %v81, 16
  %v561 = vrot.slane %v559, 7
  %v562 = vshll.u32 %v81, 16
  %v564 = vor.u32 %v561, %v562
  %v565 = vrot.slane %v561, 4
  %v567 = vshrl.u32 %v82, 16
  %v569 = vrot.slane %v567, 7
  %v570 = vshll.u32 %v82, 16
  %v572 = vor.u32 %v569, %v570
  %v573 = vsel %vm217, %v565, %v572
  %v574 = vrot.slane %v569, 4
  %v576 = vshrl.u32 %v83, 16
  %v578 = vrot.slane %v576, 7
  %v579 = vshll.u32 %v83, 16
  %v581 = vor.u32 %v578, %v579
  %v582 = vrot.slane %v578, 4
  %v584 = vshrl.u32 %v84, 16
  %v586 = vrot.slane %v584, 7
  %v587 = vshll.u32 %v84, 16
  %v589 = vor.u32 %v586, %v587
  %v590 = vsel %vm217, %v582, %v589
  %v591 = vrot.slane %v586, 4
  %v593 = vshrl.u32 %v85, 16
  %v595 = vrot.slane %v593, 7
  %v596 = vshll.u32 %v85, 16
  %v598 = vor.u32 %v595, %v596
  %v599 = vrot.slane %v595, 4
  %v601 = vshrl.u32 %v86, 16
  %v603 = vrot.slane %v601, 7
  %v604 = vshll.u32 %v86, 16
  %v606 = vor.u32 %v603, %v604
  %v607 = vsel %vm217, %v599, %v606
  %v608 = vrot.slane %v603, 4
  %v610 = vshrl.u32 %v87, 16
  %v612 = vrot.slane %v610, 7
  %v613 = vshll.u32 %v87, 16
  %v615 = vor.u32 %v612, %v613
  %v616 = vrot.slane %v612, 4
  %v618 = vshrl.u32 %v88, 16
  %v620 = vrot.slane %v618, 7
  %v621 = vshll.u32 %v88, 16
  %v623 = vor.u32 %v620, %v621
  %v624 = vsel %vm217, %v616, %v623
  %v625 = vrot.slane %v620, 4
  %v627 = vshrl.u32 %v89, 16
  %v629 = vrot.slane %v627, 7
  %v630 = vshll.u32 %v89, 16
  %v632 = vor.u32 %v629, %v630
  %v633 = vrot.slane %v629, 4
  %v635 = vshrl.u32 %v90, 16
  %v637 = vrot.slane %v635, 7
  %v638 = vshll.u32 %v90, 16
  %v640 = vor.u32 %v637, %v638
  %v641 = vsel %vm217, %v633, %v640
  %v642 = vrot.slane %v637, 4
  %v644 = vshrl.u32 %v91, 16
  %v646 = vrot.slane %v644, 7
  %v647 = vshll.u32 %v91, 16
  %v649 = vor.u32 %v646, %v647
  %v650 = vrot.slane %v646, 4
  %v652 = vshrl.u32 %v92, 16
  %v654 = vrot.slane %v652, 7
  %v655 = vshll.u32 %v92, 16
  %v657 = vor.u32 %v654, %v655
  %v658 = vsel %vm217, %v650, %v657
  %v659 = vrot.slane %v654, 4
  %v661 = vshrl.u32 %v93, 16
  %v663 = vrot.slane %v661, 7
  %v664 = vshll.u32 %v93, 16
  %v666 = vor.u32 %v663, %v664
  %v667 = vrot.slane %v663, 4
  %v669 = vshrl.u32 %v94, 16
  %v671 = vrot.slane %v669, 7
  %v672 = vshll.u32 %v94, 16
  %v674 = vor.u32 %v671, %v672
  %v675 = vsel %vm217, %v667, %v674
  %v676 = vrot.slane %v671, 4
  %v678 = vshrl.u32 %v95, 16
  %v680 = vrot.slane %v678, 7
  %v681 = vshll.u32 %v95, 16
  %v683 = vor.u32 %v680, %v681
  %v684 = vrot.slane %v680, 4
  %v686 = vshrl.u32 %v96, 16
  %v688 = vrot.slane %v686, 7
  %v689 = vshll.u32 %v96, 16
  %v691 = vor.u32 %v688, %v689
  %v692 = vsel %vm217, %v684, %v691
  %v693 = vrot.slane %v688, 4
  %v695 = vshrl.u32 %v97, 16
  %v697 = vrot.slane %v695, 7
  %v698 = vshll.u32 %v97, 16
  %v700 = vor.u32 %v697, %v698
  %v701 = vrot.slane %v697, 4
  %v703 = vshrl.u32 %v98, 16
  %v705 = vrot.slane %v703, 7
  %v706 = vshll.u32 %v98, 16
  %v708 = vor.u32 %v705, %v706
  %v709 = vsel %vm217, %v701, %v708
  %v710 = vrot.slane %v705, 4
  %v712 = vshrl.u32 %v99, 16
  %v714 = vrot.slane %v712, 7
  %v715 = vshll.u32 %v99, 16
  %v717 = vor.u32 %v714, %v715
  %v718 = vrot.slane %v714, 4
  %v720 = vshrl.u32 %v100, 16
  %v722 = vrot.slane %v720, 7
  %v723 = vshll.u32 %v100, 16
  %v725 = vor.u32 %v722, %v723
  %v726 = vsel %vm217, %v718, %v725
  %v727 = vrot.slane %v722, 4
  %v729 = vshrl.u32 %v101, 16
  %v731 = vrot.slane %v729, 7
  %v732 = vshll.u32 %v101, 16
  %v734 = vor.u32 %v731, %v732
  %v735 = vrot.slane %v731, 4
  %v737 = vshrl.u32 %v102, 16
  %v739 = vrot.slane %v737, 7
  %v740 = vshll.u32 %v102, 16
  %v742 = vor.u32 %v739, %v740
  %v743 = vsel %vm217, %v735, %v742
  %v744 = vrot.slane %v739, 4
  %v746 = vshrl.u32 %v103, 16
  %v748 = vrot.slane %v746, 7
  %v749 = vshll.u32 %v103, 16
  %v751 = vor.u32 %v748, %v749
  %v752 = vrot.slane %v748, 4
  %v754 = vshrl.u32 %v104, 16
  %v756 = vrot.slane %v754, 7
  %v757 = vshll.u32 %v104, 16
  %v759 = vor.u32 %v756, %v757
  %v760 = vsel %vm217, %v752, %v759
  %v761 = vrot.slane %v756, 4
  %s858 = scalar_lea.vmem [#allocation2], 12
  %vm859 = vcmask 19456
  %vm860 = vsmask.f32 7938
  %vm861 = vmand %vm859, %vm860
  %v862 = vld [vmem:[%s858] sm:$0xf]
  %v863 = vsel %vm861, %v224, %v862
  %864 = vst [vmem:[%s858] sm:$0xf] %v863
  %865 = vst.msk [vmem:[%s858 + $0x4] sm:$0xf] %vm105, %v233
  %vm866 = vcmask 16384
  %vm867 = vmand %vm866, %vm215
  %v868 = vld [vmem:[%s858 + $0x8] sm:$0x1]
  %v869 = vsel %vm867, %v234, %v868
  %870 = vst [vmem:[%s858 + $0x8] sm:$0x1] %v869
  %v871 = vld [vmem:[%s858 + $0xc] sm:$0xf]
  %v872 = vsel %vm861, %v241, %v871
  %873 = vst [vmem:[%s858 + $0xc] sm:$0xf] %v872
  %874 = vst.msk [vmem:[%s858 + $0x10] sm:$0xf] %vm105, %v250
  %v875 = vld [vmem:[%s858 + $0x14] sm:$0x1]
  %v876 = vsel %vm867, %v251, %v875
  %877 = vst [vmem:[%s858 + $0x14] sm:$0x1] %v876
  %v878 = vld [vmem:[%s858 + $0x18] sm:$0xf]
  %v879 = vsel %vm861, %v258, %v878
  %880 = vst [vmem:[%s858 + $0x18] sm:$0xf] %v879
  %881 = vst.msk [vmem:[%s858 + $0x1c] sm:$0xf] %vm105, %v267
  %v882 = vld [vmem:[%s858 + $0x20] sm:$0x1]
  %v883 = vsel %vm867, %v268, %v882
  %884 = vst [vmem:[%s858 + $0x20] sm:$0x1] %v883
  %v885 = vld [vmem:[%s858 + $0x24] sm:$0xf]
  %v886 = vsel %vm861, %v275, %v885
  %887 = vst [vmem:[%s858 + $0x24] sm:$0xf] %v886
  %888 = vst.msk [vmem:[%s858 + $0x28] sm:$0xf] %vm105, %v284
  %v889 = vld [vmem:[%s858 + $0x2c] sm:$0x1]
  %v890 = vsel %vm867, %v285, %v889
  %891 = vst [vmem:[%s858 + $0x2c] sm:$0x1] %v890
  %v892 = vld [vmem:[%s858 + $0x30] sm:$0xf]
  %v893 = vsel %vm861, %v292, %v892
  %894 = vst [vmem:[%s858 + $0x30] sm:$0xf] %v893
  %895 = vst.msk [vmem:[%s858 + $0x34] sm:$0xf] %vm105, %v301
  %v896 = vld [vmem:[%s858 + $0x38] sm:$0x1]
  %v897 = vsel %vm867, %v302, %v896
  %898 = vst [vmem:[%s858 + $0x38] sm:$0x1] %v897
  %v899 = vld [vmem:[%s858 + $0x3c] sm:$0xf]
  %v900 = vsel %vm861, %v309, %v899
  %901 = vst [vmem:[%s858 + $0x3c] sm:$0xf] %v900
  %902 = vst.msk [vmem:[%s858 + $0x40] sm:$0xf] %vm105, %v318
  %v903 = vld [vmem:[%s858 + $0x44] sm:$0x1]
  %v904 = vsel %vm867, %v319, %v903
  %905 = vst [vmem:[%s858 + $0x44] sm:$0x1] %v904
  %v906 = vld [vmem:[%s858 + $0x48] sm:$0xf]
  %v907 = vsel %vm861, %v326, %v906
  %908 = vst [vmem:[%s858 + $0x48] sm:$0xf] %v907
  %909 = vst.msk [vmem:[%s858 + $0x4c] sm:$0xf] %vm105, %v335
  %v910 = vld [vmem:[%s858 + $0x50] sm:$0x1]
  %v911 = vsel %vm867, %v336, %v910
  %912 = vst [vmem:[%s858 + $0x50] sm:$0x1] %v911
  %v913 = vld [vmem:[%s858 + $0x54] sm:$0xf]
  %v914 = vsel %vm861, %v343, %v913
  %915 = vst [vmem:[%s858 + $0x54] sm:$0xf] %v914
  %916 = vst.msk [vmem:[%s858 + $0x58] sm:$0xf] %vm105, %v352
  %v917 = vld [vmem:[%s858 + $0x5c] sm:$0x1]
  %v918 = vsel %vm867, %v353, %v917
  %919 = vst [vmem:[%s858 + $0x5c] sm:$0x1] %v918
  %v920 = vld [vmem:[%s858 + $0x60] sm:$0xf]
  %v921 = vsel %vm861, %v360, %v920
  %922 = vst [vmem:[%s858 + $0x60] sm:$0xf] %v921
  %923 = vst.msk [vmem:[%s858 + $0x64] sm:$0xf] %vm105, %v369
  %v924 = vld [vmem:[%s858 + $0x68] sm:$0x1]
  %v925 = vsel %vm867, %v370, %v924
  %926 = vst [vmem:[%s858 + $0x68] sm:$0x1] %v925
  %v927 = vld [vmem:[%s858 + $0x6c] sm:$0xf]
  %v928 = vsel %vm861, %v377, %v927
  %929 = vst [vmem:[%s858 + $0x6c] sm:$0xf] %v928
  %930 = vst.msk [vmem:[%s858 + $0x70] sm:$0xf] %vm105, %v386
  %v931 = vld [vmem:[%s858 + $0x74] sm:$0x1]
  %v932 = vsel %vm867, %v387, %v931
  %933 = vst [vmem:[%s858 + $0x74] sm:$0x1] %v932
  %v934 = vld [vmem:[%s858 + $0x78] sm:$0xf]
  %v935 = vsel %vm861, %v394, %v934
  %936 = vst [vmem:[%s858 + $0x78] sm:$0xf] %v935
  %937 = vst.msk [vmem:[%s858 + $0x7c] sm:$0xf] %vm105, %v403
  %v938 = vld [vmem:[%s858 + $0x80] sm:$0x1]
  %v939 = vsel %vm867, %v404, %v938
  %940 = vst [vmem:[%s858 + $0x80] sm:$0x1] %v939
  %v941 = vld [vmem:[%s858 + $0x84] sm:$0xf]
  %v942 = vsel %vm861, %v411, %v941
  %943 = vst [vmem:[%s858 + $0x84] sm:$0xf] %v942
  %944 = vst.msk [vmem:[%s858 + $0x88] sm:$0xf] %vm105, %v420
  %v945 = vld [vmem:[%s858 + $0x8c] sm:$0x1]
  %v946 = vsel %vm867, %v421, %v945
  %947 = vst [vmem:[%s858 + $0x8c] sm:$0x1] %v946
  %v948 = vld [vmem:[%s858 + $0x90] sm:$0xf]
  %v949 = vsel %vm861, %v428, %v948
  %950 = vst [vmem:[%s858 + $0x90] sm:$0xf] %v949
  %951 = vst.msk [vmem:[%s858 + $0x94] sm:$0xf] %vm105, %v437
  %v952 = vld [vmem:[%s858 + $0x98] sm:$0x1]
  %v953 = vsel %vm867, %v438, %v952
  %954 = vst [vmem:[%s858 + $0x98] sm:$0x1] %v953
  %v955 = vld [vmem:[%s858 + $0x9c] sm:$0xf]
  %v956 = vsel %vm861, %v445, %v955
  %957 = vst [vmem:[%s858 + $0x9c] sm:$0xf] %v956
  %958 = vst.msk [vmem:[%s858 + $0xa0] sm:$0xf] %vm105, %v454
  %v959 = vld [vmem:[%s858 + $0xa4] sm:$0x1]
  %v960 = vsel %vm867, %v455, %v959
  %961 = vst [vmem:[%s858 + $0xa4] sm:$0x1] %v960
  %v962 = vld [vmem:[%s858 + $0xa8] sm:$0xf]
  %v963 = vsel %vm861, %v462, %v962
  %964 = vst [vmem:[%s858 + $0xa8] sm:$0xf] %v963
  %965 = vst.msk [vmem:[%s858 + $0xac] sm:$0xf] %vm105, %v471
  %v966 = vld [vmem:[%s858 + $0xb0] sm:$0x1]
  %v967 = vsel %vm867, %v472, %v966
  %968 = vst [vmem:[%s858 + $0xb0] sm:$0x1] %v967
  %v969 = vld [vmem:[%s858 + $0xb4] sm:$0xf]
  %v970 = vsel %vm861, %v479, %v969
  %971 = vst [vmem:[%s858 + $0xb4] sm:$0xf] %v970
  %972 = vst.msk [vmem:[%s858 + $0xb8] sm:$0xf] %vm105, %v488
  %v973 = vld [vmem:[%s858 + $0xbc] sm:$0x1]
  %v974 = vsel %vm867, %v489, %v973
  %975 = vst [vmem:[%s858 + $0xbc] sm:$0x1] %v974
  %v976 = vld [vmem:[%s858 + $0xd8] sm:$0xf]
  %v977 = vsel %vm861, %v496, %v976
  %978 = vst [vmem:[%s858 + $0xd8] sm:$0xf] %v977
  %979 = vst.msk [vmem:[%s858 + $0xdc] sm:$0xf] %vm105, %v505
  %v980 = vld [vmem:[%s858 + $0xe0] sm:$0x1]
  %v981 = vsel %vm867, %v506, %v980
  %982 = vst [vmem:[%s858 + $0xe0] sm:$0x1] %v981
  %v983 = vld [vmem:[%s858 + $0xe4] sm:$0xf]
  %v984 = vsel %vm861, %v513, %v983
  %985 = vst [vmem:[%s858 + $0xe4] sm:$0xf] %v984
  %986 = vst.msk [vmem:[%s858 + $0xe8] sm:$0xf] %vm105, %v522
  %v987 = vld [vmem:[%s858 + $0xec] sm:$0x1]
  %v988 = vsel %vm867, %v523, %v987
  %989 = vst [vmem:[%s858 + $0xec] sm:$0x1] %v988
  %v990 = vld [vmem:[%s858 + $0xf0] sm:$0xf]
  %v991 = vsel %vm861, %v530, %v990
  %992 = vst [vmem:[%s858 + $0xf0] sm:$0xf] %v991
  %993 = vst.msk [vmem:[%s858 + $0xf4] sm:$0xf] %vm105, %v539
  %v994 = vld [vmem:[%s858 + $0xf8] sm:$0x1]
  %v995 = vsel %vm867, %v540, %v994
  %996 = vst [vmem:[%s858 + $0xf8] sm:$0x1] %v995
  %v997 = vld [vmem:[%s858 + $0xfc] sm:$0xf]
  %v998 = vsel %vm861, %v547, %v997
  %999 = vst [vmem:[%s858 + $0xfc] sm:$0xf] %v998
  %1000 = vst.msk [vmem:[%s858 + $0x100] sm:$0xf] %vm105, %v556
  %v1001 = vld [vmem:[%s858 + $0x104] sm:$0x1]
  %v1002 = vsel %vm867, %v557, %v1001
  %1003 = vst [vmem:[%s858 + $0x104] sm:$0x1] %v1002
  %v1004 = vld [vmem:[%s858 + $0x108] sm:$0xf]
  %v1005 = vsel %vm861, %v564, %v1004
  %1006 = vst [vmem:[%s858 + $0x108] sm:$0xf] %v1005
  %1007 = vst.msk [vmem:[%s858 + $0x10c] sm:$0xf] %vm105, %v573
  %v1008 = vld [vmem:[%s858 + $0x110] sm:$0x1]
  %v1009 = vsel %vm867, %v574, %v1008
  %1010 = vst [vmem:[%s858 + $0x110] sm:$0x1] %v1009
  %v1011 = vld [vmem:[%s858 + $0x114] sm:$0xf]
  %v1012 = vsel %vm861, %v581, %v1011
  %1013 = vst [vmem:[%s858 + $0x114] sm:$0xf] %v1012
  %1014 = vst.msk [vmem:[%s858 + $0x118] sm:$0xf] %vm105, %v590
  %v1015 = vld [vmem:[%s858 + $0x11c] sm:$0x1]
  %v1016 = vsel %vm867, %v591, %v1015
  %1017 = vst [vmem:[%s858 + $0x11c] sm:$0x1] %v1016
  %v1018 = vld [vmem:[%s858 + $0x120] sm:$0xf]
  %v1019 = vsel %vm861, %v598, %v1018
  %1020 = vst [vmem:[%s858 + $0x120] sm:$0xf] %v1019
  %1021 = vst.msk [vmem:[%s858 + $0x124] sm:$0xf] %vm105, %v607
  %v1022 = vld [vmem:[%s858 + $0x128] sm:$0x1]
  %v1023 = vsel %vm867, %v608, %v1022
  %1024 = vst [vmem:[%s858 + $0x128] sm:$0x1] %v1023
  %v1025 = vld [vmem:[%s858 + $0x12c] sm:$0xf]
  %v1026 = vsel %vm861, %v615, %v1025
  %1027 = vst [vmem:[%s858 + $0x12c] sm:$0xf] %v1026
  %1028 = vst.msk [vmem:[%s858 + $0x130] sm:$0xf] %vm105, %v624
  %v1029 = vld [vmem:[%s858 + $0x134] sm:$0x1]
  %v1030 = vsel %vm867, %v625, %v1029
  %1031 = vst [vmem:[%s858 + $0x134] sm:$0x1] %v1030
  %v1032 = vld [vmem:[%s858 + $0x138] sm:$0xf]
  %v1033 = vsel %vm861, %v632, %v1032
  %1034 = vst [vmem:[%s858 + $0x138] sm:$0xf] %v1033
  %1035 = vst.msk [vmem:[%s858 + $0x13c] sm:$0xf] %vm105, %v641
  %v1036 = vld [vmem:[%s858 + $0x140] sm:$0x1]
  %v1037 = vsel %vm867, %v642, %v1036
  %1038 = vst [vmem:[%s858 + $0x140] sm:$0x1] %v1037
  %v1039 = vld [vmem:[%s858 + $0x144] sm:$0xf]
  %v1040 = vsel %vm861, %v649, %v1039
  %1041 = vst [vmem:[%s858 + $0x144] sm:$0xf] %v1040
  %1042 = vst.msk [vmem:[%s858 + $0x148] sm:$0xf] %vm105, %v658
  %v1043 = vld [vmem:[%s858 + $0x14c] sm:$0x1]
  %v1044 = vsel %vm867, %v659, %v1043
  %1045 = vst [vmem:[%s858 + $0x14c] sm:$0x1] %v1044
  %v1046 = vld [vmem:[%s858 + $0x150] sm:$0xf]
  %v1047 = vsel %vm861, %v666, %v1046
  %1048 = vst [vmem:[%s858 + $0x150] sm:$0xf] %v1047
  %1049 = vst.msk [vmem:[%s858 + $0x154] sm:$0xf] %vm105, %v675
  %v1050 = vld [vmem:[%s858 + $0x158] sm:$0x1]
  %v1051 = vsel %vm867, %v676, %v1050
  %1052 = vst [vmem:[%s858 + $0x158] sm:$0x1] %v1051
  %v1053 = vld [vmem:[%s858 + $0x15c] sm:$0xf]
  %v1054 = vsel %vm861, %v683, %v1053
  %1055 = vst [vmem:[%s858 + $0x15c] sm:$0xf] %v1054
  %1056 = vst.msk [vmem:[%s858 + $0x160] sm:$0xf] %vm105, %v692
  %v1057 = vld [vmem:[%s858 + $0x164] sm:$0x1]
  %v1058 = vsel %vm867, %v693, %v1057
  %1059 = vst [vmem:[%s858 + $0x164] sm:$0x1] %v1058
  %v1060 = vld [vmem:[%s858 + $0x168] sm:$0xf]
  %v1061 = vsel %vm861, %v700, %v1060
  %1062 = vst [vmem:[%s858 + $0x168] sm:$0xf] %v1061
  %1063 = vst.msk [vmem:[%s858 + $0x16c] sm:$0xf] %vm105, %v709
  %v1064 = vld [vmem:[%s858 + $0x170] sm:$0x1]
  %v1065 = vsel %vm867, %v710, %v1064
  %1066 = vst [vmem:[%s858 + $0x170] sm:$0x1] %v1065
  %v1067 = vld [vmem:[%s858 + $0x174] sm:$0xf]
  %v1068 = vsel %vm861, %v717, %v1067
  %1069 = vst [vmem:[%s858 + $0x174] sm:$0xf] %v1068
  %1070 = vst.msk [vmem:[%s858 + $0x178] sm:$0xf] %vm105, %v726
  %v1071 = vld [vmem:[%s858 + $0x17c] sm:$0x1]
  %v1072 = vsel %vm867, %v727, %v1071
  %1073 = vst [vmem:[%s858 + $0x17c] sm:$0x1] %v1072
  %v1074 = vld [vmem:[%s858 + $0x180] sm:$0xf]
  %v1075 = vsel %vm861, %v734, %v1074
  %1076 = vst [vmem:[%s858 + $0x180] sm:$0xf] %v1075
  %1077 = vst.msk [vmem:[%s858 + $0x184] sm:$0xf] %vm105, %v743
  %v1078 = vld [vmem:[%s858 + $0x188] sm:$0x1]
  %v1079 = vsel %vm867, %v744, %v1078
  %1080 = vst [vmem:[%s858 + $0x188] sm:$0x1] %v1079
  %v1081 = vld [vmem:[%s858 + $0x18c] sm:$0xf]
  %v1082 = vsel %vm861, %v751, %v1081
  %1083 = vst [vmem:[%s858 + $0x18c] sm:$0xf] %v1082
  %1084 = vst.msk [vmem:[%s858 + $0x190] sm:$0xf] %vm105, %v760
  %v1085 = vld [vmem:[%s858 + $0x194] sm:$0x1]
  %v1086 = vsel %vm867, %v761, %v1085
  %1087 = vst [vmem:[%s858 + $0x194] sm:$0x1] %v1086
  %v1088 = vld [vmem:[#allocation2] sm:$0xf]
  %v1089 = vld [vmem:[#allocation2 + $0x4] sm:$0xf]
  %v1090 = vld [vmem:[#allocation2 + $0xc] sm:$0xf]
  %v1091 = vld [vmem:[#allocation2 + $0x10] sm:$0xf]
  %v1092 = vld [vmem:[#allocation2 + $0x18] sm:$0xf]
  %v1093 = vld [vmem:[#allocation2 + $0x1c] sm:$0xf]
  %v1094 = vld [vmem:[#allocation2 + $0x24] sm:$0xf]
  %v1095 = vld [vmem:[#allocation2 + $0x28] sm:$0xf]
  %v1096 = vld [vmem:[#allocation2 + $0x30] sm:$0xf]
  %v1097 = vld [vmem:[#allocation2 + $0x34] sm:$0xf]
  %v1098 = vld [vmem:[#allocation2 + $0x3c] sm:$0xf]
  %v1099 = vld [vmem:[#allocation2 + $0x40] sm:$0xf]
  %v1100 = vld [vmem:[#allocation2 + $0x48] sm:$0xf]
  %v1101 = vld [vmem:[#allocation2 + $0x4c] sm:$0xf]
  %v1102 = vld [vmem:[#allocation2 + $0x54] sm:$0xf]
  %v1103 = vld [vmem:[#allocation2 + $0x58] sm:$0xf]
  %v1104 = vld [vmem:[#allocation2 + $0x60] sm:$0xf]
  %v1105 = vld [vmem:[#allocation2 + $0x64] sm:$0xf]
  %v1106 = vld [vmem:[#allocation2 + $0x6c] sm:$0xf]
  %v1107 = vld [vmem:[#allocation2 + $0x70] sm:$0xf]
  %v1108 = vld [vmem:[#allocation2 + $0x78] sm:$0xf]
  %v1109 = vld [vmem:[#allocation2 + $0x7c] sm:$0xf]
  %v1110 = vld [vmem:[#allocation2 + $0x84] sm:$0xf]
  %v1111 = vld [vmem:[#allocation2 + $0x88] sm:$0xf]
  %v1112 = vld [vmem:[#allocation2 + $0x90] sm:$0xf]
  %v1113 = vld [vmem:[#allocation2 + $0x94] sm:$0xf]
  %v1114 = vld [vmem:[#allocation2 + $0x9c] sm:$0xf]
  %v1115 = vld [vmem:[#allocation2 + $0xa0] sm:$0xf]
  %v1116 = vld [vmem:[#allocation2 + $0xa8] sm:$0xf]
  %v1117 = vld [vmem:[#allocation2 + $0xac] sm:$0xf]
  %v1118 = vld [vmem:[#allocation2 + $0xb4] sm:$0xf]
  %v1119 = vld [vmem:[#allocation2 + $0xb8] sm:$0xf]
  %v1120 = vld [vmem:[#allocation2 + $0xc0] sm:$0xf]
  %v1121 = vld [vmem:[#allocation2 + $0xc4] sm:$0xf]
  %v1122 = vld [vmem:[#allocation2 + $0xcc] sm:$0xf]
  %v1123 = vld [vmem:[#allocation2 + $0xd0] sm:$0xf]
  %v1124 = vld [vmem:[#allocation2 + $0xd8] sm:$0xf]
  %v1125 = vld [vmem:[#allocation2 + $0xdc] sm:$0xf]
  %v1126 = vld [vmem:[#allocation2 + $0xe4] sm:$0xf]
  %v1127 = vld [vmem:[#allocation2 + $0xe8] sm:$0xf]
  %v1128 = vld [vmem:[#allocation2 + $0xf0] sm:$0xf]
  %v1129 = vld [vmem:[#allocation2 + $0xf4] sm:$0xf]
  %v1130 = vld [vmem:[#allocation2 + $0xfc] sm:$0xf]
  %v1131 = vld [vmem:[#allocation2 + $0x100] sm:$0xf]
  %v1132 = vld [vmem:[#allocation2 + $0x108] sm:$0xf]
  %v1133 = vld [vmem:[#allocation2 + $0x10c] sm:$0xf]
  %v1134 = vld [vmem:[#allocation2 + $0x114] sm:$0xf]
  %v1135 = vld [vmem:[#allocation2 + $0x118] sm:$0xf]
  %v1136 = vld [vmem:[#allocation2 + $0x120] sm:$0xf]
  %v1137 = vld [vmem:[#allocation2 + $0x124] sm:$0xf]
  %v1138 = vld [vmem:[#allocation2 + $0x12c] sm:$0xf]
  %v1139 = vld [vmem:[#allocation2 + $0x130] sm:$0xf]
  %v1140 = vld [vmem:[#allocation2 + $0x138] sm:$0xf]
  %v1141 = vld [vmem:[#allocation2 + $0x13c] sm:$0xf]
  %v1142 = vld [vmem:[#allocation2 + $0x144] sm:$0xf]
  %v1143 = vld [vmem:[#allocation2 + $0x148] sm:$0xf]
  %v1144 = vld [vmem:[#allocation2 + $0x150] sm:$0xf]
  %v1145 = vld [vmem:[#allocation2 + $0x154] sm:$0xf]
  %v1146 = vld [vmem:[#allocation2 + $0x15c] sm:$0xf]
  %v1147 = vld [vmem:[#allocation2 + $0x160] sm:$0xf]
  %v1148 = vld [vmem:[#allocation2 + $0x168] sm:$0xf]
  %v1149 = vld [vmem:[#allocation2 + $0x16c] sm:$0xf]
  %v1150 = vld [vmem:[#allocation2 + $0x174] sm:$0xf]
  %v1151 = vld [vmem:[#allocation2 + $0x178] sm:$0xf]
  %v1152 = vld [vmem:[#allocation2 + $0x180] sm:$0xf]
  %v1153 = vld [vmem:[#allocation2 + $0x184] sm:$0xf]
  %v1154 = vld [vmem:[#allocation2 + $0x18c] sm:$0xf]
  %v1155 = vld [vmem:[#allocation2 + $0x190] sm:$0xf]
  %v1156 = vld [vmem:[#allocation2 + $0x198] sm:$0xf]
  %v1157 = vld [vmem:[#allocation2 + $0x19c] sm:$0xf]
  %v1158 = vld [vmem:[#allocation2 + $0x1a4] sm:$0xf]
  %v1159 = vld [vmem:[#allocation2 + $0x1a8] sm:$0xf]
  %v1160 = vld [vmem:[#allocation2 + $0x8] sm:$0x1]
  %v1161 = vld [vmem:[#allocation2 + $0x14] sm:$0x1]
  %v1162 = vld [vmem:[#allocation2 + $0x20] sm:$0x1]
  %v1163 = vld [vmem:[#allocation2 + $0x2c] sm:$0x1]
  %v1164 = vld [vmem:[#allocation2 + $0x38] sm:$0x1]
  %v1165 = vld [vmem:[#allocation2 + $0x44] sm:$0x1]
  %v1166 = vld [vmem:[#allocation2 + $0x50] sm:$0x1]
  %v1167 = vld [vmem:[#allocation2 + $0x5c] sm:$0x1]
  %v1168 = vld [vmem:[#allocation2 + $0x68] sm:$0x1]
  %v1169 = vld [vmem:[#allocation2 + $0x74] sm:$0x1]
  %v1170 = vld [vmem:[#allocation2 + $0x80] sm:$0x1]
  %v1171 = vld [vmem:[#allocation2 + $0x8c] sm:$0x1]
  %v1172 = vld [vmem:[#allocation2 + $0x98] sm:$0x1]
  %v1173 = vld [vmem:[#allocation2 + $0xa4] sm:$0x1]
  %v1174 = vld [vmem:[#allocation2 + $0xb0] sm:$0x1]
  %v1175 = vld [vmem:[#allocation2 + $0xbc] sm:$0x1]
  %v1176 = vld [vmem:[#allocation2 + $0xc8] sm:$0x1]
  %v1177 = vld [vmem:[#allocation2 + $0xd4] sm:$0x1]
  %v1178 = vld [vmem:[#allocation2 + $0xe0] sm:$0x1]
  %v1179 = vld [vmem:[#allocation2 + $0xec] sm:$0x1]
  %v1180 = vld [vmem:[#allocation2 + $0xf8] sm:$0x1]
  %v1181 = vld [vmem:[#allocation2 + $0x104] sm:$0x1]
  %v1182 = vld [vmem:[#allocation2 + $0x110] sm:$0x1]
  %v1183 = vld [vmem:[#allocation2 + $0x11c] sm:$0x1]
  %v1184 = vld [vmem:[#allocation2 + $0x128] sm:$0x1]
  %v1185 = vld [vmem:[#allocation2 + $0x134] sm:$0x1]
  %v1186 = vld [vmem:[#allocation2 + $0x140] sm:$0x1]
  %v1187 = vld [vmem:[#allocation2 + $0x14c] sm:$0x1]
  %v1188 = vld [vmem:[#allocation2 + $0x158] sm:$0x1]
  %v1189 = vld [vmem:[#allocation2 + $0x164] sm:$0x1]
  %v1190 = vld [vmem:[#allocation2 + $0x170] sm:$0x1]
  %v1191 = vld [vmem:[#allocation2 + $0x17c] sm:$0x1]
  %v1192 = vld [vmem:[#allocation2 + $0x188] sm:$0x1]
  %v1193 = vld [vmem:[#allocation2 + $0x194] sm:$0x1]
  %v1194 = vld [vmem:[#allocation2 + $0x1a0] sm:$0x1]
  %v1195 = vld [vmem:[#allocation2 + $0x1ac] sm:$0x1]
  %v1196 = vld [vmem:[#allocation2] sm:$0xe]
  %v1197 = vld [vmem:[#allocation2 + $0xc] sm:$0xe]
  %v1198 = vld [vmem:[#allocation2 + $0x18] sm:$0xe]
  %v1199 = vld [vmem:[#allocation2 + $0x24] sm:$0xe]
  %v1200 = vld [vmem:[#allocation2 + $0x30] sm:$0xe]
  %v1201 = vld [vmem:[#allocation2 + $0x3c] sm:$0xe]
  %v1202 = vld [vmem:[#allocation2 + $0x48] sm:$0xe]
  %v1203 = vld [vmem:[#allocation2 + $0x54] sm:$0xe]
  %v1204 = vld [vmem:[#allocation2 + $0x60] sm:$0xe]
  %v1205 = vld [vmem:[#allocation2 + $0x6c] sm:$0xe]
  %v1206 = vld [vmem:[#allocation2 + $0x78] sm:$0xe]
  %v1207 = vld [vmem:[#allocation2 + $0x84] sm:$0xe]
  %v1208 = vld [vmem:[#allocation2 + $0x90] sm:$0xe]
  %v1209 = vld [vmem:[#allocation2 + $0x9c] sm:$0xe]
  %v1210 = vld [vmem:[#allocation2 + $0xa8] sm:$0xe]
  %v1211 = vld [vmem:[#allocation2 + $0xb4] sm:$0xe]
  %v1212 = vld [vmem:[#allocation2 + $0xc0] sm:$0xe]
  %v1213 = vld [vmem:[#allocation2 + $0xcc] sm:$0xe]
  %v1214 = vld [vmem:[#allocation2 + $0xd8] sm:$0xe]
  %v1215 = vld [vmem:[#allocation2 + $0xe4] sm:$0xe]
  %v1216 = vld [vmem:[#allocation2 + $0xf0] sm:$0xe]
  %v1217 = vld [vmem:[#allocation2 + $0xfc] sm:$0xe]
  %v1218 = vld [vmem:[#allocation2 + $0x108] sm:$0xe]
  %v1219 = vld [vmem:[#allocation2 + $0x114] sm:$0xe]
  %v1220 = vld [vmem:[#allocation2 + $0x120] sm:$0xe]
  %v1221 = vld [vmem:[#allocation2 + $0x12c] sm:$0xe]
  %v1222 = vld [vmem:[#allocation2 + $0x138] sm:$0xe]
  %v1223 = vld [vmem:[#allocation2 + $0x144] sm:$0xe]
  %v1224 = vld [vmem:[#allocation2 + $0x150] sm:$0xe]
  %v1225 = vld [vmem:[#allocation2 + $0x15c] sm:$0xe]
  %v1226 = vld [vmem:[#allocation2 + $0x168] sm:$0xe]
  %v1227 = vld [vmem:[#allocation2 + $0x174] sm:$0xe]
  %v1228 = vld [vmem:[#allocation2 + $0x180] sm:$0xe]
  %v1229 = vld [vmem:[#allocation2 + $0x18c] sm:$0xe]
  %v1230 = vld [vmem:[#allocation2 + $0x198] sm:$0xe]
  %v1231 = vld [vmem:[#allocation2 + $0x1a4] sm:$0xe]
  %v1296 = vunpack.c.l.b16 %v1088
  %v1297 = vunpack.c.l.b16 %v1089
  %v1298 = vunpack.c.l.b16 %v1090
  %v1299 = vunpack.c.l.b16 %v1091
  %v1300 = vunpack.c.l.b16 %v1092
  %v1301 = vunpack.c.l.b16 %v1093
  %v1302 = vunpack.c.l.b16 %v1094
  %v1303 = vunpack.c.l.b16 %v1095
  %v1304 = vunpack.c.l.b16 %v1096
  %v1305 = vunpack.c.l.b16 %v1097
  %v1306 = vunpack.c.l.b16 %v1098
  %v1307 = vunpack.c.l.b16 %v1099
  %v1308 = vunpack.c.l.b16 %v1100
  %v1309 = vunpack.c.l.b16 %v1101
  %v1310 = vunpack.c.l.b16 %v1102
  %v1311 = vunpack.c.l.b16 %v1103
  %v1312 = vunpack.c.l.b16 %v1104
  %v1313 = vunpack.c.l.b16 %v1105
  %v1314 = vunpack.c.l.b16 %v1106
  %v1315 = vunpack.c.l.b16 %v1107
  %v1316 = vunpack.c.l.b16 %v1108
  %v1317 = vunpack.c.l.b16 %v1109
  %v1318 = vunpack.c.l.b16 %v1110
  %v1319 = vunpack.c.l.b16 %v1111
  %v1320 = vunpack.c.l.b16 %v1112
  %v1321 = vunpack.c.l.b16 %v1113
  %v1322 = vunpack.c.l.b16 %v1114
  %v1323 = vunpack.c.l.b16 %v1115
  %v1324 = vunpack.c.l.b16 %v1116
  %v1325 = vunpack.c.l.b16 %v1117
  %v1326 = vunpack.c.l.b16 %v1118
  %v1327 = vunpack.c.l.b16 %v1119
  %v1328 = vunpack.c.l.b16 %v1124
  %v1329 = vunpack.c.l.b16 %v1125
  %v1330 = vunpack.c.l.b16 %v1126
  %v1331 = vunpack.c.l.b16 %v1127
  %v1332 = vunpack.c.l.b16 %v1128
  %v1333 = vunpack.c.l.b16 %v1129
  %v1334 = vunpack.c.l.b16 %v1130
  %v1335 = vunpack.c.l.b16 %v1131
  %v1336 = vunpack.c.l.b16 %v1132
  %v1337 = vunpack.c.l.b16 %v1133
  %v1338 = vunpack.c.l.b16 %v1134
  %v1339 = vunpack.c.l.b16 %v1135
  %v1340 = vunpack.c.l.b16 %v1136
  %v1341 = vunpack.c.l.b16 %v1137
  %v1342 = vunpack.c.l.b16 %v1138
  %v1343 = vunpack.c.l.b16 %v1139
  %v1344 = vunpack.c.l.b16 %v1140
  %v1345 = vunpack.c.l.b16 %v1141
  %v1346 = vunpack.c.l.b16 %v1142
  %v1347 = vunpack.c.l.b16 %v1143
  %v1348 = vunpack.c.l.b16 %v1144
  %v1349 = vunpack.c.l.b16 %v1145
  %v1350 = vunpack.c.l.b16 %v1146
  %v1351 = vunpack.c.l.b16 %v1147
  %v1352 = vunpack.c.l.b16 %v1148
  %v1353 = vunpack.c.l.b16 %v1149
  %v1354 = vunpack.c.l.b16 %v1150
  %v1355 = vunpack.c.l.b16 %v1151
  %v1356 = vunpack.c.l.b16 %v1152
  %v1357 = vunpack.c.l.b16 %v1153
  %v1358 = vunpack.c.l.b16 %v1154
  %v1359 = vunpack.c.l.b16 %v1155
  %v1360 = vpack.c.b16 %v1297, %v1296
  %v1361 = vpack.c.b16 %v1299, %v1298
  %v1362 = vpack.c.b16 %v1301, %v1300
  %v1363 = vpack.c.b16 %v1303, %v1302
  %v1364 = vpack.c.b16 %v1305, %v1304
  %v1365 = vpack.c.b16 %v1307, %v1306
  %v1366 = vpack.c.b16 %v1309, %v1308
  %v1367 = vpack.c.b16 %v1311, %v1310
  %v1368 = vpack.c.b16 %v1313, %v1312
  %v1369 = vpack.c.b16 %v1315, %v1314
  %v1370 = vpack.c.b16 %v1317, %v1316
  %v1371 = vpack.c.b16 %v1319, %v1318
  %v1372 = vpack.c.b16 %v1321, %v1320
  %v1373 = vpack.c.b16 %v1323, %v1322
  %v1374 = vpack.c.b16 %v1325, %v1324
  %v1375 = vpack.c.b16 %v1327, %v1326
  %v1376 = vpack.c.b16 %v1329, %v1328
  %v1377 = vpack.c.b16 %v1331, %v1330
  %v1378 = vpack.c.b16 %v1333, %v1332
  %v1379 = vpack.c.b16 %v1335, %v1334
  %v1380 = vpack.c.b16 %v1337, %v1336
  %v1381 = vpack.c.b16 %v1339, %v1338
  %v1382 = vpack.c.b16 %v1341, %v1340
  %v1383 = vpack.c.b16 %v1343, %v1342
  %v1384 = vpack.c.b16 %v1345, %v1344
  %v1385 = vpack.c.b16 %v1347, %v1346
  %v1386 = vpack.c.b16 %v1349, %v1348
  %v1387 = vpack.c.b16 %v1351, %v1350
  %v1388 = vpack.c.b16 %v1353, %v1352
  %v1389 = vpack.c.b16 %v1355, %v1354
  %v1390 = vpack.c.b16 %v1357, %v1356
  %v1391 = vpack.c.b16 %v1359, %v1358
  %v1424 = vunpack.c.l.b16 %v1160
  %v1425 = vunpack.c.l.b16 %v1161
  %v1426 = vunpack.c.l.b16 %v1162
  %v1427 = vunpack.c.l.b16 %v1163
  %v1428 = vunpack.c.l.b16 %v1164
  %v1429 = vunpack.c.l.b16 %v1165
  %v1430 = vunpack.c.l.b16 %v1166
  %v1431 = vunpack.c.l.b16 %v1167
  %v1432 = vunpack.c.l.b16 %v1168
  %v1433 = vunpack.c.l.b16 %v1169
  %v1434 = vunpack.c.l.b16 %v1170
  %v1435 = vunpack.c.l.b16 %v1171
  %v1436 = vunpack.c.l.b16 %v1172
  %v1437 = vunpack.c.l.b16 %v1173
  %v1438 = vunpack.c.l.b16 %v1174
  %v1439 = vunpack.c.l.b16 %v1175
  %v1440 = vunpack.c.l.b16 %v1178
  %v1441 = vunpack.c.l.b16 %v1179
  %v1442 = vunpack.c.l.b16 %v1180
  %v1443 = vunpack.c.l.b16 %v1181
  %v1444 = vunpack.c.l.b16 %v1182
  %v1445 = vunpack.c.l.b16 %v1183
  %v1446 = vunpack.c.l.b16 %v1184
  %v1447 = vunpack.c.l.b16 %v1185
  %v1448 = vunpack.c.l.b16 %v1186
  %v1449 = vunpack.c.l.b16 %v1187
  %v1450 = vunpack.c.l.b16 %v1188
  %v1451 = vunpack.c.l.b16 %v1189
  %v1452 = vunpack.c.l.b16 %v1190
  %v1453 = vunpack.c.l.b16 %v1191
  %v1454 = vunpack.c.l.b16 %v1192
  %v1455 = vunpack.c.l.b16 %v1193
  %v1456 = vpack.c.b16 %v1424, %v1424
  %v1457 = vpack.c.b16 %v1425, %v1425
  %v1458 = vpack.c.b16 %v1426, %v1426
  %v1459 = vpack.c.b16 %v1427, %v1427
  %v1460 = vpack.c.b16 %v1428, %v1428
  %v1461 = vpack.c.b16 %v1429, %v1429
  %v1462 = vpack.c.b16 %v1430, %v1430
  %v1463 = vpack.c.b16 %v1431, %v1431
  %v1464 = vpack.c.b16 %v1432, %v1432
  %v1465 = vpack.c.b16 %v1433, %v1433
  %v1466 = vpack.c.b16 %v1434, %v1434
  %v1467 = vpack.c.b16 %v1435, %v1435
  %v1468 = vpack.c.b16 %v1436, %v1436
  %v1469 = vpack.c.b16 %v1437, %v1437
  %v1470 = vpack.c.b16 %v1438, %v1438
  %v1471 = vpack.c.b16 %v1439, %v1439
  %v1472 = vpack.c.b16 %v1440, %v1440
  %v1473 = vpack.c.b16 %v1441, %v1441
  %v1474 = vpack.c.b16 %v1442, %v1442
  %v1475 = vpack.c.b16 %v1443, %v1443
  %v1476 = vpack.c.b16 %v1444, %v1444
  %v1477 = vpack.c.b16 %v1445, %v1445
  %v1478 = vpack.c.b16 %v1446, %v1446
  %v1479 = vpack.c.b16 %v1447, %v1447
  %v1480 = vpack.c.b16 %v1448, %v1448
  %v1481 = vpack.c.b16 %v1449, %v1449
  %v1482 = vpack.c.b16 %v1450, %v1450
  %v1483 = vpack.c.b16 %v1451, %v1451
  %v1484 = vpack.c.b16 %v1452, %v1452
  %v1485 = vpack.c.b16 %v1453, %v1453
  %v1486 = vpack.c.b16 %v1454, %v1454
  %v1487 = vpack.c.b16 %v1455, %v1455
  %vm1488 = vsmask.f32 7424
  %v1490 = vshrl.u32 %v1360, 16
  %v1492 = vshll.u32 %v1360, 16
  %v1494 = vrot.slane %v1492, 1
  %v1495 = vor.u32 %v1490, %v1494
  %v1497 = vshll.u32 %v1456, 16
  %v1499 = vrot.slane %v1497, 1
  %v1500 = vsel %vm1488, %v1495, %v1499
  %v1502 = vshrl.u32 %v1361, 16
  %v1504 = vshll.u32 %v1361, 16
  %v1506 = vrot.slane %v1504, 1
  %v1507 = vor.u32 %v1502, %v1506
  %v1509 = vshll.u32 %v1457, 16
  %v1511 = vrot.slane %v1509, 1
  %v1512 = vsel %vm1488, %v1507, %v1511
  %v1514 = vshrl.u32 %v1362, 16
  %v1516 = vshll.u32 %v1362, 16
  %v1518 = vrot.slane %v1516, 1
  %v1519 = vor.u32 %v1514, %v1518
  %v1521 = vshll.u32 %v1458, 16
  %v1523 = vrot.slane %v1521, 1
  %v1524 = vsel %vm1488, %v1519, %v1523
  %v1526 = vshrl.u32 %v1363, 16
  %v1528 = vshll.u32 %v1363, 16
  %v1530 = vrot.slane %v1528, 1
  %v1531 = vor.u32 %v1526, %v1530
  %v1533 = vshll.u32 %v1459, 16
  %v1535 = vrot.slane %v1533, 1
  %v1536 = vsel %vm1488, %v1531, %v1535
  %v1538 = vshrl.u32 %v1364, 16
  %v1540 = vshll.u32 %v1364, 16
  %v1542 = vrot.slane %v1540, 1
  %v1543 = vor.u32 %v1538, %v1542
  %v1545 = vshll.u32 %v1460, 16
  %v1547 = vrot.slane %v1545, 1
  %v1548 = vsel %vm1488, %v1543, %v1547
  %v1550 = vshrl.u32 %v1365, 16
  %v1552 = vshll.u32 %v1365, 16
  %v1554 = vrot.slane %v1552, 1
  %v1555 = vor.u32 %v1550, %v1554
  %v1557 = vshll.u32 %v1461, 16
  %v1559 = vrot.slane %v1557, 1
  %v1560 = vsel %vm1488, %v1555, %v1559
  %v1562 = vshrl.u32 %v1366, 16
  %v1564 = vshll.u32 %v1366, 16
  %v1566 = vrot.slane %v1564, 1
  %v1567 = vor.u32 %v1562, %v1566
  %v1569 = vshll.u32 %v1462, 16
  %v1571 = vrot.slane %v1569, 1
  %v1572 = vsel %vm1488, %v1567, %v1571
  %v1574 = vshrl.u32 %v1367, 16
  %v1576 = vshll.u32 %v1367, 16
  %v1578 = vrot.slane %v1576, 1
  %v1579 = vor.u32 %v1574, %v1578
  %v1581 = vshll.u32 %v1463, 16
  %v1583 = vrot.slane %v1581, 1
  %v1584 = vsel %vm1488, %v1579, %v1583
  %v1586 = vshrl.u32 %v1368, 16
  %v1588 = vshll.u32 %v1368, 16
  %v1590 = vrot.slane %v1588, 1
  %v1591 = vor.u32 %v1586, %v1590
  %v1593 = vshll.u32 %v1464, 16
  %v1595 = vrot.slane %v1593, 1
  %v1596 = vsel %vm1488, %v1591, %v1595
  %v1598 = vshrl.u32 %v1369, 16
  %v1600 = vshll.u32 %v1369, 16
  %v1602 = vrot.slane %v1600, 1
  %v1603 = vor.u32 %v1598, %v1602
  %v1605 = vshll.u32 %v1465, 16
  %v1607 = vrot.slane %v1605, 1
  %v1608 = vsel %vm1488, %v1603, %v1607
  %v1610 = vshrl.u32 %v1370, 16
  %v1612 = vshll.u32 %v1370, 16
  %v1614 = vrot.slane %v1612, 1
  %v1615 = vor.u32 %v1610, %v1614
  %v1617 = vshll.u32 %v1466, 16
  %v1619 = vrot.slane %v1617, 1
  %v1620 = vsel %vm1488, %v1615, %v1619
  %v1622 = vshrl.u32 %v1371, 16
  %v1624 = vshll.u32 %v1371, 16
  %v1626 = vrot.slane %v1624, 1
  %v1627 = vor.u32 %v1622, %v1626
  %v1629 = vshll.u32 %v1467, 16
  %v1631 = vrot.slane %v1629, 1
  %v1632 = vsel %vm1488, %v1627, %v1631
  %v1634 = vshrl.u32 %v1372, 16
  %v1636 = vshll.u32 %v1372, 16
  %v1638 = vrot.slane %v1636, 1
  %v1639 = vor.u32 %v1634, %v1638
  %v1641 = vshll.u32 %v1468, 16
  %v1643 = vrot.slane %v1641, 1
  %v1644 = vsel %vm1488, %v1639, %v1643
  %v1646 = vshrl.u32 %v1373, 16
  %v1648 = vshll.u32 %v1373, 16
  %v1650 = vrot.slane %v1648, 1
  %v1651 = vor.u32 %v1646, %v1650
  %v1653 = vshll.u32 %v1469, 16
  %v1655 = vrot.slane %v1653, 1
  %v1656 = vsel %vm1488, %v1651, %v1655
  %v1658 = vshrl.u32 %v1374, 16
  %v1660 = vshll.u32 %v1374, 16
  %v1662 = vrot.slane %v1660, 1
  %v1663 = vor.u32 %v1658, %v1662
  %v1665 = vshll.u32 %v1470, 16
  %v1667 = vrot.slane %v1665, 1
  %v1668 = vsel %vm1488, %v1663, %v1667
  %v1670 = vshrl.u32 %v1375, 16
  %v1672 = vshll.u32 %v1375, 16
  %v1674 = vrot.slane %v1672, 1
  %v1675 = vor.u32 %v1670, %v1674
  %v1677 = vshll.u32 %v1471, 16
  %v1679 = vrot.slane %v1677, 1
  %v1680 = vsel %vm1488, %v1675, %v1679
  %v1682 = vshrl.u32 %v1376, 16
  %v1684 = vshll.u32 %v1376, 16
  %v1686 = vrot.slane %v1684, 1
  %v1687 = vor.u32 %v1682, %v1686
  %v1689 = vshll.u32 %v1472, 16
  %v1691 = vrot.slane %v1689, 1
  %v1692 = vsel %vm1488, %v1687, %v1691
  %v1694 = vshrl.u32 %v1377, 16
  %v1696 = vshll.u32 %v1377, 16
  %v1698 = vrot.slane %v1696, 1
  %v1699 = vor.u32 %v1694, %v1698
  %v1701 = vshll.u32 %v1473, 16
  %v1703 = vrot.slane %v1701, 1
  %v1704 = vsel %vm1488, %v1699, %v1703
  %v1706 = vshrl.u32 %v1378, 16
  %v1708 = vshll.u32 %v1378, 16
  %v1710 = vrot.slane %v1708, 1
  %v1711 = vor.u32 %v1706, %v1710
  %v1713 = vshll.u32 %v1474, 16
  %v1715 = vrot.slane %v1713, 1
  %v1716 = vsel %vm1488, %v1711, %v1715
  %v1718 = vshrl.u32 %v1379, 16
  %v1720 = vshll.u32 %v1379, 16
  %v1722 = vrot.slane %v1720, 1
  %v1723 = vor.u32 %v1718, %v1722
  %v1725 = vshll.u32 %v1475, 16
  %v1727 = vrot.slane %v1725, 1
  %v1728 = vsel %vm1488, %v1723, %v1727
  %v1730 = vshrl.u32 %v1380, 16
  %v1732 = vshll.u32 %v1380, 16
  %v1734 = vrot.slane %v1732, 1
  %v1735 = vor.u32 %v1730, %v1734
  %v1737 = vshll.u32 %v1476, 16
  %v1739 = vrot.slane %v1737, 1
  %v1740 = vsel %vm1488, %v1735, %v1739
  %v1742 = vshrl.u32 %v1381, 16
  %v1744 = vshll.u32 %v1381, 16
  %v1746 = vrot.slane %v1744, 1
  %v1747 = vor.u32 %v1742, %v1746
  %v1749 = vshll.u32 %v1477, 16
  %v1751 = vrot.slane %v1749, 1
  %v1752 = vsel %vm1488, %v1747, %v1751
  %v1754 = vshrl.u32 %v1382, 16
  %v1756 = vshll.u32 %v1382, 16
  %v1758 = vrot.slane %v1756, 1
  %v1759 = vor.u32 %v1754, %v1758
  %v1761 = vshll.u32 %v1478, 16
  %v1763 = vrot.slane %v1761, 1
  %v1764 = vsel %vm1488, %v1759, %v1763
  %v1766 = vshrl.u32 %v1383, 16
  %v1768 = vshll.u32 %v1383, 16
  %v1770 = vrot.slane %v1768, 1
  %v1771 = vor.u32 %v1766, %v1770
  %v1773 = vshll.u32 %v1479, 16
  %v1775 = vrot.slane %v1773, 1
  %v1776 = vsel %vm1488, %v1771, %v1775
  %v1778 = vshrl.u32 %v1384, 16
  %v1780 = vshll.u32 %v1384, 16
  %v1782 = vrot.slane %v1780, 1
  %v1783 = vor.u32 %v1778, %v1782
  %v1785 = vshll.u32 %v1480, 16
  %v1787 = vrot.slane %v1785, 1
  %v1788 = vsel %vm1488, %v1783, %v1787
  %v1790 = vshrl.u32 %v1385, 16
  %v1792 = vshll.u32 %v1385, 16
  %v1794 = vrot.slane %v1792, 1
  %v1795 = vor.u32 %v1790, %v1794
  %v1797 = vshll.u32 %v1481, 16
  %v1799 = vrot.slane %v1797, 1
  %v1800 = vsel %vm1488, %v1795, %v1799
  %v1802 = vshrl.u32 %v1386, 16
  %v1804 = vshll.u32 %v1386, 16
  %v1806 = vrot.slane %v1804, 1
  %v1807 = vor.u32 %v1802, %v1806
  %v1809 = vshll.u32 %v1482, 16
  %v1811 = vrot.slane %v1809, 1
  %v1812 = vsel %vm1488, %v1807, %v1811
  %v1814 = vshrl.u32 %v1387, 16
  %v1816 = vshll.u32 %v1387, 16
  %v1818 = vrot.slane %v1816, 1
  %v1819 = vor.u32 %v1814, %v1818
  %v1821 = vshll.u32 %v1483, 16
  %v1823 = vrot.slane %v1821, 1
  %v1824 = vsel %vm1488, %v1819, %v1823
  %v1826 = vshrl.u32 %v1388, 16
  %v1828 = vshll.u32 %v1388, 16
  %v1830 = vrot.slane %v1828, 1
  %v1831 = vor.u32 %v1826, %v1830
  %v1833 = vshll.u32 %v1484, 16
  %v1835 = vrot.slane %v1833, 1
  %v1836 = vsel %vm1488, %v1831, %v1835
  %v1838 = vshrl.u32 %v1389, 16
  %v1840 = vshll.u32 %v1389, 16
  %v1842 = vrot.slane %v1840, 1
  %v1843 = vor.u32 %v1838, %v1842
  %v1845 = vshll.u32 %v1485, 16
  %v1847 = vrot.slane %v1845, 1
  %v1848 = vsel %vm1488, %v1843, %v1847
  %v1850 = vshrl.u32 %v1390, 16
  %v1852 = vshll.u32 %v1390, 16
  %v1854 = vrot.slane %v1852, 1
  %v1855 = vor.u32 %v1850, %v1854
  %v1857 = vshll.u32 %v1486, 16
  %v1859 = vrot.slane %v1857, 1
  %v1860 = vsel %vm1488, %v1855, %v1859
  %v1862 = vshrl.u32 %v1391, 16
  %v1864 = vshll.u32 %v1391, 16
  %v1866 = vrot.slane %v1864, 1
  %v1867 = vor.u32 %v1862, %v1866
  %v1869 = vshll.u32 %v1487, 16
  %v1871 = vrot.slane %v1869, 1
  %v1872 = vsel %vm1488, %v1867, %v1871
  %1873 = vrot.lane.b32.xlu0 %v1500, 3
  %v1874 = vpop.permute.xlu0 %1873
  %1875 = vrot.lane.b32.xlu0 %v1512, 3
  %v1876 = vpop.permute.xlu0 %1875
  %1877 = vrot.lane.b32.xlu0 %v1524, 3
  %v1878 = vpop.permute.xlu0 %1877
  %1879 = vrot.lane.b32.xlu0 %v1536, 3
  %v1880 = vpop.permute.xlu0 %1879
  %1881 = vrot.lane.b32.xlu0 %v1548, 3
  %v1882 = vpop.permute.xlu0 %1881
  %1883 = vrot.lane.b32.xlu0 %v1560, 3
  %v1884 = vpop.permute.xlu0 %1883
  %1885 = vrot.lane.b32.xlu0 %v1572, 3
  %v1886 = vpop.permute.xlu0 %1885
  %1887 = vrot.lane.b32.xlu0 %v1584, 3
  %v1888 = vpop.permute.xlu0 %1887
  %1889 = vrot.lane.b32.xlu0 %v1596, 3
  %v1890 = vpop.permute.xlu0 %1889
  %1891 = vrot.lane.b32.xlu0 %v1608, 3
  %v1892 = vpop.permute.xlu0 %1891
  %1893 = vrot.lane.b32.xlu0 %v1620, 3
  %v1894 = vpop.permute.xlu0 %1893
  %1895 = vrot.lane.b32.xlu0 %v1632, 3
  %v1896 = vpop.permute.xlu0 %1895
  %1897 = vrot.lane.b32.xlu0 %v1644, 3
  %v1898 = vpop.permute.xlu0 %1897
  %1899 = vrot.lane.b32.xlu0 %v1656, 3
  %v1900 = vpop.permute.xlu0 %1899
  %1901 = vrot.lane.b32.xlu0 %v1668, 3
  %v1902 = vpop.permute.xlu0 %1901
  %1903 = vrot.lane.b32.xlu0 %v1680, 3
  %v1904 = vpop.permute.xlu0 %1903
  %1905 = vrot.lane.b32.xlu0 %v1692, 3
  %v1906 = vpop.permute.xlu0 %1905
  %1907 = vrot.lane.b32.xlu0 %v1704, 3
  %v1908 = vpop.permute.xlu0 %1907
  %1909 = vrot.lane.b32.xlu0 %v1716, 3
  %v1910 = vpop.permute.xlu0 %1909
  %1911 = vrot.lane.b32.xlu0 %v1728, 3
  %v1912 = vpop.permute.xlu0 %1911
  %1913 = vrot.lane.b32.xlu0 %v1740, 3
  %v1914 = vpop.permute.xlu0 %1913
  %1915 = vrot.lane.b32.xlu0 %v1752, 3
  %v1916 = vpop.permute.xlu0 %1915
  %1917 = vrot.lane.b32.xlu0 %v1764, 3
  %v1918 = vpop.permute.xlu0 %1917
  %1919 = vrot.lane.b32.xlu0 %v1776, 3
  %v1920 = vpop.permute.xlu0 %1919
  %1921 = vrot.lane.b32.xlu0 %v1788, 3
  %v1922 = vpop.permute.xlu0 %1921
  %1923 = vrot.lane.b32.xlu0 %v1800, 3
  %v1924 = vpop.permute.xlu0 %1923
  %1925 = vrot.lane.b32.xlu0 %v1812, 3
  %v1926 = vpop.permute.xlu0 %1925
  %1927 = vrot.lane.b32.xlu0 %v1824, 3
  %v1928 = vpop.permute.xlu0 %1927
  %1929 = vrot.lane.b32.xlu0 %v1836, 3
  %v1930 = vpop.permute.xlu0 %1929
  %1931 = vrot.lane.b32.xlu0 %v1848, 3
  %v1932 = vpop.permute.xlu0 %1931
  %1933 = vrot.lane.b32.xlu0 %v1860, 3
  %v1934 = vpop.permute.xlu0 %1933
  %1935 = vrot.lane.b32.xlu0 %v1872, 3
  %v1936 = vpop.permute.xlu0 %1935
  %v1969 = vunpack.c.l.b16 %v1196
  %v1970 = vunpack.c.l.b16 %v1197
  %v1971 = vunpack.c.l.b16 %v1198
  %v1972 = vunpack.c.l.b16 %v1199
  %v1973 = vunpack.c.l.b16 %v1200
  %v1974 = vunpack.c.l.b16 %v1201
  %v1975 = vunpack.c.l.b16 %v1202
  %v1976 = vunpack.c.l.b16 %v1203
  %v1977 = vunpack.c.l.b16 %v1204
  %v1978 = vunpack.c.l.b16 %v1205
  %v1979 = vunpack.c.l.b16 %v1206
  %v1980 = vunpack.c.l.b16 %v1207
  %v1981 = vunpack.c.l.b16 %v1208
  %v1982 = vunpack.c.l.b16 %v1209
  %v1983 = vunpack.c.l.b16 %v1210
  %v1984 = vunpack.c.l.b16 %v1211
  %v1985 = vunpack.c.l.b16 %v1214
  %v1986 = vunpack.c.l.b16 %v1215
  %v1987 = vunpack.c.l.b16 %v1216
  %v1988 = vunpack.c.l.b16 %v1217
  %v1989 = vunpack.c.l.b16 %v1218
  %v1990 = vunpack.c.l.b16 %v1219
  %v1991 = vunpack.c.l.b16 %v1220
  %v1992 = vunpack.c.l.b16 %v1221
  %v1993 = vunpack.c.l.b16 %v1222
  %v1994 = vunpack.c.l.b16 %v1223
  %v1995 = vunpack.c.l.b16 %v1224
  %v1996 = vunpack.c.l.b16 %v1225
  %v1997 = vunpack.c.l.b16 %v1226
  %v1998 = vunpack.c.l.b16 %v1227
  %v1999 = vunpack.c.l.b16 %v1228
  %v2000 = vunpack.c.l.b16 %v1229
  %v2001 = vpack.c.b16 %v1297, %v1969
  %v2002 = vpack.c.b16 %v1299, %v1970
  %v2003 = vpack.c.b16 %v1301, %v1971
  %v2004 = vpack.c.b16 %v1303, %v1972
  %v2005 = vpack.c.b16 %v1305, %v1973
  %v2006 = vpack.c.b16 %v1307, %v1974
  %v2007 = vpack.c.b16 %v1309, %v1975
  %v2008 = vpack.c.b16 %v1311, %v1976
  %v2009 = vpack.c.b16 %v1313, %v1977
  %v2010 = vpack.c.b16 %v1315, %v1978
  %v2011 = vpack.c.b16 %v1317, %v1979
  %v2012 = vpack.c.b16 %v1319, %v1980
  %v2013 = vpack.c.b16 %v1321, %v1981
  %v2014 = vpack.c.b16 %v1323, %v1982
  %v2015 = vpack.c.b16 %v1325, %v1983
  %v2016 = vpack.c.b16 %v1327, %v1984
  %v2017 = vpack.c.b16 %v1329, %v1985
  %v2018 = vpack.c.b16 %v1331, %v1986
  %v2019 = vpack.c.b16 %v1333, %v1987
  %v2020 = vpack.c.b16 %v1335, %v1988
  %v2021 = vpack.c.b16 %v1337, %v1989
  %v2022 = vpack.c.b16 %v1339, %v1990
  %v2023 = vpack.c.b16 %v1341, %v1991
  %v2024 = vpack.c.b16 %v1343, %v1992
  %v2025 = vpack.c.b16 %v1345, %v1993
  %v2026 = vpack.c.b16 %v1347, %v1994
  %v2027 = vpack.c.b16 %v1349, %v1995
  %v2028 = vpack.c.b16 %v1351, %v1996
  %v2029 = vpack.c.b16 %v1353, %v1997
  %v2030 = vpack.c.b16 %v1355, %v1998
  %v2031 = vpack.c.b16 %v1357, %v1999
  %v2032 = vpack.c.b16 %v1359, %v2000
  %vm2033 = vcmask 1046528
  %v2034 = vrot.slane %v2001, 1
  %v2035 = vrot.slane %v1456, 1
  %v2036 = vsel %vm2033, %v2034, %v2035
  %v2037 = vrot.slane %v2002, 1
  %v2038 = vrot.slane %v1457, 1
  %v2039 = vsel %vm2033, %v2037, %v2038
  %v2040 = vrot.slane %v2003, 1
  %v2041 = vrot.slane %v1458, 1
  %v2042 = vsel %vm2033, %v2040, %v2041
  %v2043 = vrot.slane %v2004, 1
  %v2044 = vrot.slane %v1459, 1
  %v2045 = vsel %vm2033, %v2043, %v2044
  %v2046 = vrot.slane %v2005, 1
  %v2047 = vrot.slane %v1460, 1
  %v2048 = vsel %vm2033, %v2046, %v2047
  %v2049 = vrot.slane %v2006, 1
  %v2050 = vrot.slane %v1461, 1
  %v2051 = vsel %vm2033, %v2049, %v2050
  %v2052 = vrot.slane %v2007, 1
  %v2053 = vrot.slane %v1462, 1
  %v2054 = vsel %vm2033, %v2052, %v2053
  %v2055 = vrot.slane %v2008, 1
  %v2056 = vrot.slane %v1463, 1
  %v2057 = vsel %vm2033, %v2055, %v2056
  %v2058 = vrot.slane %v2009, 1
  %v2059 = vrot.slane %v1464, 1
  %v2060 = vsel %vm2033, %v2058, %v2059
  %v2061 = vrot.slane %v2010, 1
  %v2062 = vrot.slane %v1465, 1
  %v2063 = vsel %vm2033, %v2061, %v2062
  %v2064 = vrot.slane %v2011, 1
  %v2065 = vrot.slane %v1466, 1
  %v2066 = vsel %vm2033, %v2064, %v2065
  %v2067 = vrot.slane %v2012, 1
  %v2068 = vrot.slane %v1467, 1
  %v2069 = vsel %vm2033, %v2067, %v2068
  %v2070 = vrot.slane %v2013, 1
  %v2071 = vrot.slane %v1468, 1
  %v2072 = vsel %vm2033, %v2070, %v2071
  %v2073 = vrot.slane %v2014, 1
  %v2074 = vrot.slane %v1469, 1
  %v2075 = vsel %vm2033, %v2073, %v2074
  %v2076 = vrot.slane %v2015, 1
  %v2077 = vrot.slane %v1470, 1
  %v2078 = vsel %vm2033, %v2076, %v2077
  %v2079 = vrot.slane %v2016, 1
  %v2080 = vrot.slane %v1471, 1
  %v2081 = vsel %vm2033, %v2079, %v2080
  %v2082 = vrot.slane %v2017, 1
  %v2083 = vrot.slane %v1472, 1
  %v2084 = vsel %vm2033, %v2082, %v2083
  %v2085 = vrot.slane %v2018, 1
  %v2086 = vrot.slane %v1473, 1
  %v2087 = vsel %vm2033, %v2085, %v2086
  %v2088 = vrot.slane %v2019, 1
  %v2089 = vrot.slane %v1474, 1
  %v2090 = vsel %vm2033, %v2088, %v2089
  %v2091 = vrot.slane %v2020, 1
  %v2092 = vrot.slane %v1475, 1
  %v2093 = vsel %vm2033, %v2091, %v2092
  %v2094 = vrot.slane %v2021, 1
  %v2095 = vrot.slane %v1476, 1
  %v2096 = vsel %vm2033, %v2094, %v2095
  %v2097 = vrot.slane %v2022, 1
  %v2098 = vrot.slane %v1477, 1
  %v2099 = vsel %vm2033, %v2097, %v2098
  %v2100 = vrot.slane %v2023, 1
  %v2101 = vrot.slane %v1478, 1
  %v2102 = vsel %vm2033, %v2100, %v2101
  %v2103 = vrot.slane %v2024, 1
  %v2104 = vrot.slane %v1479, 1
  %v2105 = vsel %vm2033, %v2103, %v2104
  %v2106 = vrot.slane %v2025, 1
  %v2107 = vrot.slane %v1480, 1
  %v2108 = vsel %vm2033, %v2106, %v2107
  %v2109 = vrot.slane %v2026, 1
  %v2110 = vrot.slane %v1481, 1
  %v2111 = vsel %vm2033, %v2109, %v2110
  %v2112 = vrot.slane %v2027, 1
  %v2113 = vrot.slane %v1482, 1
  %v2114 = vsel %vm2033, %v2112, %v2113
  %v2115 = vrot.slane %v2028, 1
  %v2116 = vrot.slane %v1483, 1
  %v2117 = vsel %vm2033, %v2115, %v2116
  %v2118 = vrot.slane %v2029, 1
  %v2119 = vrot.slane %v1484, 1
  %v2120 = vsel %vm2033, %v2118, %v2119
  %v2121 = vrot.slane %v2030, 1
  %v2122 = vrot.slane %v1485, 1
  %v2123 = vsel %vm2033, %v2121, %v2122
  %v2124 = vrot.slane %v2031, 1
  %v2125 = vrot.slane %v1486, 1
  %v2126 = vsel %vm2033, %v2124, %v2125
  %v2127 = vrot.slane %v2032, 1
  %v2128 = vrot.slane %v1487, 1
  %v2129 = vsel %vm2033, %v2127, %v2128
  %2130 = vrot.lane.b32.xlu0 %v2036, 6
  %v2131 = vpop.permute.xlu0 %2130
  %2132 = vrot.lane.b32.xlu0 %v2039, 6
  %v2133 = vpop.permute.xlu0 %2132
  %2134 = vrot.lane.b32.xlu0 %v2042, 6
  %v2135 = vpop.permute.xlu0 %2134
  %2136 = vrot.lane.b32.xlu0 %v2045, 6
  %v2137 = vpop.permute.xlu0 %2136
  %2138 = vrot.lane.b32.xlu0 %v2048, 6
  %v2139 = vpop.permute.xlu0 %2138
  %2140 = vrot.lane.b32.xlu0 %v2051, 6
  %v2141 = vpop.permute.xlu0 %2140
  %2142 = vrot.lane.b32.xlu0 %v2054, 6
  %v2143 = vpop.permute.xlu0 %2142
  %2144 = vrot.lane.b32.xlu0 %v2057, 6
  %v2145 = vpop.permute.xlu0 %2144
  %2146 = vrot.lane.b32.xlu0 %v2060, 6
  %v2147 = vpop.permute.xlu0 %2146
  %2148 = vrot.lane.b32.xlu0 %v2063, 6
  %v2149 = vpop.permute.xlu0 %2148
  %2150 = vrot.lane.b32.xlu0 %v2066, 6
  %v2151 = vpop.permute.xlu0 %2150
  %2152 = vrot.lane.b32.xlu0 %v2069, 6
  %v2153 = vpop.permute.xlu0 %2152
  %2154 = vrot.lane.b32.xlu0 %v2072, 6
  %v2155 = vpop.permute.xlu0 %2154
  %2156 = vrot.lane.b32.xlu0 %v2075, 6
  %v2157 = vpop.permute.xlu0 %2156
  %2158 = vrot.lane.b32.xlu0 %v2078, 6
  %v2159 = vpop.permute.xlu0 %2158
  %2160 = vrot.lane.b32.xlu0 %v2081, 6
  %v2161 = vpop.permute.xlu0 %2160
  %2162 = vrot.lane.b32.xlu0 %v2084, 6
  %v2163 = vpop.permute.xlu0 %2162
  %2164 = vrot.lane.b32.xlu0 %v2087, 6
  %v2165 = vpop.permute.xlu0 %2164
  %2166 = vrot.lane.b32.xlu0 %v2090, 6
  %v2167 = vpop.permute.xlu0 %2166
  %2168 = vrot.lane.b32.xlu0 %v2093, 6
  %v2169 = vpop.permute.xlu0 %2168
  %2170 = vrot.lane.b32.xlu0 %v2096, 6
  %v2171 = vpop.permute.xlu0 %2170
  %2172 = vrot.lane.b32.xlu0 %v2099, 6
  %v2173 = vpop.permute.xlu0 %2172
  %2174 = vrot.lane.b32.xlu0 %v2102, 6
  %v2175 = vpop.permute.xlu0 %2174
  %2176 = vrot.lane.b32.xlu0 %v2105, 6
  %v2177 = vpop.permute.xlu0 %2176
  %2178 = vrot.lane.b32.xlu0 %v2108, 6
  %v2179 = vpop.permute.xlu0 %2178
  %2180 = vrot.lane.b32.xlu0 %v2111, 6
  %v2181 = vpop.permute.xlu0 %2180
  %2182 = vrot.lane.b32.xlu0 %v2114, 6
  %v2183 = vpop.permute.xlu0 %2182
  %2184 = vrot.lane.b32.xlu0 %v2117, 6
  %v2185 = vpop.permute.xlu0 %2184
  %2186 = vrot.lane.b32.xlu0 %v2120, 6
  %v2187 = vpop.permute.xlu0 %2186
  %2188 = vrot.lane.b32.xlu0 %v2123, 6
  %v2189 = vpop.permute.xlu0 %2188
  %2190 = vrot.lane.b32.xlu0 %v2126, 6
  %v2191 = vpop.permute.xlu0 %2190
  %2192 = vrot.lane.b32.xlu0 %v2129, 6
  %v2193 = vpop.permute.xlu0 %2192
  %v2198 = vunpack.c.l.b16 %v1120
  %v2199 = vunpack.c.l.b16 %v1121
  %v2200 = vunpack.c.l.b16 %v1156
  %v2201 = vunpack.c.l.b16 %v1157
  %v2202 = vpack.c.b16 %v2199, %v2198
  %v2203 = vpack.c.b16 %v2201, %v2200
  %2204 = vrot.lane.b32.xlu0 %v1361, 9
  %v2205 = vpop.permute.xlu0 %2204
  %2206 = vrot.lane.b32.xlu0 %v1362, 9
  %v2207 = vpop.permute.xlu0 %2206
  %2208 = vrot.lane.b32.xlu0 %v1363, 9
  %v2209 = vpop.permute.xlu0 %2208
  %2210 = vrot.lane.b32.xlu0 %v1364, 9
  %v2211 = vpop.permute.xlu0 %2210
  %2212 = vrot.lane.b32.xlu0 %v1365, 9
  %v2213 = vpop.permute.xlu0 %2212
  %2214 = vrot.lane.b32.xlu0 %v1366, 9
  %v2215 = vpop.permute.xlu0 %2214
  %2216 = vrot.lane.b32.xlu0 %v1367, 9
  %v2217 = vpop.permute.xlu0 %2216
  %2218 = vrot.lane.b32.xlu0 %v1368, 9
  %v2219 = vpop.permute.xlu0 %2218
  %2220 = vrot.lane.b32.xlu0 %v1369, 9
  %v2221 = vpop.permute.xlu0 %2220
  %2222 = vrot.lane.b32.xlu0 %v1370, 9
  %v2223 = vpop.permute.xlu0 %2222
  %2224 = vrot.lane.b32.xlu0 %v1371, 9
  %v2225 = vpop.permute.xlu0 %2224
  %2226 = vrot.lane.b32.xlu0 %v1372, 9
  %v2227 = vpop.permute.xlu0 %2226
  %2228 = vrot.lane.b32.xlu0 %v1373, 9
  %v2229 = vpop.permute.xlu0 %2228
  %2230 = vrot.lane.b32.xlu0 %v1374, 9
  %v2231 = vpop.permute.xlu0 %2230
  %2232 = vrot.lane.b32.xlu0 %v1375, 9
  %v2233 = vpop.permute.xlu0 %2232
  %2234 = vrot.lane.b32.xlu0 %v2202, 9
  %v2235 = vpop.permute.xlu0 %2234
  %2236 = vrot.lane.b32.xlu0 %v1377, 9
  %v2237 = vpop.permute.xlu0 %2236
  %2238 = vrot.lane.b32.xlu0 %v1378, 9
  %v2239 = vpop.permute.xlu0 %2238
  %2240 = vrot.lane.b32.xlu0 %v1379, 9
  %v2241 = vpop.permute.xlu0 %2240
  %2242 = vrot.lane.b32.xlu0 %v1380, 9
  %v2243 = vpop.permute.xlu0 %2242
  %2244 = vrot.lane.b32.xlu0 %v1381, 9
  %v2245 = vpop.permute.xlu0 %2244
  %2246 = vrot.lane.b32.xlu0 %v1382, 9
  %v2247 = vpop.permute.xlu0 %2246
  %2248 = vrot.lane.b32.xlu0 %v1383, 9
  %v2249 = vpop.permute.xlu0 %2248
  %2250 = vrot.lane.b32.xlu0 %v1384, 9
  %v2251 = vpop.permute.xlu0 %2250
  %2252 = vrot.lane.b32.xlu0 %v1385, 9
  %v2253 = vpop.permute.xlu0 %2252
  %2254 = vrot.lane.b32.xlu0 %v1386, 9
  %v2255 = vpop.permute.xlu0 %2254
  %2256 = vrot.lane.b32.xlu0 %v1387, 9
  %v2257 = vpop.permute.xlu0 %2256
  %2258 = vrot.lane.b32.xlu0 %v1388, 9
  %v2259 = vpop.permute.xlu0 %2258
  %2260 = vrot.lane.b32.xlu0 %v1389, 9
  %v2261 = vpop.permute.xlu0 %2260
  %2262 = vrot.lane.b32.xlu0 %v1390, 9
  %v2263 = vpop.permute.xlu0 %2262
  %2264 = vrot.lane.b32.xlu0 %v1391, 9
  %v2265 = vpop.permute.xlu0 %2264
  %2266 = vrot.lane.b32.xlu0 %v2203, 9
  %v2267 = vpop.permute.xlu0 %2266
  %v2270 = vunpack.c.l.b16 %v1176
  %v2271 = vunpack.c.l.b16 %v1194
  %v2272 = vpack.c.b16 %v2270, %v2270
  %v2273 = vpack.c.b16 %v2271, %v2271
  %v2275 = vshrl.u32 %v2202, 16
  %v2277 = vshll.u32 %v2202, 16
  %v2279 = vrot.slane %v2277, 1
  %v2280 = vor.u32 %v2275, %v2279
  %v2282 = vshll.u32 %v2272, 16
  %v2284 = vrot.slane %v2282, 1
  %v2285 = vsel %vm1488, %v2280, %v2284
  %v2287 = vshrl.u32 %v2203, 16
  %v2289 = vshll.u32 %v2203, 16
  %v2291 = vrot.slane %v2289, 1
  %v2292 = vor.u32 %v2287, %v2291
  %v2294 = vshll.u32 %v2273, 16
  %v2296 = vrot.slane %v2294, 1
  %v2297 = vsel %vm1488, %v2292, %v2296
  %2298 = vrot.lane.b32.xlu0 %v1512, 12
  %v2299 = vpop.permute.xlu0 %2298
  %2300 = vrot.lane.b32.xlu0 %v1524, 12
  %v2301 = vpop.permute.xlu0 %2300
  %2302 = vrot.lane.b32.xlu0 %v1536, 12
  %v2303 = vpop.permute.xlu0 %2302
  %2304 = vrot.lane.b32.xlu0 %v1548, 12
  %v2305 = vpop.permute.xlu0 %2304
  %2306 = vrot.lane.b32.xlu0 %v1560, 12
  %v2307 = vpop.permute.xlu0 %2306
  %2308 = vrot.lane.b32.xlu0 %v1572, 12
  %v2309 = vpop.permute.xlu0 %2308
  %2310 = vrot.lane.b32.xlu0 %v1584, 12
  %v2311 = vpop.permute.xlu0 %2310
  %2312 = vrot.lane.b32.xlu0 %v1596, 12
  %v2313 = vpop.permute.xlu0 %2312
  %2314 = vrot.lane.b32.xlu0 %v1608, 12
  %v2315 = vpop.permute.xlu0 %2314
  %2316 = vrot.lane.b32.xlu0 %v1620, 12
  %v2317 = vpop.permute.xlu0 %2316
  %2318 = vrot.lane.b32.xlu0 %v1632, 12
  %v2319 = vpop.permute.xlu0 %2318
  %2320 = vrot.lane.b32.xlu0 %v1644, 12
  %v2321 = vpop.permute.xlu0 %2320
  %2322 = vrot.lane.b32.xlu0 %v1656, 12
  %v2323 = vpop.permute.xlu0 %2322
  %2324 = vrot.lane.b32.xlu0 %v1668, 12
  %v2325 = vpop.permute.xlu0 %2324
  %2326 = vrot.lane.b32.xlu0 %v1680, 12
  %v2327 = vpop.permute.xlu0 %2326
  %2328 = vrot.lane.b32.xlu0 %v2285, 12
  %v2329 = vpop.permute.xlu0 %2328
  %2330 = vrot.lane.b32.xlu0 %v1704, 12
  %v2331 = vpop.permute.xlu0 %2330
  %2332 = vrot.lane.b32.xlu0 %v1716, 12
  %v2333 = vpop.permute.xlu0 %2332
  %2334 = vrot.lane.b32.xlu0 %v1728, 12
  %v2335 = vpop.permute.xlu0 %2334
  %2336 = vrot.lane.b32.xlu0 %v1740, 12
  %v2337 = vpop.permute.xlu0 %2336
  %2338 = vrot.lane.b32.xlu0 %v1752, 12
  %v2339 = vpop.permute.xlu0 %2338
  %2340 = vrot.lane.b32.xlu0 %v1764, 12
  %v2341 = vpop.permute.xlu0 %2340
  %2342 = vrot.lane.b32.xlu0 %v1776, 12
  %v2343 = vpop.permute.xlu0 %2342
  %2344 = vrot.lane.b32.xlu0 %v1788, 12
  %v2345 = vpop.permute.xlu0 %2344
  %2346 = vrot.lane.b32.xlu0 %v1800, 12
  %v2347 = vpop.permute.xlu0 %2346
  %2348 = vrot.lane.b32.xlu0 %v1812, 12
  %v2349 = vpop.permute.xlu0 %2348
  %2350 = vrot.lane.b32.xlu0 %v1824, 12
  %v2351 = vpop.permute.xlu0 %2350
  %2352 = vrot.lane.b32.xlu0 %v1836, 12
  %v2353 = vpop.permute.xlu0 %2352
  %2354 = vrot.lane.b32.xlu0 %v1848, 12
  %v2355 = vpop.permute.xlu0 %2354
  %2356 = vrot.lane.b32.xlu0 %v1860, 12
  %v2357 = vpop.permute.xlu0 %2356
  %2358 = vrot.lane.b32.xlu0 %v1872, 12
  %v2359 = vpop.permute.xlu0 %2358
  %2360 = vrot.lane.b32.xlu0 %v2297, 12
  %v2361 = vpop.permute.xlu0 %2360
  %v2364 = vunpack.c.l.b16 %v1212
  %v2365 = vunpack.c.l.b16 %v1230
  %v2366 = vpack.c.b16 %v2199, %v2364
  %v2367 = vpack.c.b16 %v2201, %v2365
  %v2368 = vrot.slane %v2366, 1
  %v2369 = vrot.slane %v2272, 1
  %v2370 = vsel %vm2033, %v2368, %v2369
  %v2371 = vrot.slane %v2367, 1
  %v2372 = vrot.slane %v2273, 1
  %v2373 = vsel %vm2033, %v2371, %v2372
  %2374 = vrot.lane.b32.xlu0 %v2039, 15
  %v2375 = vpop.permute.xlu0 %2374
  %2376 = vrot.lane.b32.xlu0 %v2042, 15
  %v2377 = vpop.permute.xlu0 %2376
  %2378 = vrot.lane.b32.xlu0 %v2045, 15
  %v2379 = vpop.permute.xlu0 %2378
  %2380 = vrot.lane.b32.xlu0 %v2048, 15
  %v2381 = vpop.permute.xlu0 %2380
  %2382 = vrot.lane.b32.xlu0 %v2051, 15
  %v2383 = vpop.permute.xlu0 %2382
  %2384 = vrot.lane.b32.xlu0 %v2054, 15
  %v2385 = vpop.permute.xlu0 %2384
  %2386 = vrot.lane.b32.xlu0 %v2057, 15
  %v2387 = vpop.permute.xlu0 %2386
  %2388 = vrot.lane.b32.xlu0 %v2060, 15
  %v2389 = vpop.permute.xlu0 %2388
  %2390 = vrot.lane.b32.xlu0 %v2063, 15
  %v2391 = vpop.permute.xlu0 %2390
  %2392 = vrot.lane.b32.xlu0 %v2066, 15
  %v2393 = vpop.permute.xlu0 %2392
  %2394 = vrot.lane.b32.xlu0 %v2069, 15
  %v2395 = vpop.permute.xlu0 %2394
  %2396 = vrot.lane.b32.xlu0 %v2072, 15
  %v2397 = vpop.permute.xlu0 %2396
  %2398 = vrot.lane.b32.xlu0 %v2075, 15
  %v2399 = vpop.permute.xlu0 %2398
  %2400 = vrot.lane.b32.xlu0 %v2078, 15
  %v2401 = vpop.permute.xlu0 %2400
  %2402 = vrot.lane.b32.xlu0 %v2081, 15
  %v2403 = vpop.permute.xlu0 %2402
  %2404 = vrot.lane.b32.xlu0 %v2370, 15
  %v2405 = vpop.permute.xlu0 %2404
  %2406 = vrot.lane.b32.xlu0 %v2087, 15
  %v2407 = vpop.permute.xlu0 %2406
  %2408 = vrot.lane.b32.xlu0 %v2090, 15
  %v2409 = vpop.permute.xlu0 %2408
  %2410 = vrot.lane.b32.xlu0 %v2093, 15
  %v2411 = vpop.permute.xlu0 %2410
  %2412 = vrot.lane.b32.xlu0 %v2096, 15
  %v2413 = vpop.permute.xlu0 %2412
  %2414 = vrot.lane.b32.xlu0 %v2099, 15
  %v2415 = vpop.permute.xlu0 %2414
  %2416 = vrot.lane.b32.xlu0 %v2102, 15
  %v2417 = vpop.permute.xlu0 %2416
  %2418 = vrot.lane.b32.xlu0 %v2105, 15
  %v2419 = vpop.permute.xlu0 %2418
  %2420 = vrot.lane.b32.xlu0 %v2108, 15
  %v2421 = vpop.permute.xlu0 %2420
  %2422 = vrot.lane.b32.xlu0 %v2111, 15
  %v2423 = vpop.permute.xlu0 %2422
  %2424 = vrot.lane.b32.xlu0 %v2114, 15
  %v2425 = vpop.permute.xlu0 %2424
  %2426 = vrot.lane.b32.xlu0 %v2117, 15
  %v2427 = vpop.permute.xlu0 %2426
  %2428 = vrot.lane.b32.xlu0 %v2120, 15
  %v2429 = vpop.permute.xlu0 %2428
  %2430 = vrot.lane.b32.xlu0 %v2123, 15
  %v2431 = vpop.permute.xlu0 %2430
  %2432 = vrot.lane.b32.xlu0 %v2126, 15
  %v2433 = vpop.permute.xlu0 %2432
  %2434 = vrot.lane.b32.xlu0 %v2129, 15
  %v2435 = vpop.permute.xlu0 %2434
  %2436 = vrot.lane.b32.xlu0 %v2373, 15
  %v2437 = vpop.permute.xlu0 %2436
  %v2442 = vunpack.c.l.b16 %v1122
  %v2443 = vunpack.c.l.b16 %v1123
  %v2444 = vunpack.c.l.b16 %v1158
  %v2445 = vunpack.c.l.b16 %v1159
  %v2446 = vpack.c.b16 %v2443, %v2442
  %v2447 = vpack.c.b16 %v2445, %v2444
  %2448 = vrot.lane.b32.xlu0 %v1362, 18
  %v2449 = vpop.permute.xlu0 %2448
  %2450 = vrot.lane.b32.xlu0 %v1363, 18
  %v2451 = vpop.permute.xlu0 %2450
  %2452 = vrot.lane.b32.xlu0 %v1364, 18
  %v2453 = vpop.permute.xlu0 %2452
  %2454 = vrot.lane.b32.xlu0 %v1365, 18
  %v2455 = vpop.permute.xlu0 %2454
  %2456 = vrot.lane.b32.xlu0 %v1366, 18
  %v2457 = vpop.permute.xlu0 %2456
  %2458 = vrot.lane.b32.xlu0 %v1367, 18
  %v2459 = vpop.permute.xlu0 %2458
  %2460 = vrot.lane.b32.xlu0 %v1368, 18
  %v2461 = vpop.permute.xlu0 %2460
  %2462 = vrot.lane.b32.xlu0 %v1369, 18
  %v2463 = vpop.permute.xlu0 %2462
  %2464 = vrot.lane.b32.xlu0 %v1370, 18
  %v2465 = vpop.permute.xlu0 %2464
  %2466 = vrot.lane.b32.xlu0 %v1371, 18
  %v2467 = vpop.permute.xlu0 %2466
  %2468 = vrot.lane.b32.xlu0 %v1372, 18
  %v2469 = vpop.permute.xlu0 %2468
  %2470 = vrot.lane.b32.xlu0 %v1373, 18
  %v2471 = vpop.permute.xlu0 %2470
  %2472 = vrot.lane.b32.xlu0 %v1374, 18
  %v2473 = vpop.permute.xlu0 %2472
  %2474 = vrot.lane.b32.xlu0 %v1375, 18
  %v2475 = vpop.permute.xlu0 %2474
  %2476 = vrot.lane.b32.xlu0 %v2202, 18
  %v2477 = vpop.permute.xlu0 %2476
  %2478 = vrot.lane.b32.xlu0 %v2446, 18
  %v2479 = vpop.permute.xlu0 %2478
  %2480 = vrot.lane.b32.xlu0 %v1378, 18
  %v2481 = vpop.permute.xlu0 %2480
  %2482 = vrot.lane.b32.xlu0 %v1379, 18
  %v2483 = vpop.permute.xlu0 %2482
  %2484 = vrot.lane.b32.xlu0 %v1380, 18
  %v2485 = vpop.permute.xlu0 %2484
  %2486 = vrot.lane.b32.xlu0 %v1381, 18
  %v2487 = vpop.permute.xlu0 %2486
  %2488 = vrot.lane.b32.xlu0 %v1382, 18
  %v2489 = vpop.permute.xlu0 %2488
  %2490 = vrot.lane.b32.xlu0 %v1383, 18
  %v2491 = vpop.permute.xlu0 %2490
  %2492 = vrot.lane.b32.xlu0 %v1384, 18
  %v2493 = vpop.permute.xlu0 %2492
  %2494 = vrot.lane.b32.xlu0 %v1385, 18
  %v2495 = vpop.permute.xlu0 %2494
  %2496 = vrot.lane.b32.xlu0 %v1386, 18
  %v2497 = vpop.permute.xlu0 %2496
  %2498 = vrot.lane.b32.xlu0 %v1387, 18
  %v2499 = vpop.permute.xlu0 %2498
  %2500 = vrot.lane.b32.xlu0 %v1388, 18
  %v2501 = vpop.permute.xlu0 %2500
  %2502 = vrot.lane.b32.xlu0 %v1389, 18
  %v2503 = vpop.permute.xlu0 %2502
  %2504 = vrot.lane.b32.xlu0 %v1390, 18
  %v2505 = vpop.permute.xlu0 %2504
  %2506 = vrot.lane.b32.xlu0 %v1391, 18
  %v2507 = vpop.permute.xlu0 %2506
  %2508 = vrot.lane.b32.xlu0 %v2203, 18
  %v2509 = vpop.permute.xlu0 %2508
  %2510 = vrot.lane.b32.xlu0 %v2447, 18
  %v2511 = vpop.permute.xlu0 %2510
  %v2514 = vunpack.c.l.b16 %v1177
  %v2515 = vunpack.c.l.b16 %v1195
  %v2516 = vpack.c.b16 %v2514, %v2514
  %v2517 = vpack.c.b16 %v2515, %v2515
  %v2519 = vshrl.u32 %v2446, 16
  %v2521 = vshll.u32 %v2446, 16
  %v2523 = vrot.slane %v2521, 1
  %v2524 = vor.u32 %v2519, %v2523
  %v2526 = vshll.u32 %v2516, 16
  %v2528 = vrot.slane %v2526, 1
  %v2529 = vsel %vm1488, %v2524, %v2528
  %v2531 = vshrl.u32 %v2447, 16
  %v2533 = vshll.u32 %v2447, 16
  %v2535 = vrot.slane %v2533, 1
  %v2536 = vor.u32 %v2531, %v2535
  %v2538 = vshll.u32 %v2517, 16
  %v2540 = vrot.slane %v2538, 1
  %v2541 = vsel %vm1488, %v2536, %v2540
  %2542 = vrot.lane.b32.xlu0 %v1524, 21
  %v2543 = vpop.permute.xlu0 %2542
  %2544 = vrot.lane.b32.xlu0 %v1536, 21
  %v2545 = vpop.permute.xlu0 %2544
  %2546 = vrot.lane.b32.xlu0 %v1548, 21
  %v2547 = vpop.permute.xlu0 %2546
  %2548 = vrot.lane.b32.xlu0 %v1560, 21
  %v2549 = vpop.permute.xlu0 %2548
  %2550 = vrot.lane.b32.xlu0 %v1572, 21
  %v2551 = vpop.permute.xlu0 %2550
  %2552 = vrot.lane.b32.xlu0 %v1584, 21
  %v2553 = vpop.permute.xlu0 %2552
  %2554 = vrot.lane.b32.xlu0 %v1596, 21
  %v2555 = vpop.permute.xlu0 %2554
  %2556 = vrot.lane.b32.xlu0 %v1608, 21
  %v2557 = vpop.permute.xlu0 %2556
  %2558 = vrot.lane.b32.xlu0 %v1620, 21
  %v2559 = vpop.permute.xlu0 %2558
  %2560 = vrot.lane.b32.xlu0 %v1632, 21
  %v2561 = vpop.permute.xlu0 %2560
  %2562 = vrot.lane.b32.xlu0 %v1644, 21
  %v2563 = vpop.permute.xlu0 %2562
  %2564 = vrot.lane.b32.xlu0 %v1656, 21
  %v2565 = vpop.permute.xlu0 %2564
  %2566 = vrot.lane.b32.xlu0 %v1668, 21
  %v2567 = vpop.permute.xlu0 %2566
  %2568 = vrot.lane.b32.xlu0 %v1680, 21
  %v2569 = vpop.permute.xlu0 %2568
  %2570 = vrot.lane.b32.xlu0 %v2285, 21
  %v2571 = vpop.permute.xlu0 %2570
  %2572 = vrot.lane.b32.xlu0 %v2529, 21
  %v2573 = vpop.permute.xlu0 %2572
  %2574 = vrot.lane.b32.xlu0 %v1716, 21
  %v2575 = vpop.permute.xlu0 %2574
  %2576 = vrot.lane.b32.xlu0 %v1728, 21
  %v2577 = vpop.permute.xlu0 %2576
  %2578 = vrot.lane.b32.xlu0 %v1740, 21
  %v2579 = vpop.permute.xlu0 %2578
  %2580 = vrot.lane.b32.xlu0 %v1752, 21
  %v2581 = vpop.permute.xlu0 %2580
  %2582 = vrot.lane.b32.xlu0 %v1764, 21
  %v2583 = vpop.permute.xlu0 %2582
  %2584 = vrot.lane.b32.xlu0 %v1776, 21
  %v2585 = vpop.permute.xlu0 %2584
  %2586 = vrot.lane.b32.xlu0 %v1788, 21
  %v2587 = vpop.permute.xlu0 %2586
  %2588 = vrot.lane.b32.xlu0 %v1800, 21
  %v2589 = vpop.permute.xlu0 %2588
  %2590 = vrot.lane.b32.xlu0 %v1812, 21
  %v2591 = vpop.permute.xlu0 %2590
  %2592 = vrot.lane.b32.xlu0 %v1824, 21
  %v2593 = vpop.permute.xlu0 %2592
  %2594 = vrot.lane.b32.xlu0 %v1836, 21
  %v2595 = vpop.permute.xlu0 %2594
  %2596 = vrot.lane.b32.xlu0 %v1848, 21
  %v2597 = vpop.permute.xlu0 %2596
  %2598 = vrot.lane.b32.xlu0 %v1860, 21
  %v2599 = vpop.permute.xlu0 %2598
  %2600 = vrot.lane.b32.xlu0 %v1872, 21
  %v2601 = vpop.permute.xlu0 %2600
  %2602 = vrot.lane.b32.xlu0 %v2297, 21
  %v2603 = vpop.permute.xlu0 %2602
  %2604 = vrot.lane.b32.xlu0 %v2541, 21
  %v2605 = vpop.permute.xlu0 %2604
  %v2608 = vunpack.c.l.b16 %v1213
  %v2609 = vunpack.c.l.b16 %v1231
  %v2610 = vpack.c.b16 %v2443, %v2608
  %v2611 = vpack.c.b16 %v2445, %v2609
  %v2612 = vrot.slane %v2610, 1
  %v2613 = vrot.slane %v2516, 1
  %v2614 = vsel %vm2033, %v2612, %v2613
  %v2615 = vrot.slane %v2611, 1
  %v2616 = vrot.slane %v2517, 1
  %v2617 = vsel %vm2033, %v2615, %v2616
  %2618 = vrot.lane.b32.xlu0 %v2042, 24
  %v2619 = vpop.permute.xlu0 %2618
  %2620 = vrot.lane.b32.xlu0 %v2045, 24
  %v2621 = vpop.permute.xlu0 %2620
  %2622 = vrot.lane.b32.xlu0 %v2048, 24
  %v2623 = vpop.permute.xlu0 %2622
  %2624 = vrot.lane.b32.xlu0 %v2051, 24
  %v2625 = vpop.permute.xlu0 %2624
  %2626 = vrot.lane.b32.xlu0 %v2054, 24
  %v2627 = vpop.permute.xlu0 %2626
  %2628 = vrot.lane.b32.xlu0 %v2057, 24
  %v2629 = vpop.permute.xlu0 %2628
  %2630 = vrot.lane.b32.xlu0 %v2060, 24
  %v2631 = vpop.permute.xlu0 %2630
  %2632 = vrot.lane.b32.xlu0 %v2063, 24
  %v2633 = vpop.permute.xlu0 %2632
  %2634 = vrot.lane.b32.xlu0 %v2066, 24
  %v2635 = vpop.permute.xlu0 %2634
  %2636 = vrot.lane.b32.xlu0 %v2069, 24
  %v2637 = vpop.permute.xlu0 %2636
  %2638 = vrot.lane.b32.xlu0 %v2072, 24
  %v2639 = vpop.permute.xlu0 %2638
  %2640 = vrot.lane.b32.xlu0 %v2075, 24
  %v2641 = vpop.permute.xlu0 %2640
  %2642 = vrot.lane.b32.xlu0 %v2078, 24
  %v2643 = vpop.permute.xlu0 %2642
  %2644 = vrot.lane.b32.xlu0 %v2081, 24
  %v2645 = vpop.permute.xlu0 %2644
  %2646 = vrot.lane.b32.xlu0 %v2370, 24
  %v2647 = vpop.permute.xlu0 %2646
  %2648 = vrot.lane.b32.xlu0 %v2614, 24
  %v2649 = vpop.permute.xlu0 %2648
  %2650 = vrot.lane.b32.xlu0 %v2090, 24
  %v2651 = vpop.permute.xlu0 %2650
  %2652 = vrot.lane.b32.xlu0 %v2093, 24
  %v2653 = vpop.permute.xlu0 %2652
  %2654 = vrot.lane.b32.xlu0 %v2096, 24
  %v2655 = vpop.permute.xlu0 %2654
  %2656 = vrot.lane.b32.xlu0 %v2099, 24
  %v2657 = vpop.permute.xlu0 %2656
  %2658 = vrot.lane.b32.xlu0 %v2102, 24
  %v2659 = vpop.permute.xlu0 %2658
  %2660 = vrot.lane.b32.xlu0 %v2105, 24
  %v2661 = vpop.permute.xlu0 %2660
  %2662 = vrot.lane.b32.xlu0 %v2108, 24
  %v2663 = vpop.permute.xlu0 %2662
  %2664 = vrot.lane.b32.xlu0 %v2111, 24
  %v2665 = vpop.permute.xlu0 %2664
  %2666 = vrot.lane.b32.xlu0 %v2114, 24
  %v2667 = vpop.permute.xlu0 %2666
  %2668 = vrot.lane.b32.xlu0 %v2117, 24
  %v2669 = vpop.permute.xlu0 %2668
  %2670 = vrot.lane.b32.xlu0 %v2120, 24
  %v2671 = vpop.permute.xlu0 %2670
  %2672 = vrot.lane.b32.xlu0 %v2123, 24
  %v2673 = vpop.permute.xlu0 %2672
  %2674 = vrot.lane.b32.xlu0 %v2126, 24
  %v2675 = vpop.permute.xlu0 %2674
  %2676 = vrot.lane.b32.xlu0 %v2129, 24
  %v2677 = vpop.permute.xlu0 %2676
  %2678 = vrot.lane.b32.xlu0 %v2373, 24
  %v2679 = vpop.permute.xlu0 %2678
  %2680 = vrot.lane.b32.xlu0 %v2617, 24
  %v2681 = vpop.permute.xlu0 %2680
  %vm2682 = vcmask 23552
  %v2684 = vsel %vm2682, %v1360, %v1874
  %v2686 = vsel %vm2682, %v1361, %v1876
  %v2688 = vsel %vm2682, %v1362, %v1878
  %v2690 = vsel %vm2682, %v1363, %v1880
  %v2692 = vsel %vm2682, %v1364, %v1882
  %v2694 = vsel %vm2682, %v1365, %v1884
  %v2696 = vsel %vm2682, %v1366, %v1886
  %v2698 = vsel %vm2682, %v1367, %v1888
  %v2700 = vsel %vm2682, %v1368, %v1890
  %v2702 = vsel %vm2682, %v1369, %v1892
  %v2704 = vsel %vm2682, %v1370, %v1894
  %v2706 = vsel %vm2682, %v1371, %v1896
  %v2708 = vsel %vm2682, %v1372, %v1898
  %v2710 = vsel %vm2682, %v1373, %v1900
  %v2712 = vsel %vm2682, %v1374, %v1902
  %v2714 = vsel %vm2682, %v1375, %v1904
  %v2716 = vsel %vm2682, %v1376, %v1906
  %v2718 = vsel %vm2682, %v1377, %v1908
  %v2720 = vsel %vm2682, %v1378, %v1910
  %v2722 = vsel %vm2682, %v1379, %v1912
  %v2724 = vsel %vm2682, %v1380, %v1914
  %v2726 = vsel %vm2682, %v1381, %v1916
  %v2728 = vsel %vm2682, %v1382, %v1918
  %v2730 = vsel %vm2682, %v1383, %v1920
  %v2732 = vsel %vm2682, %v1384, %v1922
  %v2734 = vsel %vm2682, %v1385, %v1924
  %v2736 = vsel %vm2682, %v1386, %v1926
  %v2738 = vsel %vm2682, %v1387, %v1928
  %v2740 = vsel %vm2682, %v1388, %v1930
  %v2742 = vsel %vm2682, %v1389, %v1932
  %v2744 = vsel %vm2682, %v1390, %v1934
  %v2746 = vsel %vm2682, %v1391, %v1936
  %vm2747 = vcmask 48128
  %v2749 = vsel %vm2747, %v2684, %v2131
  %v2751 = vsel %vm2747, %v2686, %v2133
  %v2753 = vsel %vm2747, %v2688, %v2135
  %v2755 = vsel %vm2747, %v2690, %v2137
  %v2757 = vsel %vm2747, %v2692, %v2139
  %v2759 = vsel %vm2747, %v2694, %v2141
  %v2761 = vsel %vm2747, %v2696, %v2143
  %v2763 = vsel %vm2747, %v2698, %v2145
  %v2765 = vsel %vm2747, %v2700, %v2147
  %v2767 = vsel %vm2747, %v2702, %v2149
  %v2769 = vsel %vm2747, %v2704, %v2151
  %v2771 = vsel %vm2747, %v2706, %v2153
  %v2773 = vsel %vm2747, %v2708, %v2155
  %v2775 = vsel %vm2747, %v2710, %v2157
  %v2777 = vsel %vm2747, %v2712, %v2159
  %v2779 = vsel %vm2747, %v2714, %v2161
  %v2781 = vsel %vm2747, %v2716, %v2163
  %v2783 = vsel %vm2747, %v2718, %v2165
  %v2785 = vsel %vm2747, %v2720, %v2167
  %v2787 = vsel %vm2747, %v2722, %v2169
  %v2789 = vsel %vm2747, %v2724, %v2171
  %v2791 = vsel %vm2747, %v2726, %v2173
  %v2793 = vsel %vm2747, %v2728, %v2175
  %v2795 = vsel %vm2747, %v2730, %v2177
  %v2797 = vsel %vm2747, %v2732, %v2179
  %v2799 = vsel %vm2747, %v2734, %v2181
  %v2801 = vsel %vm2747, %v2736, %v2183
  %v2803 = vsel %vm2747, %v2738, %v2185
  %v2805 = vsel %vm2747, %v2740, %v2187
  %v2807 = vsel %vm2747, %v2742, %v2189
  %v2809 = vsel %vm2747, %v2744, %v2191
  %v2811 = vsel %vm2747, %v2746, %v2193
  %vm2812 = vcmask 72704
  %v2814 = vsel %vm2812, %v2749, %v2205
  %v2816 = vsel %vm2812, %v2751, %v2207
  %v2818 = vsel %vm2812, %v2753, %v2209
  %v2820 = vsel %vm2812, %v2755, %v2211
  %v2822 = vsel %vm2812, %v2757, %v2213
  %v2824 = vsel %vm2812, %v2759, %v2215
  %v2826 = vsel %vm2812, %v2761, %v2217
  %v2828 = vsel %vm2812, %v2763, %v2219
  %v2830 = vsel %vm2812, %v2765, %v2221
  %v2832 = vsel %vm2812, %v2767, %v2223
  %v2834 = vsel %vm2812, %v2769, %v2225
  %v2836 = vsel %vm2812, %v2771, %v2227
  %v2838 = vsel %vm2812, %v2773, %v2229
  %v2840 = vsel %vm2812, %v2775, %v2231
  %v2842 = vsel %vm2812, %v2777, %v2233
  %v2844 = vsel %vm2812, %v2779, %v2235
  %v2846 = vsel %vm2812, %v2781, %v2237
  %v2848 = vsel %vm2812, %v2783, %v2239
  %v2850 = vsel %vm2812, %v2785, %v2241
  %v2852 = vsel %vm2812, %v2787, %v2243
  %v2854 = vsel %vm2812, %v2789, %v2245
  %v2856 = vsel %vm2812, %v2791, %v2247
  %v2858 = vsel %vm2812, %v2793, %v2249
  %v2860 = vsel %vm2812, %v2795, %v2251
  %v2862 = vsel %vm2812, %v2797, %v2253
  %v2864 = vsel %vm2812, %v2799, %v2255
  %v2866 = vsel %vm2812, %v2801, %v2257
  %v2868 = vsel %vm2812, %v2803, %v2259
  %v2870 = vsel %vm2812, %v2805, %v2261
  %v2872 = vsel %vm2812, %v2807, %v2263
  %v2874 = vsel %vm2812, %v2809, %v2265
  %v2876 = vsel %vm2812, %v2811, %v2267
  %vm2877 = vcmask 97280
  %v2879 = vsel %vm2877, %v2814, %v2299
  %v2881 = vsel %vm2877, %v2816, %v2301
  %v2883 = vsel %vm2877, %v2818, %v2303
  %v2885 = vsel %vm2877, %v2820, %v2305
  %v2887 = vsel %vm2877, %v2822, %v2307
  %v2889 = vsel %vm2877, %v2824, %v2309
  %v2891 = vsel %vm2877, %v2826, %v2311
  %v2893 = vsel %vm2877, %v2828, %v2313
  %v2895 = vsel %vm2877, %v2830, %v2315
  %v2897 = vsel %vm2877, %v2832, %v2317
  %v2899 = vsel %vm2877, %v2834, %v2319
  %v2901 = vsel %vm2877, %v2836, %v2321
  %v2903 = vsel %vm2877, %v2838, %v2323
  %v2905 = vsel %vm2877, %v2840, %v2325
  %v2907 = vsel %vm2877, %v2842, %v2327
  %v2909 = vsel %vm2877, %v2844, %v2329
  %v2911 = vsel %vm2877, %v2846, %v2331
  %v2913 = vsel %vm2877, %v2848, %v2333
  %v2915 = vsel %vm2877, %v2850, %v2335
  %v2917 = vsel %vm2877, %v2852, %v2337
  %v2919 = vsel %vm2877, %v2854, %v2339
  %v2921 = vsel %vm2877, %v2856, %v2341
  %v2923 = vsel %vm2877, %v2858, %v2343
  %v2925 = vsel %vm2877, %v2860, %v2345
  %v2927 = vsel %vm2877, %v2862, %v2347
  %v2929 = vsel %vm2877, %v2864, %v2349
  %v2931 = vsel %vm2877, %v2866, %v2351
  %v2933 = vsel %vm2877, %v2868, %v2353
  %v2935 = vsel %vm2877, %v2870, %v2355
  %v2937 = vsel %vm2877, %v2872, %v2357
  %v2939 = vsel %vm2877, %v2874, %v2359
  %v2941 = vsel %vm2877, %v2876, %v2361
  %vm2942 = vcmask 121856
  %v2944 = vsel %vm2942, %v2879, %v2375
  %v2946 = vsel %vm2942, %v2881, %v2377
  %v2948 = vsel %vm2942, %v2883, %v2379
  %v2950 = vsel %vm2942, %v2885, %v2381
  %v2952 = vsel %vm2942, %v2887, %v2383
  %v2954 = vsel %vm2942, %v2889, %v2385
  %v2956 = vsel %vm2942, %v2891, %v2387
  %v2958 = vsel %vm2942, %v2893, %v2389
  %v2960 = vsel %vm2942, %v2895, %v2391
  %v2962 = vsel %vm2942, %v2897, %v2393
  %v2964 = vsel %vm2942, %v2899, %v2395
  %v2966 = vsel %vm2942, %v2901, %v2397
  %v2968 = vsel %vm2942, %v2903, %v2399
  %v2970 = vsel %vm2942, %v2905, %v2401
  %v2972 = vsel %vm2942, %v2907, %v2403
  %v2974 = vsel %vm2942, %v2909, %v2405
  %v2976 = vsel %vm2942, %v2911, %v2407
  %v2978 = vsel %vm2942, %v2913, %v2409
  %v2980 = vsel %vm2942, %v2915, %v2411
  %v2982 = vsel %vm2942, %v2917, %v2413
  %v2984 = vsel %vm2942, %v2919, %v2415
  %v2986 = vsel %vm2942, %v2921, %v2417
  %v2988 = vsel %vm2942, %v2923, %v2419
  %v2990 = vsel %vm2942, %v2925, %v2421
  %v2992 = vsel %vm2942, %v2927, %v2423
  %v2994 = vsel %vm2942, %v2929, %v2425
  %v2996 = vsel %vm2942, %v2931, %v2427
  %v2998 = vsel %vm2942, %v2933, %v2429
  %v3000 = vsel %vm2942, %v2935, %v2431
  %v3002 = vsel %vm2942, %v2937, %v2433
  %v3004 = vsel %vm2942, %v2939, %v2435
  %v3006 = vsel %vm2942, %v2941, %v2437
  %vm3007 = vcmask 146432
  %v3009 = vsel %vm3007, %v2944, %v2449
  %v3011 = vsel %vm3007, %v2946, %v2451
  %v3013 = vsel %vm3007, %v2948, %v2453
  %v3015 = vsel %vm3007, %v2950, %v2455
  %v3017 = vsel %vm3007, %v2952, %v2457
  %v3019 = vsel %vm3007, %v2954, %v2459
  %v3021 = vsel %vm3007, %v2956, %v2461
  %v3023 = vsel %vm3007, %v2958, %v2463
  %v3025 = vsel %vm3007, %v2960, %v2465
  %v3027 = vsel %vm3007, %v2962, %v2467
  %v3029 = vsel %vm3007, %v2964, %v2469
  %v3031 = vsel %vm3007, %v2966, %v2471
  %v3033 = vsel %vm3007, %v2968, %v2473
  %v3035 = vsel %vm3007, %v2970, %v2475
  %v3037 = vsel %vm3007, %v2972, %v2477
  %v3039 = vsel %vm3007, %v2974, %v2479
  %v3041 = vsel %vm3007, %v2976, %v2481
  %v3043 = vsel %vm3007, %v2978, %v2483
  %v3045 = vsel %vm3007, %v2980, %v2485
  %v3047 = vsel %vm3007, %v2982, %v2487
  %v3049 = vsel %vm3007, %v2984, %v2489
  %v3051 = vsel %vm3007, %v2986, %v2491
  %v3053 = vsel %vm3007, %v2988, %v2493
  %v3055 = vsel %vm3007, %v2990, %v2495
  %v3057 = vsel %vm3007, %v2992, %v2497
  %v3059 = vsel %vm3007, %v2994, %v2499
  %v3061 = vsel %vm3007, %v2996, %v2501
  %v3063 = vsel %vm3007, %v2998, %v2503
  %v3065 = vsel %vm3007, %v3000, %v2505
  %v3067 = vsel %vm3007, %v3002, %v2507
  %v3069 = vsel %vm3007, %v3004, %v2509
  %v3071 = vsel %vm3007, %v3006, %v2511
  %vm3072 = vcmask 171008
  %v3074 = vsel %vm3072, %v3009, %v2543
  %v3076 = vsel %vm3072, %v3011, %v2545
  %v3078 = vsel %vm3072, %v3013, %v2547
  %v3080 = vsel %vm3072, %v3015, %v2549
  %v3082 = vsel %vm3072, %v3017, %v2551
  %v3084 = vsel %vm3072, %v3019, %v2553
  %v3086 = vsel %vm3072, %v3021, %v2555
  %v3088 = vsel %vm3072, %v3023, %v2557
  %v3090 = vsel %vm3072, %v3025, %v2559
  %v3092 = vsel %vm3072, %v3027, %v2561
  %v3094 = vsel %vm3072, %v3029, %v2563
  %v3096 = vsel %vm3072, %v3031, %v2565
  %v3098 = vsel %vm3072, %v3033, %v2567
  %v3100 = vsel %vm3072, %v3035, %v2569
  %v3102 = vsel %vm3072, %v3037, %v2571
  %v3104 = vsel %vm3072, %v3039, %v2573
  %v3106 = vsel %vm3072, %v3041, %v2575
  %v3108 = vsel %vm3072, %v3043, %v2577
  %v3110 = vsel %vm3072, %v3045, %v2579
  %v3112 = vsel %vm3072, %v3047, %v2581
  %v3114 = vsel %vm3072, %v3049, %v2583
  %v3116 = vsel %vm3072, %v3051, %v2585
  %v3118 = vsel %vm3072, %v3053, %v2587
  %v3120 = vsel %vm3072, %v3055, %v2589
  %v3122 = vsel %vm3072, %v3057, %v2591
  %v3124 = vsel %vm3072, %v3059, %v2593
  %v3126 = vsel %vm3072, %v3061, %v2595
  %v3128 = vsel %vm3072, %v3063, %v2597
  %v3130 = vsel %vm3072, %v3065, %v2599
  %v3132 = vsel %vm3072, %v3067, %v2601
  %v3134 = vsel %vm3072, %v3069, %v2603
  %v3136 = vsel %vm3072, %v3071, %v2605
  %vm3137 = vcmask 195584
  %v3139 = vsel %vm3137, %v3074, %v2619
  %v3141 = vsel %vm3137, %v3076, %v2621
  %v3143 = vsel %vm3137, %v3078, %v2623
  %v3145 = vsel %vm3137, %v3080, %v2625
  %v3147 = vsel %vm3137, %v3082, %v2627
  %v3149 = vsel %vm3137, %v3084, %v2629
  %v3151 = vsel %vm3137, %v3086, %v2631
  %v3153 = vsel %vm3137, %v3088, %v2633
  %v3155 = vsel %vm3137, %v3090, %v2635
  %v3157 = vsel %vm3137, %v3092, %v2637
  %v3159 = vsel %vm3137, %v3094, %v2639
  %v3161 = vsel %vm3137, %v3096, %v2641
  %v3163 = vsel %vm3137, %v3098, %v2643
  %v3165 = vsel %vm3137, %v3100, %v2645
  %v3167 = vsel %vm3137, %v3102, %v2647
  %v3169 = vsel %vm3137, %v3104, %v2649
  %v3171 = vsel %vm3137, %v3106, %v2651
  %v3173 = vsel %vm3137, %v3108, %v2653
  %v3175 = vsel %vm3137, %v3110, %v2655
  %v3177 = vsel %vm3137, %v3112, %v2657
  %v3179 = vsel %vm3137, %v3114, %v2659
  %v3181 = vsel %vm3137, %v3116, %v2661
  %v3183 = vsel %vm3137, %v3118, %v2663
  %v3185 = vsel %vm3137, %v3120, %v2665
  %v3187 = vsel %vm3137, %v3122, %v2667
  %v3189 = vsel %vm3137, %v3124, %v2669
  %v3191 = vsel %vm3137, %v3126, %v2671
  %v3193 = vsel %vm3137, %v3128, %v2673
  %v3195 = vsel %vm3137, %v3130, %v2675
  %v3197 = vsel %vm3137, %v3132, %v2677
  %v3199 = vsel %vm3137, %v3134, %v2679
  %v3201 = vsel %vm3137, %v3136, %v2681
  %v3202 = vld [vmem:[%s1] sm:$0xf]
  %v3203 = vld [vmem:[%s1 + $0x4] sm:$0xf]
  %v3204 = vld [vmem:[%s1 + $0x8] sm:$0xf]
  %v3205 = vld [vmem:[%s1 + $0xc] sm:$0x3]
  %v3206 = vld [vmem:[%s2] sm:$0x1]
  %v3208 = vlaneseq
  %v3209 = vshrl.u32 %v3208, 7
  %v3210 = vsub.s32 0, %v3209
  %v3211 = vrot.slane %v3206, %v3210
  %v3217 = vunpack.c.l.b16 %v3202
  %v3218 = vunpack.c.l.b16 %v3203
  %v3219 = vunpack.c.l.b16 %v3204
  %v3220 = vunpack.c.l.b16 %v3205
  %v3221 = vpack.c.b16 %v3218, %v3217
  %v3222 = vpack.c.b16 %v3220, %v3219
  %vm3224 = vcmask 220160
  %v3225 = vsel %vm3224, %v3139, 0
  %v3227 = vsel %vm3224, %v3141, 0
  %v3229 = vsel %vm3224, %v3143, 0
  %v3231 = vsel %vm3224, %v3145, 0
  %v3233 = vsel %vm3224, %v3147, 0
  %v3235 = vsel %vm3224, %v3149, 0
  %v3237 = vsel %vm3224, %v3151, 0
  %v3239 = vsel %vm3224, %v3153, 0
  %v3241 = vsel %vm3224, %v3155, 0
  %v3243 = vsel %vm3224, %v3157, 0
  %v3245 = vsel %vm3224, %v3159, 0
  %v3247 = vsel %vm3224, %v3161, 0
  %v3249 = vsel %vm3224, %v3163, 0
  %v3251 = vsel %vm3224, %v3165, 0
  %v3253 = vsel %vm3224, %v3167, 0
  %v3255 = vsel %vm3224, %v3169, 0
  %v3257 = vsel %vm3224, %v3171, 0
  %v3259 = vsel %vm3224, %v3173, 0
  %v3261 = vsel %vm3224, %v3175, 0
  %v3263 = vsel %vm3224, %v3177, 0
  %v3265 = vsel %vm3224, %v3179, 0
  %v3267 = vsel %vm3224, %v3181, 0
  %v3269 = vsel %vm3224, %v3183, 0
  %v3271 = vsel %vm3224, %v3185, 0
  %v3273 = vsel %vm3224, %v3187, 0
  %v3275 = vsel %vm3224, %v3189, 0
  %v3277 = vsel %vm3224, %v3191, 0
  %v3279 = vsel %vm3224, %v3193, 0
  %v3281 = vsel %vm3224, %v3195, 0
  %v3283 = vsel %vm3224, %v3197, 0
  %v3285 = vsel %vm3224, %v3199, 0
  %v3287 = vsel %vm3224, %v3201, 0
  %vm3289 = vcmask 1044480
  %vm3290 = vcmask 1045504
  %v3291 = vsel %vm3289, 4294967295, 65535
  %v3292 = vsel %vm3290, %v3291, 0
  %v3294 = vand.u32 %v3222, %v3292
  %3296 = vmatprep.subr.bf16.mxu0 0
  %3297 = vmatpush1.bf16.msra.mxu0 %v3221
  %3298 = vmatprep.subr.bf16.mxu0 0
  %3299 = vmatpush1.bf16.msra.mxu0 %v3294
  %3300 = vmatprep.subr.bf16.mxu0 0
  %3301 = vmatpush1.bf16.msra.mxu0 0
  %3302 = vmatprep.subr.bf16.mxu0 0
  %3303 = vmatpush1.bf16.msra.mxu0 0
  %3304 = vmatprep.subr.bf16.mxu0 0
  %3305 = vmatpush1.bf16.msra.mxu0 0
  %3306 = vmatprep.subr.bf16.mxu0 0
  %3307 = vmatpush1.bf16.msra.mxu0 0
  %3308 = vmatprep.subr.bf16.mxu0 0
  %3309 = vmatpush1.bf16.msra.mxu0 0
  %3310 = vmatprep.subr.bf16.mxu0 0
  %3311 = vmatpush1.bf16.msra.mxu0 0
  %3312 = vmatprep.subr.bf16.mxu0 0
  %3313 = vmatpush1.bf16.msra.mxu0 0
  %3314 = vmatprep.subr.bf16.mxu0 0
  %3315 = vmatpush1.bf16.msra.mxu0 0
  %3316 = vmatprep.subr.bf16.mxu0 0
  %3317 = vmatpush1.bf16.msra.mxu0 0
  %3318 = vmatprep.subr.bf16.mxu0 0
  %3319 = vmatpush1.bf16.msra.mxu0 0
  %3320 = vmatprep.subr.bf16.mxu0 0
  %3321 = vmatpush1.bf16.msra.mxu0 0
  %3322 = vmatprep.subr.bf16.mxu0 0
  %3323 = vmatpush1.bf16.msra.mxu0 0
  %3324 = vmatprep.subr.bf16.mxu0 0
  %3325 = vmatpush1.bf16.msra.mxu0 0
  %3326 = vmatprep.subr.bf16.mxu0 0
  %3327 = vmatpush1.bf16.msra.mxu0 0
  %3328 = vmatprep.mubr.bf16.mxu0 0
  %3329 = vmatmul.mubr.bf16.gmra.mrb[0].mxu0 %v3225
  %v3330 = vpop.f32.mrb[0].mxu0
  %v3331 = vadd.f32 %v3211, %v3330
  %v3332 = vpop.f32.mrb[0].mxu0
  %v3333 = vpop.f32.mrb[0].mxu0
  %v3334 = vadd.f32 %v3211, %v3333
  %v3335 = vpop.f32.mrb[0].mxu0
  %3336 = vmatprep.mubr.bf16.mxu0 0
  %3337 = vmatmul.mubr.bf16.gmra.mrb[0].mxu0 %v3227
  %v3338 = vpop.f32.mrb[0].mxu0
  %v3339 = vadd.f32 %v3211, %v3338
  %v3340 = vpop.f32.mrb[0].mxu0
  %v3341 = vpop.f32.mrb[0].mxu0
  %v3342 = vadd.f32 %v3211, %v3341
  %v3343 = vpop.f32.mrb[0].mxu0
  %3344 = vmatprep.mubr.bf16.mxu0 0
  %3345 = vmatmul.mubr.bf16.gmra.mrb[0].mxu0 %v3229
  %v3346 = vpop.f32.mrb[0].mxu0
  %v3347 = vadd.f32 %v3211, %v3346
  %v3348 = vpop.f32.mrb[0].mxu0
  %v3349 = vpop.f32.mrb[0].mxu0
  %v3350 = vadd.f32 %v3211, %v3349
  %v3351 = vpop.f32.mrb[0].mxu0
  %3352 = vmatprep.mubr.bf16.mxu0 0
  %3353 = vmatmul.mubr.bf16.gmra.mrb[0].mxu0 %v3231
  %v3354 = vpop.f32.mrb[0].mxu0
  %v3355 = vadd.f32 %v3211, %v3354
  %v3356 = vpop.f32.mrb[0].mxu0
  %v3357 = vpop.f32.mrb[0].mxu0
  %v3358 = vadd.f32 %v3211, %v3357
  %v3359 = vpop.f32.mrb[0].mxu0
  %3360 = vmatprep.mubr.bf16.mxu0 0
  %3361 = vmatmul.mubr.bf16.gmra.mrb[0].mxu0 %v3233
  %v3362 = vpop.f32.mrb[0].mxu0
  %v3363 = vadd.f32 %v3211, %v3362
  %v3364 = vpop.f32.mrb[0].mxu0
  %v3365 = vpop.f32.mrb[0].mxu0
  %v3366 = vadd.f32 %v3211, %v3365
  %v3367 = vpop.f32.mrb[0].mxu0
  %3368 = vmatprep.mubr.bf16.mxu0 0
  %3369 = vmatmul.mubr.bf16.gmra.mrb[0].mxu0 %v3235
  %v3370 = vpop.f32.mrb[0].mxu0
  %v3371 = vadd.f32 %v3211, %v3370
  %v3372 = vpop.f32.mrb[0].mxu0
  %v3373 = vpop.f32.mrb[0].mxu0
  %v3374 = vadd.f32 %v3211, %v3373
  %v3375 = vpop.f32.mrb[0].mxu0
  %3376 = vmatprep.mubr.bf16.mxu0 0
  %3377 = vmatmul.mubr.bf16.gmra.mrb[0].mxu0 %v3237
  %v3378 = vpop.f32.mrb[0].mxu0
  %v3379 = vadd.f32 %v3211, %v3378
  %v3380 = vpop.f32.mrb[0].mxu0
  %v3381 = vpop.f32.mrb[0].mxu0
  %v3382 = vadd.f32 %v3211, %v3381
  %v3383 = vpop.f32.mrb[0].mxu0
  %3384 = vmatprep.mubr.bf16.mxu0 0
  %3385 = vmatmul.mubr.bf16.gmra.mrb[0].mxu0 %v3239
  %v3386 = vpop.f32.mrb[0].mxu0
  %v3387 = vadd.f32 %v3211, %v3386
  %v3388 = vpop.f32.mrb[0].mxu0
  %v3389 = vpop.f32.mrb[0].mxu0
  %v3390 = vadd.f32 %v3211, %v3389
  %v3391 = vpop.f32.mrb[0].mxu0
  %3392 = vmatprep.mubr.bf16.mxu0 0
  %3393 = vmatmul.mubr.bf16.gmra.mrb[0].mxu0 %v3241
  %v3394 = vpop.f32.mrb[0].mxu0
  %v3395 = vadd.f32 %v3211, %v3394
  %v3396 = vpop.f32.mrb[0].mxu0
  %v3397 = vpop.f32.mrb[0].mxu0
  %v3398 = vadd.f32 %v3211, %v3397
  %v3399 = vpop.f32.mrb[0].mxu0
  %3400 = vmatprep.mubr.bf16.mxu0 0
  %3401 = vmatmul.mubr.bf16.gmra.mrb[0].mxu0 %v3243
  %v3402 = vpop.f32.mrb[0].mxu0
  %v3403 = vadd.f32 %v3211, %v3402
  %v3404 = vpop.f32.mrb[0].mxu0
  %v3405 = vpop.f32.mrb[0].mxu0
  %v3406 = vadd.f32 %v3211, %v3405
  %v3407 = vpop.f32.mrb[0].mxu0
  %3408 = vmatprep.mubr.bf16.mxu0 0
  %3409 = vmatmul.mubr.bf16.gmra.mrb[0].mxu0 %v3245
  %v3410 = vpop.f32.mrb[0].mxu0
  %v3411 = vadd.f32 %v3211, %v3410
  %v3412 = vpop.f32.mrb[0].mxu0
  %v3413 = vpop.f32.mrb[0].mxu0
  %v3414 = vadd.f32 %v3211, %v3413
  %v3415 = vpop.f32.mrb[0].mxu0
  %3416 = vmatprep.mubr.bf16.mxu0 0
  %3417 = vmatmul.mubr.bf16.gmra.mrb[0].mxu0 %v3247
  %v3418 = vpop.f32.mrb[0].mxu0
  %v3419 = vadd.f32 %v3211, %v3418
  %v3420 = vpop.f32.mrb[0].mxu0
  %v3421 = vpop.f32.mrb[0].mxu0
  %v3422 = vadd.f32 %v3211, %v3421
  %v3423 = vpop.f32.mrb[0].mxu0
  %3424 = vmatprep.mubr.bf16.mxu0 0
  %3425 = vmatmul.mubr.bf16.gmra.mrb[0].mxu0 %v3249
  %v3426 = vpop.f32.mrb[0].mxu0
  %v3427 = vadd.f32 %v3211, %v3426
  %v3428 = vpop.f32.mrb[0].mxu0
  %v3429 = vpop.f32.mrb[0].mxu0
  %v3430 = vadd.f32 %v3211, %v3429
  %v3431 = vpop.f32.mrb[0].mxu0
  %3432 = vmatprep.mubr.bf16.mxu0 0
  %3433 = vmatmul.mubr.bf16.gmra.mrb[0].mxu0 %v3251
  %v3434 = vpop.f32.mrb[0].mxu0
  %v3435 = vadd.f32 %v3211, %v3434
  %v3436 = vpop.f32.mrb[0].mxu0
  %v3437 = vpop.f32.mrb[0].mxu0
  %v3438 = vadd.f32 %v3211, %v3437
  %v3439 = vpop.f32.mrb[0].mxu0
  %3440 = vmatprep.mubr.bf16.mxu0 0
  %3441 = vmatmul.mubr.bf16.gmra.mrb[0].mxu0 %v3253
  %v3442 = vpop.f32.mrb[0].mxu0
  %v3443 = vadd.f32 %v3211, %v3442
  %v3444 = vpop.f32.mrb[0].mxu0
  %v3445 = vpop.f32.mrb[0].mxu0
  %v3446 = vadd.f32 %v3211, %v3445
  %v3447 = vpop.f32.mrb[0].mxu0
  %3448 = vmatprep.mubr.bf16.mxu0 0
  %3449 = vmatmul.mubr.bf16.gmra.mrb[0].mxu0 %v3255
  %v3450 = vpop.f32.mrb[0].mxu0
  %v3451 = vadd.f32 %v3211, %v3450
  %v3452 = vpop.f32.mrb[0].mxu0
  %v3453 = vpop.f32.mrb[0].mxu0
  %v3454 = vadd.f32 %v3211, %v3453
  %v3455 = vpop.f32.mrb[0].mxu0
  %3456 = vmatprep.mubr.bf16.mxu0 0
  %3457 = vmatmul.mubr.bf16.gmra.mrb[0].mxu0 %v3257
  %v3458 = vpop.f32.mrb[0].mxu0
  %v3459 = vadd.f32 %v3211, %v3458
  %v3460 = vpop.f32.mrb[0].mxu0
  %v3461 = vpop.f32.mrb[0].mxu0
  %v3462 = vadd.f32 %v3211, %v3461
  %v3463 = vpop.f32.mrb[0].mxu0
  %3464 = vmatprep.mubr.bf16.mxu0 0
  %3465 = vmatmul.mubr.bf16.gmra.mrb[0].mxu0 %v3259
  %v3466 = vpop.f32.mrb[0].mxu0
  %v3467 = vadd.f32 %v3211, %v3466
  %v3468 = vpop.f32.mrb[0].mxu0
  %v3469 = vpop.f32.mrb[0].mxu0
  %v3470 = vadd.f32 %v3211, %v3469
  %v3471 = vpop.f32.mrb[0].mxu0
  %3472 = vmatprep.mubr.bf16.mxu0 0
  %3473 = vmatmul.mubr.bf16.gmra.mrb[0].mxu0 %v3261
  %v3474 = vpop.f32.mrb[0].mxu0
  %v3475 = vadd.f32 %v3211, %v3474
  %v3476 = vpop.f32.mrb[0].mxu0
  %v3477 = vpop.f32.mrb[0].mxu0
  %v3478 = vadd.f32 %v3211, %v3477
  %v3479 = vpop.f32.mrb[0].mxu0
  %3480 = vmatprep.mubr.bf16.mxu0 0
  %3481 = vmatmul.mubr.bf16.gmra.mrb[0].mxu0 %v3263
  %v3482 = vpop.f32.mrb[0].mxu0
  %v3483 = vadd.f32 %v3211, %v3482
  %v3484 = vpop.f32.mrb[0].mxu0
  %v3485 = vpop.f32.mrb[0].mxu0
  %v3486 = vadd.f32 %v3211, %v3485
  %v3487 = vpop.f32.mrb[0].mxu0
  %3488 = vmatprep.mubr.bf16.mxu0 0
  %3489 = vmatmul.mubr.bf16.gmra.mrb[0].mxu0 %v3265
  %v3490 = vpop.f32.mrb[0].mxu0
  %v3491 = vadd.f32 %v3211, %v3490
  %v3492 = vpop.f32.mrb[0].mxu0
  %v3493 = vpop.f32.mrb[0].mxu0
  %v3494 = vadd.f32 %v3211, %v3493
  %v3495 = vpop.f32.mrb[0].mxu0
  %3496 = vmatprep.mubr.bf16.mxu0 0
  %3497 = vmatmul.mubr.bf16.gmra.mrb[0].mxu0 %v3267
  %v3498 = vpop.f32.mrb[0].mxu0
  %v3499 = vadd.f32 %v3211, %v3498
  %v3500 = vpop.f32.mrb[0].mxu0
  %v3501 = vpop.f32.mrb[0].mxu0
  %v3502 = vadd.f32 %v3211, %v3501
  %v3503 = vpop.f32.mrb[0].mxu0
  %3504 = vmatprep.mubr.bf16.mxu0 0
  %3505 = vmatmul.mubr.bf16.gmra.mrb[0].mxu0 %v3269
  %v3506 = vpop.f32.mrb[0].mxu0
  %v3507 = vadd.f32 %v3211, %v3506
  %v3508 = vpop.f32.mrb[0].mxu0
  %v3509 = vpop.f32.mrb[0].mxu0
  %v3510 = vadd.f32 %v3211, %v3509
  %v3511 = vpop.f32.mrb[0].mxu0
  %3512 = vmatprep.mubr.bf16.mxu0 0
  %3513 = vmatmul.mubr.bf16.gmra.mrb[0].mxu0 %v3271
  %v3514 = vpop.f32.mrb[0].mxu0
  %v3515 = vadd.f32 %v3211, %v3514
  %v3516 = vpop.f32.mrb[0].mxu0
  %v3517 = vpop.f32.mrb[0].mxu0
  %v3518 = vadd.f32 %v3211, %v3517
  %v3519 = vpop.f32.mrb[0].mxu0
  %3520 = vmatprep.mubr.bf16.mxu0 0
  %3521 = vmatmul.mubr.bf16.gmra.mrb[0].mxu0 %v3273
  %v3522 = vpop.f32.mrb[0].mxu0
  %v3523 = vadd.f32 %v3211, %v3522
  %v3524 = vpop.f32.mrb[0].mxu0
  %v3525 = vpop.f32.mrb[0].mxu0
  %v3526 = vadd.f32 %v3211, %v3525
  %v3527 = vpop.f32.mrb[0].mxu0
  %3528 = vmatprep.mubr.bf16.mxu0 0
  %3529 = vmatmul.mubr.bf16.gmra.mrb[0].mxu0 %v3275
  %v3530 = vpop.f32.mrb[0].mxu0
  %v3531 = vadd.f32 %v3211, %v3530
  %v3532 = vpop.f32.mrb[0].mxu0
  %v3533 = vpop.f32.mrb[0].mxu0
  %v3534 = vadd.f32 %v3211, %v3533
  %v3535 = vpop.f32.mrb[0].mxu0
  %3536 = vmatprep.mubr.bf16.mxu0 0
  %3537 = vmatmul.mubr.bf16.gmra.mrb[0].mxu0 %v3277
  %v3538 = vpop.f32.mrb[0].mxu0
  %v3539 = vadd.f32 %v3211, %v3538
  %v3540 = vpop.f32.mrb[0].mxu0
  %v3541 = vpop.f32.mrb[0].mxu0
  %v3542 = vadd.f32 %v3211, %v3541
  %v3543 = vpop.f32.mrb[0].mxu0
  %3544 = vmatprep.mubr.bf16.mxu0 0
  %3545 = vmatmul.mubr.bf16.gmra.mrb[0].mxu0 %v3279
  %v3546 = vpop.f32.mrb[0].mxu0
  %v3547 = vadd.f32 %v3211, %v3546
  %v3548 = vpop.f32.mrb[0].mxu0
  %v3549 = vpop.f32.mrb[0].mxu0
  %v3550 = vadd.f32 %v3211, %v3549
  %v3551 = vpop.f32.mrb[0].mxu0
  %3552 = vmatprep.mubr.bf16.mxu0 0
  %3553 = vmatmul.mubr.bf16.gmra.mrb[0].mxu0 %v3281
  %v3554 = vpop.f32.mrb[0].mxu0
  %v3555 = vadd.f32 %v3211, %v3554
  %v3556 = vpop.f32.mrb[0].mxu0
  %v3557 = vpop.f32.mrb[0].mxu0
  %v3558 = vadd.f32 %v3211, %v3557
  %v3559 = vpop.f32.mrb[0].mxu0
  %3560 = vmatprep.mubr.bf16.mxu0 0
  %3561 = vmatmul.mubr.bf16.gmra.mrb[0].mxu0 %v3283
  %v3562 = vpop.f32.mrb[0].mxu0
  %v3563 = vadd.f32 %v3211, %v3562
  %v3564 = vpop.f32.mrb[0].mxu0
  %v3565 = vpop.f32.mrb[0].mxu0
  %v3566 = vadd.f32 %v3211, %v3565
  %v3567 = vpop.f32.mrb[0].mxu0
  %3568 = vmatprep.mubr.bf16.mxu0 0
  %3569 = vmatmul.mubr.bf16.gmra.mrb[0].mxu0 %v3285
  %v3570 = vpop.f32.mrb[0].mxu0
  %v3571 = vadd.f32 %v3211, %v3570
  %v3572 = vpop.f32.mrb[0].mxu0
  %v3573 = vpop.f32.mrb[0].mxu0
  %v3574 = vadd.f32 %v3211, %v3573
  %v3575 = vpop.f32.mrb[0].mxu0
  %3576 = vmatprep.mubr.bf16.mxu0 0
  %3577 = vmatmul.mubr.bf16.gmra.mrb[0].mxu0 %v3287
  %v3578 = vpop.f32.mrb[0].mxu0
  %v3579 = vadd.f32 %v3211, %v3578
  %v3580 = vpop.f32.mrb[0].mxu0
  %v3581 = vpop.f32.mrb[0].mxu0
  %v3582 = vadd.f32 %v3211, %v3581
  %v3583 = vpop.f32.mrb[0].mxu0
  %3584 = vdwg.mxu0
  %v3585 = vmax.f32 %v3331, 0.0
  %v3586 = vmax.f32 %v3334, 0.0
  %v3587 = vmax.f32 %v3339, 0.0
  %v3588 = vmax.f32 %v3342, 0.0
  %v3589 = vmax.f32 %v3347, 0.0
  %v3590 = vmax.f32 %v3350, 0.0
  %v3591 = vmax.f32 %v3355, 0.0
  %v3592 = vmax.f32 %v3358, 0.0
  %v3593 = vmax.f32 %v3363, 0.0
  %v3594 = vmax.f32 %v3366, 0.0
  %v3595 = vmax.f32 %v3371, 0.0
  %v3596 = vmax.f32 %v3374, 0.0
  %v3597 = vmax.f32 %v3379, 0.0
  %v3598 = vmax.f32 %v3382, 0.0
  %v3599 = vmax.f32 %v3387, 0.0
  %v3600 = vmax.f32 %v3390, 0.0
  %v3601 = vmax.f32 %v3395, 0.0
  %v3602 = vmax.f32 %v3398, 0.0
  %v3603 = vmax.f32 %v3403, 0.0
  %v3604 = vmax.f32 %v3406, 0.0
  %v3605 = vmax.f32 %v3411, 0.0
  %v3606 = vmax.f32 %v3414, 0.0
  %v3607 = vmax.f32 %v3419, 0.0
  %v3608 = vmax.f32 %v3422, 0.0
  %v3609 = vmax.f32 %v3427, 0.0
  %v3610 = vmax.f32 %v3430, 0.0
  %v3611 = vmax.f32 %v3435, 0.0
  %v3612 = vmax.f32 %v3438, 0.0
  %v3613 = vmax.f32 %v3443, 0.0
  %v3614 = vmax.f32 %v3446, 0.0
  %v3615 = vmax.f32 %v3451, 0.0
  %v3616 = vmax.f32 %v3454, 0.0
  %v3617 = vmax.f32 %v3459, 0.0
  %v3618 = vmax.f32 %v3462, 0.0
  %v3619 = vmax.f32 %v3467, 0.0
  %v3620 = vmax.f32 %v3470, 0.0
  %v3621 = vmax.f32 %v3475, 0.0
  %v3622 = vmax.f32 %v3478, 0.0
  %v3623 = vmax.f32 %v3483, 0.0
  %v3624 = vmax.f32 %v3486, 0.0
  %v3625 = vmax.f32 %v3491, 0.0
  %v3626 = vmax.f32 %v3494, 0.0
  %v3627 = vmax.f32 %v3499, 0.0
  %v3628 = vmax.f32 %v3502, 0.0
  %v3629 = vmax.f32 %v3507, 0.0
  %v3630 = vmax.f32 %v3510, 0.0
  %v3631 = vmax.f32 %v3515, 0.0
  %v3632 = vmax.f32 %v3518, 0.0
  %v3633 = vmax.f32 %v3523, 0.0
  %v3634 = vmax.f32 %v3526, 0.0
  %v3635 = vmax.f32 %v3531, 0.0
  %v3636 = vmax.f32 %v3534, 0.0
  %v3637 = vmax.f32 %v3539, 0.0
  %v3638 = vmax.f32 %v3542, 0.0
  %v3639 = vmax.f32 %v3547, 0.0
  %v3640 = vmax.f32 %v3550, 0.0
  %v3641 = vmax.f32 %v3555, 0.0
  %v3642 = vmax.f32 %v3558, 0.0
  %v3643 = vmax.f32 %v3563, 0.0
  %v3644 = vmax.f32 %v3566, 0.0
  %v3645 = vmax.f32 %v3571, 0.0
  %v3646 = vmax.f32 %v3574, 0.0
  %v3647 = vmax.f32 %v3579, 0.0
  %v3648 = vmax.f32 %v3582, 0.0
  %v3649 = vmax.f32 %v3585, %v3587
  %v3650 = vmax.f32 %v3586, %v3588
  %v3651 = vmax.f32 %v3589, %v3591
  %v3652 = vmax.f32 %v3590, %v3592
  %v3653 = vmax.f32 %v3593, %v3595
  %v3654 = vmax.f32 %v3594, %v3596
  %v3655 = vmax.f32 %v3597, %v3599
  %v3656 = vmax.f32 %v3598, %v3600
  %v3657 = vmax.f32 %v3601, %v3603
  %v3658 = vmax.f32 %v3602, %v3604
  %v3659 = vmax.f32 %v3605, %v3607
  %v3660 = vmax.f32 %v3606, %v3608
  %v3661 = vmax.f32 %v3609, %v3611
  %v3662 = vmax.f32 %v3610, %v3612
  %v3663 = vmax.f32 %v3613, %v3615
  %v3664 = vmax.f32 %v3614, %v3616
  %v3665 = vmax.f32 %v3617, %v3619
  %v3666 = vmax.f32 %v3618, %v3620
  %v3667 = vmax.f32 %v3621, %v3623
  %v3668 = vmax.f32 %v3622, %v3624
  %v3669 = vmax.f32 %v3625, %v3627
  %v3670 = vmax.f32 %v3626, %v3628
  %v3671 = vmax.f32 %v3629, %v3631
  %v3672 = vmax.f32 %v3630, %v3632
  %v3673 = vmax.f32 %v3633, %v3635
  %v3674 = vmax.f32 %v3634, %v3636
  %v3675 = vmax.f32 %v3637, %v3639
  %v3676 = vmax.f32 %v3638, %v3640
  %v3677 = vmax.f32 %v3641, %v3643
  %v3678 = vmax.f32 %v3642, %v3644
  %v3679 = vmax.f32 %v3645, %v3647
  %v3680 = vmax.f32 %v3646, %v3648
  %v3713 = vcombine.high %v3649, %v3649
  %v3715 = vunpack.c.l.s4 1983009808
  %v3716 = vunpack.c.0.s8 %v3715
  %v3717 = vlaneseq
  %v3718 = vshrl.u32 %v3717, 7
  %v3719 = vsub.s32 %v3716, %v3718
  %v3720 = vrot.slane %v3649, %v3719
  %v3722 = vunpack.c.l.s4 1983009808
  %v3723 = vunpack.c.0.s8 %v3722
  %v3724 = vlaneseq
  %v3725 = vshrl.u32 %v3724, 7
  %v3726 = vsub.s32 %v3723, %v3725
  %v3727 = vrot.slane %v3713, %v3726
  %v3728 = vcombine.high %v3720, %v3720
  %v3729 = vcombine.high %v3727, %v3727
  %v3730 = vcombine.high %v3650, %v3650
  %v3732 = vunpack.c.l.s4 1983009808
  %v3733 = vunpack.c.0.s8 %v3732
  %v3734 = vlaneseq
  %v3735 = vshrl.u32 %v3734, 7
  %v3736 = vsub.s32 %v3733, %v3735
  %v3737 = vrot.slane %v3650, %v3736
  %v3739 = vunpack.c.l.s4 1983009808
  %v3740 = vunpack.c.0.s8 %v3739
  %v3741 = vlaneseq
  %v3742 = vshrl.u32 %v3741, 7
  %v3743 = vsub.s32 %v3740, %v3742
  %v3744 = vrot.slane %v3730, %v3743
  %v3745 = vcombine.high %v3737, %v3737
  %v3746 = vcombine.high %v3744, %v3744
  %v3747 = vcombine.high %v3651, %v3651
  %v3749 = vunpack.c.l.s4 1983009808
  %v3750 = vunpack.c.0.s8 %v3749
  %v3751 = vlaneseq
  %v3752 = vshrl.u32 %v3751, 7
  %v3753 = vsub.s32 %v3750, %v3752
  %v3754 = vrot.slane %v3651, %v3753
  %v3756 = vunpack.c.l.s4 1983009808
  %v3757 = vunpack.c.0.s8 %v3756
  %v3758 = vlaneseq
  %v3759 = vshrl.u32 %v3758, 7
  %v3760 = vsub.s32 %v3757, %v3759
  %v3761 = vrot.slane %v3747, %v3760
  %v3762 = vcombine.high %v3754, %v3754
  %v3763 = vcombine.high %v3761, %v3761
  %v3764 = vcombine.high %v3652, %v3652
  %v3766 = vunpack.c.l.s4 1983009808
  %v3767 = vunpack.c.0.s8 %v3766
  %v3768 = vlaneseq
  %v3769 = vshrl.u32 %v3768, 7
  %v3770 = vsub.s32 %v3767, %v3769
  %v3771 = vrot.slane %v3652, %v3770
  %v3773 = vunpack.c.l.s4 1983009808
  %v3774 = vunpack.c.0.s8 %v3773
  %v3775 = vlaneseq
  %v3776 = vshrl.u32 %v3775, 7
  %v3777 = vsub.s32 %v3774, %v3776
  %v3778 = vrot.slane %v3764, %v3777
  %v3779 = vcombine.high %v3771, %v3771
  %v3780 = vcombine.high %v3778, %v3778
  %v3781 = vcombine.high %v3653, %v3653
  %v3783 = vunpack.c.l.s4 1983009808
  %v3784 = vunpack.c.0.s8 %v3783
  %v3785 = vlaneseq
  %v3786 = vshrl.u32 %v3785, 7
  %v3787 = vsub.s32 %v3784, %v3786
  %v3788 = vrot.slane %v3653, %v3787
  %v3790 = vunpack.c.l.s4 1983009808
  %v3791 = vunpack.c.0.s8 %v3790
  %v3792 = vlaneseq
  %v3793 = vshrl.u32 %v3792, 7
  %v3794 = vsub.s32 %v3791, %v3793
  %v3795 = vrot.slane %v3781, %v3794
  %v3796 = vcombine.high %v3788, %v3788
  %v3797 = vcombine.high %v3795, %v3795
  %v3798 = vcombine.high %v3654, %v3654
  %v3800 = vunpack.c.l.s4 1983009808
  %v3801 = vunpack.c.0.s8 %v3800
  %v3802 = vlaneseq
  %v3803 = vshrl.u32 %v3802, 7
  %v3804 = vsub.s32 %v3801, %v3803
  %v3805 = vrot.slane %v3654, %v3804
  %v3807 = vunpack.c.l.s4 1983009808
  %v3808 = vunpack.c.0.s8 %v3807
  %v3809 = vlaneseq
  %v3810 = vshrl.u32 %v3809, 7
  %v3811 = vsub.s32 %v3808, %v3810
  %v3812 = vrot.slane %v3798, %v3811
  %v3813 = vcombine.high %v3805, %v3805
  %v3814 = vcombine.high %v3812, %v3812
  %v3815 = vcombine.high %v3655, %v3655
  %v3817 = vunpack.c.l.s4 1983009808
  %v3818 = vunpack.c.0.s8 %v3817
  %v3819 = vlaneseq
  %v3820 = vshrl.u32 %v3819, 7
  %v3821 = vsub.s32 %v3818, %v3820
  %v3822 = vrot.slane %v3655, %v3821
  %v3824 = vunpack.c.l.s4 1983009808
  %v3825 = vunpack.c.0.s8 %v3824
  %v3826 = vlaneseq
  %v3827 = vshrl.u32 %v3826, 7
  %v3828 = vsub.s32 %v3825, %v3827
  %v3829 = vrot.slane %v3815, %v3828
  %v3830 = vcombine.high %v3822, %v3822
  %v3831 = vcombine.high %v3829, %v3829
  %v3832 = vcombine.high %v3656, %v3656
  %v3834 = vunpack.c.l.s4 1983009808
  %v3835 = vunpack.c.0.s8 %v3834
  %v3836 = vlaneseq
  %v3837 = vshrl.u32 %v3836, 7
  %v3838 = vsub.s32 %v3835, %v3837
  %v3839 = vrot.slane %v3656, %v3838
  %v3841 = vunpack.c.l.s4 1983009808
  %v3842 = vunpack.c.0.s8 %v3841
  %v3843 = vlaneseq
  %v3844 = vshrl.u32 %v3843, 7
  %v3845 = vsub.s32 %v3842, %v3844
  %v3846 = vrot.slane %v3832, %v3845
  %v3847 = vcombine.high %v3839, %v3839
  %v3848 = vcombine.high %v3846, %v3846
  %v3849 = vcombine.high %v3657, %v3657
  %v3851 = vunpack.c.l.s4 1983009808
  %v3852 = vunpack.c.0.s8 %v3851
  %v3853 = vlaneseq
  %v3854 = vshrl.u32 %v3853, 7
  %v3855 = vsub.s32 %v3852, %v3854
  %v3856 = vrot.slane %v3657, %v3855
  %v3858 = vunpack.c.l.s4 1983009808
  %v3859 = vunpack.c.0.s8 %v3858
  %v3860 = vlaneseq
  %v3861 = vshrl.u32 %v3860, 7
  %v3862 = vsub.s32 %v3859, %v3861
  %v3863 = vrot.slane %v3849, %v3862
  %v3864 = vcombine.high %v3856, %v3856
  %v3865 = vcombine.high %v3863, %v3863
  %v3866 = vcombine.high %v3658, %v3658
  %v3868 = vunpack.c.l.s4 1983009808
  %v3869 = vunpack.c.0.s8 %v3868
  %v3870 = vlaneseq
  %v3871 = vshrl.u32 %v3870, 7
  %v3872 = vsub.s32 %v3869, %v3871
  %v3873 = vrot.slane %v3658, %v3872
  %v3875 = vunpack.c.l.s4 1983009808
  %v3876 = vunpack.c.0.s8 %v3875
  %v3877 = vlaneseq
  %v3878 = vshrl.u32 %v3877, 7
  %v3879 = vsub.s32 %v3876, %v3878
  %v3880 = vrot.slane %v3866, %v3879
  %v3881 = vcombine.high %v3873, %v3873
  %v3882 = vcombine.high %v3880, %v3880
  %v3883 = vcombine.high %v3659, %v3659
  %v3885 = vunpack.c.l.s4 1983009808
  %v3886 = vunpack.c.0.s8 %v3885
  %v3887 = vlaneseq
  %v3888 = vshrl.u32 %v3887, 7
  %v3889 = vsub.s32 %v3886, %v3888
  %v3890 = vrot.slane %v3659, %v3889
  %v3892 = vunpack.c.l.s4 1983009808
  %v3893 = vunpack.c.0.s8 %v3892
  %v3894 = vlaneseq
  %v3895 = vshrl.u32 %v3894, 7
  %v3896 = vsub.s32 %v3893, %v3895
  %v3897 = vrot.slane %v3883, %v3896
  %v3898 = vcombine.high %v3890, %v3890
  %v3899 = vcombine.high %v3897, %v3897
  %v3900 = vcombine.high %v3660, %v3660
  %v3902 = vunpack.c.l.s4 1983009808
  %v3903 = vunpack.c.0.s8 %v3902
  %v3904 = vlaneseq
  %v3905 = vshrl.u32 %v3904, 7
  %v3906 = vsub.s32 %v3903, %v3905
  %v3907 = vrot.slane %v3660, %v3906
  %v3909 = vunpack.c.l.s4 1983009808
  %v3910 = vunpack.c.0.s8 %v3909
  %v3911 = vlaneseq
  %v3912 = vshrl.u32 %v3911, 7
  %v3913 = vsub.s32 %v3910, %v3912
  %v3914 = vrot.slane %v3900, %v3913
  %v3915 = vcombine.high %v3907, %v3907
  %v3916 = vcombine.high %v3914, %v3914
  %v3917 = vcombine.high %v3661, %v3661
  %v3919 = vunpack.c.l.s4 1983009808
  %v3920 = vunpack.c.0.s8 %v3919
  %v3921 = vlaneseq
  %v3922 = vshrl.u32 %v3921, 7
  %v3923 = vsub.s32 %v3920, %v3922
  %v3924 = vrot.slane %v3661, %v3923
  %v3926 = vunpack.c.l.s4 1983009808
  %v3927 = vunpack.c.0.s8 %v3926
  %v3928 = vlaneseq
  %v3929 = vshrl.u32 %v3928, 7
  %v3930 = vsub.s32 %v3927, %v3929
  %v3931 = vrot.slane %v3917, %v3930
  %v3932 = vcombine.high %v3924, %v3924
  %v3933 = vcombine.high %v3931, %v3931
  %v3934 = vcombine.high %v3662, %v3662
  %v3936 = vunpack.c.l.s4 1983009808
  %v3937 = vunpack.c.0.s8 %v3936
  %v3938 = vlaneseq
  %v3939 = vshrl.u32 %v3938, 7
  %v3940 = vsub.s32 %v3937, %v3939
  %v3941 = vrot.slane %v3662, %v3940
  %v3943 = vunpack.c.l.s4 1983009808
  %v3944 = vunpack.c.0.s8 %v3943
  %v3945 = vlaneseq
  %v3946 = vshrl.u32 %v3945, 7
  %v3947 = vsub.s32 %v3944, %v3946
  %v3948 = vrot.slane %v3934, %v3947
  %v3949 = vcombine.high %v3941, %v3941
  %v3950 = vcombine.high %v3948, %v3948
  %v3951 = vcombine.high %v3663, %v3663
  %v3953 = vunpack.c.l.s4 1983009808
  %v3954 = vunpack.c.0.s8 %v3953
  %v3955 = vlaneseq
  %v3956 = vshrl.u32 %v3955, 7
  %v3957 = vsub.s32 %v3954, %v3956
  %v3958 = vrot.slane %v3663, %v3957
  %v3960 = vunpack.c.l.s4 1983009808
  %v3961 = vunpack.c.0.s8 %v3960
  %v3962 = vlaneseq
  %v3963 = vshrl.u32 %v3962, 7
  %v3964 = vsub.s32 %v3961, %v3963
  %v3965 = vrot.slane %v3951, %v3964
  %v3966 = vcombine.high %v3958, %v3958
  %v3967 = vcombine.high %v3965, %v3965
  %v3968 = vcombine.high %v3664, %v3664
  %v3970 = vunpack.c.l.s4 1983009808
  %v3971 = vunpack.c.0.s8 %v3970
  %v3972 = vlaneseq
  %v3973 = vshrl.u32 %v3972, 7
  %v3974 = vsub.s32 %v3971, %v3973
  %v3975 = vrot.slane %v3664, %v3974
  %v3977 = vunpack.c.l.s4 1983009808
  %v3978 = vunpack.c.0.s8 %v3977
  %v3979 = vlaneseq
  %v3980 = vshrl.u32 %v3979, 7
  %v3981 = vsub.s32 %v3978, %v3980
  %v3982 = vrot.slane %v3968, %v3981
  %v3983 = vcombine.high %v3975, %v3975
  %v3984 = vcombine.high %v3982, %v3982
  %v3985 = vcombine.high %v3665, %v3665
  %v3987 = vunpack.c.l.s4 1983009808
  %v3988 = vunpack.c.0.s8 %v3987
  %v3989 = vlaneseq
  %v3990 = vshrl.u32 %v3989, 7
  %v3991 = vsub.s32 %v3988, %v3990
  %v3992 = vrot.slane %v3665, %v3991
  %v3994 = vunpack.c.l.s4 1983009808
  %v3995 = vunpack.c.0.s8 %v3994
  %v3996 = vlaneseq
  %v3997 = vshrl.u32 %v3996, 7
  %v3998 = vsub.s32 %v3995, %v3997
  %v3999 = vrot.slane %v3985, %v3998
  %v4000 = vcombine.high %v3992, %v3992
  %v4001 = vcombine.high %v3999, %v3999
  %v4002 = vcombine.high %v3666, %v3666
  %v4004 = vunpack.c.l.s4 1983009808
  %v4005 = vunpack.c.0.s8 %v4004
  %v4006 = vlaneseq
  %v4007 = vshrl.u32 %v4006, 7
  %v4008 = vsub.s32 %v4005, %v4007
  %v4009 = vrot.slane %v3666, %v4008
  %v4011 = vunpack.c.l.s4 1983009808
  %v4012 = vunpack.c.0.s8 %v4011
  %v4013 = vlaneseq
  %v4014 = vshrl.u32 %v4013, 7
  %v4015 = vsub.s32 %v4012, %v4014
  %v4016 = vrot.slane %v4002, %v4015
  %v4017 = vcombine.high %v4009, %v4009
  %v4018 = vcombine.high %v4016, %v4016
  %v4019 = vcombine.high %v3667, %v3667
  %v4021 = vunpack.c.l.s4 1983009808
  %v4022 = vunpack.c.0.s8 %v4021
  %v4023 = vlaneseq
  %v4024 = vshrl.u32 %v4023, 7
  %v4025 = vsub.s32 %v4022, %v4024
  %v4026 = vrot.slane %v3667, %v4025
  %v4028 = vunpack.c.l.s4 1983009808
  %v4029 = vunpack.c.0.s8 %v4028
  %v4030 = vlaneseq
  %v4031 = vshrl.u32 %v4030, 7
  %v4032 = vsub.s32 %v4029, %v4031
  %v4033 = vrot.slane %v4019, %v4032
  %v4034 = vcombine.high %v4026, %v4026
  %v4035 = vcombine.high %v4033, %v4033
  %v4036 = vcombine.high %v3668, %v3668
  %v4038 = vunpack.c.l.s4 1983009808
  %v4039 = vunpack.c.0.s8 %v4038
  %v4040 = vlaneseq
  %v4041 = vshrl.u32 %v4040, 7
  %v4042 = vsub.s32 %v4039, %v4041
  %v4043 = vrot.slane %v3668, %v4042
  %v4045 = vunpack.c.l.s4 1983009808
  %v4046 = vunpack.c.0.s8 %v4045
  %v4047 = vlaneseq
  %v4048 = vshrl.u32 %v4047, 7
  %v4049 = vsub.s32 %v4046, %v4048
  %v4050 = vrot.slane %v4036, %v4049
  %v4051 = vcombine.high %v4043, %v4043
  %v4052 = vcombine.high %v4050, %v4050
  %v4053 = vcombine.high %v3669, %v3669
  %v4055 = vunpack.c.l.s4 1983009808
  %v4056 = vunpack.c.0.s8 %v4055
  %v4057 = vlaneseq
  %v4058 = vshrl.u32 %v4057, 7
  %v4059 = vsub.s32 %v4056, %v4058
  %v4060 = vrot.slane %v3669, %v4059
  %v4062 = vunpack.c.l.s4 1983009808
  %v4063 = vunpack.c.0.s8 %v4062
  %v4064 = vlaneseq
  %v4065 = vshrl.u32 %v4064, 7
  %v4066 = vsub.s32 %v4063, %v4065
  %v4067 = vrot.slane %v4053, %v4066
  %v4068 = vcombine.high %v4060, %v4060
  %v4069 = vcombine.high %v4067, %v4067
  %v4070 = vcombine.high %v3670, %v3670
  %v4072 = vunpack.c.l.s4 1983009808
  %v4073 = vunpack.c.0.s8 %v4072
  %v4074 = vlaneseq
  %v4075 = vshrl.u32 %v4074, 7
  %v4076 = vsub.s32 %v4073, %v4075
  %v4077 = vrot.slane %v3670, %v4076
  %v4079 = vunpack.c.l.s4 1983009808
  %v4080 = vunpack.c.0.s8 %v4079
  %v4081 = vlaneseq
  %v4082 = vshrl.u32 %v4081, 7
  %v4083 = vsub.s32 %v4080, %v4082
  %v4084 = vrot.slane %v4070, %v4083
  %v4085 = vcombine.high %v4077, %v4077
  %v4086 = vcombine.high %v4084, %v4084
  %v4087 = vcombine.high %v3671, %v3671
  %v4089 = vunpack.c.l.s4 1983009808
  %v4090 = vunpack.c.0.s8 %v4089
  %v4091 = vlaneseq
  %v4092 = vshrl.u32 %v4091, 7
  %v4093 = vsub.s32 %v4090, %v4092
  %v4094 = vrot.slane %v3671, %v4093
  %v4096 = vunpack.c.l.s4 1983009808
  %v4097 = vunpack.c.0.s8 %v4096
  %v4098 = vlaneseq
  %v4099 = vshrl.u32 %v4098, 7
  %v4100 = vsub.s32 %v4097, %v4099
  %v4101 = vrot.slane %v4087, %v4100
  %v4102 = vcombine.high %v4094, %v4094
  %v4103 = vcombine.high %v4101, %v4101
  %v4104 = vcombine.high %v3672, %v3672
  %v4106 = vunpack.c.l.s4 1983009808
  %v4107 = vunpack.c.0.s8 %v4106
  %v4108 = vlaneseq
  %v4109 = vshrl.u32 %v4108, 7
  %v4110 = vsub.s32 %v4107, %v4109
  %v4111 = vrot.slane %v3672, %v4110
  %v4113 = vunpack.c.l.s4 1983009808
  %v4114 = vunpack.c.0.s8 %v4113
  %v4115 = vlaneseq
  %v4116 = vshrl.u32 %v4115, 7
  %v4117 = vsub.s32 %v4114, %v4116
  %v4118 = vrot.slane %v4104, %v4117
  %v4119 = vcombine.high %v4111, %v4111
  %v4120 = vcombine.high %v4118, %v4118
  %v4121 = vcombine.high %v3673, %v3673
  %v4123 = vunpack.c.l.s4 1983009808
  %v4124 = vunpack.c.0.s8 %v4123
  %v4125 = vlaneseq
  %v4126 = vshrl.u32 %v4125, 7
  %v4127 = vsub.s32 %v4124, %v4126
  %v4128 = vrot.slane %v3673, %v4127
  %v4130 = vunpack.c.l.s4 1983009808
  %v4131 = vunpack.c.0.s8 %v4130
  %v4132 = vlaneseq
  %v4133 = vshrl.u32 %v4132, 7
  %v4134 = vsub.s32 %v4131, %v4133
  %v4135 = vrot.slane %v4121, %v4134
  %v4136 = vcombine.high %v4128, %v4128
  %v4137 = vcombine.high %v4135, %v4135
  %v4138 = vcombine.high %v3674, %v3674
  %v4140 = vunpack.c.l.s4 1983009808
  %v4141 = vunpack.c.0.s8 %v4140
  %v4142 = vlaneseq
  %v4143 = vshrl.u32 %v4142, 7
  %v4144 = vsub.s32 %v4141, %v4143
  %v4145 = vrot.slane %v3674, %v4144
  %v4147 = vunpack.c.l.s4 1983009808
  %v4148 = vunpack.c.0.s8 %v4147
  %v4149 = vlaneseq
  %v4150 = vshrl.u32 %v4149, 7
  %v4151 = vsub.s32 %v4148, %v4150
  %v4152 = vrot.slane %v4138, %v4151
  %v4153 = vcombine.high %v4145, %v4145
  %v4154 = vcombine.high %v4152, %v4152
  %v4155 = vcombine.high %v3675, %v3675
  %v4157 = vunpack.c.l.s4 1983009808
  %v4158 = vunpack.c.0.s8 %v4157
  %v4159 = vlaneseq
  %v4160 = vshrl.u32 %v4159, 7
  %v4161 = vsub.s32 %v4158, %v4160
  %v4162 = vrot.slane %v3675, %v4161
  %v4164 = vunpack.c.l.s4 1983009808
  %v4165 = vunpack.c.0.s8 %v4164
  %v4166 = vlaneseq
  %v4167 = vshrl.u32 %v4166, 7
  %v4168 = vsub.s32 %v4165, %v4167
  %v4169 = vrot.slane %v4155, %v4168
  %v4170 = vcombine.high %v4162, %v4162
  %v4171 = vcombine.high %v4169, %v4169
  %v4172 = vcombine.high %v3676, %v3676
  %v4174 = vunpack.c.l.s4 1983009808
  %v4175 = vunpack.c.0.s8 %v4174
  %v4176 = vlaneseq
  %v4177 = vshrl.u32 %v4176, 7
  %v4178 = vsub.s32 %v4175, %v4177
  %v4179 = vrot.slane %v3676, %v4178
  %v4181 = vunpack.c.l.s4 1983009808
  %v4182 = vunpack.c.0.s8 %v4181
  %v4183 = vlaneseq
  %v4184 = vshrl.u32 %v4183, 7
  %v4185 = vsub.s32 %v4182, %v4184
  %v4186 = vrot.slane %v4172, %v4185
  %v4187 = vcombine.high %v4179, %v4179
  %v4188 = vcombine.high %v4186, %v4186
  %v4189 = vcombine.high %v3677, %v3677
  %v4191 = vunpack.c.l.s4 1983009808
  %v4192 = vunpack.c.0.s8 %v4191
  %v4193 = vlaneseq
  %v4194 = vshrl.u32 %v4193, 7
  %v4195 = vsub.s32 %v4192, %v4194
  %v4196 = vrot.slane %v3677, %v4195
  %v4198 = vunpack.c.l.s4 1983009808
  %v4199 = vunpack.c.0.s8 %v4198
  %v4200 = vlaneseq
  %v4201 = vshrl.u32 %v4200, 7
  %v4202 = vsub.s32 %v4199, %v4201
  %v4203 = vrot.slane %v4189, %v4202
  %v4204 = vcombine.high %v4196, %v4196
  %v4205 = vcombine.high %v4203, %v4203
  %v4206 = vcombine.high %v3678, %v3678
  %v4208 = vunpack.c.l.s4 1983009808
  %v4209 = vunpack.c.0.s8 %v4208
  %v4210 = vlaneseq
  %v4211 = vshrl.u32 %v4210, 7
  %v4212 = vsub.s32 %v4209, %v4211
  %v4213 = vrot.slane %v3678, %v4212
  %v4215 = vunpack.c.l.s4 1983009808
  %v4216 = vunpack.c.0.s8 %v4215
  %v4217 = vlaneseq
  %v4218 = vshrl.u32 %v4217, 7
  %v4219 = vsub.s32 %v4216, %v4218
  %v4220 = vrot.slane %v4206, %v4219
  %v4221 = vcombine.high %v4213, %v4213
  %v4222 = vcombine.high %v4220, %v4220
  %v4223 = vcombine.high %v3679, %v3679
  %v4225 = vunpack.c.l.s4 1983009808
  %v4226 = vunpack.c.0.s8 %v4225
  %v4227 = vlaneseq
  %v4228 = vshrl.u32 %v4227, 7
  %v4229 = vsub.s32 %v4226, %v4228
  %v4230 = vrot.slane %v3679, %v4229
  %v4232 = vunpack.c.l.s4 1983009808
  %v4233 = vunpack.c.0.s8 %v4232
  %v4234 = vlaneseq
  %v4235 = vshrl.u32 %v4234, 7
  %v4236 = vsub.s32 %v4233, %v4235
  %v4237 = vrot.slane %v4223, %v4236
  %v4238 = vcombine.high %v4230, %v4230
  %v4239 = vcombine.high %v4237, %v4237
  %v4240 = vcombine.high %v3680, %v3680
  %v4242 = vunpack.c.l.s4 1983009808
  %v4243 = vunpack.c.0.s8 %v4242
  %v4244 = vlaneseq
  %v4245 = vshrl.u32 %v4244, 7
  %v4246 = vsub.s32 %v4243, %v4245
  %v4247 = vrot.slane %v3680, %v4246
  %v4249 = vunpack.c.l.s4 1983009808
  %v4250 = vunpack.c.0.s8 %v4249
  %v4251 = vlaneseq
  %v4252 = vshrl.u32 %v4251, 7
  %v4253 = vsub.s32 %v4250, %v4252
  %v4254 = vrot.slane %v4240, %v4253
  %v4255 = vcombine.high %v4247, %v4247
  %v4256 = vcombine.high %v4254, %v4254
  %v4385 = vrot.slane %v3720, 7
  %v4386 = vrot.slane %v4385, 2
  %v4387 = vrot.slane %v3728, 7
  %v4388 = vrot.slane %v4387, 2
  %v4389 = vrot.slane %v3727, 7
  %v4390 = vrot.slane %v4389, 2
  %v4391 = vrot.slane %v3729, 7
  %v4392 = vrot.slane %v4391, 2
  %v4393 = vrot.slane %v3737, 7
  %v4394 = vrot.slane %v4393, 2
  %v4395 = vrot.slane %v3745, 7
  %v4396 = vrot.slane %v4395, 2
  %v4397 = vrot.slane %v3744, 7
  %v4398 = vrot.slane %v4397, 2
  %v4399 = vrot.slane %v3746, 7
  %v4400 = vrot.slane %v4399, 2
  %v4401 = vrot.slane %v3754, 7
  %v4402 = vrot.slane %v4401, 2
  %v4403 = vrot.slane %v3762, 7
  %v4404 = vrot.slane %v4403, 2
  %v4405 = vrot.slane %v3761, 7
  %v4406 = vrot.slane %v4405, 2
  %v4407 = vrot.slane %v3763, 7
  %v4408 = vrot.slane %v4407, 2
  %v4409 = vrot.slane %v3771, 7
  %v4410 = vrot.slane %v4409, 2
  %v4411 = vrot.slane %v3779, 7
  %v4412 = vrot.slane %v4411, 2
  %v4413 = vrot.slane %v3778, 7
  %v4414 = vrot.slane %v4413, 2
  %v4415 = vrot.slane %v3780, 7
  %v4416 = vrot.slane %v4415, 2
  %v4417 = vrot.slane %v3788, 7
  %v4418 = vrot.slane %v4417, 2
  %v4419 = vrot.slane %v3796, 7
  %v4420 = vrot.slane %v4419, 2
  %v4421 = vrot.slane %v3795, 7
  %v4422 = vrot.slane %v4421, 2
  %v4423 = vrot.slane %v3797, 7
  %v4424 = vrot.slane %v4423, 2
  %v4425 = vrot.slane %v3805, 7
  %v4426 = vrot.slane %v4425, 2
  %v4427 = vrot.slane %v3813, 7
  %v4428 = vrot.slane %v4427, 2
  %v4429 = vrot.slane %v3812, 7
  %v4430 = vrot.slane %v4429, 2
  %v4431 = vrot.slane %v3814, 7
  %v4432 = vrot.slane %v4431, 2
  %v4433 = vrot.slane %v3822, 7
  %v4434 = vrot.slane %v4433, 2
  %v4435 = vrot.slane %v3830, 7
  %v4436 = vrot.slane %v4435, 2
  %v4437 = vrot.slane %v3829, 7
  %v4438 = vrot.slane %v4437, 2
  %v4439 = vrot.slane %v3831, 7
  %v4440 = vrot.slane %v4439, 2
  %v4441 = vrot.slane %v3839, 7
  %v4442 = vrot.slane %v4441, 2
  %v4443 = vrot.slane %v3847, 7
  %v4444 = vrot.slane %v4443, 2
  %v4445 = vrot.slane %v3846, 7
  %v4446 = vrot.slane %v4445, 2
  %v4447 = vrot.slane %v3848, 7
  %v4448 = vrot.slane %v4447, 2
  %v4449 = vrot.slane %v3856, 7
  %v4450 = vrot.slane %v4449, 2
  %v4451 = vrot.slane %v3864, 7
  %v4452 = vrot.slane %v4451, 2
  %v4453 = vrot.slane %v3863, 7
  %v4454 = vrot.slane %v4453, 2
  %v4455 = vrot.slane %v3865, 7
  %v4456 = vrot.slane %v4455, 2
  %v4457 = vrot.slane %v3873, 7
  %v4458 = vrot.slane %v4457, 2
  %v4459 = vrot.slane %v3881, 7
  %v4460 = vrot.slane %v4459, 2
  %v4461 = vrot.slane %v3880, 7
  %v4462 = vrot.slane %v4461, 2
  %v4463 = vrot.slane %v3882, 7
  %v4464 = vrot.slane %v4463, 2
  %v4465 = vrot.slane %v3890, 7
  %v4466 = vrot.slane %v4465, 2
  %v4467 = vrot.slane %v3898, 7
  %v4468 = vrot.slane %v4467, 2
  %v4469 = vrot.slane %v3897, 7
  %v4470 = vrot.slane %v4469, 2
  %v4471 = vrot.slane %v3899, 7
  %v4472 = vrot.slane %v4471, 2
  %v4473 = vrot.slane %v3907, 7
  %v4474 = vrot.slane %v4473, 2
  %v4475 = vrot.slane %v3915, 7
  %v4476 = vrot.slane %v4475, 2
  %v4477 = vrot.slane %v3914, 7
  %v4478 = vrot.slane %v4477, 2
  %v4479 = vrot.slane %v3916, 7
  %v4480 = vrot.slane %v4479, 2
  %v4481 = vrot.slane %v3924, 7
  %v4482 = vrot.slane %v4481, 2
  %v4483 = vrot.slane %v3932, 7
  %v4484 = vrot.slane %v4483, 2
  %v4485 = vrot.slane %v3931, 7
  %v4486 = vrot.slane %v4485, 2
  %v4487 = vrot.slane %v3933, 7
  %v4488 = vrot.slane %v4487, 2
  %v4489 = vrot.slane %v3941, 7
  %v4490 = vrot.slane %v4489, 2
  %v4491 = vrot.slane %v3949, 7
  %v4492 = vrot.slane %v4491, 2
  %v4493 = vrot.slane %v3948, 7
  %v4494 = vrot.slane %v4493, 2
  %v4495 = vrot.slane %v3950, 7
  %v4496 = vrot.slane %v4495, 2
  %v4497 = vrot.slane %v3958, 7
  %v4498 = vrot.slane %v4497, 2
  %v4499 = vrot.slane %v3966, 7
  %v4500 = vrot.slane %v4499, 2
  %v4501 = vrot.slane %v3965, 7
  %v4502 = vrot.slane %v4501, 2
  %v4503 = vrot.slane %v3967, 7
  %v4504 = vrot.slane %v4503, 2
  %v4505 = vrot.slane %v3975, 7
  %v4506 = vrot.slane %v4505, 2
  %v4507 = vrot.slane %v3983, 7
  %v4508 = vrot.slane %v4507, 2
  %v4509 = vrot.slane %v3982, 7
  %v4510 = vrot.slane %v4509, 2
  %v4511 = vrot.slane %v3984, 7
  %v4512 = vrot.slane %v4511, 2
  %v4513 = vrot.slane %v3992, 7
  %v4514 = vrot.slane %v4513, 2
  %v4515 = vrot.slane %v4000, 7
  %v4516 = vrot.slane %v4515, 2
  %v4517 = vrot.slane %v3999, 7
  %v4518 = vrot.slane %v4517, 2
  %v4519 = vrot.slane %v4001, 7
  %v4520 = vrot.slane %v4519, 2
  %v4521 = vrot.slane %v4009, 7
  %v4522 = vrot.slane %v4521, 2
  %v4523 = vrot.slane %v4017, 7
  %v4524 = vrot.slane %v4523, 2
  %v4525 = vrot.slane %v4016, 7
  %v4526 = vrot.slane %v4525, 2
  %v4527 = vrot.slane %v4018, 7
  %v4528 = vrot.slane %v4527, 2
  %v4529 = vrot.slane %v4026, 7
  %v4530 = vrot.slane %v4529, 2
  %v4531 = vrot.slane %v4034, 7
  %v4532 = vrot.slane %v4531, 2
  %v4533 = vrot.slane %v4033, 7
  %v4534 = vrot.slane %v4533, 2
  %v4535 = vrot.slane %v4035, 7
  %v4536 = vrot.slane %v4535, 2
  %v4537 = vrot.slane %v4043, 7
  %v4538 = vrot.slane %v4537, 2
  %v4539 = vrot.slane %v4051, 7
  %v4540 = vrot.slane %v4539, 2
  %v4541 = vrot.slane %v4050, 7
  %v4542 = vrot.slane %v4541, 2
  %v4543 = vrot.slane %v4052, 7
  %v4544 = vrot.slane %v4543, 2
  %v4545 = vrot.slane %v4060, 7
  %v4546 = vrot.slane %v4545, 2
  %v4547 = vrot.slane %v4068, 7
  %v4548 = vrot.slane %v4547, 2
  %v4549 = vrot.slane %v4067, 7
  %v4550 = vrot.slane %v4549, 2
  %v4551 = vrot.slane %v4069, 7
  %v4552 = vrot.slane %v4551, 2
  %v4553 = vrot.slane %v4077, 7
  %v4554 = vrot.slane %v4553, 2
  %v4555 = vrot.slane %v4085, 7
  %v4556 = vrot.slane %v4555, 2
  %v4557 = vrot.slane %v4084, 7
  %v4558 = vrot.slane %v4557, 2
  %v4559 = vrot.slane %v4086, 7
  %v4560 = vrot.slane %v4559, 2
  %v4561 = vrot.slane %v4094, 7
  %v4562 = vrot.slane %v4561, 2
  %v4563 = vrot.slane %v4102, 7
  %v4564 = vrot.slane %v4563, 2
  %v4565 = vrot.slane %v4101, 7
  %v4566 = vrot.slane %v4565, 2
  %v4567 = vrot.slane %v4103, 7
  %v4568 = vrot.slane %v4567, 2
  %v4569 = vrot.slane %v4111, 7
  %v4570 = vrot.slane %v4569, 2
  %v4571 = vrot.slane %v4119, 7
  %v4572 = vrot.slane %v4571, 2
  %v4573 = vrot.slane %v4118, 7
  %v4574 = vrot.slane %v4573, 2
  %v4575 = vrot.slane %v4120, 7
  %v4576 = vrot.slane %v4575, 2
  %v4577 = vrot.slane %v4128, 7
  %v4578 = vrot.slane %v4577, 2
  %v4579 = vrot.slane %v4136, 7
  %v4580 = vrot.slane %v4579, 2
  %v4581 = vrot.slane %v4135, 7
  %v4582 = vrot.slane %v4581, 2
  %v4583 = vrot.slane %v4137, 7
  %v4584 = vrot.slane %v4583, 2
  %v4585 = vrot.slane %v4145, 7
  %v4586 = vrot.slane %v4585, 2
  %v4587 = vrot.slane %v4153, 7
  %v4588 = vrot.slane %v4587, 2
  %v4589 = vrot.slane %v4152, 7
  %v4590 = vrot.slane %v4589, 2
  %v4591 = vrot.slane %v4154, 7
  %v4592 = vrot.slane %v4591, 2
  %v4593 = vrot.slane %v4162, 7
  %v4594 = vrot.slane %v4593, 2
  %v4595 = vrot.slane %v4170, 7
  %v4596 = vrot.slane %v4595, 2
  %v4597 = vrot.slane %v4169, 7
  %v4598 = vrot.slane %v4597, 2
  %v4599 = vrot.slane %v4171, 7
  %v4600 = vrot.slane %v4599, 2
  %v4601 = vrot.slane %v4179, 7
  %v4602 = vrot.slane %v4601, 2
  %v4603 = vrot.slane %v4187, 7
  %v4604 = vrot.slane %v4603, 2
  %v4605 = vrot.slane %v4186, 7
  %v4606 = vrot.slane %v4605, 2
  %v4607 = vrot.slane %v4188, 7
  %v4608 = vrot.slane %v4607, 2
  %v4609 = vrot.slane %v4196, 7
  %v4610 = vrot.slane %v4609, 2
  %v4611 = vrot.slane %v4204, 7
  %v4612 = vrot.slane %v4611, 2
  %v4613 = vrot.slane %v4203, 7
  %v4614 = vrot.slane %v4613, 2
  %v4615 = vrot.slane %v4205, 7
  %v4616 = vrot.slane %v4615, 2
  %v4617 = vrot.slane %v4213, 7
  %v4618 = vrot.slane %v4617, 2
  %v4619 = vrot.slane %v4221, 7
  %v4620 = vrot.slane %v4619, 2
  %v4621 = vrot.slane %v4220, 7
  %v4622 = vrot.slane %v4621, 2
  %v4623 = vrot.slane %v4222, 7
  %v4624 = vrot.slane %v4623, 2
  %v4625 = vrot.slane %v4230, 7
  %v4626 = vrot.slane %v4625, 2
  %v4627 = vrot.slane %v4238, 7
  %v4628 = vrot.slane %v4627, 2
  %v4629 = vrot.slane %v4237, 7
  %v4630 = vrot.slane %v4629, 2
  %v4631 = vrot.slane %v4239, 7
  %v4632 = vrot.slane %v4631, 2
  %v4633 = vrot.slane %v4247, 7
  %v4634 = vrot.slane %v4633, 2
  %v4635 = vrot.slane %v4255, 7
  %v4636 = vrot.slane %v4635, 2
  %v4637 = vrot.slane %v4254, 7
  %v4638 = vrot.slane %v4637, 2
  %v4639 = vrot.slane %v4256, 7
  %v4640 = vrot.slane %v4639, 2
  %v4769 = vmax.f32 %v3720, %v4386
  %v4770 = vmax.f32 %v3728, %v4388
  %v4771 = vmax.f32 %v3727, %v4390
  %v4772 = vmax.f32 %v3729, %v4392
  %v4773 = vmax.f32 %v3737, %v4394
  %v4774 = vmax.f32 %v3745, %v4396
  %v4775 = vmax.f32 %v3744, %v4398
  %v4776 = vmax.f32 %v3746, %v4400
  %v4777 = vmax.f32 %v3754, %v4402
  %v4778 = vmax.f32 %v3762, %v4404
  %v4779 = vmax.f32 %v3761, %v4406
  %v4780 = vmax.f32 %v3763, %v4408
  %v4781 = vmax.f32 %v3771, %v4410
  %v4782 = vmax.f32 %v3779, %v4412
  %v4783 = vmax.f32 %v3778, %v4414
  %v4784 = vmax.f32 %v3780, %v4416
  %v4785 = vmax.f32 %v3788, %v4418
  %v4786 = vmax.f32 %v3796, %v4420
  %v4787 = vmax.f32 %v3795, %v4422
  %v4788 = vmax.f32 %v3797, %v4424
  %v4789 = vmax.f32 %v3805, %v4426
  %v4790 = vmax.f32 %v3813, %v4428
  %v4791 = vmax.f32 %v3812, %v4430
  %v4792 = vmax.f32 %v3814, %v4432
  %v4793 = vmax.f32 %v3822, %v4434
  %v4794 = vmax.f32 %v3830, %v4436
  %v4795 = vmax.f32 %v3829, %v4438
  %v4796 = vmax.f32 %v3831, %v4440
  %v4797 = vmax.f32 %v3839, %v4442
  %v4798 = vmax.f32 %v3847, %v4444
  %v4799 = vmax.f32 %v3846, %v4446
  %v4800 = vmax.f32 %v3848, %v4448
  %v4801 = vmax.f32 %v3856, %v4450
  %v4802 = vmax.f32 %v3864, %v4452
  %v4803 = vmax.f32 %v3863, %v4454
  %v4804 = vmax.f32 %v3865, %v4456
  %v4805 = vmax.f32 %v3873, %v4458
  %v4806 = vmax.f32 %v3881, %v4460
  %v4807 = vmax.f32 %v3880, %v4462
  %v4808 = vmax.f32 %v3882, %v4464
  %v4809 = vmax.f32 %v3890, %v4466
  %v4810 = vmax.f32 %v3898, %v4468
  %v4811 = vmax.f32 %v3897, %v4470
  %v4812 = vmax.f32 %v3899, %v4472
  %v4813 = vmax.f32 %v3907, %v4474
  %v4814 = vmax.f32 %v3915, %v4476
  %v4815 = vmax.f32 %v3914, %v4478
  %v4816 = vmax.f32 %v3916, %v4480
  %v4817 = vmax.f32 %v3924, %v4482
  %v4818 = vmax.f32 %v3932, %v4484
  %v4819 = vmax.f32 %v3931, %v4486
  %v4820 = vmax.f32 %v3933, %v4488
  %v4821 = vmax.f32 %v3941, %v4490
  %v4822 = vmax.f32 %v3949, %v4492
  %v4823 = vmax.f32 %v3948, %v4494
  %v4824 = vmax.f32 %v3950, %v4496
  %v4825 = vmax.f32 %v3958, %v4498
  %v4826 = vmax.f32 %v3966, %v4500
  %v4827 = vmax.f32 %v3965, %v4502
  %v4828 = vmax.f32 %v3967, %v4504
  %v4829 = vmax.f32 %v3975, %v4506
  %v4830 = vmax.f32 %v3983, %v4508
  %v4831 = vmax.f32 %v3982, %v4510
  %v4832 = vmax.f32 %v3984, %v4512
  %v4833 = vmax.f32 %v3992, %v4514
  %v4834 = vmax.f32 %v4000, %v4516
  %v4835 = vmax.f32 %v3999, %v4518
  %v4836 = vmax.f32 %v4001, %v4520
  %v4837 = vmax.f32 %v4009, %v4522
  %v4838 = vmax.f32 %v4017, %v4524
  %v4839 = vmax.f32 %v4016, %v4526
  %v4840 = vmax.f32 %v4018, %v4528
  %v4841 = vmax.f32 %v4026, %v4530
  %v4842 = vmax.f32 %v4034, %v4532
  %v4843 = vmax.f32 %v4033, %v4534
  %v4844 = vmax.f32 %v4035, %v4536
  %v4845 = vmax.f32 %v4043, %v4538
  %v4846 = vmax.f32 %v4051, %v4540
  %v4847 = vmax.f32 %v4050, %v4542
  %v4848 = vmax.f32 %v4052, %v4544
  %v4849 = vmax.f32 %v4060, %v4546
  %v4850 = vmax.f32 %v4068, %v4548
  %v4851 = vmax.f32 %v4067, %v4550
  %v4852 = vmax.f32 %v4069, %v4552
  %v4853 = vmax.f32 %v4077, %v4554
  %v4854 = vmax.f32 %v4085, %v4556
  %v4855 = vmax.f32 %v4084, %v4558
  %v4856 = vmax.f32 %v4086, %v4560
  %v4857 = vmax.f32 %v4094, %v4562
  %v4858 = vmax.f32 %v4102, %v4564
  %v4859 = vmax.f32 %v4101, %v4566
  %v4860 = vmax.f32 %v4103, %v4568
  %v4861 = vmax.f32 %v4111, %v4570
  %v4862 = vmax.f32 %v4119, %v4572
  %v4863 = vmax.f32 %v4118, %v4574
  %v4864 = vmax.f32 %v4120, %v4576
  %v4865 = vmax.f32 %v4128, %v4578
  %v4866 = vmax.f32 %v4136, %v4580
  %v4867 = vmax.f32 %v4135, %v4582
  %v4868 = vmax.f32 %v4137, %v4584
  %v4869 = vmax.f32 %v4145, %v4586
  %v4870 = vmax.f32 %v4153, %v4588
  %v4871 = vmax.f32 %v4152, %v4590
  %v4872 = vmax.f32 %v4154, %v4592
  %v4873 = vmax.f32 %v4162, %v4594
  %v4874 = vmax.f32 %v4170, %v4596
  %v4875 = vmax.f32 %v4169, %v4598
  %v4876 = vmax.f32 %v4171, %v4600
  %v4877 = vmax.f32 %v4179, %v4602
  %v4878 = vmax.f32 %v4187, %v4604
  %v4879 = vmax.f32 %v4186, %v4606
  %v4880 = vmax.f32 %v4188, %v4608
  %v4881 = vmax.f32 %v4196, %v4610
  %v4882 = vmax.f32 %v4204, %v4612
  %v4883 = vmax.f32 %v4203, %v4614
  %v4884 = vmax.f32 %v4205, %v4616
  %v4885 = vmax.f32 %v4213, %v4618
  %v4886 = vmax.f32 %v4221, %v4620
  %v4887 = vmax.f32 %v4220, %v4622
  %v4888 = vmax.f32 %v4222, %v4624
  %v4889 = vmax.f32 %v4230, %v4626
  %v4890 = vmax.f32 %v4238, %v4628
  %v4891 = vmax.f32 %v4237, %v4630
  %v4892 = vmax.f32 %v4239, %v4632
  %v4893 = vmax.f32 %v4247, %v4634
  %v4894 = vmax.f32 %v4255, %v4636
  %v4895 = vmax.f32 %v4254, %v4638
  %v4896 = vmax.f32 %v4256, %v4640
  %v4897 = vpack.c.bf16 %v4769, %v4769
  %v4898 = vpack.c.bf16 %v4770, %v4770
  %v4899 = vpack.c.bf16 %v4771, %v4771
  %v4900 = vpack.c.bf16 %v4772, %v4772
  %v4901 = vpack.c.bf16 %v4773, %v4773
  %v4902 = vpack.c.bf16 %v4774, %v4774
  %v4903 = vpack.c.bf16 %v4775, %v4775
  %v4904 = vpack.c.bf16 %v4776, %v4776
  %v4905 = vpack.c.bf16 %v4777, %v4777
  %v4906 = vpack.c.bf16 %v4778, %v4778
  %v4907 = vpack.c.bf16 %v4779, %v4779
  %v4908 = vpack.c.bf16 %v4780, %v4780
  %v4909 = vpack.c.bf16 %v4781, %v4781
  %v4910 = vpack.c.bf16 %v4782, %v4782
  %v4911 = vpack.c.bf16 %v4783, %v4783
  %v4912 = vpack.c.bf16 %v4784, %v4784
  %v4913 = vpack.c.bf16 %v4785, %v4785
  %v4914 = vpack.c.bf16 %v4786, %v4786
  %v4915 = vpack.c.bf16 %v4787, %v4787
  %v4916 = vpack.c.bf16 %v4788, %v4788
  %v4917 = vpack.c.bf16 %v4789, %v4789
  %v4918 = vpack.c.bf16 %v4790, %v4790
  %v4919 = vpack.c.bf16 %v4791, %v4791
  %v4920 = vpack.c.bf16 %v4792, %v4792
  %v4921 = vpack.c.bf16 %v4793, %v4793
  %v4922 = vpack.c.bf16 %v4794, %v4794
  %v4923 = vpack.c.bf16 %v4795, %v4795
  %v4924 = vpack.c.bf16 %v4796, %v4796
  %v4925 = vpack.c.bf16 %v4797, %v4797
  %v4926 = vpack.c.bf16 %v4798, %v4798
  %v4927 = vpack.c.bf16 %v4799, %v4799
  %v4928 = vpack.c.bf16 %v4800, %v4800
  %v4929 = vpack.c.bf16 %v4801, %v4801
  %v4930 = vpack.c.bf16 %v4802, %v4802
  %v4931 = vpack.c.bf16 %v4803, %v4803
  %v4932 = vpack.c.bf16 %v4804, %v4804
  %v4933 = vpack.c.bf16 %v4805, %v4805
  %v4934 = vpack.c.bf16 %v4806, %v4806
  %v4935 = vpack.c.bf16 %v4807, %v4807
  %v4936 = vpack.c.bf16 %v4808, %v4808
  %v4937 = vpack.c.bf16 %v4809, %v4809
  %v4938 = vpack.c.bf16 %v4810, %v4810
  %v4939 = vpack.c.bf16 %v4811, %v4811
  %v4940 = vpack.c.bf16 %v4812, %v4812
  %v4941 = vpack.c.bf16 %v4813, %v4813
  %v4942 = vpack.c.bf16 %v4814, %v4814
  %v4943 = vpack.c.bf16 %v4815, %v4815
  %v4944 = vpack.c.bf16 %v4816, %v4816
  %v4945 = vpack.c.bf16 %v4817, %v4817
  %v4946 = vpack.c.bf16 %v4818, %v4818
  %v4947 = vpack.c.bf16 %v4819, %v4819
  %v4948 = vpack.c.bf16 %v4820, %v4820
  %v4949 = vpack.c.bf16 %v4821, %v4821
  %v4950 = vpack.c.bf16 %v4822, %v4822
  %v4951 = vpack.c.bf16 %v4823, %v4823
  %v4952 = vpack.c.bf16 %v4824, %v4824
  %v4953 = vpack.c.bf16 %v4825, %v4825
  %v4954 = vpack.c.bf16 %v4826, %v4826
  %v4955 = vpack.c.bf16 %v4827, %v4827
  %v4956 = vpack.c.bf16 %v4828, %v4828
  %v4957 = vpack.c.bf16 %v4829, %v4829
  %v4958 = vpack.c.bf16 %v4830, %v4830
  %v4959 = vpack.c.bf16 %v4831, %v4831
  %v4960 = vpack.c.bf16 %v4832, %v4832
  %v4961 = vpack.c.bf16 %v4833, %v4833
  %v4962 = vpack.c.bf16 %v4834, %v4834
  %v4963 = vpack.c.bf16 %v4835, %v4835
  %v4964 = vpack.c.bf16 %v4836, %v4836
  %v4965 = vpack.c.bf16 %v4837, %v4837
  %v4966 = vpack.c.bf16 %v4838, %v4838
  %v4967 = vpack.c.bf16 %v4839, %v4839
  %v4968 = vpack.c.bf16 %v4840, %v4840
  %v4969 = vpack.c.bf16 %v4841, %v4841
  %v4970 = vpack.c.bf16 %v4842, %v4842
  %v4971 = vpack.c.bf16 %v4843, %v4843
  %v4972 = vpack.c.bf16 %v4844, %v4844
  %v4973 = vpack.c.bf16 %v4845, %v4845
  %v4974 = vpack.c.bf16 %v4846, %v4846
  %v4975 = vpack.c.bf16 %v4847, %v4847
  %v4976 = vpack.c.bf16 %v4848, %v4848
  %v4977 = vpack.c.bf16 %v4849, %v4849
  %v4978 = vpack.c.bf16 %v4850, %v4850
  %v4979 = vpack.c.bf16 %v4851, %v4851
  %v4980 = vpack.c.bf16 %v4852, %v4852
  %v4981 = vpack.c.bf16 %v4853, %v4853
  %v4982 = vpack.c.bf16 %v4854, %v4854
  %v4983 = vpack.c.bf16 %v4855, %v4855
  %v4984 = vpack.c.bf16 %v4856, %v4856
  %v4985 = vpack.c.bf16 %v4857, %v4857
  %v4986 = vpack.c.bf16 %v4858, %v4858
  %v4987 = vpack.c.bf16 %v4859, %v4859
  %v4988 = vpack.c.bf16 %v4860, %v4860
  %v4989 = vpack.c.bf16 %v4861, %v4861
  %v4990 = vpack.c.bf16 %v4862, %v4862
  %v4991 = vpack.c.bf16 %v4863, %v4863
  %v4992 = vpack.c.bf16 %v4864, %v4864
  %v4993 = vpack.c.bf16 %v4865, %v4865
  %v4994 = vpack.c.bf16 %v4866, %v4866
  %v4995 = vpack.c.bf16 %v4867, %v4867
  %v4996 = vpack.c.bf16 %v4868, %v4868
  %v4997 = vpack.c.bf16 %v4869, %v4869
  %v4998 = vpack.c.bf16 %v4870, %v4870
  %v4999 = vpack.c.bf16 %v4871, %v4871
  %v5000 = vpack.c.bf16 %v4872, %v4872
  %v5001 = vpack.c.bf16 %v4873, %v4873
  %v5002 = vpack.c.bf16 %v4874, %v4874
  %v5003 = vpack.c.bf16 %v4875, %v4875
  %v5004 = vpack.c.bf16 %v4876, %v4876
  %v5005 = vpack.c.bf16 %v4877, %v4877
  %v5006 = vpack.c.bf16 %v4878, %v4878
  %v5007 = vpack.c.bf16 %v4879, %v4879
  %v5008 = vpack.c.bf16 %v4880, %v4880
  %v5009 = vpack.c.bf16 %v4881, %v4881
  %v5010 = vpack.c.bf16 %v4882, %v4882
  %v5011 = vpack.c.bf16 %v4883, %v4883
  %v5012 = vpack.c.bf16 %v4884, %v4884
  %v5013 = vpack.c.bf16 %v4885, %v4885
  %v5014 = vpack.c.bf16 %v4886, %v4886
  %v5015 = vpack.c.bf16 %v4887, %v4887
  %v5016 = vpack.c.bf16 %v4888, %v4888
  %v5017 = vpack.c.bf16 %v4889, %v4889
  %v5018 = vpack.c.bf16 %v4890, %v4890
  %v5019 = vpack.c.bf16 %v4891, %v4891
  %v5020 = vpack.c.bf16 %v4892, %v4892
  %v5021 = vpack.c.bf16 %v4893, %v4893
  %v5022 = vpack.c.bf16 %v4894, %v4894
  %v5023 = vpack.c.bf16 %v4895, %v4895
  %v5024 = vpack.c.bf16 %v4896, %v4896
  %vm5025 = vcmask 257024
  %5026 = vst.msk [vmem:[#allocation3] sm:$0xf] %vm5025, 0
  %vm5027 = vcmask 253952
  %5028 = vst.msk [vmem:[#allocation3 + $0x4] sm:$0x1] %vm5027, 0
  %5029 = vst.msk [vmem:[#allocation3 + $0x8] sm:$0xf] %vm5025, 0
  %5030 = vst.msk [vmem:[#allocation3 + $0xc] sm:$0x1] %vm5027, 0
  %5031 = vst.msk [vmem:[#allocation3 + $0x10] sm:$0xf] %vm5025, 0
  %5032 = vst.msk [vmem:[#allocation3 + $0x14] sm:$0x1] %vm5027, 0
  %5033 = vst.msk [vmem:[#allocation3 + $0x18] sm:$0xf] %vm5025, 0
  %5034 = vst.msk [vmem:[#allocation3 + $0x1c] sm:$0x1] %vm5027, 0
  %5035 = vst.msk [vmem:[#allocation3 + $0x20] sm:$0xf] %vm5025, 0
  %5036 = vst.msk [vmem:[#allocation3 + $0x24] sm:$0x1] %vm5027, 0
  %5037 = vst.msk [vmem:[#allocation3 + $0x28] sm:$0xf] %vm5025, 0
  %5038 = vst.msk [vmem:[#allocation3 + $0x2c] sm:$0x1] %vm5027, 0
  %5039 = vst.msk [vmem:[#allocation3 + $0x30] sm:$0xf] %vm5025, 0
  %5040 = vst.msk [vmem:[#allocation3 + $0x34] sm:$0x1] %vm5027, 0
  %5041 = vst.msk [vmem:[#allocation3 + $0x38] sm:$0xf] %vm5025, 0
  %5042 = vst.msk [vmem:[#allocation3 + $0x3c] sm:$0x1] %vm5027, 0
  %5043 = vst.msk [vmem:[#allocation3 + $0x40] sm:$0xf] %vm5025, 0
  %5044 = vst.msk [vmem:[#allocation3 + $0x44] sm:$0x1] %vm5027, 0
  %5045 = vst.msk [vmem:[#allocation3 + $0x48] sm:$0xf] %vm5025, 0
  %5046 = vst.msk [vmem:[#allocation3 + $0x4c] sm:$0x1] %vm5027, 0
  %5047 = vst.msk [vmem:[#allocation3 + $0x50] sm:$0xf] %vm5025, 0
  %5048 = vst.msk [vmem:[#allocation3 + $0x54] sm:$0x1] %vm5027, 0
  %5049 = vst.msk [vmem:[#allocation3 + $0x58] sm:$0xf] %vm5025, 0
  %5050 = vst.msk [vmem:[#allocation3 + $0x5c] sm:$0x1] %vm5027, 0
  %5051 = vst.msk [vmem:[#allocation3 + $0x60] sm:$0xf] %vm5025, 0
  %5052 = vst.msk [vmem:[#allocation3 + $0x64] sm:$0x1] %vm5027, 0
  %5053 = vst.msk [vmem:[#allocation3 + $0x68] sm:$0xf] %vm5025, 0
  %5054 = vst.msk [vmem:[#allocation3 + $0x6c] sm:$0x1] %vm5027, 0
  %5055 = vst.msk [vmem:[#allocation3 + $0x70] sm:$0xf] %vm5025, 0
  %5056 = vst.msk [vmem:[#allocation3 + $0x74] sm:$0x1] %vm5027, 0
  %5057 = vst.msk [vmem:[#allocation3 + $0x78] sm:$0xf] %vm5025, 0
  %5058 = vst.msk [vmem:[#allocation3 + $0x7c] sm:$0x1] %vm5027, 0
  %5059 = vst.msk [vmem:[#allocation3 + $0x80] sm:$0xf] %vm5025, 0
  %5060 = vst.msk [vmem:[#allocation3 + $0x84] sm:$0x1] %vm5027, 0
  %5061 = vst.msk [vmem:[#allocation3 + $0x88] sm:$0xf] %vm5025, 0
  %5062 = vst.msk [vmem:[#allocation3 + $0x8c] sm:$0x1] %vm5027, 0
  %5063 = vst.msk [vmem:[#allocation3 + $0x90] sm:$0xf] %vm5025, 0
  %5064 = vst.msk [vmem:[#allocation3 + $0x94] sm:$0x1] %vm5027, 0
  %5065 = vst.msk [vmem:[#allocation3 + $0x98] sm:$0xf] %vm5025, 0
  %5066 = vst.msk [vmem:[#allocation3 + $0x9c] sm:$0x1] %vm5027, 0
  %v5195 = vunpack.c.l.b16 %v4897
  %v5196 = vunpack.c.l.b16 %v4898
  %v5197 = vunpack.c.l.b16 %v4899
  %v5198 = vunpack.c.l.b16 %v4900
  %v5199 = vunpack.c.l.b16 %v4901
  %v5200 = vunpack.c.l.b16 %v4902
  %v5201 = vunpack.c.l.b16 %v4903
  %v5202 = vunpack.c.l.b16 %v4904
  %v5203 = vunpack.c.l.b16 %v4905
  %v5204 = vunpack.c.l.b16 %v4906
  %v5205 = vunpack.c.l.b16 %v4907
  %v5206 = vunpack.c.l.b16 %v4908
  %v5207 = vunpack.c.l.b16 %v4909
  %v5208 = vunpack.c.l.b16 %v4910
  %v5209 = vunpack.c.l.b16 %v4911
  %v5210 = vunpack.c.l.b16 %v4912
  %v5211 = vunpack.c.l.b16 %v4913
  %v5212 = vunpack.c.l.b16 %v4914
  %v5213 = vunpack.c.l.b16 %v4915
  %v5214 = vunpack.c.l.b16 %v4916
  %v5215 = vunpack.c.l.b16 %v4917
  %v5216 = vunpack.c.l.b16 %v4918
  %v5217 = vunpack.c.l.b16 %v4919
  %v5218 = vunpack.c.l.b16 %v4920
  %v5219 = vunpack.c.l.b16 %v4921
  %v5220 = vunpack.c.l.b16 %v4922
  %v5221 = vunpack.c.l.b16 %v4923
  %v5222 = vunpack.c.l.b16 %v4924
  %v5223 = vunpack.c.l.b16 %v4925
  %v5224 = vunpack.c.l.b16 %v4926
  %v5225 = vunpack.c.l.b16 %v4927
  %v5226 = vunpack.c.l.b16 %v4928
  %v5227 = vunpack.c.l.b16 %v4929
  %v5228 = vunpack.c.l.b16 %v4930
  %v5229 = vunpack.c.l.b16 %v4931
  %v5230 = vunpack.c.l.b16 %v4932
  %v5231 = vunpack.c.l.b16 %v4933
  %v5232 = vunpack.c.l.b16 %v4934
  %v5233 = vunpack.c.l.b16 %v4935
  %v5234 = vunpack.c.l.b16 %v4936
  %v5235 = vunpack.c.l.b16 %v4937
  %v5236 = vunpack.c.l.b16 %v4938
  %v5237 = vunpack.c.l.b16 %v4939
  %v5238 = vunpack.c.l.b16 %v4940
  %v5239 = vunpack.c.l.b16 %v4941
  %v5240 = vunpack.c.l.b16 %v4942
  %v5241 = vunpack.c.l.b16 %v4943
  %v5242 = vunpack.c.l.b16 %v4944
  %v5243 = vunpack.c.l.b16 %v4945
  %v5244 = vunpack.c.l.b16 %v4946
  %v5245 = vunpack.c.l.b16 %v4947
  %v5246 = vunpack.c.l.b16 %v4948
  %v5247 = vunpack.c.l.b16 %v4949
  %v5248 = vunpack.c.l.b16 %v4950
  %v5249 = vunpack.c.l.b16 %v4951
  %v5250 = vunpack.c.l.b16 %v4952
  %v5251 = vunpack.c.l.b16 %v4953
  %v5252 = vunpack.c.l.b16 %v4954
  %v5253 = vunpack.c.l.b16 %v4955
  %v5254 = vunpack.c.l.b16 %v4956
  %v5255 = vunpack.c.l.b16 %v4957
  %v5256 = vunpack.c.l.b16 %v4958
  %v5257 = vunpack.c.l.b16 %v4959
  %v5258 = vunpack.c.l.b16 %v4960
  %v5259 = vunpack.c.l.b16 %v4961
  %v5260 = vunpack.c.l.b16 %v4962
  %v5261 = vunpack.c.l.b16 %v4963
  %v5262 = vunpack.c.l.b16 %v4964
  %v5263 = vunpack.c.l.b16 %v4965
  %v5264 = vunpack.c.l.b16 %v4966
  %v5265 = vunpack.c.l.b16 %v4967
  %v5266 = vunpack.c.l.b16 %v4968
  %v5267 = vunpack.c.l.b16 %v4969
  %v5268 = vunpack.c.l.b16 %v4970
  %v5269 = vunpack.c.l.b16 %v4971
  %v5270 = vunpack.c.l.b16 %v4972
  %v5271 = vunpack.c.l.b16 %v4973
  %v5272 = vunpack.c.l.b16 %v4974
  %v5273 = vunpack.c.l.b16 %v4975
  %v5274 = vunpack.c.l.b16 %v4976
  %v5275 = vunpack.c.l.b16 %v4977
  %v5276 = vunpack.c.l.b16 %v4978
  %v5277 = vunpack.c.l.b16 %v4979
  %v5278 = vunpack.c.l.b16 %v4980
  %v5279 = vunpack.c.l.b16 %v4981
  %v5280 = vunpack.c.l.b16 %v4982
  %v5281 = vunpack.c.l.b16 %v4983
  %v5282 = vunpack.c.l.b16 %v4984
  %v5283 = vunpack.c.l.b16 %v4985
  %v5284 = vunpack.c.l.b16 %v4986
  %v5285 = vunpack.c.l.b16 %v4987
  %v5286 = vunpack.c.l.b16 %v4988
  %v5287 = vunpack.c.l.b16 %v4989
  %v5288 = vunpack.c.l.b16 %v4990
  %v5289 = vunpack.c.l.b16 %v4991
  %v5290 = vunpack.c.l.b16 %v4992
  %v5291 = vunpack.c.l.b16 %v4993
  %v5292 = vunpack.c.l.b16 %v4994
  %v5293 = vunpack.c.l.b16 %v4995
  %v5294 = vunpack.c.l.b16 %v4996
  %v5295 = vunpack.c.l.b16 %v4997
  %v5296 = vunpack.c.l.b16 %v4998
  %v5297 = vunpack.c.l.b16 %v4999
  %v5298 = vunpack.c.l.b16 %v5000
  %v5299 = vunpack.c.l.b16 %v5001
  %v5300 = vunpack.c.l.b16 %v5002
  %v5301 = vunpack.c.l.b16 %v5003
  %v5302 = vunpack.c.l.b16 %v5004
  %v5303 = vunpack.c.l.b16 %v5005
  %v5304 = vunpack.c.l.b16 %v5006
  %v5305 = vunpack.c.l.b16 %v5007
  %v5306 = vunpack.c.l.b16 %v5008
  %v5307 = vunpack.c.l.b16 %v5009
  %v5308 = vunpack.c.l.b16 %v5010
  %v5309 = vunpack.c.l.b16 %v5011
  %v5310 = vunpack.c.l.b16 %v5012
  %v5311 = vunpack.c.l.b16 %v5013
  %v5312 = vunpack.c.l.b16 %v5014
  %v5313 = vunpack.c.l.b16 %v5015
  %v5314 = vunpack.c.l.b16 %v5016
  %v5315 = vunpack.c.l.b16 %v5017
  %v5316 = vunpack.c.l.b16 %v5018
  %v5317 = vunpack.c.l.b16 %v5019
  %v5318 = vunpack.c.l.b16 %v5020
  %v5319 = vunpack.c.l.b16 %v5021
  %v5320 = vunpack.c.l.b16 %v5022
  %v5321 = vunpack.c.l.b16 %v5023
  %v5322 = vunpack.c.l.b16 %v5024
  %v5323 = vpack.c.b16 %v5195, %v5195
  %v5324 = vpack.c.b16 %v5196, %v5196
  %v5325 = vpack.c.b16 %v5197, %v5197
  %v5326 = vpack.c.b16 %v5198, %v5198
  %v5327 = vpack.c.b16 %v5199, %v5199
  %v5328 = vpack.c.b16 %v5200, %v5200
  %v5329 = vpack.c.b16 %v5201, %v5201
  %v5330 = vpack.c.b16 %v5202, %v5202
  %v5331 = vpack.c.b16 %v5203, %v5203
  %v5332 = vpack.c.b16 %v5204, %v5204
  %v5333 = vpack.c.b16 %v5205, %v5205
  %v5334 = vpack.c.b16 %v5206, %v5206
  %v5335 = vpack.c.b16 %v5207, %v5207
  %v5336 = vpack.c.b16 %v5208, %v5208
  %v5337 = vpack.c.b16 %v5209, %v5209
  %v5338 = vpack.c.b16 %v5210, %v5210
  %v5339 = vpack.c.b16 %v5211, %v5211
  %v5340 = vpack.c.b16 %v5212, %v5212
  %v5341 = vpack.c.b16 %v5213, %v5213
  %v5342 = vpack.c.b16 %v5214, %v5214
  %v5343 = vpack.c.b16 %v5215, %v5215
  %v5344 = vpack.c.b16 %v5216, %v5216
  %v5345 = vpack.c.b16 %v5217, %v5217
  %v5346 = vpack.c.b16 %v5218, %v5218
  %v5347 = vpack.c.b16 %v5219, %v5219
  %v5348 = vpack.c.b16 %v5220, %v5220
  %v5349 = vpack.c.b16 %v5221, %v5221
  %v5350 = vpack.c.b16 %v5222, %v5222
  %v5351 = vpack.c.b16 %v5223, %v5223
  %v5352 = vpack.c.b16 %v5224, %v5224
  %v5353 = vpack.c.b16 %v5225, %v5225
  %v5354 = vpack.c.b16 %v5226, %v5226
  %v5355 = vpack.c.b16 %v5227, %v5227
  %v5356 = vpack.c.b16 %v5228, %v5228
  %v5357 = vpack.c.b16 %v5229, %v5229
  %v5358 = vpack.c.b16 %v5230, %v5230
  %v5359 = vpack.c.b16 %v5231, %v5231
  %v5360 = vpack.c.b16 %v5232, %v5232
  %v5361 = vpack.c.b16 %v5233, %v5233
  %v5362 = vpack.c.b16 %v5234, %v5234
  %v5363 = vpack.c.b16 %v5235, %v5235
  %v5364 = vpack.c.b16 %v5236, %v5236
  %v5365 = vpack.c.b16 %v5237, %v5237
  %v5366 = vpack.c.b16 %v5238, %v5238
  %v5367 = vpack.c.b16 %v5239, %v5239
  %v5368 = vpack.c.b16 %v5240, %v5240
  %v5369 = vpack.c.b16 %v5241, %v5241
  %v5370 = vpack.c.b16 %v5242, %v5242
  %v5371 = vpack.c.b16 %v5243, %v5243
  %v5372 = vpack.c.b16 %v5244, %v5244
  %v5373 = vpack.c.b16 %v5245, %v5245
  %v5374 = vpack.c.b16 %v5246, %v5246
  %v5375 = vpack.c.b16 %v5247, %v5247
  %v5376 = vpack.c.b16 %v5248, %v5248
  %v5377 = vpack.c.b16 %v5249, %v5249
  %v5378 = vpack.c.b16 %v5250, %v5250
  %v5379 = vpack.c.b16 %v5251, %v5251
  %v5380 = vpack.c.b16 %v5252, %v5252
  %v5381 = vpack.c.b16 %v5253, %v5253
  %v5382 = vpack.c.b16 %v5254, %v5254
  %v5383 = vpack.c.b16 %v5255, %v5255
  %v5384 = vpack.c.b16 %v5256, %v5256
  %v5385 = vpack.c.b16 %v5257, %v5257
  %v5386 = vpack.c.b16 %v5258, %v5258
  %v5387 = vpack.c.b16 %v5259, %v5259
  %v5388 = vpack.c.b16 %v5260, %v5260
  %v5389 = vpack.c.b16 %v5261, %v5261
  %v5390 = vpack.c.b16 %v5262, %v5262
  %v5391 = vpack.c.b16 %v5263, %v5263
  %v5392 = vpack.c.b16 %v5264, %v5264
  %v5393 = vpack.c.b16 %v5265, %v5265
  %v5394 = vpack.c.b16 %v5266, %v5266
  %v5395 = vpack.c.b16 %v5267, %v5267
  %v5396 = vpack.c.b16 %v5268, %v5268
  %v5397 = vpack.c.b16 %v5269, %v5269
  %v5398 = vpack.c.b16 %v5270, %v5270
  %v5399 = vpack.c.b16 %v5271, %v5271
  %v5400 = vpack.c.b16 %v5272, %v5272
  %v5401 = vpack.c.b16 %v5273, %v5273
  %v5402 = vpack.c.b16 %v5274, %v5274
  %v5403 = vpack.c.b16 %v5275, %v5275
  %v5404 = vpack.c.b16 %v5276, %v5276
  %v5405 = vpack.c.b16 %v5277, %v5277
  %v5406 = vpack.c.b16 %v5278, %v5278
  %v5407 = vpack.c.b16 %v5279, %v5279
  %v5408 = vpack.c.b16 %v5280, %v5280
  %v5409 = vpack.c.b16 %v5281, %v5281
  %v5410 = vpack.c.b16 %v5282, %v5282
  %v5411 = vpack.c.b16 %v5283, %v5283
  %v5412 = vpack.c.b16 %v5284, %v5284
  %v5413 = vpack.c.b16 %v5285, %v5285
  %v5414 = vpack.c.b16 %v5286, %v5286
  %v5415 = vpack.c.b16 %v5287, %v5287
  %v5416 = vpack.c.b16 %v5288, %v5288
  %v5417 = vpack.c.b16 %v5289, %v5289
  %v5418 = vpack.c.b16 %v5290, %v5290
  %v5419 = vpack.c.b16 %v5291, %v5291
  %v5420 = vpack.c.b16 %v5292, %v5292
  %v5421 = vpack.c.b16 %v5293, %v5293
  %v5422 = vpack.c.b16 %v5294, %v5294
  %v5423 = vpack.c.b16 %v5295, %v5295
  %v5424 = vpack.c.b16 %v5296, %v5296
  %v5425 = vpack.c.b16 %v5297, %v5297
  %v5426 = vpack.c.b16 %v5298, %v5298
  %v5427 = vpack.c.b16 %v5299, %v5299
  %v5428 = vpack.c.b16 %v5300, %v5300
  %v5429 = vpack.c.b16 %v5301, %v5301
  %v5430 = vpack.c.b16 %v5302, %v5302
  %v5431 = vpack.c.b16 %v5303, %v5303
  %v5432 = vpack.c.b16 %v5304, %v5304
  %v5433 = vpack.c.b16 %v5305, %v5305
  %v5434 = vpack.c.b16 %v5306, %v5306
  %v5435 = vpack.c.b16 %v5307, %v5307
  %v5436 = vpack.c.b16 %v5308, %v5308
  %v5437 = vpack.c.b16 %v5309, %v5309
  %v5438 = vpack.c.b16 %v5310, %v5310
  %v5439 = vpack.c.b16 %v5311, %v5311
  %v5440 = vpack.c.b16 %v5312, %v5312
  %v5441 = vpack.c.b16 %v5313, %v5313
  %v5442 = vpack.c.b16 %v5314, %v5314
  %v5443 = vpack.c.b16 %v5315, %v5315
  %v5444 = vpack.c.b16 %v5316, %v5316
  %v5445 = vpack.c.b16 %v5317, %v5317
  %v5446 = vpack.c.b16 %v5318, %v5318
  %v5447 = vpack.c.b16 %v5319, %v5319
  %v5448 = vpack.c.b16 %v5320, %v5320
  %v5449 = vpack.c.b16 %v5321, %v5321
  %v5450 = vpack.c.b16 %v5322, %v5322
  %v5451 = vunpack.c.l.b16 %v5323
  %v5452 = vunpack.c.l.b16 %v5324
  %v5453 = vunpack.c.l.b16 %v5325
  %v5454 = vunpack.c.l.b16 %v5326
  %v5455 = vunpack.c.l.b16 %v5327
  %v5456 = vunpack.c.l.b16 %v5328
  %v5457 = vunpack.c.l.b16 %v5329
  %v5458 = vunpack.c.l.b16 %v5330
  %v5459 = vunpack.c.l.b16 %v5331
  %v5460 = vunpack.c.l.b16 %v5332
  %v5461 = vunpack.c.l.b16 %v5333
  %v5462 = vunpack.c.l.b16 %v5334
  %v5463 = vunpack.c.l.b16 %v5335
  %v5464 = vunpack.c.l.b16 %v5336
  %v5465 = vunpack.c.l.b16 %v5337
  %v5466 = vunpack.c.l.b16 %v5338
  %v5467 = vunpack.c.l.b16 %v5339
  %v5468 = vunpack.c.l.b16 %v5340
  %v5469 = vunpack.c.l.b16 %v5341
  %v5470 = vunpack.c.l.b16 %v5342
  %v5471 = vunpack.c.l.b16 %v5343
  %v5472 = vunpack.c.l.b16 %v5344
  %v5473 = vunpack.c.l.b16 %v5345
  %v5474 = vunpack.c.l.b16 %v5346
  %v5475 = vunpack.c.l.b16 %v5347
  %v5476 = vunpack.c.l.b16 %v5348
  %v5477 = vunpack.c.l.b16 %v5349
  %v5478 = vunpack.c.l.b16 %v5350
  %v5479 = vunpack.c.l.b16 %v5351
  %v5480 = vunpack.c.l.b16 %v5352
  %v5481 = vunpack.c.l.b16 %v5353
  %v5482 = vunpack.c.l.b16 %v5354
  %v5483 = vunpack.c.l.b16 %v5355
  %v5484 = vunpack.c.l.b16 %v5356
  %v5485 = vunpack.c.l.b16 %v5357
  %v5486 = vunpack.c.l.b16 %v5358
  %v5487 = vunpack.c.l.b16 %v5359
  %v5488 = vunpack.c.l.b16 %v5360
  %v5489 = vunpack.c.l.b16 %v5361
  %v5490 = vunpack.c.l.b16 %v5362
  %v5491 = vunpack.c.l.b16 %v5363
  %v5492 = vunpack.c.l.b16 %v5364
  %v5493 = vunpack.c.l.b16 %v5365
  %v5494 = vunpack.c.l.b16 %v5366
  %v5495 = vunpack.c.l.b16 %v5367
  %v5496 = vunpack.c.l.b16 %v5368
  %v5497 = vunpack.c.l.b16 %v5369
  %v5498 = vunpack.c.l.b16 %v5370
  %v5499 = vunpack.c.l.b16 %v5371
  %v5500 = vunpack.c.l.b16 %v5372
  %v5501 = vunpack.c.l.b16 %v5373
  %v5502 = vunpack.c.l.b16 %v5374
  %v5503 = vunpack.c.l.b16 %v5375
  %v5504 = vunpack.c.l.b16 %v5376
  %v5505 = vunpack.c.l.b16 %v5377
  %v5506 = vunpack.c.l.b16 %v5378
  %v5507 = vunpack.c.l.b16 %v5379
  %v5508 = vunpack.c.l.b16 %v5380
  %v5509 = vunpack.c.l.b16 %v5381
  %v5510 = vunpack.c.l.b16 %v5382
  %v5511 = vunpack.c.l.b16 %v5383
  %v5512 = vunpack.c.l.b16 %v5384
  %v5513 = vunpack.c.l.b16 %v5385
  %v5514 = vunpack.c.l.b16 %v5386
  %v5515 = vunpack.c.l.b16 %v5387
  %v5516 = vunpack.c.l.b16 %v5388
  %v5517 = vunpack.c.l.b16 %v5389
  %v5518 = vunpack.c.l.b16 %v5390
  %v5519 = vunpack.c.l.b16 %v5391
  %v5520 = vunpack.c.l.b16 %v5392
  %v5521 = vunpack.c.l.b16 %v5393
  %v5522 = vunpack.c.l.b16 %v5394
  %v5523 = vunpack.c.l.b16 %v5395
  %v5524 = vunpack.c.l.b16 %v5396
  %v5525 = vunpack.c.l.b16 %v5397
  %v5526 = vunpack.c.l.b16 %v5398
  %v5527 = vunpack.c.l.b16 %v5399
  %v5528 = vunpack.c.l.b16 %v5400
  %v5529 = vunpack.c.l.b16 %v5401
  %v5530 = vunpack.c.l.b16 %v5402
  %v5531 = vunpack.c.l.b16 %v5403
  %v5532 = vunpack.c.l.b16 %v5404
  %v5533 = vunpack.c.l.b16 %v5405
  %v5534 = vunpack.c.l.b16 %v5406
  %v5535 = vunpack.c.l.b16 %v5407
  %v5536 = vunpack.c.l.b16 %v5408
  %v5537 = vunpack.c.l.b16 %v5409
  %v5538 = vunpack.c.l.b16 %v5410
  %v5539 = vunpack.c.l.b16 %v5411
  %v5540 = vunpack.c.l.b16 %v5412
  %v5541 = vunpack.c.l.b16 %v5413
  %v5542 = vunpack.c.l.b16 %v5414
  %v5543 = vunpack.c.l.b16 %v5415
  %v5544 = vunpack.c.l.b16 %v5416
  %v5545 = vunpack.c.l.b16 %v5417
  %v5546 = vunpack.c.l.b16 %v5418
  %v5547 = vunpack.c.l.b16 %v5419
  %v5548 = vunpack.c.l.b16 %v5420
  %v5549 = vunpack.c.l.b16 %v5421
  %v5550 = vunpack.c.l.b16 %v5422
  %v5551 = vunpack.c.l.b16 %v5423
  %v5552 = vunpack.c.l.b16 %v5424
  %v5553 = vunpack.c.l.b16 %v5425
  %v5554 = vunpack.c.l.b16 %v5426
  %v5555 = vunpack.c.l.b16 %v5427
  %v5556 = vunpack.c.l.b16 %v5428
  %v5557 = vunpack.c.l.b16 %v5429
  %v5558 = vunpack.c.l.b16 %v5430
  %v5559 = vunpack.c.l.b16 %v5431
  %v5560 = vunpack.c.l.b16 %v5432
  %v5561 = vunpack.c.l.b16 %v5433
  %v5562 = vunpack.c.l.b16 %v5434
  %v5563 = vunpack.c.l.b16 %v5435
  %v5564 = vunpack.c.l.b16 %v5436
  %v5565 = vunpack.c.l.b16 %v5437
  %v5566 = vunpack.c.l.b16 %v5438
  %v5567 = vunpack.c.l.b16 %v5439
  %v5568 = vunpack.c.l.b16 %v5440
  %v5569 = vunpack.c.l.b16 %v5441
  %v5570 = vunpack.c.l.b16 %v5442
  %v5571 = vunpack.c.l.b16 %v5443
  %v5572 = vunpack.c.l.b16 %v5444
  %v5573 = vunpack.c.l.b16 %v5445
  %v5574 = vunpack.c.l.b16 %v5446
  %v5575 = vunpack.c.l.b16 %v5447
  %v5576 = vunpack.c.l.b16 %v5448
  %v5577 = vunpack.c.l.b16 %v5449
  %v5578 = vunpack.c.l.b16 %v5450
  %v5579 = vrot.slane %v5451, 7
  %v5580 = vrot.slane %v5452, 6
  %vm5581 = vcmask 1042434
  %v5582 = vsel %vm5581, %v5580, %v5579
  %v5583 = vrot.slane %v5453, 5
  %vm5584 = vcmask 1043459
  %v5585 = vsel %vm5584, %v5583, %v5582
  %v5586 = vrot.slane %v5454, 4
  %vm5587 = vcmask 1044484
  %v5588 = vsel %vm5587, %v5586, %v5585
  %v5589 = vrot.slane %v5455, 3
  %vm5590 = vcmask 1045509
  %v5591 = vsel %vm5590, %v5589, %v5588
  %v5592 = vrot.slane %v5456, 2
  %vm5593 = vcmask 1046534
  %v5594 = vsel %vm5593, %v5592, %v5591
  %v5595 = vrot.slane %v5457, 1
  %vm5596 = vcmask 1047559
  %v5597 = vsel %vm5596, %v5595, %v5594
  %v5598 = vrot.slane %v5459, 7
  %v5599 = vrot.slane %v5460, 6
  %v5600 = vsel %vm5581, %v5599, %v5598
  %v5601 = vrot.slane %v5461, 5
  %v5602 = vsel %vm5584, %v5601, %v5600
  %v5603 = vrot.slane %v5462, 4
  %v5604 = vsel %vm5587, %v5603, %v5602
  %v5605 = vrot.slane %v5463, 3
  %v5606 = vsel %vm5590, %v5605, %v5604
  %v5607 = vrot.slane %v5464, 2
  %v5608 = vsel %vm5593, %v5607, %v5606
  %v5609 = vrot.slane %v5465, 1
  %v5610 = vsel %vm5596, %v5609, %v5608
  %v5611 = vrot.slane %v5467, 7
  %v5612 = vrot.slane %v5468, 6
  %v5613 = vsel %vm5581, %v5612, %v5611
  %v5614 = vrot.slane %v5469, 5
  %v5615 = vsel %vm5584, %v5614, %v5613
  %v5616 = vrot.slane %v5470, 4
  %v5617 = vsel %vm5587, %v5616, %v5615
  %v5618 = vrot.slane %v5471, 3
  %v5619 = vsel %vm5590, %v5618, %v5617
  %v5620 = vrot.slane %v5472, 2
  %v5621 = vsel %vm5593, %v5620, %v5619
  %v5622 = vrot.slane %v5473, 1
  %v5623 = vsel %vm5596, %v5622, %v5621
  %v5624 = vrot.slane %v5475, 7
  %v5625 = vrot.slane %v5476, 6
  %v5626 = vsel %vm5581, %v5625, %v5624
  %v5627 = vrot.slane %v5477, 5
  %v5628 = vsel %vm5584, %v5627, %v5626
  %v5629 = vrot.slane %v5478, 4
  %v5630 = vsel %vm5587, %v5629, %v5628
  %v5631 = vrot.slane %v5479, 3
  %v5632 = vsel %vm5590, %v5631, %v5630
  %v5633 = vrot.slane %v5480, 2
  %v5634 = vsel %vm5593, %v5633, %v5632
  %v5635 = vrot.slane %v5481, 1
  %v5636 = vsel %vm5596, %v5635, %v5634
  %v5637 = vrot.slane %v5483, 7
  %v5638 = vrot.slane %v5484, 6
  %v5639 = vsel %vm5581, %v5638, %v5637
  %v5640 = vrot.slane %v5485, 5
  %v5641 = vsel %vm5584, %v5640, %v5639
  %v5642 = vrot.slane %v5486, 4
  %v5643 = vsel %vm5587, %v5642, %v5641
  %v5644 = vrot.slane %v5487, 3
  %v5645 = vsel %vm5590, %v5644, %v5643
  %v5646 = vrot.slane %v5488, 2
  %v5647 = vsel %vm5593, %v5646, %v5645
  %v5648 = vrot.slane %v5489, 1
  %v5649 = vsel %vm5596, %v5648, %v5647
  %v5650 = vrot.slane %v5491, 7
  %v5651 = vrot.slane %v5492, 6
  %v5652 = vsel %vm5581, %v5651, %v5650
  %v5653 = vrot.slane %v5493, 5
  %v5654 = vsel %vm5584, %v5653, %v5652
  %v5655 = vrot.slane %v5494, 4
  %v5656 = vsel %vm5587, %v5655, %v5654
  %v5657 = vrot.slane %v5495, 3
  %v5658 = vsel %vm5590, %v5657, %v5656
  %v5659 = vrot.slane %v5496, 2
  %v5660 = vsel %vm5593, %v5659, %v5658
  %v5661 = vrot.slane %v5497, 1
  %v5662 = vsel %vm5596, %v5661, %v5660
  %v5663 = vrot.slane %v5499, 7
  %v5664 = vrot.slane %v5500, 6
  %v5665 = vsel %vm5581, %v5664, %v5663
  %v5666 = vrot.slane %v5501, 5
  %v5667 = vsel %vm5584, %v5666, %v5665
  %v5668 = vrot.slane %v5502, 4
  %v5669 = vsel %vm5587, %v5668, %v5667
  %v5670 = vrot.slane %v5503, 3
  %v5671 = vsel %vm5590, %v5670, %v5669
  %v5672 = vrot.slane %v5504, 2
  %v5673 = vsel %vm5593, %v5672, %v5671
  %v5674 = vrot.slane %v5505, 1
  %v5675 = vsel %vm5596, %v5674, %v5673
  %v5676 = vrot.slane %v5507, 7
  %v5677 = vrot.slane %v5508, 6
  %v5678 = vsel %vm5581, %v5677, %v5676
  %v5679 = vrot.slane %v5509, 5
  %v5680 = vsel %vm5584, %v5679, %v5678
  %v5681 = vrot.slane %v5510, 4
  %v5682 = vsel %vm5587, %v5681, %v5680
  %v5683 = vrot.slane %v5511, 3
  %v5684 = vsel %vm5590, %v5683, %v5682
  %v5685 = vrot.slane %v5512, 2
  %v5686 = vsel %vm5593, %v5685, %v5684
  %v5687 = vrot.slane %v5513, 1
  %v5688 = vsel %vm5596, %v5687, %v5686
  %v5689 = vrot.slane %v5515, 7
  %v5690 = vrot.slane %v5516, 6
  %v5691 = vsel %vm5581, %v5690, %v5689
  %v5692 = vrot.slane %v5517, 5
  %v5693 = vsel %vm5584, %v5692, %v5691
  %v5694 = vrot.slane %v5518, 4
  %v5695 = vsel %vm5587, %v5694, %v5693
  %v5696 = vrot.slane %v5519, 3
  %v5697 = vsel %vm5590, %v5696, %v5695
  %v5698 = vrot.slane %v5520, 2
  %v5699 = vsel %vm5593, %v5698, %v5697
  %v5700 = vrot.slane %v5521, 1
  %v5701 = vsel %vm5596, %v5700, %v5699
  %v5702 = vrot.slane %v5523, 7
  %v5703 = vrot.slane %v5524, 6
  %v5704 = vsel %vm5581, %v5703, %v5702
  %v5705 = vrot.slane %v5525, 5
  %v5706 = vsel %vm5584, %v5705, %v5704
  %v5707 = vrot.slane %v5526, 4
  %v5708 = vsel %vm5587, %v5707, %v5706
  %v5709 = vrot.slane %v5527, 3
  %v5710 = vsel %vm5590, %v5709, %v5708
  %v5711 = vrot.slane %v5528, 2
  %v5712 = vsel %vm5593, %v5711, %v5710
  %v5713 = vrot.slane %v5529, 1
  %v5714 = vsel %vm5596, %v5713, %v5712
  %v5715 = vrot.slane %v5531, 7
  %v5716 = vrot.slane %v5532, 6
  %v5717 = vsel %vm5581, %v5716, %v5715
  %v5718 = vrot.slane %v5533, 5
  %v5719 = vsel %vm5584, %v5718, %v5717
  %v5720 = vrot.slane %v5534, 4
  %v5721 = vsel %vm5587, %v5720, %v5719
  %v5722 = vrot.slane %v5535, 3
  %v5723 = vsel %vm5590, %v5722, %v5721
  %v5724 = vrot.slane %v5536, 2
  %v5725 = vsel %vm5593, %v5724, %v5723
  %v5726 = vrot.slane %v5537, 1
  %v5727 = vsel %vm5596, %v5726, %v5725
  %v5728 = vrot.slane %v5539, 7
  %v5729 = vrot.slane %v5540, 6
  %v5730 = vsel %vm5581, %v5729, %v5728
  %v5731 = vrot.slane %v5541, 5
  %v5732 = vsel %vm5584, %v5731, %v5730
  %v5733 = vrot.slane %v5542, 4
  %v5734 = vsel %vm5587, %v5733, %v5732
  %v5735 = vrot.slane %v5543, 3
  %v5736 = vsel %vm5590, %v5735, %v5734
  %v5737 = vrot.slane %v5544, 2
  %v5738 = vsel %vm5593, %v5737, %v5736
  %v5739 = vrot.slane %v5545, 1
  %v5740 = vsel %vm5596, %v5739, %v5738
  %v5741 = vrot.slane %v5547, 7
  %v5742 = vrot.slane %v5548, 6
  %v5743 = vsel %vm5581, %v5742, %v5741
  %v5744 = vrot.slane %v5549, 5
  %v5745 = vsel %vm5584, %v5744, %v5743
  %v5746 = vrot.slane %v5550, 4
  %v5747 = vsel %vm5587, %v5746, %v5745
  %v5748 = vrot.slane %v5551, 3
  %v5749 = vsel %vm5590, %v5748, %v5747
  %v5750 = vrot.slane %v5552, 2
  %v5751 = vsel %vm5593, %v5750, %v5749
  %v5752 = vrot.slane %v5553, 1
  %v5753 = vsel %vm5596, %v5752, %v5751
  %v5754 = vrot.slane %v5555, 7
  %v5755 = vrot.slane %v5556, 6
  %v5756 = vsel %vm5581, %v5755, %v5754
  %v5757 = vrot.slane %v5557, 5
  %v5758 = vsel %vm5584, %v5757, %v5756
  %v5759 = vrot.slane %v5558, 4
  %v5760 = vsel %vm5587, %v5759, %v5758
  %v5761 = vrot.slane %v5559, 3
  %v5762 = vsel %vm5590, %v5761, %v5760
  %v5763 = vrot.slane %v5560, 2
  %v5764 = vsel %vm5593, %v5763, %v5762
  %v5765 = vrot.slane %v5561, 1
  %v5766 = vsel %vm5596, %v5765, %v5764
  %v5767 = vrot.slane %v5563, 7
  %v5768 = vrot.slane %v5564, 6
  %v5769 = vsel %vm5581, %v5768, %v5767
  %v5770 = vrot.slane %v5565, 5
  %v5771 = vsel %vm5584, %v5770, %v5769
  %v5772 = vrot.slane %v5566, 4
  %v5773 = vsel %vm5587, %v5772, %v5771
  %v5774 = vrot.slane %v5567, 3
  %v5775 = vsel %vm5590, %v5774, %v5773
  %v5776 = vrot.slane %v5568, 2
  %v5777 = vsel %vm5593, %v5776, %v5775
  %v5778 = vrot.slane %v5569, 1
  %v5779 = vsel %vm5596, %v5778, %v5777
  %v5780 = vrot.slane %v5571, 7
  %v5781 = vrot.slane %v5572, 6
  %v5782 = vsel %vm5581, %v5781, %v5780
  %v5783 = vrot.slane %v5573, 5
  %v5784 = vsel %vm5584, %v5783, %v5782
  %v5785 = vrot.slane %v5574, 4
  %v5786 = vsel %vm5587, %v5785, %v5784
  %v5787 = vrot.slane %v5575, 3
  %v5788 = vsel %vm5590, %v5787, %v5786
  %v5789 = vrot.slane %v5576, 2
  %v5790 = vsel %vm5593, %v5789, %v5788
  %v5791 = vrot.slane %v5577, 1
  %v5792 = vsel %vm5596, %v5791, %v5790
  %v5793 = vpack.c.b16 %v5597, %v5597
  %v5794 = vpack.c.b16 %v5458, %v5458
  %v5795 = vpack.c.b16 %v5610, %v5610
  %v5796 = vpack.c.b16 %v5466, %v5466
  %v5797 = vpack.c.b16 %v5623, %v5623
  %v5798 = vpack.c.b16 %v5474, %v5474
  %v5799 = vpack.c.b16 %v5636, %v5636
  %v5800 = vpack.c.b16 %v5482, %v5482
  %v5801 = vpack.c.b16 %v5649, %v5649
  %v5802 = vpack.c.b16 %v5490, %v5490
  %v5803 = vpack.c.b16 %v5662, %v5662
  %v5804 = vpack.c.b16 %v5498, %v5498
  %v5805 = vpack.c.b16 %v5675, %v5675
  %v5806 = vpack.c.b16 %v5506, %v5506
  %v5807 = vpack.c.b16 %v5688, %v5688
  %v5808 = vpack.c.b16 %v5514, %v5514
  %v5809 = vpack.c.b16 %v5701, %v5701
  %v5810 = vpack.c.b16 %v5522, %v5522
  %v5811 = vpack.c.b16 %v5714, %v5714
  %v5812 = vpack.c.b16 %v5530, %v5530
  %v5813 = vpack.c.b16 %v5727, %v5727
  %v5814 = vpack.c.b16 %v5538, %v5538
  %v5815 = vpack.c.b16 %v5740, %v5740
  %v5816 = vpack.c.b16 %v5546, %v5546
  %v5817 = vpack.c.b16 %v5753, %v5753
  %v5818 = vpack.c.b16 %v5554, %v5554
  %v5819 = vpack.c.b16 %v5766, %v5766
  %v5820 = vpack.c.b16 %v5562, %v5562
  %v5821 = vpack.c.b16 %v5779, %v5779
  %v5822 = vpack.c.b16 %v5570, %v5570
  %v5823 = vpack.c.b16 %v5792, %v5792
  %v5824 = vpack.c.b16 %v5578, %v5578
  %s5857 = scalar_lea.vmem [#allocation3], 8
  %vm5858 = vcmask 257024
  %vm5859 = vmand %vm5858, %vm860
  %v5860 = vld [vmem:[%s5857] sm:$0xf]
  %v5861 = vsel %vm5859, %v5793, %v5860
  %5862 = vst [vmem:[%s5857] sm:$0xf] %v5861
  %vm5863 = vcmask 253952
  %vm5864 = vmand %vm5863, %vm215
  %v5865 = vld [vmem:[%s5857 + $0x4] sm:$0x1]
  %v5866 = vsel %vm5864, %v5794, %v5865
  %5867 = vst [vmem:[%s5857 + $0x4] sm:$0x1] %v5866
  %v5868 = vld [vmem:[%s5857 + $0x8] sm:$0xf]
  %v5869 = vsel %vm5859, %v5795, %v5868
  %5870 = vst [vmem:[%s5857 + $0x8] sm:$0xf] %v5869
  %v5871 = vld [vmem:[%s5857 + $0xc] sm:$0x1]
  %v5872 = vsel %vm5864, %v5796, %v5871
  %5873 = vst [vmem:[%s5857 + $0xc] sm:$0x1] %v5872
  %v5874 = vld [vmem:[%s5857 + $0x10] sm:$0xf]
  %v5875 = vsel %vm5859, %v5797, %v5874
  %5876 = vst [vmem:[%s5857 + $0x10] sm:$0xf] %v5875
  %v5877 = vld [vmem:[%s5857 + $0x14] sm:$0x1]
  %v5878 = vsel %vm5864, %v5798, %v5877
  %5879 = vst [vmem:[%s5857 + $0x14] sm:$0x1] %v5878
  %v5880 = vld [vmem:[%s5857 + $0x18] sm:$0xf]
  %v5881 = vsel %vm5859, %v5799, %v5880
  %5882 = vst [vmem:[%s5857 + $0x18] sm:$0xf] %v5881
  %v5883 = vld [vmem:[%s5857 + $0x1c] sm:$0x1]
  %v5884 = vsel %vm5864, %v5800, %v5883
  %5885 = vst [vmem:[%s5857 + $0x1c] sm:$0x1] %v5884
  %v5886 = vld [vmem:[%s5857 + $0x20] sm:$0xf]
  %v5887 = vsel %vm5859, %v5801, %v5886
  %5888 = vst [vmem:[%s5857 + $0x20] sm:$0xf] %v5887
  %v5889 = vld [vmem:[%s5857 + $0x24] sm:$0x1]
  %v5890 = vsel %vm5864, %v5802, %v5889
  %5891 = vst [vmem:[%s5857 + $0x24] sm:$0x1] %v5890
  %v5892 = vld [vmem:[%s5857 + $0x28] sm:$0xf]
  %v5893 = vsel %vm5859, %v5803, %v5892
  %5894 = vst [vmem:[%s5857 + $0x28] sm:$0xf] %v5893
  %v5895 = vld [vmem:[%s5857 + $0x2c] sm:$0x1]
  %v5896 = vsel %vm5864, %v5804, %v5895
  %5897 = vst [vmem:[%s5857 + $0x2c] sm:$0x1] %v5896
  %v5898 = vld [vmem:[%s5857 + $0x30] sm:$0xf]
  %v5899 = vsel %vm5859, %v5805, %v5898
  %5900 = vst [vmem:[%s5857 + $0x30] sm:$0xf] %v5899
  %v5901 = vld [vmem:[%s5857 + $0x34] sm:$0x1]
  %v5902 = vsel %vm5864, %v5806, %v5901
  %5903 = vst [vmem:[%s5857 + $0x34] sm:$0x1] %v5902
  %v5904 = vld [vmem:[%s5857 + $0x38] sm:$0xf]
  %v5905 = vsel %vm5859, %v5807, %v5904
  %5906 = vst [vmem:[%s5857 + $0x38] sm:$0xf] %v5905
  %v5907 = vld [vmem:[%s5857 + $0x3c] sm:$0x1]
  %v5908 = vsel %vm5864, %v5808, %v5907
  %5909 = vst [vmem:[%s5857 + $0x3c] sm:$0x1] %v5908
  %v5910 = vld [vmem:[%s5857 + $0x50] sm:$0xf]
  %v5911 = vsel %vm5859, %v5809, %v5910
  %5912 = vst [vmem:[%s5857 + $0x50] sm:$0xf] %v5911
  %v5913 = vld [vmem:[%s5857 + $0x54] sm:$0x1]
  %v5914 = vsel %vm5864, %v5810, %v5913
  %5915 = vst [vmem:[%s5857 + $0x54] sm:$0x1] %v5914
  %v5916 = vld [vmem:[%s5857 + $0x58] sm:$0xf]
  %v5917 = vsel %vm5859, %v5811, %v5916
  %5918 = vst [vmem:[%s5857 + $0x58] sm:$0xf] %v5917
  %v5919 = vld [vmem:[%s5857 + $0x5c] sm:$0x1]
  %v5920 = vsel %vm5864, %v5812, %v5919
  %5921 = vst [vmem:[%s5857 + $0x5c] sm:$0x1] %v5920
  %v5922 = vld [vmem:[%s5857 + $0x60] sm:$0xf]
  %v5923 = vsel %vm5859, %v5813, %v5922
  %5924 = vst [vmem:[%s5857 + $0x60] sm:$0xf] %v5923
  %v5925 = vld [vmem:[%s5857 + $0x64] sm:$0x1]
  %v5926 = vsel %vm5864, %v5814, %v5925
  %5927 = vst [vmem:[%s5857 + $0x64] sm:$0x1] %v5926
  %v5928 = vld [vmem:[%s5857 + $0x68] sm:$0xf]
  %v5929 = vsel %vm5859, %v5815, %v5928
  %5930 = vst [vmem:[%s5857 + $0x68] sm:$0xf] %v5929
  %v5931 = vld [vmem:[%s5857 + $0x6c] sm:$0x1]
  %v5932 = vsel %vm5864, %v5816, %v5931
  %5933 = vst [vmem:[%s5857 + $0x6c] sm:$0x1] %v5932
  %v5934 = vld [vmem:[%s5857 + $0x70] sm:$0xf]
  %v5935 = vsel %vm5859, %v5817, %v5934
  %5936 = vst [vmem:[%s5857 + $0x70] sm:$0xf] %v5935
  %v5937 = vld [vmem:[%s5857 + $0x74] sm:$0x1]
  %v5938 = vsel %vm5864, %v5818, %v5937
  %5939 = vst [vmem:[%s5857 + $0x74] sm:$0x1] %v5938
  %v5940 = vld [vmem:[%s5857 + $0x78] sm:$0xf]
  %v5941 = vsel %vm5859, %v5819, %v5940
  %5942 = vst [vmem:[%s5857 + $0x78] sm:$0xf] %v5941
  %v5943 = vld [vmem:[%s5857 + $0x7c] sm:$0x1]
  %v5944 = vsel %vm5864, %v5820, %v5943
  %5945 = vst [vmem:[%s5857 + $0x7c] sm:$0x1] %v5944
  %v5946 = vld [vmem:[%s5857 + $0x80] sm:$0xf]
  %v5947 = vsel %vm5859, %v5821, %v5946
  %5948 = vst [vmem:[%s5857 + $0x80] sm:$0xf] %v5947
  %v5949 = vld [vmem:[%s5857 + $0x84] sm:$0x1]
  %v5950 = vsel %vm5864, %v5822, %v5949
  %5951 = vst [vmem:[%s5857 + $0x84] sm:$0x1] %v5950
  %v5952 = vld [vmem:[%s5857 + $0x88] sm:$0xf]
  %v5953 = vsel %vm5859, %v5823, %v5952
  %5954 = vst [vmem:[%s5857 + $0x88] sm:$0xf] %v5953
  %v5955 = vld [vmem:[%s5857 + $0x8c] sm:$0x1]
  %v5956 = vsel %vm5864, %v5824, %v5955
  %5957 = vst [vmem:[%s5857 + $0x8c] sm:$0x1] %v5956
  %v5958 = vld [vmem:[#allocation3] sm:$0xf]
  %v5959 = vld [vmem:[#allocation3 + $0x8] sm:$0xf]
  %v5960 = vld [vmem:[#allocation3 + $0x10] sm:$0xf]
  %v5961 = vld [vmem:[#allocation3 + $0x18] sm:$0xf]
  %v5962 = vld [vmem:[#allocation3 + $0x20] sm:$0xf]
  %v5963 = vld [vmem:[#allocation3 + $0x28] sm:$0xf]
  %v5964 = vld [vmem:[#allocation3 + $0x30] sm:$0xf]
  %v5965 = vld [vmem:[#allocation3 + $0x38] sm:$0xf]
  %v5966 = vld [vmem:[#allocation3 + $0x40] sm:$0xf]
  %v5967 = vld [vmem:[#allocation3 + $0x48] sm:$0xf]
  %v5968 = vld [vmem:[#allocation3 + $0x50] sm:$0xf]
  %v5969 = vld [vmem:[#allocation3 + $0x58] sm:$0xf]
  %v5970 = vld [vmem:[#allocation3 + $0x60] sm:$0xf]
  %v5971 = vld [vmem:[#allocation3 + $0x68] sm:$0xf]
  %v5972 = vld [vmem:[#allocation3 + $0x70] sm:$0xf]
  %v5973 = vld [vmem:[#allocation3 + $0x78] sm:$0xf]
  %v5974 = vld [vmem:[#allocation3 + $0x80] sm:$0xf]
  %v5975 = vld [vmem:[#allocation3 + $0x88] sm:$0xf]
  %v5976 = vld [vmem:[#allocation3 + $0x90] sm:$0xf]
  %v5977 = vld [vmem:[#allocation3 + $0x98] sm:$0xf]
  %v5978 = vld [vmem:[#allocation3 + $0x4] sm:$0x1]
  %v5979 = vld [vmem:[#allocation3 + $0xc] sm:$0x1]
  %v5980 = vld [vmem:[#allocation3 + $0x14] sm:$0x1]
  %v5981 = vld [vmem:[#allocation3 + $0x1c] sm:$0x1]
  %v5982 = vld [vmem:[#allocation3 + $0x24] sm:$0x1]
  %v5983 = vld [vmem:[#allocation3 + $0x2c] sm:$0x1]
  %v5984 = vld [vmem:[#allocation3 + $0x34] sm:$0x1]
  %v5985 = vld [vmem:[#allocation3 + $0x3c] sm:$0x1]
  %v5986 = vld [vmem:[#allocation3 + $0x44] sm:$0x1]
  %v5987 = vld [vmem:[#allocation3 + $0x4c] sm:$0x1]
  %v5988 = vld [vmem:[#allocation3 + $0x54] sm:$0x1]
  %v5989 = vld [vmem:[#allocation3 + $0x5c] sm:$0x1]
  %v5990 = vld [vmem:[#allocation3 + $0x64] sm:$0x1]
  %v5991 = vld [vmem:[#allocation3 + $0x6c] sm:$0x1]
  %v5992 = vld [vmem:[#allocation3 + $0x74] sm:$0x1]
  %v5993 = vld [vmem:[#allocation3 + $0x7c] sm:$0x1]
  %v5994 = vld [vmem:[#allocation3 + $0x84] sm:$0x1]
  %v5995 = vld [vmem:[#allocation3 + $0x8c] sm:$0x1]
  %v5996 = vld [vmem:[#allocation3 + $0x94] sm:$0x1]
  %v5997 = vld [vmem:[#allocation3 + $0x9c] sm:$0x1]
  %v5998 = vld [vmem:[#allocation3] sm:$0xe]
  %v5999 = vld [vmem:[#allocation3 + $0x8] sm:$0xe]
  %v6000 = vld [vmem:[#allocation3 + $0x10] sm:$0xe]
  %v6001 = vld [vmem:[#allocation3 + $0x18] sm:$0xe]
  %v6002 = vld [vmem:[#allocation3 + $0x20] sm:$0xe]
  %v6003 = vld [vmem:[#allocation3 + $0x28] sm:$0xe]
  %v6004 = vld [vmem:[#allocation3 + $0x30] sm:$0xe]
  %v6005 = vld [vmem:[#allocation3 + $0x38] sm:$0xe]
  %v6006 = vld [vmem:[#allocation3 + $0x40] sm:$0xe]
  %v6007 = vld [vmem:[#allocation3 + $0x48] sm:$0xe]
  %v6008 = vld [vmem:[#allocation3 + $0x50] sm:$0xe]
  %v6009 = vld [vmem:[#allocation3 + $0x58] sm:$0xe]
  %v6010 = vld [vmem:[#allocation3 + $0x60] sm:$0xe]
  %v6011 = vld [vmem:[#allocation3 + $0x68] sm:$0xe]
  %v6012 = vld [vmem:[#allocation3 + $0x70] sm:$0xe]
  %v6013 = vld [vmem:[#allocation3 + $0x78] sm:$0xe]
  %v6014 = vld [vmem:[#allocation3 + $0x80] sm:$0xe]
  %v6015 = vld [vmem:[#allocation3 + $0x88] sm:$0xe]
  %v6016 = vld [vmem:[#allocation3 + $0x90] sm:$0xe]
  %v6017 = vld [vmem:[#allocation3 + $0x98] sm:$0xe]
  %v6050 = vunpack.c.l.b16 %v5958
  %v6051 = vunpack.c.l.b16 %v5978
  %v6052 = vunpack.c.l.b16 %v5959
  %v6053 = vunpack.c.l.b16 %v5979
  %v6054 = vunpack.c.l.b16 %v5960
  %v6055 = vunpack.c.l.b16 %v5980
  %v6056 = vunpack.c.l.b16 %v5961
  %v6057 = vunpack.c.l.b16 %v5981
  %v6058 = vunpack.c.l.b16 %v5962
  %v6059 = vunpack.c.l.b16 %v5982
  %v6060 = vunpack.c.l.b16 %v5963
  %v6061 = vunpack.c.l.b16 %v5983
  %v6062 = vunpack.c.l.b16 %v5964
  %v6063 = vunpack.c.l.b16 %v5984
  %v6064 = vunpack.c.l.b16 %v5965
  %v6065 = vunpack.c.l.b16 %v5985
  %v6066 = vunpack.c.l.b16 %v5968
  %v6067 = vunpack.c.l.b16 %v5988
  %v6068 = vunpack.c.l.b16 %v5969
  %v6069 = vunpack.c.l.b16 %v5989
  %v6070 = vunpack.c.l.b16 %v5970
  %v6071 = vunpack.c.l.b16 %v5990
  %v6072 = vunpack.c.l.b16 %v5971
  %v6073 = vunpack.c.l.b16 %v5991
  %v6074 = vunpack.c.l.b16 %v5972
  %v6075 = vunpack.c.l.b16 %v5992
  %v6076 = vunpack.c.l.b16 %v5973
  %v6077 = vunpack.c.l.b16 %v5993
  %v6078 = vunpack.c.l.b16 %v5974
  %v6079 = vunpack.c.l.b16 %v5994
  %v6080 = vunpack.c.l.b16 %v5975
  %v6081 = vunpack.c.l.b16 %v5995
  %v6082 = vpack.c.b16 %v6051, %v6050
  %v6083 = vpack.c.b16 %v6053, %v6052
  %v6084 = vpack.c.b16 %v6055, %v6054
  %v6085 = vpack.c.b16 %v6057, %v6056
  %v6086 = vpack.c.b16 %v6059, %v6058
  %v6087 = vpack.c.b16 %v6061, %v6060
  %v6088 = vpack.c.b16 %v6063, %v6062
  %v6089 = vpack.c.b16 %v6065, %v6064
  %v6090 = vpack.c.b16 %v6067, %v6066
  %v6091 = vpack.c.b16 %v6069, %v6068
  %v6092 = vpack.c.b16 %v6071, %v6070
  %v6093 = vpack.c.b16 %v6073, %v6072
  %v6094 = vpack.c.b16 %v6075, %v6074
  %v6095 = vpack.c.b16 %v6077, %v6076
  %v6096 = vpack.c.b16 %v6079, %v6078
  %v6097 = vpack.c.b16 %v6081, %v6080
  %v6099 = vshrl.u32 %v6082, 16
  %v6101 = vshll.u32 %v6082, 16
  %v6103 = vrot.slane %v6101, 1
  %v6104 = vor.u32 %v6099, %v6103
  %v6106 = vshrl.u32 %v6083, 16
  %v6108 = vshll.u32 %v6083, 16
  %v6110 = vrot.slane %v6108, 1
  %v6111 = vor.u32 %v6106, %v6110
  %v6113 = vshrl.u32 %v6084, 16
  %v6115 = vshll.u32 %v6084, 16
  %v6117 = vrot.slane %v6115, 1
  %v6118 = vor.u32 %v6113, %v6117
  %v6120 = vshrl.u32 %v6085, 16
  %v6122 = vshll.u32 %v6085, 16
  %v6124 = vrot.slane %v6122, 1
  %v6125 = vor.u32 %v6120, %v6124
  %v6127 = vshrl.u32 %v6086, 16
  %v6129 = vshll.u32 %v6086, 16
  %v6131 = vrot.slane %v6129, 1
  %v6132 = vor.u32 %v6127, %v6131
  %v6134 = vshrl.u32 %v6087, 16
  %v6136 = vshll.u32 %v6087, 16
  %v6138 = vrot.slane %v6136, 1
  %v6139 = vor.u32 %v6134, %v6138
  %v6141 = vshrl.u32 %v6088, 16
  %v6143 = vshll.u32 %v6088, 16
  %v6145 = vrot.slane %v6143, 1
  %v6146 = vor.u32 %v6141, %v6145
  %v6148 = vshrl.u32 %v6089, 16
  %v6150 = vshll.u32 %v6089, 16
  %v6152 = vrot.slane %v6150, 1
  %v6153 = vor.u32 %v6148, %v6152
  %v6155 = vshrl.u32 %v6090, 16
  %v6157 = vshll.u32 %v6090, 16
  %v6159 = vrot.slane %v6157, 1
  %v6160 = vor.u32 %v6155, %v6159
  %v6162 = vshrl.u32 %v6091, 16
  %v6164 = vshll.u32 %v6091, 16
  %v6166 = vrot.slane %v6164, 1
  %v6167 = vor.u32 %v6162, %v6166
  %v6169 = vshrl.u32 %v6092, 16
  %v6171 = vshll.u32 %v6092, 16
  %v6173 = vrot.slane %v6171, 1
  %v6174 = vor.u32 %v6169, %v6173
  %v6176 = vshrl.u32 %v6093, 16
  %v6178 = vshll.u32 %v6093, 16
  %v6180 = vrot.slane %v6178, 1
  %v6181 = vor.u32 %v6176, %v6180
  %v6183 = vshrl.u32 %v6094, 16
  %v6185 = vshll.u32 %v6094, 16
  %v6187 = vrot.slane %v6185, 1
  %v6188 = vor.u32 %v6183, %v6187
  %v6190 = vshrl.u32 %v6095, 16
  %v6192 = vshll.u32 %v6095, 16
  %v6194 = vrot.slane %v6192, 1
  %v6195 = vor.u32 %v6190, %v6194
  %v6197 = vshrl.u32 %v6096, 16
  %v6199 = vshll.u32 %v6096, 16
  %v6201 = vrot.slane %v6199, 1
  %v6202 = vor.u32 %v6197, %v6201
  %v6204 = vshrl.u32 %v6097, 16
  %v6206 = vshll.u32 %v6097, 16
  %v6208 = vrot.slane %v6206, 1
  %v6209 = vor.u32 %v6204, %v6208
  %6210 = vrot.lane.b32.xlu0 %v6104, 32
  %v6211 = vpop.permute.xlu0 %6210
  %6212 = vrot.lane.b32.xlu0 %v6111, 32
  %v6213 = vpop.permute.xlu0 %6212
  %6214 = vrot.lane.b32.xlu0 %v6118, 32
  %v6215 = vpop.permute.xlu0 %6214
  %6216 = vrot.lane.b32.xlu0 %v6125, 32
  %v6217 = vpop.permute.xlu0 %6216
  %6218 = vrot.lane.b32.xlu0 %v6132, 32
  %v6219 = vpop.permute.xlu0 %6218
  %6220 = vrot.lane.b32.xlu0 %v6139, 32
  %v6221 = vpop.permute.xlu0 %6220
  %6222 = vrot.lane.b32.xlu0 %v6146, 32
  %v6223 = vpop.permute.xlu0 %6222
  %6224 = vrot.lane.b32.xlu0 %v6153, 32
  %v6225 = vpop.permute.xlu0 %6224
  %6226 = vrot.lane.b32.xlu0 %v6160, 32
  %v6227 = vpop.permute.xlu0 %6226
  %6228 = vrot.lane.b32.xlu0 %v6167, 32
  %v6229 = vpop.permute.xlu0 %6228
  %6230 = vrot.lane.b32.xlu0 %v6174, 32
  %v6231 = vpop.permute.xlu0 %6230
  %6232 = vrot.lane.b32.xlu0 %v6181, 32
  %v6233 = vpop.permute.xlu0 %6232
  %6234 = vrot.lane.b32.xlu0 %v6188, 32
  %v6235 = vpop.permute.xlu0 %6234
  %6236 = vrot.lane.b32.xlu0 %v6195, 32
  %v6237 = vpop.permute.xlu0 %6236
  %6238 = vrot.lane.b32.xlu0 %v6202, 32
  %v6239 = vpop.permute.xlu0 %6238
  %6240 = vrot.lane.b32.xlu0 %v6209, 32
  %v6241 = vpop.permute.xlu0 %6240
  %v6258 = vunpack.c.l.b16 %v5998
  %v6259 = vunpack.c.l.b16 %v5999
  %v6260 = vunpack.c.l.b16 %v6000
  %v6261 = vunpack.c.l.b16 %v6001
  %v6262 = vunpack.c.l.b16 %v6002
  %v6263 = vunpack.c.l.b16 %v6003
  %v6264 = vunpack.c.l.b16 %v6004
  %v6265 = vunpack.c.l.b16 %v6005
  %v6266 = vunpack.c.l.b16 %v6008
  %v6267 = vunpack.c.l.b16 %v6009
  %v6268 = vunpack.c.l.b16 %v6010
  %v6269 = vunpack.c.l.b16 %v6011
  %v6270 = vunpack.c.l.b16 %v6012
  %v6271 = vunpack.c.l.b16 %v6013
  %v6272 = vunpack.c.l.b16 %v6014
  %v6273 = vunpack.c.l.b16 %v6015
  %v6274 = vpack.c.b16 %v6051, %v6258
  %v6275 = vpack.c.b16 %v6053, %v6259
  %v6276 = vpack.c.b16 %v6055, %v6260
  %v6277 = vpack.c.b16 %v6057, %v6261
  %v6278 = vpack.c.b16 %v6059, %v6262
  %v6279 = vpack.c.b16 %v6061, %v6263
  %v6280 = vpack.c.b16 %v6063, %v6264
  %v6281 = vpack.c.b16 %v6065, %v6265
  %v6282 = vpack.c.b16 %v6067, %v6266
  %v6283 = vpack.c.b16 %v6069, %v6267
  %v6284 = vpack.c.b16 %v6071, %v6268
  %v6285 = vpack.c.b16 %v6073, %v6269
  %v6286 = vpack.c.b16 %v6075, %v6270
  %v6287 = vpack.c.b16 %v6077, %v6271
  %v6288 = vpack.c.b16 %v6079, %v6272
  %v6289 = vpack.c.b16 %v6081, %v6273
  %v6290 = vrot.slane %v6274, 1
  %v6291 = vrot.slane %v6275, 1
  %v6292 = vrot.slane %v6276, 1
  %v6293 = vrot.slane %v6277, 1
  %v6294 = vrot.slane %v6278, 1
  %v6295 = vrot.slane %v6279, 1
  %v6296 = vrot.slane %v6280, 1
  %v6297 = vrot.slane %v6281, 1
  %v6298 = vrot.slane %v6282, 1
  %v6299 = vrot.slane %v6283, 1
  %v6300 = vrot.slane %v6284, 1
  %v6301 = vrot.slane %v6285, 1
  %v6302 = vrot.slane %v6286, 1
  %v6303 = vrot.slane %v6287, 1
  %v6304 = vrot.slane %v6288, 1
  %v6305 = vrot.slane %v6289, 1
  %6306 = vrot.lane.b32.xlu0 %v6290, 64
  %v6307 = vpop.permute.xlu0 %6306
  %6308 = vrot.lane.b32.xlu0 %v6291, 64
  %v6309 = vpop.permute.xlu0 %6308
  %6310 = vrot.lane.b32.xlu0 %v6292, 64
  %v6311 = vpop.permute.xlu0 %6310
  %6312 = vrot.lane.b32.xlu0 %v6293, 64
  %v6313 = vpop.permute.xlu0 %6312
  %6314 = vrot.lane.b32.xlu0 %v6294, 64
  %v6315 = vpop.permute.xlu0 %6314
  %6316 = vrot.lane.b32.xlu0 %v6295, 64
  %v6317 = vpop.permute.xlu0 %6316
  %6318 = vrot.lane.b32.xlu0 %v6296, 64
  %v6319 = vpop.permute.xlu0 %6318
  %6320 = vrot.lane.b32.xlu0 %v6297, 64
  %v6321 = vpop.permute.xlu0 %6320
  %6322 = vrot.lane.b32.xlu0 %v6298, 64
  %v6323 = vpop.permute.xlu0 %6322
  %6324 = vrot.lane.b32.xlu0 %v6299, 64
  %v6325 = vpop.permute.xlu0 %6324
  %6326 = vrot.lane.b32.xlu0 %v6300, 64
  %v6327 = vpop.permute.xlu0 %6326
  %6328 = vrot.lane.b32.xlu0 %v6301, 64
  %v6329 = vpop.permute.xlu0 %6328
  %6330 = vrot.lane.b32.xlu0 %v6302, 64
  %v6331 = vpop.permute.xlu0 %6330
  %6332 = vrot.lane.b32.xlu0 %v6303, 64
  %v6333 = vpop.permute.xlu0 %6332
  %6334 = vrot.lane.b32.xlu0 %v6304, 64
  %v6335 = vpop.permute.xlu0 %6334
  %6336 = vrot.lane.b32.xlu0 %v6305, 64
  %v6337 = vpop.permute.xlu0 %6336
  %v6340 = vunpack.c.l.b16 %v5966
  %v6341 = vunpack.c.l.b16 %v5976
  %v6342 = vpack.c.b16 %v6052, %v6052
  %v6343 = vpack.c.b16 %v6054, %v6054
  %v6344 = vpack.c.b16 %v6056, %v6056
  %v6345 = vpack.c.b16 %v6058, %v6058
  %v6346 = vpack.c.b16 %v6060, %v6060
  %v6347 = vpack.c.b16 %v6062, %v6062
  %v6348 = vpack.c.b16 %v6064, %v6064
  %v6349 = vpack.c.b16 %v6340, %v6340
  %v6350 = vpack.c.b16 %v6068, %v6068
  %v6351 = vpack.c.b16 %v6070, %v6070
  %v6352 = vpack.c.b16 %v6072, %v6072
  %v6353 = vpack.c.b16 %v6074, %v6074
  %v6354 = vpack.c.b16 %v6076, %v6076
  %v6355 = vpack.c.b16 %v6078, %v6078
  %v6356 = vpack.c.b16 %v6080, %v6080
  %v6357 = vpack.c.b16 %v6341, %v6341
  %6358 = vrot.lane.b32.xlu0 %v6342, 96
  %v6359 = vpop.permute.xlu0 %6358
  %6360 = vrot.lane.b32.xlu0 %v6343, 96
  %v6361 = vpop.permute.xlu0 %6360
  %6362 = vrot.lane.b32.xlu0 %v6344, 96
  %v6363 = vpop.permute.xlu0 %6362
  %6364 = vrot.lane.b32.xlu0 %v6345, 96
  %v6365 = vpop.permute.xlu0 %6364
  %6366 = vrot.lane.b32.xlu0 %v6346, 96
  %v6367 = vpop.permute.xlu0 %6366
  %6368 = vrot.lane.b32.xlu0 %v6347, 96
  %v6369 = vpop.permute.xlu0 %6368
  %6370 = vrot.lane.b32.xlu0 %v6348, 96
  %v6371 = vpop.permute.xlu0 %6370
  %6372 = vrot.lane.b32.xlu0 %v6349, 96
  %v6373 = vpop.permute.xlu0 %6372
  %6374 = vrot.lane.b32.xlu0 %v6350, 96
  %v6375 = vpop.permute.xlu0 %6374
  %6376 = vrot.lane.b32.xlu0 %v6351, 96
  %v6377 = vpop.permute.xlu0 %6376
  %6378 = vrot.lane.b32.xlu0 %v6352, 96
  %v6379 = vpop.permute.xlu0 %6378
  %6380 = vrot.lane.b32.xlu0 %v6353, 96
  %v6381 = vpop.permute.xlu0 %6380
  %6382 = vrot.lane.b32.xlu0 %v6354, 96
  %v6383 = vpop.permute.xlu0 %6382
  %6384 = vrot.lane.b32.xlu0 %v6355, 96
  %v6385 = vpop.permute.xlu0 %6384
  %6386 = vrot.lane.b32.xlu0 %v6356, 96
  %v6387 = vpop.permute.xlu0 %6386
  %6388 = vrot.lane.b32.xlu0 %v6357, 96
  %v6389 = vpop.permute.xlu0 %6388
  %v6392 = vunpack.c.l.b16 %v5986
  %v6393 = vunpack.c.l.b16 %v5996
  %v6394 = vpack.c.b16 %v6392, %v6340
  %v6395 = vpack.c.b16 %v6393, %v6341
  %v6397 = vshrl.u32 %v6394, 16
  %v6399 = vshll.u32 %v6394, 16
  %v6401 = vrot.slane %v6399, 1
  %v6402 = vor.u32 %v6397, %v6401
  %v6404 = vshrl.u32 %v6395, 16
  %v6406 = vshll.u32 %v6395, 16
  %v6408 = vrot.slane %v6406, 1
  %v6409 = vor.u32 %v6404, %v6408
  %v6412 = vunpack.c.l.b16 %v6006
  %v6413 = vunpack.c.l.b16 %v6016
  %v6414 = vpack.c.b16 %v6392, %v6412
  %v6415 = vpack.c.b16 %v6393, %v6413
  %v6416 = vrot.slane %v6414, 1
  %v6417 = vrot.slane %v6415, 1
  %6418 = vrot.lane.b32.xlu0 %v6291, 32
  %v6419 = vpop.permute.xlu0 %6418
  %6420 = vrot.lane.b32.xlu0 %v6292, 32
  %v6421 = vpop.permute.xlu0 %6420
  %6422 = vrot.lane.b32.xlu0 %v6293, 32
  %v6423 = vpop.permute.xlu0 %6422
  %6424 = vrot.lane.b32.xlu0 %v6294, 32
  %v6425 = vpop.permute.xlu0 %6424
  %6426 = vrot.lane.b32.xlu0 %v6295, 32
  %v6427 = vpop.permute.xlu0 %6426
  %6428 = vrot.lane.b32.xlu0 %v6296, 32
  %v6429 = vpop.permute.xlu0 %6428
  %6430 = vrot.lane.b32.xlu0 %v6297, 32
  %v6431 = vpop.permute.xlu0 %6430
  %6432 = vrot.lane.b32.xlu0 %v6416, 32
  %v6433 = vpop.permute.xlu0 %6432
  %6434 = vrot.lane.b32.xlu0 %v6299, 32
  %v6435 = vpop.permute.xlu0 %6434
  %6436 = vrot.lane.b32.xlu0 %v6300, 32
  %v6437 = vpop.permute.xlu0 %6436
  %6438 = vrot.lane.b32.xlu0 %v6301, 32
  %v6439 = vpop.permute.xlu0 %6438
  %6440 = vrot.lane.b32.xlu0 %v6302, 32
  %v6441 = vpop.permute.xlu0 %6440
  %6442 = vrot.lane.b32.xlu0 %v6303, 32
  %v6443 = vpop.permute.xlu0 %6442
  %6444 = vrot.lane.b32.xlu0 %v6304, 32
  %v6445 = vpop.permute.xlu0 %6444
  %6446 = vrot.lane.b32.xlu0 %v6305, 32
  %v6447 = vpop.permute.xlu0 %6446
  %6448 = vrot.lane.b32.xlu0 %v6417, 32
  %v6449 = vpop.permute.xlu0 %6448
  %v6452 = vunpack.c.l.b16 %v5967
  %v6453 = vunpack.c.l.b16 %v5977
  %v6454 = vpack.c.b16 %v6452, %v6452
  %v6455 = vpack.c.b16 %v6453, %v6453
  %6456 = vrot.lane.b32.xlu0 %v6343, 64
  %v6457 = vpop.permute.xlu0 %6456
  %6458 = vrot.lane.b32.xlu0 %v6344, 64
  %v6459 = vpop.permute.xlu0 %6458
  %6460 = vrot.lane.b32.xlu0 %v6345, 64
  %v6461 = vpop.permute.xlu0 %6460
  %6462 = vrot.lane.b32.xlu0 %v6346, 64
  %v6463 = vpop.permute.xlu0 %6462
  %6464 = vrot.lane.b32.xlu0 %v6347, 64
  %v6465 = vpop.permute.xlu0 %6464
  %6466 = vrot.lane.b32.xlu0 %v6348, 64
  %v6467 = vpop.permute.xlu0 %6466
  %6468 = vrot.lane.b32.xlu0 %v6349, 64
  %v6469 = vpop.permute.xlu0 %6468
  %6470 = vrot.lane.b32.xlu0 %v6454, 64
  %v6471 = vpop.permute.xlu0 %6470
  %6472 = vrot.lane.b32.xlu0 %v6351, 64
  %v6473 = vpop.permute.xlu0 %6472
  %6474 = vrot.lane.b32.xlu0 %v6352, 64
  %v6475 = vpop.permute.xlu0 %6474
  %6476 = vrot.lane.b32.xlu0 %v6353, 64
  %v6477 = vpop.permute.xlu0 %6476
  %6478 = vrot.lane.b32.xlu0 %v6354, 64
  %v6479 = vpop.permute.xlu0 %6478
  %6480 = vrot.lane.b32.xlu0 %v6355, 64
  %v6481 = vpop.permute.xlu0 %6480
  %6482 = vrot.lane.b32.xlu0 %v6356, 64
  %v6483 = vpop.permute.xlu0 %6482
  %6484 = vrot.lane.b32.xlu0 %v6357, 64
  %v6485 = vpop.permute.xlu0 %6484
  %6486 = vrot.lane.b32.xlu0 %v6455, 64
  %v6487 = vpop.permute.xlu0 %6486
  %v6490 = vunpack.c.l.b16 %v5987
  %v6491 = vunpack.c.l.b16 %v5997
  %v6492 = vpack.c.b16 %v6490, %v6452
  %v6493 = vpack.c.b16 %v6491, %v6453
  %v6495 = vshrl.u32 %v6492, 16
  %v6497 = vshll.u32 %v6492, 16
  %v6499 = vrot.slane %v6497, 1
  %v6500 = vor.u32 %v6495, %v6499
  %v6502 = vshrl.u32 %v6493, 16
  %v6504 = vshll.u32 %v6493, 16
  %v6506 = vrot.slane %v6504, 1
  %v6507 = vor.u32 %v6502, %v6506
  %6508 = vrot.lane.b32.xlu0 %v6118, 96
  %v6509 = vpop.permute.xlu0 %6508
  %6510 = vrot.lane.b32.xlu0 %v6125, 96
  %v6511 = vpop.permute.xlu0 %6510
  %6512 = vrot.lane.b32.xlu0 %v6132, 96
  %v6513 = vpop.permute.xlu0 %6512
  %6514 = vrot.lane.b32.xlu0 %v6139, 96
  %v6515 = vpop.permute.xlu0 %6514
  %6516 = vrot.lane.b32.xlu0 %v6146, 96
  %v6517 = vpop.permute.xlu0 %6516
  %6518 = vrot.lane.b32.xlu0 %v6153, 96
  %v6519 = vpop.permute.xlu0 %6518
  %6520 = vrot.lane.b32.xlu0 %v6402, 96
  %v6521 = vpop.permute.xlu0 %6520
  %6522 = vrot.lane.b32.xlu0 %v6500, 96
  %v6523 = vpop.permute.xlu0 %6522
  %6524 = vrot.lane.b32.xlu0 %v6174, 96
  %v6525 = vpop.permute.xlu0 %6524
  %6526 = vrot.lane.b32.xlu0 %v6181, 96
  %v6527 = vpop.permute.xlu0 %6526
  %6528 = vrot.lane.b32.xlu0 %v6188, 96
  %v6529 = vpop.permute.xlu0 %6528
  %6530 = vrot.lane.b32.xlu0 %v6195, 96
  %v6531 = vpop.permute.xlu0 %6530
  %6532 = vrot.lane.b32.xlu0 %v6202, 96
  %v6533 = vpop.permute.xlu0 %6532
  %6534 = vrot.lane.b32.xlu0 %v6209, 96
  %v6535 = vpop.permute.xlu0 %6534
  %6536 = vrot.lane.b32.xlu0 %v6409, 96
  %v6537 = vpop.permute.xlu0 %6536
  %6538 = vrot.lane.b32.xlu0 %v6507, 96
  %v6539 = vpop.permute.xlu0 %6538
  %v6542 = vunpack.c.l.b16 %v6007
  %v6543 = vunpack.c.l.b16 %v6017
  %v6544 = vpack.c.b16 %v6490, %v6542
  %v6545 = vpack.c.b16 %v6491, %v6543
  %v6546 = vrot.slane %v6544, 1
  %v6547 = vrot.slane %v6545, 1
  %vm6548 = vcmask 261120
  %v6551 = vsel %vm6548, %v5958, %v6211
  %v6554 = vsel %vm6548, %v5959, %v6213
  %v6557 = vsel %vm6548, %v5960, %v6215
  %v6560 = vsel %vm6548, %v5961, %v6217
  %v6563 = vsel %vm6548, %v5962, %v6219
  %v6566 = vsel %vm6548, %v5963, %v6221
  %v6569 = vsel %vm6548, %v5964, %v6223
  %v6572 = vsel %vm6548, %v5965, %v6225
  %v6575 = vsel %vm6548, %v5968, %v6227
  %v6578 = vsel %vm6548, %v5969, %v6229
  %v6581 = vsel %vm6548, %v5970, %v6231
  %v6584 = vsel %vm6548, %v5971, %v6233
  %v6587 = vsel %vm6548, %v5972, %v6235
  %v6590 = vsel %vm6548, %v5973, %v6237
  %v6593 = vsel %vm6548, %v5974, %v6239
  %v6596 = vsel %vm6548, %v5975, %v6241
  %vm6597 = vcmask 523264
  %v6599 = vsel %vm6597, %v6551, %v6307
  %v6601 = vsel %vm6597, %v6554, %v6309
  %v6603 = vsel %vm6597, %v6557, %v6311
  %v6605 = vsel %vm6597, %v6560, %v6313
  %v6607 = vsel %vm6597, %v6563, %v6315
  %v6609 = vsel %vm6597, %v6566, %v6317
  %v6611 = vsel %vm6597, %v6569, %v6319
  %v6613 = vsel %vm6597, %v6572, %v6321
  %v6615 = vsel %vm6597, %v6575, %v6323
  %v6617 = vsel %vm6597, %v6578, %v6325
  %v6619 = vsel %vm6597, %v6581, %v6327
  %v6621 = vsel %vm6597, %v6584, %v6329
  %v6623 = vsel %vm6597, %v6587, %v6331
  %v6625 = vsel %vm6597, %v6590, %v6333
  %v6627 = vsel %vm6597, %v6593, %v6335
  %v6629 = vsel %vm6597, %v6596, %v6337
  %vm6630 = vcmask 785408
  %v6632 = vsel %vm6630, %v6599, %v6359
  %v6634 = vsel %vm6630, %v6601, %v6361
  %v6636 = vsel %vm6630, %v6603, %v6363
  %v6638 = vsel %vm6630, %v6605, %v6365
  %v6640 = vsel %vm6630, %v6607, %v6367
  %v6642 = vsel %vm6630, %v6609, %v6369
  %v6644 = vsel %vm6630, %v6611, %v6371
  %v6646 = vsel %vm6630, %v6613, %v6373
  %v6648 = vsel %vm6630, %v6615, %v6375
  %v6650 = vsel %vm6630, %v6617, %v6377
  %v6652 = vsel %vm6630, %v6619, %v6379
  %v6654 = vsel %vm6630, %v6621, %v6381
  %v6656 = vsel %vm6630, %v6623, %v6383
  %v6658 = vsel %vm6630, %v6625, %v6385
  %v6660 = vsel %vm6630, %v6627, %v6387
  %v6662 = vsel %vm6630, %v6629, %v6389
  %v6665 = vsel %vm6548, %v6111, %v6419
  %v6668 = vsel %vm6548, %v6118, %v6421
  %v6671 = vsel %vm6548, %v6125, %v6423
  %v6674 = vsel %vm6548, %v6132, %v6425
  %v6677 = vsel %vm6548, %v6139, %v6427
  %v6680 = vsel %vm6548, %v6146, %v6429
  %v6683 = vsel %vm6548, %v6153, %v6431
  %v6686 = vsel %vm6548, %v6402, %v6433
  %v6689 = vsel %vm6548, %v6167, %v6435
  %v6692 = vsel %vm6548, %v6174, %v6437
  %v6695 = vsel %vm6548, %v6181, %v6439
  %v6698 = vsel %vm6548, %v6188, %v6441
  %v6701 = vsel %vm6548, %v6195, %v6443
  %v6704 = vsel %vm6548, %v6202, %v6445
  %v6707 = vsel %vm6548, %v6209, %v6447
  %v6710 = vsel %vm6548, %v6409, %v6449
  %v6712 = vsel %vm6597, %v6665, %v6457
  %v6714 = vsel %vm6597, %v6668, %v6459
  %v6716 = vsel %vm6597, %v6671, %v6461
  %v6718 = vsel %vm6597, %v6674, %v6463
  %v6720 = vsel %vm6597, %v6677, %v6465
  %v6722 = vsel %vm6597, %v6680, %v6467
  %v6724 = vsel %vm6597, %v6683, %v6469
  %v6726 = vsel %vm6597, %v6686, %v6471
  %v6728 = vsel %vm6597, %v6689, %v6473
  %v6730 = vsel %vm6597, %v6692, %v6475
  %v6732 = vsel %vm6597, %v6695, %v6477
  %v6734 = vsel %vm6597, %v6698, %v6479
  %v6736 = vsel %vm6597, %v6701, %v6481
  %v6738 = vsel %vm6597, %v6704, %v6483
  %v6740 = vsel %vm6597, %v6707, %v6485
  %v6742 = vsel %vm6597, %v6710, %v6487
  %v6744 = vsel %vm6630, %v6712, %v6509
  %v6746 = vsel %vm6630, %v6714, %v6511
  %v6748 = vsel %vm6630, %v6716, %v6513
  %v6750 = vsel %vm6630, %v6718, %v6515
  %v6752 = vsel %vm6630, %v6720, %v6517
  %v6754 = vsel %vm6630, %v6722, %v6519
  %v6756 = vsel %vm6630, %v6724, %v6521
  %v6758 = vsel %vm6630, %v6726, %v6523
  %v6760 = vsel %vm6630, %v6728, %v6525
  %v6762 = vsel %vm6630, %v6730, %v6527
  %v6764 = vsel %vm6630, %v6732, %v6529
  %v6766 = vsel %vm6630, %v6734, %v6531
  %v6768 = vsel %vm6630, %v6736, %v6533
  %v6770 = vsel %vm6630, %v6738, %v6535
  %v6772 = vsel %vm6630, %v6740, %v6537
  %v6774 = vsel %vm6630, %v6742, %v6539
  %v6807 = vunpack.c.l.b16 %v6632
  %v6808 = vunpack.c.l.b16 %v6744
  %v6809 = vunpack.c.l.b16 %v6292
  %v6810 = vunpack.c.l.b16 %v6634
  %v6811 = vunpack.c.l.b16 %v6746
  %v6812 = vunpack.c.l.b16 %v6293
  %v6813 = vunpack.c.l.b16 %v6636
  %v6814 = vunpack.c.l.b16 %v6748
  %v6815 = vunpack.c.l.b16 %v6294
  %v6816 = vunpack.c.l.b16 %v6638
  %v6817 = vunpack.c.l.b16 %v6750
  %v6818 = vunpack.c.l.b16 %v6295
  %v6819 = vunpack.c.l.b16 %v6640
  %v6820 = vunpack.c.l.b16 %v6752
  %v6821 = vunpack.c.l.b16 %v6296
  %v6822 = vunpack.c.l.b16 %v6642
  %v6823 = vunpack.c.l.b16 %v6754
  %v6824 = vunpack.c.l.b16 %v6297
  %v6825 = vunpack.c.l.b16 %v6644
  %v6826 = vunpack.c.l.b16 %v6756
  %v6827 = vunpack.c.l.b16 %v6416
  %v6828 = vunpack.c.l.b16 %v6646
  %v6829 = vunpack.c.l.b16 %v6758
  %v6830 = vunpack.c.l.b16 %v6546
  %v6831 = vunpack.c.l.b16 %v6648
  %v6832 = vunpack.c.l.b16 %v6760
  %v6833 = vunpack.c.l.b16 %v6300
  %v6834 = vunpack.c.l.b16 %v6650
  %v6835 = vunpack.c.l.b16 %v6762
  %v6836 = vunpack.c.l.b16 %v6301
  %v6837 = vunpack.c.l.b16 %v6652
  %v6838 = vunpack.c.l.b16 %v6764
  %v6839 = vunpack.c.l.b16 %v6302
  %v6840 = vunpack.c.l.b16 %v6654
  %v6841 = vunpack.c.l.b16 %v6766
  %v6842 = vunpack.c.l.b16 %v6303
  %v6843 = vunpack.c.l.b16 %v6656
  %v6844 = vunpack.c.l.b16 %v6768
  %v6845 = vunpack.c.l.b16 %v6304
  %v6846 = vunpack.c.l.b16 %v6658
  %v6847 = vunpack.c.l.b16 %v6770
  %v6848 = vunpack.c.l.b16 %v6305
  %v6849 = vunpack.c.l.b16 %v6660
  %v6850 = vunpack.c.l.b16 %v6772
  %v6851 = vunpack.c.l.b16 %v6417
  %v6852 = vunpack.c.l.b16 %v6662
  %v6853 = vunpack.c.l.b16 %v6774
  %v6854 = vunpack.c.l.b16 %v6547
  %v6855 = vld [vmem:[%s3] sm:$0xf]
  %v6856 = vld [vmem:[%s3 + $0x4] sm:$0xf]
  %v6857 = vld [vmem:[%s3 + $0x8] sm:$0xf]
  %v6858 = vld [vmem:[%s3 + $0xc] sm:$0xf]
  %v6859 = vld [vmem:[%s3 + $0x10] sm:$0xf]
  %v6860 = vld [vmem:[%s3 + $0x14] sm:$0xf]
  %v6861 = vld [vmem:[%s3 + $0x18] sm:$0xf]
  %v6862 = vld [vmem:[%s3 + $0x1c] sm:$0xf]
  %v6863 = vld [vmem:[%s3 + $0x20] sm:$0xf]
  %v6864 = vld [vmem:[%s3 + $0x24] sm:$0xf]
  %v6865 = vld [vmem:[%s3 + $0x28] sm:$0xf]
  %v6866 = vld [vmem:[%s3 + $0x2c] sm:$0xf]
  %v6867 = vld [vmem:[%s3 + $0x30] sm:$0xf]
  %v6868 = vld [vmem:[%s3 + $0x34] sm:$0xf]
  %v6869 = vld [vmem:[%s3 + $0x38] sm:$0xf]
  %v6870 = vld [vmem:[%s3 + $0x3c] sm:$0xf]
  %v6871 = vld [vmem:[%s3 + $0x40] sm:$0xf]
  %v6872 = vld [vmem:[%s3 + $0x44] sm:$0xf]
  %v6873 = vld [vmem:[%s3 + $0x48] sm:$0xf]
  %v6874 = vld [vmem:[%s3 + $0x4c] sm:$0xf]
  %v6875 = vld [vmem:[%s3 + $0x50] sm:$0xf]
  %v6876 = vld [vmem:[%s3 + $0x54] sm:$0xf]
  %v6877 = vld [vmem:[%s3 + $0x58] sm:$0xf]
  %v6878 = vld [vmem:[%s3 + $0x5c] sm:$0xf]
  %v6879 = vld [vmem:[%s3 + $0x60] sm:$0xf]
  %v6880 = vld [vmem:[%s3 + $0x64] sm:$0xf]
  %v6881 = vld [vmem:[%s3 + $0x68] sm:$0xf]
  %v6882 = vld [vmem:[%s3 + $0x6c] sm:$0xf]
  %v6883 = vld [vmem:[%s3 + $0x70] sm:$0xf]
  %v6884 = vld [vmem:[%s3 + $0x74] sm:$0xf]
  %v6885 = vld [vmem:[%s3 + $0x78] sm:$0xf]
  %v6886 = vld [vmem:[%s3 + $0x7c] sm:$0xf]
  %v6887 = vld [vmem:[%s3 + $0x80] sm:$0xf]
  %v6888 = vld [vmem:[%s3 + $0x84] sm:$0xf]
  %v6889 = vld [vmem:[%s3 + $0x88] sm:$0xf]
  %v6890 = vld [vmem:[%s3 + $0x8c] sm:$0xf]
  %v6891 = vld [vmem:[%s4] sm:$0x1]
  %v6893 = vlaneseq
  %v6894 = vshrl.u32 %v6893, 7
  %v6895 = vsub.s32 0, %v6894
  %v6896 = vrot.slane %v6891, %v6895
  %v6898 = vpack.c.b16 %v6810, %v6807
  %v6899 = vpack.c.b16 %v6811, %v6808
  %v6900 = vpack.c.b16 %v6812, %v6809
  %v6901 = vpack.c.b16 %v6816, %v6813
  %v6902 = vpack.c.b16 %v6817, %v6814
  %v6903 = vpack.c.b16 %v6818, %v6815
  %v6904 = vpack.c.b16 %v6822, %v6819
  %v6905 = vpack.c.b16 %v6823, %v6820
  %v6906 = vpack.c.b16 %v6824, %v6821
  %v6907 = vpack.c.b16 %v6828, %v6825
  %v6908 = vpack.c.b16 %v6829, %v6826
  %v6909 = vpack.c.b16 %v6830, %v6827
  %v6910 = vpack.c.b16 %v6834, %v6831
  %v6911 = vpack.c.b16 %v6835, %v6832
  %v6912 = vpack.c.b16 %v6836, %v6833
  %v6913 = vpack.c.b16 %v6840, %v6837
  %v6914 = vpack.c.b16 %v6841, %v6838
  %v6915 = vpack.c.b16 %v6842, %v6839
  %v6916 = vpack.c.b16 %v6846, %v6843
  %v6917 = vpack.c.b16 %v6847, %v6844
  %v6918 = vpack.c.b16 %v6848, %v6845
  %v6919 = vpack.c.b16 %v6852, %v6849
  %v6920 = vpack.c.b16 %v6853, %v6850
  %v6921 = vpack.c.b16 %v6854, %v6851
  %v6974 = vunpack.c.l.b16 %v6855
  %v6975 = vunpack.c.l.b16 %v6856
  %v6976 = vunpack.c.l.b16 %v6857
  %v6977 = vunpack.c.l.b16 %v6858
  %v6978 = vunpack.c.l.b16 %v6859
  %v6979 = vunpack.c.l.b16 %v6860
  %v6980 = vunpack.c.l.b16 %v6861
  %v6981 = vunpack.c.l.b16 %v6862
  %v6982 = vunpack.c.l.b16 %v6863
  %v6983 = vunpack.c.l.b16 %v6864
  %v6984 = vunpack.c.l.b16 %v6865
  %v6985 = vunpack.c.l.b16 %v6866
  %v6986 = vunpack.c.l.b16 %v6867
  %v6987 = vunpack.c.l.b16 %v6868
  %v6988 = vunpack.c.l.b16 %v6869
  %v6989 = vunpack.c.l.b16 %v6870
  %v6990 = vunpack.c.l.b16 %v6871
  %v6991 = vunpack.c.l.b16 %v6872
  %v6992 = vunpack.c.l.b16 %v6873
  %v6993 = vunpack.c.l.b16 %v6874
  %v6994 = vunpack.c.l.b16 %v6875
  %v6995 = vunpack.c.l.b16 %v6876
  %v6996 = vunpack.c.l.b16 %v6877
  %v6997 = vunpack.c.l.b16 %v6878
  %v6998 = vunpack.c.l.b16 %v6879
  %v6999 = vunpack.c.l.b16 %v6880
  %v7000 = vunpack.c.l.b16 %v6881
  %v7001 = vunpack.c.l.b16 %v6882
  %v7002 = vunpack.c.l.b16 %v6883
  %v7003 = vunpack.c.l.b16 %v6884
  %v7004 = vunpack.c.l.b16 %v6885
  %v7005 = vunpack.c.l.b16 %v6886
  %v7006 = vunpack.c.l.b16 %v6887
  %v7007 = vunpack.c.l.b16 %v6888
  %v7008 = vunpack.c.l.b16 %v6889
  %v7009 = vunpack.c.l.b16 %v6890
  %v7010 = vpack.c.b16 %v6975, %v6974
  %v7011 = vpack.c.b16 %v6977, %v6976
  %v7012 = vpack.c.b16 %v6979, %v6978
  %v7013 = vpack.c.b16 %v6981, %v6980
  %v7014 = vpack.c.b16 %v6983, %v6982
  %v7015 = vpack.c.b16 %v6985, %v6984
  %v7016 = vpack.c.b16 %v6987, %v6986
  %v7017 = vpack.c.b16 %v6989, %v6988
  %v7018 = vpack.c.b16 %v6991, %v6990
  %v7019 = vpack.c.b16 %v6993, %v6992
  %v7020 = vpack.c.b16 %v6995, %v6994
  %v7021 = vpack.c.b16 %v6997, %v6996
  %v7022 = vpack.c.b16 %v6999, %v6998
  %v7023 = vpack.c.b16 %v7001, %v7000
  %v7024 = vpack.c.b16 %v7003, %v7002
  %v7025 = vpack.c.b16 %v7005, %v7004
  %v7026 = vpack.c.b16 %v7007, %v7006
  %v7027 = vpack.c.b16 %v7009, %v7008
  %v7047 = vsel %vm6548, %v6900, 0
  %v7050 = vsel %vm6548, %v6903, 0
  %v7053 = vsel %vm6548, %v6906, 0
  %v7056 = vsel %vm6548, %v6909, 0
  %v7059 = vsel %vm6548, %v6912, 0
  %v7062 = vsel %vm6548, %v6915, 0
  %v7065 = vsel %vm6548, %v6918, 0
  %v7068 = vsel %vm6548, %v6921, 0
  %7070 = vmatprep.subr.bf16.mxu0 0
  %7071 = vmatpush1.bf16.msra.mxu0 %v7010
  %7072 = vmatprep.subr.bf16.mxu0 0
  %7073 = vmatpush1.bf16.msra.mxu0 %v7011
  %7074 = vmatprep.subr.bf16.mxu0 0
  %7075 = vmatpush1.bf16.msra.mxu0 %v7012
  %7076 = vmatprep.subr.bf16.mxu0 0
  %7077 = vmatpush1.bf16.msra.mxu0 %v7013
  %7078 = vmatprep.subr.bf16.mxu0 0
  %7079 = vmatpush1.bf16.msra.mxu0 %v7014
  %7080 = vmatprep.subr.bf16.mxu0 0
  %7081 = vmatpush1.bf16.msra.mxu0 %v7015
  %7082 = vmatprep.subr.bf16.mxu0 0
  %7083 = vmatpush1.bf16.msra.mxu0 %v7016
  %7084 = vmatprep.subr.bf16.mxu0 0
  %7085 = vmatpush1.bf16.msra.mxu0 %v7017
  %7086 = vmatprep.subr.bf16.mxu0 0
  %7087 = vmatpush1.bf16.msra.mxu0 %v7018
  %7088 = vmatprep.subr.bf16.mxu0 0
  %7089 = vmatpush1.bf16.msra.mxu0 %v7019
  %7090 = vmatprep.subr.bf16.mxu0 0
  %7091 = vmatpush1.bf16.msra.mxu0 %v7020
  %7092 = vmatprep.subr.bf16.mxu0 0
  %7093 = vmatpush1.bf16.msra.mxu0 %v7021
  %7094 = vmatprep.subr.bf16.mxu0 0
  %7095 = vmatpush1.bf16.msra.mxu0 %v7022
  %7096 = vmatprep.subr.bf16.mxu0 0
  %7097 = vmatpush1.bf16.msra.mxu0 %v7023
  %7098 = vmatprep.subr.bf16.mxu0 0
  %7099 = vmatpush1.bf16.msra.mxu0 %v7024
  %7100 = vmatprep.subr.bf16.mxu0 0
  %7101 = vmatpush1.bf16.msra.mxu0 %v7025
  %7102 = vmatprep.mubr.bf16.mxu0 %v6899
  %7103 = vmatmul.mubr.bf16.gmra.mrb[0].mxu0 %v6898
  %v7104 = vpop.f32.mrb[0].mxu0
  %v7105 = vadd.f32 %v6896, %v7104
  %v7106 = vpop.f32.mrb[0].mxu0
  %v7107 = vpop.f32.mrb[0].mxu0
  %v7108 = vadd.f32 %v6896, %v7107
  %v7109 = vpop.f32.mrb[0].mxu0
  %7110 = vmatprep.mubr.bf16.mxu0 %v6902
  %7111 = vmatmul.mubr.bf16.gmra.mrb[0].mxu0 %v6901
  %v7112 = vpop.f32.mrb[0].mxu0
  %v7113 = vadd.f32 %v6896, %v7112
  %v7114 = vpop.f32.mrb[0].mxu0
  %v7115 = vpop.f32.mrb[0].mxu0
  %v7116 = vadd.f32 %v6896, %v7115
  %v7117 = vpop.f32.mrb[0].mxu0
  %7118 = vmatprep.mubr.bf16.mxu0 %v6905
  %7119 = vmatmul.mubr.bf16.gmra.mrb[0].mxu0 %v6904
  %v7120 = vpop.f32.mrb[0].mxu0
  %v7121 = vadd.f32 %v6896, %v7120
  %v7122 = vpop.f32.mrb[0].mxu0
  %v7123 = vpop.f32.mrb[0].mxu0
  %v7124 = vadd.f32 %v6896, %v7123
  %v7125 = vpop.f32.mrb[0].mxu0
  %7126 = vmatprep.mubr.bf16.mxu0 %v6908
  %7127 = vmatmul.mubr.bf16.gmra.mrb[0].mxu0 %v6907
  %v7128 = vpop.f32.mrb[0].mxu0
  %v7129 = vadd.f32 %v6896, %v7128
  %v7130 = vpop.f32.mrb[0].mxu0
  %v7131 = vpop.f32.mrb[0].mxu0
  %v7132 = vadd.f32 %v6896, %v7131
  %v7133 = vpop.f32.mrb[0].mxu0
  %7134 = vmatprep.mubr.bf16.mxu0 %v6911
  %7135 = vmatmul.mubr.bf16.gmra.mrb[0].mxu0 %v6910
  %v7136 = vpop.f32.mrb[0].mxu0
  %v7137 = vadd.f32 %v6896, %v7136
  %v7138 = vpop.f32.mrb[0].mxu0
  %v7139 = vpop.f32.mrb[0].mxu0
  %v7140 = vadd.f32 %v6896, %v7139
  %v7141 = vpop.f32.mrb[0].mxu0
  %7142 = vmatprep.mubr.bf16.mxu0 %v6914
  %7143 = vmatmul.mubr.bf16.gmra.mrb[0].mxu0 %v6913
  %v7144 = vpop.f32.mrb[0].mxu0
  %v7145 = vadd.f32 %v6896, %v7144
  %v7146 = vpop.f32.mrb[0].mxu0
  %v7147 = vpop.f32.mrb[0].mxu0
  %v7148 = vadd.f32 %v6896, %v7147
  %v7149 = vpop.f32.mrb[0].mxu0
  %7150 = vmatprep.mubr.bf16.mxu0 %v6917
  %7151 = vmatmul.mubr.bf16.gmra.mrb[0].mxu0 %v6916
  %v7152 = vpop.f32.mrb[0].mxu0
  %v7153 = vadd.f32 %v6896, %v7152
  %v7154 = vpop.f32.mrb[0].mxu0
  %v7155 = vpop.f32.mrb[0].mxu0
  %v7156 = vadd.f32 %v6896, %v7155
  %v7157 = vpop.f32.mrb[0].mxu0
  %7158 = vmatprep.mubr.bf16.mxu0 %v6920
  %7159 = vmatmul.mubr.bf16.gmra.mrb[0].mxu0 %v6919
  %v7160 = vpop.f32.mrb[0].mxu0
  %v7161 = vadd.f32 %v6896, %v7160
  %v7162 = vpop.f32.mrb[0].mxu0
  %v7163 = vpop.f32.mrb[0].mxu0
  %v7164 = vadd.f32 %v6896, %v7163
  %v7165 = vpop.f32.mrb[0].mxu0
  %7166 = vdwg.mxu0
  %7167 = vmatprep.subr.bf16.mxu0 0
  %7168 = vmatpush1.bf16.msra.mxu0 %v7026
  %7169 = vmatprep.subr.bf16.mxu0 0
  %7170 = vmatpush1.bf16.msra.mxu0 %v7027
  %7171 = vmatprep.subr.bf16.mxu0 0
  %7172 = vmatpush1.bf16.msra.mxu0 0
  %7173 = vmatprep.subr.bf16.mxu0 0
  %7174 = vmatpush1.bf16.msra.mxu0 0
  %7175 = vmatprep.subr.bf16.mxu0 0
  %7176 = vmatpush1.bf16.msra.mxu0 0
  %7177 = vmatprep.subr.bf16.mxu0 0
  %7178 = vmatpush1.bf16.msra.mxu0 0
  %7179 = vmatprep.subr.bf16.mxu0 0
  %7180 = vmatpush1.bf16.msra.mxu0 0
  %7181 = vmatprep.subr.bf16.mxu0 0
  %7182 = vmatpush1.bf16.msra.mxu0 0
  %7183 = vmatprep.subr.bf16.mxu0 0
  %7184 = vmatpush1.bf16.msra.mxu0 0
  %7185 = vmatprep.subr.bf16.mxu0 0
  %7186 = vmatpush1.bf16.msra.mxu0 0
  %7187 = vmatprep.subr.bf16.mxu0 0
  %7188 = vmatpush1.bf16.msra.mxu0 0
  %7189 = vmatprep.subr.bf16.mxu0 0
  %7190 = vmatpush1.bf16.msra.mxu0 0
  %7191 = vmatprep.subr.bf16.mxu0 0
  %7192 = vmatpush1.bf16.msra.mxu0 0
  %7193 = vmatprep.subr.bf16.mxu0 0
  %7194 = vmatpush1.bf16.msra.mxu0 0
  %7195 = vmatprep.subr.bf16.mxu0 0
  %7196 = vmatpush1.bf16.msra.mxu0 0
  %7197 = vmatprep.subr.bf16.mxu0 0
  %7198 = vmatpush1.bf16.msra.mxu0 0
  %7199 = vmatprep.mubr.bf16.mxu0 0
  %7200 = vmatmul.mubr.bf16.gmra.mrb[0].mxu0 %v7047
  %v7201 = vpop.f32.mrb[0].mxu0
  %v7202 = vadd.f32 %v7105, %v7201
  %v7203 = vpop.f32.mrb[0].mxu0
  %v7204 = vpop.f32.mrb[0].mxu0
  %v7205 = vadd.f32 %v7108, %v7204
  %v7206 = vpop.f32.mrb[0].mxu0
  %7207 = vmatprep.mubr.bf16.mxu0 0
  %7208 = vmatmul.mubr.bf16.gmra.mrb[0].mxu0 %v7050
  %v7209 = vpop.f32.mrb[0].mxu0
  %v7210 = vadd.f32 %v7113, %v7209
  %v7211 = vpop.f32.mrb[0].mxu0
  %v7212 = vpop.f32.mrb[0].mxu0
  %v7213 = vadd.f32 %v7116, %v7212
  %v7214 = vpop.f32.mrb[0].mxu0
  %7215 = vmatprep.mubr.bf16.mxu0 0
  %7216 = vmatmul.mubr.bf16.gmra.mrb[0].mxu0 %v7053
  %v7217 = vpop.f32.mrb[0].mxu0
  %v7218 = vadd.f32 %v7121, %v7217
  %v7219 = vpop.f32.mrb[0].mxu0
  %v7220 = vpop.f32.mrb[0].mxu0
  %v7221 = vadd.f32 %v7124, %v7220
  %v7222 = vpop.f32.mrb[0].mxu0
  %7223 = vmatprep.mubr.bf16.mxu0 0
  %7224 = vmatmul.mubr.bf16.gmra.mrb[0].mxu0 %v7056
  %v7225 = vpop.f32.mrb[0].mxu0
  %v7226 = vadd.f32 %v7129, %v7225
  %v7227 = vpop.f32.mrb[0].mxu0
  %v7228 = vpop.f32.mrb[0].mxu0
  %v7229 = vadd.f32 %v7132, %v7228
  %v7230 = vpop.f32.mrb[0].mxu0
  %7231 = vmatprep.mubr.bf16.mxu0 0
  %7232 = vmatmul.mubr.bf16.gmra.mrb[0].mxu0 %v7059
  %v7233 = vpop.f32.mrb[0].mxu0
  %v7234 = vadd.f32 %v7137, %v7233
  %v7235 = vpop.f32.mrb[0].mxu0
  %v7236 = vpop.f32.mrb[0].mxu0
  %v7237 = vadd.f32 %v7140, %v7236
  %v7238 = vpop.f32.mrb[0].mxu0
  %7239 = vmatprep.mubr.bf16.mxu0 0
  %7240 = vmatmul.mubr.bf16.gmra.mrb[0].mxu0 %v7062
  %v7241 = vpop.f32.mrb[0].mxu0
  %v7242 = vadd.f32 %v7145, %v7241
  %v7243 = vpop.f32.mrb[0].mxu0
  %v7244 = vpop.f32.mrb[0].mxu0
  %v7245 = vadd.f32 %v7148, %v7244
  %v7246 = vpop.f32.mrb[0].mxu0
  %7247 = vmatprep.mubr.bf16.mxu0 0
  %7248 = vmatmul.mubr.bf16.gmra.mrb[0].mxu0 %v7065
  %v7249 = vpop.f32.mrb[0].mxu0
  %v7250 = vadd.f32 %v7153, %v7249
  %v7251 = vpop.f32.mrb[0].mxu0
  %v7252 = vpop.f32.mrb[0].mxu0
  %v7253 = vadd.f32 %v7156, %v7252
  %v7254 = vpop.f32.mrb[0].mxu0
  %7255 = vmatprep.mubr.bf16.mxu0 0
  %7256 = vmatmul.mubr.bf16.gmra.mrb[0].mxu0 %v7068
  %v7257 = vpop.f32.mrb[0].mxu0
  %v7258 = vadd.f32 %v7161, %v7257
  %v7259 = vpop.f32.mrb[0].mxu0
  %v7260 = vpop.f32.mrb[0].mxu0
  %v7261 = vadd.f32 %v7164, %v7260
  %v7262 = vpop.f32.mrb[0].mxu0
  %7263 = vdwg.mxu0
  %v7264 = vmax.f32 %v7202, 0.0
  %v7265 = vmax.f32 %v7205, 0.0
  %v7266 = vmax.f32 %v7210, 0.0
  %v7267 = vmax.f32 %v7213, 0.0
  %v7268 = vmax.f32 %v7218, 0.0
  %v7269 = vmax.f32 %v7221, 0.0
  %v7270 = vmax.f32 %v7226, 0.0
  %v7271 = vmax.f32 %v7229, 0.0
  %v7272 = vmax.f32 %v7234, 0.0
  %v7273 = vmax.f32 %v7237, 0.0
  %v7274 = vmax.f32 %v7242, 0.0
  %v7275 = vmax.f32 %v7245, 0.0
  %v7276 = vmax.f32 %v7250, 0.0
  %v7277 = vmax.f32 %v7253, 0.0
  %v7278 = vmax.f32 %v7258, 0.0
  %v7279 = vmax.f32 %v7261, 0.0
  %v7280 = vmax.f32 %v7264, %v7265
  %v7281 = vmax.f32 %v7266, %v7267
  %v7282 = vmax.f32 %v7268, %v7269
  %v7283 = vmax.f32 %v7270, %v7271
  %v7284 = vmax.f32 %v7272, %v7273
  %v7285 = vmax.f32 %v7274, %v7275
  %v7286 = vmax.f32 %v7276, %v7277
  %v7287 = vmax.f32 %v7278, %v7279
  %v7296 = vcombine.high %v7280, %v7280
  %v7298 = vunpack.c.l.s4 1983009808
  %v7299 = vunpack.c.0.s8 %v7298
  %v7300 = vlaneseq
  %v7301 = vshrl.u32 %v7300, 7
  %v7302 = vsub.s32 %v7299, %v7301
  %v7303 = vrot.slane %v7280, %v7302
  %v7305 = vunpack.c.l.s4 1983009808
  %v7306 = vunpack.c.0.s8 %v7305
  %v7307 = vlaneseq
  %v7308 = vshrl.u32 %v7307, 7
  %v7309 = vsub.s32 %v7306, %v7308
  %v7310 = vrot.slane %v7296, %v7309
  %v7311 = vcombine.high %v7303, %v7303
  %v7312 = vcombine.high %v7310, %v7310
  %v7313 = vcombine.high %v7281, %v7281
  %v7315 = vunpack.c.l.s4 1983009808
  %v7316 = vunpack.c.0.s8 %v7315
  %v7317 = vlaneseq
  %v7318 = vshrl.u32 %v7317, 7
  %v7319 = vsub.s32 %v7316, %v7318
  %v7320 = vrot.slane %v7281, %v7319
  %v7322 = vunpack.c.l.s4 1983009808
  %v7323 = vunpack.c.0.s8 %v7322
  %v7324 = vlaneseq
  %v7325 = vshrl.u32 %v7324, 7
  %v7326 = vsub.s32 %v7323, %v7325
  %v7327 = vrot.slane %v7313, %v7326
  %v7328 = vcombine.high %v7320, %v7320
  %v7329 = vcombine.high %v7327, %v7327
  %v7330 = vcombine.high %v7282, %v7282
  %v7332 = vunpack.c.l.s4 1983009808
  %v7333 = vunpack.c.0.s8 %v7332
  %v7334 = vlaneseq
  %v7335 = vshrl.u32 %v7334, 7
  %v7336 = vsub.s32 %v7333, %v7335
  %v7337 = vrot.slane %v7282, %v7336
  %v7339 = vunpack.c.l.s4 1983009808
  %v7340 = vunpack.c.0.s8 %v7339
  %v7341 = vlaneseq
  %v7342 = vshrl.u32 %v7341, 7
  %v7343 = vsub.s32 %v7340, %v7342
  %v7344 = vrot.slane %v7330, %v7343
  %v7345 = vcombine.high %v7337, %v7337
  %v7346 = vcombine.high %v7344, %v7344
  %v7347 = vcombine.high %v7283, %v7283
  %v7349 = vunpack.c.l.s4 1983009808
  %v7350 = vunpack.c.0.s8 %v7349
  %v7351 = vlaneseq
  %v7352 = vshrl.u32 %v7351, 7
  %v7353 = vsub.s32 %v7350, %v7352
  %v7354 = vrot.slane %v7283, %v7353
  %v7356 = vunpack.c.l.s4 1983009808
  %v7357 = vunpack.c.0.s8 %v7356
  %v7358 = vlaneseq
  %v7359 = vshrl.u32 %v7358, 7
  %v7360 = vsub.s32 %v7357, %v7359
  %v7361 = vrot.slane %v7347, %v7360
  %v7362 = vcombine.high %v7354, %v7354
  %v7363 = vcombine.high %v7361, %v7361
  %v7364 = vcombine.high %v7284, %v7284
  %v7366 = vunpack.c.l.s4 1983009808
  %v7367 = vunpack.c.0.s8 %v7366
  %v7368 = vlaneseq
  %v7369 = vshrl.u32 %v7368, 7
  %v7370 = vsub.s32 %v7367, %v7369
  %v7371 = vrot.slane %v7284, %v7370
  %v7373 = vunpack.c.l.s4 1983009808
  %v7374 = vunpack.c.0.s8 %v7373
  %v7375 = vlaneseq
  %v7376 = vshrl.u32 %v7375, 7
  %v7377 = vsub.s32 %v7374, %v7376
  %v7378 = vrot.slane %v7364, %v7377
  %v7379 = vcombine.high %v7371, %v7371
  %v7380 = vcombine.high %v7378, %v7378
  %v7381 = vcombine.high %v7285, %v7285
  %v7383 = vunpack.c.l.s4 1983009808
  %v7384 = vunpack.c.0.s8 %v7383
  %v7385 = vlaneseq
  %v7386 = vshrl.u32 %v7385, 7
  %v7387 = vsub.s32 %v7384, %v7386
  %v7388 = vrot.slane %v7285, %v7387
  %v7390 = vunpack.c.l.s4 1983009808
  %v7391 = vunpack.c.0.s8 %v7390
  %v7392 = vlaneseq
  %v7393 = vshrl.u32 %v7392, 7
  %v7394 = vsub.s32 %v7391, %v7393
  %v7395 = vrot.slane %v7381, %v7394
  %v7396 = vcombine.high %v7388, %v7388
  %v7397 = vcombine.high %v7395, %v7395
  %v7398 = vcombine.high %v7286, %v7286
  %v7400 = vunpack.c.l.s4 1983009808
  %v7401 = vunpack.c.0.s8 %v7400
  %v7402 = vlaneseq
  %v7403 = vshrl.u32 %v7402, 7
  %v7404 = vsub.s32 %v7401, %v7403
  %v7405 = vrot.slane %v7286, %v7404
  %v7407 = vunpack.c.l.s4 1983009808
  %v7408 = vunpack.c.0.s8 %v7407
  %v7409 = vlaneseq
  %v7410 = vshrl.u32 %v7409, 7
  %v7411 = vsub.s32 %v7408, %v7410
  %v7412 = vrot.slane %v7398, %v7411
  %v7413 = vcombine.high %v7405, %v7405
  %v7414 = vcombine.high %v7412, %v7412
  %v7415 = vcombine.high %v7287, %v7287
  %v7417 = vunpack.c.l.s4 1983009808
  %v7418 = vunpack.c.0.s8 %v7417
  %v7419 = vlaneseq
  %v7420 = vshrl.u32 %v7419, 7
  %v7421 = vsub.s32 %v7418, %v7420
  %v7422 = vrot.slane %v7287, %v7421
  %v7424 = vunpack.c.l.s4 1983009808
  %v7425 = vunpack.c.0.s8 %v7424
  %v7426 = vlaneseq
  %v7427 = vshrl.u32 %v7426, 7
  %v7428 = vsub.s32 %v7425, %v7427
  %v7429 = vrot.slane %v7415, %v7428
  %v7430 = vcombine.high %v7422, %v7422
  %v7431 = vcombine.high %v7429, %v7429
  %v7464 = vrot.slane %v7303, 7
  %v7465 = vrot.slane %v7464, 2
  %v7466 = vrot.slane %v7311, 7
  %v7467 = vrot.slane %v7466, 2
  %v7468 = vrot.slane %v7310, 7
  %v7469 = vrot.slane %v7468, 2
  %v7470 = vrot.slane %v7312, 7
  %v7471 = vrot.slane %v7470, 2
  %v7472 = vrot.slane %v7320, 7
  %v7473 = vrot.slane %v7472, 2
  %v7474 = vrot.slane %v7328, 7
  %v7475 = vrot.slane %v7474, 2
  %v7476 = vrot.slane %v7327, 7
  %v7477 = vrot.slane %v7476, 2
  %v7478 = vrot.slane %v7329, 7
  %v7479 = vrot.slane %v7478, 2
  %v7480 = vrot.slane %v7337, 7
  %v7481 = vrot.slane %v7480, 2
  %v7482 = vrot.slane %v7345, 7
  %v7483 = vrot.slane %v7482, 2
  %v7484 = vrot.slane %v7344, 7
  %v7485 = vrot.slane %v7484, 2
  %v7486 = vrot.slane %v7346, 7
  %v7487 = vrot.slane %v7486, 2
  %v7488 = vrot.slane %v7354, 7
  %v7489 = vrot.slane %v7488, 2
  %v7490 = vrot.slane %v7362, 7
  %v7491 = vrot.slane %v7490, 2
  %v7492 = vrot.slane %v7361, 7
  %v7493 = vrot.slane %v7492, 2
  %v7494 = vrot.slane %v7363, 7
  %v7495 = vrot.slane %v7494, 2
  %v7496 = vrot.slane %v7371, 7
  %v7497 = vrot.slane %v7496, 2
  %v7498 = vrot.slane %v7379, 7
  %v7499 = vrot.slane %v7498, 2
  %v7500 = vrot.slane %v7378, 7
  %v7501 = vrot.slane %v7500, 2
  %v7502 = vrot.slane %v7380, 7
  %v7503 = vrot.slane %v7502, 2
  %v7504 = vrot.slane %v7388, 7
  %v7505 = vrot.slane %v7504, 2
  %v7506 = vrot.slane %v7396, 7
  %v7507 = vrot.slane %v7506, 2
  %v7508 = vrot.slane %v7395, 7
  %v7509 = vrot.slane %v7508, 2
  %v7510 = vrot.slane %v7397, 7
  %v7511 = vrot.slane %v7510, 2
  %v7512 = vrot.slane %v7405, 7
  %v7513 = vrot.slane %v7512, 2
  %v7514 = vrot.slane %v7413, 7
  %v7515 = vrot.slane %v7514, 2
  %v7516 = vrot.slane %v7412, 7
  %v7517 = vrot.slane %v7516, 2
  %v7518 = vrot.slane %v7414, 7
  %v7519 = vrot.slane %v7518, 2
  %v7520 = vrot.slane %v7422, 7
  %v7521 = vrot.slane %v7520, 2
  %v7522 = vrot.slane %v7430, 7
  %v7523 = vrot.slane %v7522, 2
  %v7524 = vrot.slane %v7429, 7
  %v7525 = vrot.slane %v7524, 2
  %v7526 = vrot.slane %v7431, 7
  %v7527 = vrot.slane %v7526, 2
  %v7560 = vmax.f32 %v7303, %v7465
  %v7561 = vmax.f32 %v7311, %v7467
  %v7562 = vmax.f32 %v7310, %v7469
  %v7563 = vmax.f32 %v7312, %v7471
  %v7564 = vmax.f32 %v7320, %v7473
  %v7565 = vmax.f32 %v7328, %v7475
  %v7566 = vmax.f32 %v7327, %v7477
  %v7567 = vmax.f32 %v7329, %v7479
  %v7568 = vmax.f32 %v7337, %v7481
  %v7569 = vmax.f32 %v7345, %v7483
  %v7570 = vmax.f32 %v7344, %v7485
  %v7571 = vmax.f32 %v7346, %v7487
  %v7572 = vmax.f32 %v7354, %v7489
  %v7573 = vmax.f32 %v7362, %v7491
  %v7574 = vmax.f32 %v7361, %v7493
  %v7575 = vmax.f32 %v7363, %v7495
  %v7576 = vmax.f32 %v7371, %v7497
  %v7577 = vmax.f32 %v7379, %v7499
  %v7578 = vmax.f32 %v7378, %v7501
  %v7579 = vmax.f32 %v7380, %v7503
  %v7580 = vmax.f32 %v7388, %v7505
  %v7581 = vmax.f32 %v7396, %v7507
  %v7582 = vmax.f32 %v7395, %v7509
  %v7583 = vmax.f32 %v7397, %v7511
  %v7584 = vmax.f32 %v7405, %v7513
  %v7585 = vmax.f32 %v7413, %v7515
  %v7586 = vmax.f32 %v7412, %v7517
  %v7587 = vmax.f32 %v7414, %v7519
  %v7588 = vmax.f32 %v7422, %v7521
  %v7589 = vmax.f32 %v7430, %v7523
  %v7590 = vmax.f32 %v7429, %v7525
  %v7591 = vmax.f32 %v7431, %v7527
  %v7592 = vpack.c.bf16 %v7560, %v7560
  %v7593 = vpack.c.bf16 %v7561, %v7561
  %v7594 = vpack.c.bf16 %v7562, %v7562
  %v7595 = vpack.c.bf16 %v7563, %v7563
  %v7596 = vpack.c.bf16 %v7564, %v7564
  %v7597 = vpack.c.bf16 %v7565, %v7565
  %v7598 = vpack.c.bf16 %v7566, %v7566
  %v7599 = vpack.c.bf16 %v7567, %v7567
  %v7600 = vpack.c.bf16 %v7568, %v7568
  %v7601 = vpack.c.bf16 %v7569, %v7569
  %v7602 = vpack.c.bf16 %v7570, %v7570
  %v7603 = vpack.c.bf16 %v7571, %v7571
  %v7604 = vpack.c.bf16 %v7572, %v7572
  %v7605 = vpack.c.bf16 %v7573, %v7573
  %v7606 = vpack.c.bf16 %v7574, %v7574
  %v7607 = vpack.c.bf16 %v7575, %v7575
  %v7608 = vpack.c.bf16 %v7576, %v7576
  %v7609 = vpack.c.bf16 %v7577, %v7577
  %v7610 = vpack.c.bf16 %v7578, %v7578
  %v7611 = vpack.c.bf16 %v7579, %v7579
  %v7612 = vpack.c.bf16 %v7580, %v7580
  %v7613 = vpack.c.bf16 %v7581, %v7581
  %v7614 = vpack.c.bf16 %v7582, %v7582
  %v7615 = vpack.c.bf16 %v7583, %v7583
  %v7616 = vpack.c.bf16 %v7584, %v7584
  %v7617 = vpack.c.bf16 %v7585, %v7585
  %v7618 = vpack.c.bf16 %v7586, %v7586
  %v7619 = vpack.c.bf16 %v7587, %v7587
  %v7620 = vpack.c.bf16 %v7588, %v7588
  %v7621 = vpack.c.bf16 %v7589, %v7589
  %v7622 = vpack.c.bf16 %v7590, %v7590
  %v7623 = vpack.c.bf16 %v7591, %v7591
  %vm7624 = vcmask 518144
  %7625 = vst.msk [vmem:[#allocation4] sm:$0x7] %vm7624, 0
  %7626 = vst.msk [vmem:[#allocation4 + $0x4] sm:$0x7] %vm7624, 0
  %7627 = vst.msk [vmem:[#allocation4 + $0x8] sm:$0x7] %vm7624, 0
  %7628 = vst.msk [vmem:[#allocation4 + $0xc] sm:$0x7] %vm7624, 0
  %7629 = vst.msk [vmem:[#allocation4 + $0x10] sm:$0x7] %vm7624, 0
  %7630 = vst.msk [vmem:[#allocation4 + $0x14] sm:$0x7] %vm7624, 0
  %7631 = vst.msk [vmem:[#allocation4 + $0x18] sm:$0x7] %vm7624, 0
  %7632 = vst.msk [vmem:[#allocation4 + $0x1c] sm:$0x7] %vm7624, 0
  %7633 = vst.msk [vmem:[#allocation4 + $0x20] sm:$0x7] %vm7624, 0
  %7634 = vst.msk [vmem:[#allocation4 + $0x24] sm:$0x7] %vm7624, 0
  %7635 = vst.msk [vmem:[#allocation4 + $0x28] sm:$0x7] %vm7624, 0
  %7636 = vst.msk [vmem:[#allocation4 + $0x2c] sm:$0x7] %vm7624, 0
  %v7669 = vunpack.c.l.b16 %v7592
  %v7670 = vunpack.c.l.b16 %v7593
  %v7671 = vunpack.c.l.b16 %v7594
  %v7672 = vunpack.c.l.b16 %v7595
  %v7673 = vunpack.c.l.b16 %v7596
  %v7674 = vunpack.c.l.b16 %v7597
  %v7675 = vunpack.c.l.b16 %v7598
  %v7676 = vunpack.c.l.b16 %v7599
  %v7677 = vunpack.c.l.b16 %v7600
  %v7678 = vunpack.c.l.b16 %v7601
  %v7679 = vunpack.c.l.b16 %v7602
  %v7680 = vunpack.c.l.b16 %v7603
  %v7681 = vunpack.c.l.b16 %v7604
  %v7682 = vunpack.c.l.b16 %v7605
  %v7683 = vunpack.c.l.b16 %v7606
  %v7684 = vunpack.c.l.b16 %v7607
  %v7685 = vunpack.c.l.b16 %v7608
  %v7686 = vunpack.c.l.b16 %v7609
  %v7687 = vunpack.c.l.b16 %v7610
  %v7688 = vunpack.c.l.b16 %v7611
  %v7689 = vunpack.c.l.b16 %v7612
  %v7690 = vunpack.c.l.b16 %v7613
  %v7691 = vunpack.c.l.b16 %v7614
  %v7692 = vunpack.c.l.b16 %v7615
  %v7693 = vunpack.c.l.b16 %v7616
  %v7694 = vunpack.c.l.b16 %v7617
  %v7695 = vunpack.c.l.b16 %v7618
  %v7696 = vunpack.c.l.b16 %v7619
  %v7697 = vunpack.c.l.b16 %v7620
  %v7698 = vunpack.c.l.b16 %v7621
  %v7699 = vunpack.c.l.b16 %v7622
  %v7700 = vunpack.c.l.b16 %v7623
  %v7701 = vpack.c.b16 %v7669, %v7669
  %v7702 = vpack.c.b16 %v7670, %v7670
  %v7703 = vpack.c.b16 %v7671, %v7671
  %v7704 = vpack.c.b16 %v7672, %v7672
  %v7705 = vpack.c.b16 %v7673, %v7673
  %v7706 = vpack.c.b16 %v7674, %v7674
  %v7707 = vpack.c.b16 %v7675, %v7675
  %v7708 = vpack.c.b16 %v7676, %v7676
  %v7709 = vpack.c.b16 %v7677, %v7677
  %v7710 = vpack.c.b16 %v7678, %v7678
  %v7711 = vpack.c.b16 %v7679, %v7679
  %v7712 = vpack.c.b16 %v7680, %v7680
  %v7713 = vpack.c.b16 %v7681, %v7681
  %v7714 = vpack.c.b16 %v7682, %v7682
  %v7715 = vpack.c.b16 %v7683, %v7683
  %v7716 = vpack.c.b16 %v7684, %v7684
  %v7717 = vpack.c.b16 %v7685, %v7685
  %v7718 = vpack.c.b16 %v7686, %v7686
  %v7719 = vpack.c.b16 %v7687, %v7687
  %v7720 = vpack.c.b16 %v7688, %v7688
  %v7721 = vpack.c.b16 %v7689, %v7689
  %v7722 = vpack.c.b16 %v7690, %v7690
  %v7723 = vpack.c.b16 %v7691, %v7691
  %v7724 = vpack.c.b16 %v7692, %v7692
  %v7725 = vpack.c.b16 %v7693, %v7693
  %v7726 = vpack.c.b16 %v7694, %v7694
  %v7727 = vpack.c.b16 %v7695, %v7695
  %v7728 = vpack.c.b16 %v7696, %v7696
  %v7729 = vpack.c.b16 %v7697, %v7697
  %v7730 = vpack.c.b16 %v7698, %v7698
  %v7731 = vpack.c.b16 %v7699, %v7699
  %v7732 = vpack.c.b16 %v7700, %v7700
  %v7733 = vunpack.c.l.b16 %v7701
  %v7734 = vunpack.c.l.b16 %v7702
  %v7735 = vunpack.c.l.b16 %v7703
  %v7736 = vunpack.c.l.b16 %v7704
  %v7737 = vunpack.c.l.b16 %v7705
  %v7738 = vunpack.c.l.b16 %v7706
  %v7739 = vunpack.c.l.b16 %v7707
  %v7740 = vunpack.c.l.b16 %v7708
  %v7741 = vunpack.c.l.b16 %v7709
  %v7742 = vunpack.c.l.b16 %v7710
  %v7743 = vunpack.c.l.b16 %v7711
  %v7744 = vunpack.c.l.b16 %v7712
  %v7745 = vunpack.c.l.b16 %v7713
  %v7746 = vunpack.c.l.b16 %v7714
  %v7747 = vunpack.c.l.b16 %v7715
  %v7748 = vunpack.c.l.b16 %v7716
  %v7749 = vunpack.c.l.b16 %v7717
  %v7750 = vunpack.c.l.b16 %v7718
  %v7751 = vunpack.c.l.b16 %v7719
  %v7752 = vunpack.c.l.b16 %v7720
  %v7753 = vunpack.c.l.b16 %v7721
  %v7754 = vunpack.c.l.b16 %v7722
  %v7755 = vunpack.c.l.b16 %v7723
  %v7756 = vunpack.c.l.b16 %v7724
  %v7757 = vunpack.c.l.b16 %v7725
  %v7758 = vunpack.c.l.b16 %v7726
  %v7759 = vunpack.c.l.b16 %v7727
  %v7760 = vunpack.c.l.b16 %v7728
  %v7761 = vunpack.c.l.b16 %v7729
  %v7762 = vunpack.c.l.b16 %v7730
  %v7763 = vunpack.c.l.b16 %v7731
  %v7764 = vunpack.c.l.b16 %v7732
  %v7765 = vrot.slane %v7733, 7
  %v7766 = vrot.slane %v7734, 6
  %v7767 = vsel %vm5581, %v7766, %v7765
  %v7768 = vrot.slane %v7735, 5
  %v7769 = vsel %vm5584, %v7768, %v7767
  %v7770 = vrot.slane %v7736, 4
  %v7771 = vsel %vm5587, %v7770, %v7769
  %v7772 = vrot.slane %v7737, 7
  %v7773 = vrot.slane %v7738, 6
  %v7774 = vsel %vm5581, %v7773, %v7772
  %v7775 = vrot.slane %v7739, 5
  %v7776 = vsel %vm5584, %v7775, %v7774
  %v7777 = vrot.slane %v7740, 4
  %v7778 = vsel %vm5587, %v7777, %v7776
  %v7779 = vrot.slane %v7741, 7
  %v7780 = vrot.slane %v7742, 6
  %v7781 = vsel %vm5581, %v7780, %v7779
  %v7782 = vrot.slane %v7743, 5
  %v7783 = vsel %vm5584, %v7782, %v7781
  %v7784 = vrot.slane %v7744, 4
  %v7785 = vsel %vm5587, %v7784, %v7783
  %v7786 = vrot.slane %v7745, 7
  %v7787 = vrot.slane %v7746, 6
  %v7788 = vsel %vm5581, %v7787, %v7786
  %v7789 = vrot.slane %v7747, 5
  %v7790 = vsel %vm5584, %v7789, %v7788
  %v7791 = vrot.slane %v7748, 4
  %v7792 = vsel %vm5587, %v7791, %v7790
  %v7793 = vrot.slane %v7749, 7
  %v7794 = vrot.slane %v7750, 6
  %v7795 = vsel %vm5581, %v7794, %v7793
  %v7796 = vrot.slane %v7751, 5
  %v7797 = vsel %vm5584, %v7796, %v7795
  %v7798 = vrot.slane %v7752, 4
  %v7799 = vsel %vm5587, %v7798, %v7797
  %v7800 = vrot.slane %v7753, 7
  %v7801 = vrot.slane %v7754, 6
  %v7802 = vsel %vm5581, %v7801, %v7800
  %v7803 = vrot.slane %v7755, 5
  %v7804 = vsel %vm5584, %v7803, %v7802
  %v7805 = vrot.slane %v7756, 4
  %v7806 = vsel %vm5587, %v7805, %v7804
  %v7807 = vrot.slane %v7757, 7
  %v7808 = vrot.slane %v7758, 6
  %v7809 = vsel %vm5581, %v7808, %v7807
  %v7810 = vrot.slane %v7759, 5
  %v7811 = vsel %vm5584, %v7810, %v7809
  %v7812 = vrot.slane %v7760, 4
  %v7813 = vsel %vm5587, %v7812, %v7811
  %v7814 = vrot.slane %v7761, 7
  %v7815 = vrot.slane %v7762, 6
  %v7816 = vsel %vm5581, %v7815, %v7814
  %v7817 = vrot.slane %v7763, 5
  %v7818 = vsel %vm5584, %v7817, %v7816
  %v7819 = vrot.slane %v7764, 4
  %v7820 = vsel %vm5587, %v7819, %v7818
  %v7821 = vpack.c.b16 %v7771, %v7771
  %v7822 = vpack.c.b16 %v7778, %v7778
  %v7823 = vpack.c.b16 %v7785, %v7785
  %v7824 = vpack.c.b16 %v7792, %v7792
  %v7825 = vpack.c.b16 %v7799, %v7799
  %v7826 = vpack.c.b16 %v7806, %v7806
  %v7827 = vpack.c.b16 %v7813, %v7813
  %v7828 = vpack.c.b16 %v7820, %v7820
  %s7837 = scalar_lea.vmem [#allocation4], 4
  %vm7838 = vcmask 518144
  %vm7839 = vsmask.f32 2306
  %vm7840 = vmand %vm7838, %vm7839
  %v7841 = vld [vmem:[%s7837] sm:$0x7]
  %v7842 = vsel %vm7840, %v7821, %v7841
  %7843 = vst [vmem:[%s7837] sm:$0x7] %v7842
  %v7844 = vld [vmem:[%s7837 + $0x4] sm:$0x7]
  %v7845 = vsel %vm7840, %v7822, %v7844
  %7846 = vst [vmem:[%s7837 + $0x4] sm:$0x7] %v7845
  %v7847 = vld [vmem:[%s7837 + $0x8] sm:$0x7]
  %v7848 = vsel %vm7840, %v7823, %v7847
  %7849 = vst [vmem:[%s7837 + $0x8] sm:$0x7] %v7848
  %v7850 = vld [vmem:[%s7837 + $0xc] sm:$0x7]
  %v7851 = vsel %vm7840, %v7824, %v7850
  %7852 = vst [vmem:[%s7837 + $0xc] sm:$0x7] %v7851
  %v7853 = vld [vmem:[%s7837 + $0x18] sm:$0x7]
  %v7854 = vsel %vm7840, %v7825, %v7853
  %7855 = vst [vmem:[%s7837 + $0x18] sm:$0x7] %v7854
  %v7856 = vld [vmem:[%s7837 + $0x1c] sm:$0x7]
  %v7857 = vsel %vm7840, %v7826, %v7856
  %7858 = vst [vmem:[%s7837 + $0x1c] sm:$0x7] %v7857
  %v7859 = vld [vmem:[%s7837 + $0x20] sm:$0x7]
  %v7860 = vsel %vm7840, %v7827, %v7859
  %7861 = vst [vmem:[%s7837 + $0x20] sm:$0x7] %v7860
  %v7862 = vld [vmem:[%s7837 + $0x24] sm:$0x7]
  %v7863 = vsel %vm7840, %v7828, %v7862
  %7864 = vst [vmem:[%s7837 + $0x24] sm:$0x7] %v7863
  %v7865 = vld [vmem:[#allocation4] sm:$0x3]
  %v7866 = vld [vmem:[#allocation4 + $0x4] sm:$0x3]
  %v7867 = vld [vmem:[#allocation4 + $0x8] sm:$0x3]
  %v7868 = vld [vmem:[#allocation4 + $0xc] sm:$0x3]
  %v7869 = vld [vmem:[#allocation4 + $0x10] sm:$0x3]
  %v7870 = vld [vmem:[#allocation4 + $0x14] sm:$0x3]
  %v7871 = vld [vmem:[#allocation4 + $0x18] sm:$0x3]
  %v7872 = vld [vmem:[#allocation4 + $0x1c] sm:$0x3]
  %v7873 = vld [vmem:[#allocation4 + $0x20] sm:$0x3]
  %v7874 = vld [vmem:[#allocation4 + $0x24] sm:$0x3]
  %v7875 = vld [vmem:[#allocation4 + $0x28] sm:$0x3]
  %v7876 = vld [vmem:[#allocation4 + $0x2c] sm:$0x3]
  %v7877 = vld [vmem:[#allocation4] sm:$0x7]
  %v7878 = vld [vmem:[#allocation4 + $0x4] sm:$0x7]
  %v7879 = vld [vmem:[#allocation4 + $0x8] sm:$0x7]
  %v7880 = vld [vmem:[#allocation4 + $0xc] sm:$0x7]
  %v7881 = vld [vmem:[#allocation4 + $0x10] sm:$0x7]
  %v7882 = vld [vmem:[#allocation4 + $0x14] sm:$0x7]
  %v7883 = vld [vmem:[#allocation4 + $0x18] sm:$0x7]
  %v7884 = vld [vmem:[#allocation4 + $0x1c] sm:$0x7]
  %v7885 = vld [vmem:[#allocation4 + $0x20] sm:$0x7]
  %v7886 = vld [vmem:[#allocation4 + $0x24] sm:$0x7]
  %v7887 = vld [vmem:[#allocation4 + $0x28] sm:$0x7]
  %v7888 = vld [vmem:[#allocation4 + $0x2c] sm:$0x7]
  %v7889 = vld [vmem:[#allocation4] sm:$0x6]
  %v7890 = vld [vmem:[#allocation4 + $0x4] sm:$0x6]
  %v7891 = vld [vmem:[#allocation4 + $0x8] sm:$0x6]
  %v7892 = vld [vmem:[#allocation4 + $0xc] sm:$0x6]
  %v7893 = vld [vmem:[#allocation4 + $0x10] sm:$0x6]
  %v7894 = vld [vmem:[#allocation4 + $0x14] sm:$0x6]
  %v7895 = vld [vmem:[#allocation4 + $0x18] sm:$0x6]
  %v7896 = vld [vmem:[#allocation4 + $0x1c] sm:$0x6]
  %v7897 = vld [vmem:[#allocation4 + $0x20] sm:$0x6]
  %v7898 = vld [vmem:[#allocation4 + $0x24] sm:$0x6]
  %v7899 = vld [vmem:[#allocation4 + $0x28] sm:$0x6]
  %v7900 = vld [vmem:[#allocation4 + $0x2c] sm:$0x6]
  %v7909 = vunpack.c.l.b16 %v7877
  %v7910 = vunpack.c.l.b16 %v7878
  %v7911 = vunpack.c.l.b16 %v7879
  %v7912 = vunpack.c.l.b16 %v7880
  %v7913 = vunpack.c.l.b16 %v7883
  %v7914 = vunpack.c.l.b16 %v7884
  %v7915 = vunpack.c.l.b16 %v7885
  %v7916 = vunpack.c.l.b16 %v7886
  %v7917 = vpack.c.b16 %v7909, %v7909
  %v7918 = vpack.c.b16 %v7910, %v7910
  %v7919 = vpack.c.b16 %v7911, %v7911
  %v7920 = vpack.c.b16 %v7912, %v7912
  %v7921 = vpack.c.b16 %v7913, %v7913
  %v7922 = vpack.c.b16 %v7914, %v7914
  %v7923 = vpack.c.b16 %v7915, %v7915
  %v7924 = vpack.c.b16 %v7916, %v7916
  %v7926 = vshrl.u32 %v7917, 16
  %v7928 = vshll.u32 %v7917, 16
  %v7930 = vrot.slane %v7928, 1
  %v7931 = vor.u32 %v7926, %v7930
  %v7933 = vshrl.u32 %v7918, 16
  %v7935 = vshll.u32 %v7918, 16
  %v7937 = vrot.slane %v7935, 1
  %v7938 = vor.u32 %v7933, %v7937
  %v7940 = vshrl.u32 %v7919, 16
  %v7942 = vshll.u32 %v7919, 16
  %v7944 = vrot.slane %v7942, 1
  %v7945 = vor.u32 %v7940, %v7944
  %v7947 = vshrl.u32 %v7920, 16
  %v7949 = vshll.u32 %v7920, 16
  %v7951 = vrot.slane %v7949, 1
  %v7952 = vor.u32 %v7947, %v7951
  %v7954 = vshrl.u32 %v7921, 16
  %v7956 = vshll.u32 %v7921, 16
  %v7958 = vrot.slane %v7956, 1
  %v7959 = vor.u32 %v7954, %v7958
  %v7961 = vshrl.u32 %v7922, 16
  %v7963 = vshll.u32 %v7922, 16
  %v7965 = vrot.slane %v7963, 1
  %v7966 = vor.u32 %v7961, %v7965
  %v7968 = vshrl.u32 %v7923, 16
  %v7970 = vshll.u32 %v7923, 16
  %v7972 = vrot.slane %v7970, 1
  %v7973 = vor.u32 %v7968, %v7972
  %v7975 = vshrl.u32 %v7924, 16
  %v7977 = vshll.u32 %v7924, 16
  %v7979 = vrot.slane %v7977, 1
  %v7980 = vor.u32 %v7975, %v7979
  %7981 = vrot.lane.b32.xlu0 %v7931, 64
  %v7982 = vpop.permute.xlu0 %7981
  %7983 = vrot.lane.b32.xlu0 %v7938, 64
  %v7984 = vpop.permute.xlu0 %7983
  %7985 = vrot.lane.b32.xlu0 %v7945, 64
  %v7986 = vpop.permute.xlu0 %7985
  %7987 = vrot.lane.b32.xlu0 %v7952, 64
  %v7988 = vpop.permute.xlu0 %7987
  %7989 = vrot.lane.b32.xlu0 %v7959, 64
  %v7990 = vpop.permute.xlu0 %7989
  %7991 = vrot.lane.b32.xlu0 %v7966, 64
  %v7992 = vpop.permute.xlu0 %7991
  %7993 = vrot.lane.b32.xlu0 %v7973, 64
  %v7994 = vpop.permute.xlu0 %7993
  %7995 = vrot.lane.b32.xlu0 %v7980, 64
  %v7996 = vpop.permute.xlu0 %7995
  %v8005 = vunpack.c.l.b16 %v7889
  %v8006 = vunpack.c.l.b16 %v7890
  %v8007 = vunpack.c.l.b16 %v7891
  %v8008 = vunpack.c.l.b16 %v7892
  %v8009 = vunpack.c.l.b16 %v7895
  %v8010 = vunpack.c.l.b16 %v7896
  %v8011 = vunpack.c.l.b16 %v7897
  %v8012 = vunpack.c.l.b16 %v7898
  %v8013 = vpack.c.b16 %v8005, %v8005
  %v8014 = vpack.c.b16 %v8006, %v8006
  %v8015 = vpack.c.b16 %v8007, %v8007
  %v8016 = vpack.c.b16 %v8008, %v8008
  %v8017 = vpack.c.b16 %v8009, %v8009
  %v8018 = vpack.c.b16 %v8010, %v8010
  %v8019 = vpack.c.b16 %v8011, %v8011
  %v8020 = vpack.c.b16 %v8012, %v8012
  %v8021 = vrot.slane %v8013, 1
  %v8022 = vrot.slane %v8014, 1
  %v8023 = vrot.slane %v8015, 1
  %v8024 = vrot.slane %v8016, 1
  %v8025 = vrot.slane %v8017, 1
  %v8026 = vrot.slane %v8018, 1
  %v8027 = vrot.slane %v8019, 1
  %v8028 = vrot.slane %v8020, 1
  %v8037 = vunpack.c.l.b16 %v7866
  %v8038 = vunpack.c.l.b16 %v7867
  %v8039 = vunpack.c.l.b16 %v7868
  %v8040 = vunpack.c.l.b16 %v7869
  %v8041 = vunpack.c.l.b16 %v7872
  %v8042 = vunpack.c.l.b16 %v7873
  %v8043 = vunpack.c.l.b16 %v7874
  %v8044 = vunpack.c.l.b16 %v7875
  %v8045 = vpack.c.b16 %v8037, %v8037
  %v8046 = vpack.c.b16 %v8038, %v8038
  %v8047 = vpack.c.b16 %v8039, %v8039
  %v8048 = vpack.c.b16 %v8040, %v8040
  %v8049 = vpack.c.b16 %v8041, %v8041
  %v8050 = vpack.c.b16 %v8042, %v8042
  %v8051 = vpack.c.b16 %v8043, %v8043
  %v8052 = vpack.c.b16 %v8044, %v8044
  %8053 = vrot.lane.b32.xlu0 %v8045, 64
  %v8054 = vpop.permute.xlu0 %8053
  %8055 = vrot.lane.b32.xlu0 %v8046, 64
  %v8056 = vpop.permute.xlu0 %8055
  %8057 = vrot.lane.b32.xlu0 %v8047, 64
  %v8058 = vpop.permute.xlu0 %8057
  %8059 = vrot.lane.b32.xlu0 %v8048, 64
  %v8060 = vpop.permute.xlu0 %8059
  %8061 = vrot.lane.b32.xlu0 %v8049, 64
  %v8062 = vpop.permute.xlu0 %8061
  %8063 = vrot.lane.b32.xlu0 %v8050, 64
  %v8064 = vpop.permute.xlu0 %8063
  %8065 = vrot.lane.b32.xlu0 %v8051, 64
  %v8066 = vpop.permute.xlu0 %8065
  %8067 = vrot.lane.b32.xlu0 %v8052, 64
  %v8068 = vpop.permute.xlu0 %8067
  %v8071 = vunpack.c.l.b16 %v7881
  %v8072 = vunpack.c.l.b16 %v7887
  %v8073 = vpack.c.b16 %v8071, %v8071
  %v8074 = vpack.c.b16 %v8072, %v8072
  %v8076 = vshrl.u32 %v8073, 16
  %v8078 = vshll.u32 %v8073, 16
  %v8080 = vrot.slane %v8078, 1
  %v8081 = vor.u32 %v8076, %v8080
  %v8083 = vshrl.u32 %v8074, 16
  %v8085 = vshll.u32 %v8074, 16
  %v8087 = vrot.slane %v8085, 1
  %v8088 = vor.u32 %v8083, %v8087
  %v8091 = vunpack.c.l.b16 %v7893
  %v8092 = vunpack.c.l.b16 %v7899
  %v8093 = vpack.c.b16 %v8091, %v8091
  %v8094 = vpack.c.b16 %v8092, %v8092
  %v8095 = vrot.slane %v8093, 1
  %v8096 = vrot.slane %v8094, 1
  %8097 = vrot.lane.b32.xlu0 %v8022, 64
  %v8098 = vpop.permute.xlu0 %8097
  %8099 = vrot.lane.b32.xlu0 %v8023, 64
  %v8100 = vpop.permute.xlu0 %8099
  %8101 = vrot.lane.b32.xlu0 %v8024, 64
  %v8102 = vpop.permute.xlu0 %8101
  %8103 = vrot.lane.b32.xlu0 %v8095, 64
  %v8104 = vpop.permute.xlu0 %8103
  %8105 = vrot.lane.b32.xlu0 %v8026, 64
  %v8106 = vpop.permute.xlu0 %8105
  %8107 = vrot.lane.b32.xlu0 %v8027, 64
  %v8108 = vpop.permute.xlu0 %8107
  %8109 = vrot.lane.b32.xlu0 %v8028, 64
  %v8110 = vpop.permute.xlu0 %8109
  %8111 = vrot.lane.b32.xlu0 %v8096, 64
  %v8112 = vpop.permute.xlu0 %8111
  %v8115 = vunpack.c.l.b16 %v7882
  %v8116 = vunpack.c.l.b16 %v7888
  %v8117 = vpack.c.b16 %v8115, %v8115
  %v8118 = vpack.c.b16 %v8116, %v8116
  %v8120 = vshrl.u32 %v8117, 16
  %v8122 = vshll.u32 %v8117, 16
  %v8124 = vrot.slane %v8122, 1
  %v8125 = vor.u32 %v8120, %v8124
  %v8127 = vshrl.u32 %v8118, 16
  %v8129 = vshll.u32 %v8118, 16
  %v8131 = vrot.slane %v8129, 1
  %v8132 = vor.u32 %v8127, %v8131
  %8133 = vrot.lane.b32.xlu0 %v8081, 64
  %v8134 = vpop.permute.xlu0 %8133
  %8135 = vrot.lane.b32.xlu0 %v8125, 64
  %v8136 = vpop.permute.xlu0 %8135
  %8137 = vrot.lane.b32.xlu0 %v8088, 64
  %v8138 = vpop.permute.xlu0 %8137
  %8139 = vrot.lane.b32.xlu0 %v8132, 64
  %v8140 = vpop.permute.xlu0 %8139
  %v8143 = vunpack.c.l.b16 %v7894
  %v8144 = vunpack.c.l.b16 %v7900
  %v8145 = vpack.c.b16 %v8143, %v8143
  %v8146 = vpack.c.b16 %v8144, %v8144
  %v8147 = vrot.slane %v8145, 1
  %v8148 = vrot.slane %v8146, 1
  %v8151 = vsel %vm6597, %v7865, %v7982
  %v8154 = vsel %vm6597, %v7866, %v7984
  %v8157 = vsel %vm6597, %v7867, %v7986
  %v8160 = vsel %vm6597, %v7868, %v7988
  %v8163 = vsel %vm6597, %v7871, %v7990
  %v8166 = vsel %vm6597, %v7872, %v7992
  %v8169 = vsel %vm6597, %v7873, %v7994
  %v8172 = vsel %vm6597, %v7874, %v7996
  %v8175 = vsel %vm6597, %v8021, %v8054
  %v8178 = vsel %vm6597, %v8022, %v8056
  %v8181 = vsel %vm6597, %v8023, %v8058
  %v8184 = vsel %vm6597, %v8024, %v8060
  %v8187 = vsel %vm6597, %v8025, %v8062
  %v8190 = vsel %vm6597, %v8026, %v8064
  %v8193 = vsel %vm6597, %v8027, %v8066
  %v8196 = vsel %vm6597, %v8028, %v8068
  %v8199 = vsel %vm6597, %v7938, %v8098
  %v8202 = vsel %vm6597, %v7945, %v8100
  %v8205 = vsel %vm6597, %v7952, %v8102
  %v8208 = vsel %vm6597, %v8081, %v8104
  %v8211 = vsel %vm6597, %v7966, %v8106
  %v8214 = vsel %vm6597, %v7973, %v8108
  %v8217 = vsel %vm6597, %v7980, %v8110
  %v8220 = vsel %vm6597, %v8088, %v8112
  %v8223 = vsel %vm6597, %v7869, %v8134
  %v8226 = vsel %vm6597, %v7870, %v8136
  %v8229 = vsel %vm6597, %v7875, %v8138
  %v8232 = vsel %vm6597, %v7876, %v8140
  %v8261 = vcombine.low %v8151, %v8175
  %v8262 = vcombine.low %v8199, %v8157
  %v8264 = vunpack.c.l.s4 1983009808
  %v8265 = vunpack.c.0.s8 %v8264
  %v8266 = vlaneseq
  %v8267 = vshrl.u32 %v8266, 7
  %v8268 = vsub.s32 %v8265, %v8267
  %v8269 = vrot.slane %v8261, %v8268
  %v8271 = vunpack.c.l.s4 1983009808
  %v8272 = vunpack.c.0.s8 %v8271
  %v8273 = vlaneseq
  %v8274 = vshrl.u32 %v8273, 7
  %v8275 = vsub.s32 %v8272, %v8274
  %v8276 = vrot.slane %v8262, %v8275
  %v8277 = vcombine.low %v8269, %v8276
  %v8279 = vunpack.c.l.s4 1983009808
  %v8280 = vunpack.c.0.s8 %v8279
  %v8281 = vlaneseq
  %v8282 = vshrl.u32 %v8281, 7
  %v8283 = vsub.s32 %v8280, %v8282
  %v8284 = vrot.slane %v8023, %v8283
  %v8285 = vcombine.low %v8154, %v8178
  %v8286 = vcombine.low %v8202, %v8160
  %v8288 = vunpack.c.l.s4 1983009808
  %v8289 = vunpack.c.0.s8 %v8288
  %v8290 = vlaneseq
  %v8291 = vshrl.u32 %v8290, 7
  %v8292 = vsub.s32 %v8289, %v8291
  %v8293 = vrot.slane %v8285, %v8292
  %v8295 = vunpack.c.l.s4 1983009808
  %v8296 = vunpack.c.0.s8 %v8295
  %v8297 = vlaneseq
  %v8298 = vshrl.u32 %v8297, 7
  %v8299 = vsub.s32 %v8296, %v8298
  %v8300 = vrot.slane %v8286, %v8299
  %v8301 = vcombine.low %v8293, %v8300
  %v8303 = vunpack.c.l.s4 1983009808
  %v8304 = vunpack.c.0.s8 %v8303
  %v8305 = vlaneseq
  %v8306 = vshrl.u32 %v8305, 7
  %v8307 = vsub.s32 %v8304, %v8306
  %v8308 = vrot.slane %v8024, %v8307
  %v8309 = vcombine.low %v8157, %v8181
  %v8310 = vcombine.low %v8205, %v8223
  %v8312 = vunpack.c.l.s4 1983009808
  %v8313 = vunpack.c.0.s8 %v8312
  %v8314 = vlaneseq
  %v8315 = vshrl.u32 %v8314, 7
  %v8316 = vsub.s32 %v8313, %v8315
  %v8317 = vrot.slane %v8309, %v8316
  %v8319 = vunpack.c.l.s4 1983009808
  %v8320 = vunpack.c.0.s8 %v8319
  %v8321 = vlaneseq
  %v8322 = vshrl.u32 %v8321, 7
  %v8323 = vsub.s32 %v8320, %v8322
  %v8324 = vrot.slane %v8310, %v8323
  %v8325 = vcombine.low %v8317, %v8324
  %v8327 = vunpack.c.l.s4 1983009808
  %v8328 = vunpack.c.0.s8 %v8327
  %v8329 = vlaneseq
  %v8330 = vshrl.u32 %v8329, 7
  %v8331 = vsub.s32 %v8328, %v8330
  %v8332 = vrot.slane %v8095, %v8331
  %v8333 = vcombine.low %v8160, %v8184
  %v8334 = vcombine.low %v8208, %v8226
  %v8336 = vunpack.c.l.s4 1983009808
  %v8337 = vunpack.c.0.s8 %v8336
  %v8338 = vlaneseq
  %v8339 = vshrl.u32 %v8338, 7
  %v8340 = vsub.s32 %v8337, %v8339
  %v8341 = vrot.slane %v8333, %v8340
  %v8343 = vunpack.c.l.s4 1983009808
  %v8344 = vunpack.c.0.s8 %v8343
  %v8345 = vlaneseq
  %v8346 = vshrl.u32 %v8345, 7
  %v8347 = vsub.s32 %v8344, %v8346
  %v8348 = vrot.slane %v8334, %v8347
  %v8349 = vcombine.low %v8341, %v8348
  %v8351 = vunpack.c.l.s4 1983009808
  %v8352 = vunpack.c.0.s8 %v8351
  %v8353 = vlaneseq
  %v8354 = vshrl.u32 %v8353, 7
  %v8355 = vsub.s32 %v8352, %v8354
  %v8356 = vrot.slane %v8147, %v8355
  %v8357 = vcombine.low %v8163, %v8187
  %v8358 = vcombine.low %v8211, %v8169
  %v8360 = vunpack.c.l.s4 1983009808
  %v8361 = vunpack.c.0.s8 %v8360
  %v8362 = vlaneseq
  %v8363 = vshrl.u32 %v8362, 7
  %v8364 = vsub.s32 %v8361, %v8363
  %v8365 = vrot.slane %v8357, %v8364
  %v8367 = vunpack.c.l.s4 1983009808
  %v8368 = vunpack.c.0.s8 %v8367
  %v8369 = vlaneseq
  %v8370 = vshrl.u32 %v8369, 7
  %v8371 = vsub.s32 %v8368, %v8370
  %v8372 = vrot.slane %v8358, %v8371
  %v8373 = vcombine.low %v8365, %v8372
  %v8375 = vunpack.c.l.s4 1983009808
  %v8376 = vunpack.c.0.s8 %v8375
  %v8377 = vlaneseq
  %v8378 = vshrl.u32 %v8377, 7
  %v8379 = vsub.s32 %v8376, %v8378
  %v8380 = vrot.slane %v8027, %v8379
  %v8381 = vcombine.low %v8166, %v8190
  %v8382 = vcombine.low %v8214, %v8172
  %v8384 = vunpack.c.l.s4 1983009808
  %v8385 = vunpack.c.0.s8 %v8384
  %v8386 = vlaneseq
  %v8387 = vshrl.u32 %v8386, 7
  %v8388 = vsub.s32 %v8385, %v8387
  %v8389 = vrot.slane %v8381, %v8388
  %v8391 = vunpack.c.l.s4 1983009808
  %v8392 = vunpack.c.0.s8 %v8391
  %v8393 = vlaneseq
  %v8394 = vshrl.u32 %v8393, 7
  %v8395 = vsub.s32 %v8392, %v8394
  %v8396 = vrot.slane %v8382, %v8395
  %v8397 = vcombine.low %v8389, %v8396
  %v8399 = vunpack.c.l.s4 1983009808
  %v8400 = vunpack.c.0.s8 %v8399
  %v8401 = vlaneseq
  %v8402 = vshrl.u32 %v8401, 7
  %v8403 = vsub.s32 %v8400, %v8402
  %v8404 = vrot.slane %v8028, %v8403
  %v8405 = vcombine.low %v8169, %v8193
  %v8406 = vcombine.low %v8217, %v8229
  %v8408 = vunpack.c.l.s4 1983009808
  %v8409 = vunpack.c.0.s8 %v8408
  %v8410 = vlaneseq
  %v8411 = vshrl.u32 %v8410, 7
  %v8412 = vsub.s32 %v8409, %v8411
  %v8413 = vrot.slane %v8405, %v8412
  %v8415 = vunpack.c.l.s4 1983009808
  %v8416 = vunpack.c.0.s8 %v8415
  %v8417 = vlaneseq
  %v8418 = vshrl.u32 %v8417, 7
  %v8419 = vsub.s32 %v8416, %v8418
  %v8420 = vrot.slane %v8406, %v8419
  %v8421 = vcombine.low %v8413, %v8420
  %v8423 = vunpack.c.l.s4 1983009808
  %v8424 = vunpack.c.0.s8 %v8423
  %v8425 = vlaneseq
  %v8426 = vshrl.u32 %v8425, 7
  %v8427 = vsub.s32 %v8424, %v8426
  %v8428 = vrot.slane %v8096, %v8427
  %v8429 = vcombine.low %v8172, %v8196
  %v8430 = vcombine.low %v8220, %v8232
  %v8432 = vunpack.c.l.s4 1983009808
  %v8433 = vunpack.c.0.s8 %v8432
  %v8434 = vlaneseq
  %v8435 = vshrl.u32 %v8434, 7
  %v8436 = vsub.s32 %v8433, %v8435
  %v8437 = vrot.slane %v8429, %v8436
  %v8439 = vunpack.c.l.s4 1983009808
  %v8440 = vunpack.c.0.s8 %v8439
  %v8441 = vlaneseq
  %v8442 = vshrl.u32 %v8441, 7
  %v8443 = vsub.s32 %v8440, %v8442
  %v8444 = vrot.slane %v8430, %v8443
  %v8445 = vcombine.low %v8437, %v8444
  %v8447 = vunpack.c.l.s4 1983009808
  %v8448 = vunpack.c.0.s8 %v8447
  %v8449 = vlaneseq
  %v8450 = vshrl.u32 %v8449, 7
  %v8451 = vsub.s32 %v8448, %v8450
  %v8452 = vrot.slane %v8148, %v8451
  %v8453 = vld [vmem:[%s5] sm:$0xf]
  %v8454 = vld [vmem:[%s5 + $0x4] sm:$0xf]
  %v8455 = vld [vmem:[%s5 + $0x8] sm:$0xf]
  %v8456 = vld [vmem:[%s5 + $0xc] sm:$0xf]
  %v8457 = vld [vmem:[%s5 + $0x10] sm:$0xf]
  %v8458 = vld [vmem:[%s5 + $0x14] sm:$0xf]
  %v8459 = vld [vmem:[%s5 + $0x18] sm:$0xf]
  %v8460 = vld [vmem:[%s5 + $0x1c] sm:$0xf]
  %v8461 = vld [vmem:[%s5 + $0x20] sm:$0xf]
  %v8462 = vld [vmem:[%s5 + $0x24] sm:$0xf]
  %v8463 = vld [vmem:[%s5 + $0x28] sm:$0xf]
  %v8464 = vld [vmem:[%s5 + $0x2c] sm:$0xf]
  %v8465 = vld [vmem:[%s5 + $0x30] sm:$0xf]
  %v8466 = vld [vmem:[%s5 + $0x34] sm:$0xf]
  %v8467 = vld [vmem:[%s5 + $0x38] sm:$0xf]
  %v8468 = vld [vmem:[%s5 + $0x3c] sm:$0xf]
  %v8469 = vld [vmem:[%s5 + $0x40] sm:$0xf]
  %v8470 = vld [vmem:[%s5 + $0x44] sm:$0xf]
  %v8471 = vld [vmem:[%s5 + $0x48] sm:$0xf]
  %v8472 = vld [vmem:[%s5 + $0x4c] sm:$0xf]
  %v8473 = vld [vmem:[%s5 + $0x50] sm:$0xf]
  %v8474 = vld [vmem:[%s5 + $0x54] sm:$0xf]
  %v8475 = vld [vmem:[%s5 + $0x58] sm:$0xf]
  %v8476 = vld [vmem:[%s5 + $0x5c] sm:$0xf]
  %v8477 = vld [vmem:[%s5 + $0x60] sm:$0xf]
  %v8478 = vld [vmem:[%s5 + $0x64] sm:$0xf]
  %v8479 = vld [vmem:[%s5 + $0x68] sm:$0xf]
  %v8480 = vld [vmem:[%s5 + $0x6c] sm:$0xf]
  %v8481 = vld [vmem:[%s5 + $0x70] sm:$0xf]
  %v8482 = vld [vmem:[%s5 + $0x74] sm:$0xf]
  %v8483 = vld [vmem:[%s5 + $0x78] sm:$0xf]
  %v8484 = vld [vmem:[%s5 + $0x7c] sm:$0xf]
  %v8485 = vld [vmem:[%s5 + $0x80] sm:$0xf]
  %v8486 = vld [vmem:[%s5 + $0x84] sm:$0xf]
  %v8487 = vld [vmem:[%s5 + $0x88] sm:$0xf]
  %v8488 = vld [vmem:[%s5 + $0x8c] sm:$0xf]
  %v8489 = vld [vmem:[%s5 + $0x90] sm:$0xf]
  %v8490 = vld [vmem:[%s5 + $0x94] sm:$0xf]
  %v8491 = vld [vmem:[%s5 + $0x98] sm:$0xf]
  %v8492 = vld [vmem:[%s5 + $0x9c] sm:$0xf]
  %v8493 = vld [vmem:[%s5 + $0xa0] sm:$0xf]
  %v8494 = vld [vmem:[%s5 + $0xa4] sm:$0xf]
  %v8495 = vld [vmem:[%s5 + $0xa8] sm:$0xf]
  %v8496 = vld [vmem:[%s5 + $0xac] sm:$0xf]
  %v8497 = vld [vmem:[%s5 + $0xb0] sm:$0xf]
  %v8498 = vld [vmem:[%s5 + $0xb4] sm:$0xf]
  %v8499 = vld [vmem:[%s5 + $0xb8] sm:$0xf]
  %v8500 = vld [vmem:[%s5 + $0xbc] sm:$0xf]
  %v8501 = vld [vmem:[%s5 + $0xc0] sm:$0xf]
  %v8502 = vld [vmem:[%s5 + $0xc4] sm:$0xf]
  %v8503 = vld [vmem:[%s5 + $0xc8] sm:$0xf]
  %v8504 = vld [vmem:[%s5 + $0xcc] sm:$0xf]
  %v8505 = vld [vmem:[%s5 + $0xd0] sm:$0xf]
  %v8506 = vld [vmem:[%s5 + $0xd4] sm:$0xf]
  %v8507 = vld [vmem:[%s5 + $0xd8] sm:$0xf]
  %v8508 = vld [vmem:[%s5 + $0xdc] sm:$0xf]
  %v8509 = vld [vmem:[%s5 + $0xe0] sm:$0xf]
  %v8510 = vld [vmem:[%s5 + $0xe4] sm:$0xf]
  %v8511 = vld [vmem:[%s5 + $0xe8] sm:$0xf]
  %v8512 = vld [vmem:[%s5 + $0xec] sm:$0xf]
  %v8513 = vld [vmem:[%s5 + $0xf0] sm:$0xf]
  %v8514 = vld [vmem:[%s5 + $0xf4] sm:$0xf]
  %v8515 = vld [vmem:[%s5 + $0xf8] sm:$0xf]
  %v8516 = vld [vmem:[%s5 + $0xfc] sm:$0xf]
  %v8517 = vld [vmem:[%s5 + $0x100] sm:$0xf]
  %v8518 = vld [vmem:[%s5 + $0x104] sm:$0xf]
  %v8519 = vld [vmem:[%s5 + $0x108] sm:$0xf]
  %v8520 = vld [vmem:[%s5 + $0x10c] sm:$0xf]
  %v8521 = vld [vmem:[%s5 + $0x110] sm:$0xf]
  %v8522 = vld [vmem:[%s5 + $0x114] sm:$0xf]
  %v8523 = vld [vmem:[%s5 + $0x118] sm:$0xf]
  %v8524 = vld [vmem:[%s5 + $0x11c] sm:$0xf]
  %v8525 = vld [vmem:[%s6] sm:$0x1]
  %v8527 = vlaneseq
  %v8528 = vshrl.u32 %v8527, 7
  %v8529 = vsub.s32 0, %v8528
  %v8530 = vrot.slane %v8525, %v8529
  %v8532 = vcombine.low %v8277, %v8301
  %v8533 = vcombine.high %v8277, %v8301
  %v8534 = vcombine.low %v8325, %v8349
  %v8535 = vcombine.high %v8325, %v8349
  %v8537 = vunpack.c.l.s4 1983009808
  %v8538 = vunpack.c.0.s8 %v8537
  %v8539 = vlaneseq
  %v8540 = vshrl.u32 %v8539, 7
  %v8541 = vsub.s32 %v8538, %v8540
  %v8542 = vrot.slane %v8532, %v8541
  %v8544 = vunpack.c.l.s4 1983009808
  %v8545 = vunpack.c.0.s8 %v8544
  %v8546 = vlaneseq
  %v8547 = vshrl.u32 %v8546, 7
  %v8548 = vsub.s32 %v8545, %v8547
  %v8549 = vrot.slane %v8533, %v8548
  %v8551 = vunpack.c.l.s4 1983009808
  %v8552 = vunpack.c.0.s8 %v8551
  %v8553 = vlaneseq
  %v8554 = vshrl.u32 %v8553, 7
  %v8555 = vsub.s32 %v8552, %v8554
  %v8556 = vrot.slane %v8534, %v8555
  %v8558 = vunpack.c.l.s4 1983009808
  %v8559 = vunpack.c.0.s8 %v8558
  %v8560 = vlaneseq
  %v8561 = vshrl.u32 %v8560, 7
  %v8562 = vsub.s32 %v8559, %v8561
  %v8563 = vrot.slane %v8535, %v8562
  %v8564 = vcombine.low %v8542, %v8556
  %v8565 = vcombine.high %v8542, %v8556
  %v8566 = vcombine.low %v8549, %v8563
  %v8567 = vcombine.high %v8549, %v8563
  %v8568 = vcombine.low %v8284, %v8308
  %v8569 = vcombine.low %v8332, %v8356
  %v8571 = vunpack.c.l.s4 1983009808
  %v8572 = vunpack.c.0.s8 %v8571
  %v8573 = vlaneseq
  %v8574 = vshrl.u32 %v8573, 7
  %v8575 = vsub.s32 %v8572, %v8574
  %v8576 = vrot.slane %v8568, %v8575
  %v8578 = vunpack.c.l.s4 1983009808
  %v8579 = vunpack.c.0.s8 %v8578
  %v8580 = vlaneseq
  %v8581 = vshrl.u32 %v8580, 7
  %v8582 = vsub.s32 %v8579, %v8581
  %v8583 = vrot.slane %v8569, %v8582
  %v8584 = vcombine.low %v8576, %v8583
  %v8585 = vcombine.low %v8373, %v8397
  %v8586 = vcombine.high %v8373, %v8397
  %v8587 = vcombine.low %v8421, %v8445
  %v8588 = vcombine.high %v8421, %v8445
  %v8590 = vunpack.c.l.s4 1983009808
  %v8591 = vunpack.c.0.s8 %v8590
  %v8592 = vlaneseq
  %v8593 = vshrl.u32 %v8592, 7
  %v8594 = vsub.s32 %v8591, %v8593
  %v8595 = vrot.slane %v8585, %v8594
  %v8597 = vunpack.c.l.s4 1983009808
  %v8598 = vunpack.c.0.s8 %v8597
  %v8599 = vlaneseq
  %v8600 = vshrl.u32 %v8599, 7
  %v8601 = vsub.s32 %v8598, %v8600
  %v8602 = vrot.slane %v8586, %v8601
  %v8604 = vunpack.c.l.s4 1983009808
  %v8605 = vunpack.c.0.s8 %v8604
  %v8606 = vlaneseq
  %v8607 = vshrl.u32 %v8606, 7
  %v8608 = vsub.s32 %v8605, %v8607
  %v8609 = vrot.slane %v8587, %v8608
  %v8611 = vunpack.c.l.s4 1983009808
  %v8612 = vunpack.c.0.s8 %v8611
  %v8613 = vlaneseq
  %v8614 = vshrl.u32 %v8613, 7
  %v8615 = vsub.s32 %v8612, %v8614
  %v8616 = vrot.slane %v8588, %v8615
  %v8617 = vcombine.low %v8595, %v8609
  %v8618 = vcombine.high %v8595, %v8609
  %v8619 = vcombine.low %v8602, %v8616
  %v8620 = vcombine.high %v8602, %v8616
  %v8621 = vcombine.low %v8380, %v8404
  %v8622 = vcombine.low %v8428, %v8452
  %v8624 = vunpack.c.l.s4 1983009808
  %v8625 = vunpack.c.0.s8 %v8624
  %v8626 = vlaneseq
  %v8627 = vshrl.u32 %v8626, 7
  %v8628 = vsub.s32 %v8625, %v8627
  %v8629 = vrot.slane %v8621, %v8628
  %v8631 = vunpack.c.l.s4 1983009808
  %v8632 = vunpack.c.0.s8 %v8631
  %v8633 = vlaneseq
  %v8634 = vshrl.u32 %v8633, 7
  %v8635 = vsub.s32 %v8632, %v8634
  %v8636 = vrot.slane %v8622, %v8635
  %v8637 = vcombine.low %v8629, %v8636
  %v8718 = vunpack.c.l.b16 %v8453
  %v8719 = vunpack.c.l.b16 %v8454
  %v8720 = vunpack.c.l.b16 %v8455
  %v8721 = vunpack.c.l.b16 %v8456
  %v8722 = vunpack.c.l.b16 %v8457
  %v8723 = vunpack.c.l.b16 %v8458
  %v8724 = vunpack.c.l.b16 %v8459
  %v8725 = vunpack.c.l.b16 %v8460
  %v8726 = vunpack.c.l.b16 %v8461
  %v8727 = vunpack.c.l.b16 %v8462
  %v8728 = vunpack.c.l.b16 %v8463
  %v8729 = vunpack.c.l.b16 %v8464
  %v8730 = vunpack.c.l.b16 %v8465
  %v8731 = vunpack.c.l.b16 %v8466
  %v8732 = vunpack.c.l.b16 %v8467
  %v8733 = vunpack.c.l.b16 %v8468
  %v8734 = vunpack.c.l.b16 %v8469
  %v8735 = vunpack.c.l.b16 %v8470
  %v8736 = vunpack.c.l.b16 %v8471
  %v8737 = vunpack.c.l.b16 %v8472
  %v8738 = vunpack.c.l.b16 %v8473
  %v8739 = vunpack.c.l.b16 %v8474
  %v8740 = vunpack.c.l.b16 %v8475
  %v8741 = vunpack.c.l.b16 %v8476
  %v8742 = vunpack.c.l.b16 %v8477
  %v8743 = vunpack.c.l.b16 %v8478
  %v8744 = vunpack.c.l.b16 %v8479
  %v8745 = vunpack.c.l.b16 %v8480
  %v8746 = vunpack.c.l.b16 %v8481
  %v8747 = vunpack.c.l.b16 %v8482
  %v8748 = vunpack.c.l.b16 %v8483
  %v8749 = vunpack.c.l.b16 %v8484
  %v8750 = vunpack.c.l.b16 %v8485
  %v8751 = vunpack.c.l.b16 %v8486
  %v8752 = vunpack.c.l.b16 %v8487
  %v8753 = vunpack.c.l.b16 %v8488
  %v8754 = vunpack.c.l.b16 %v8489
  %v8755 = vunpack.c.l.b16 %v8490
  %v8756 = vunpack.c.l.b16 %v8491
  %v8757 = vunpack.c.l.b16 %v8492
  %v8758 = vunpack.c.l.b16 %v8493
  %v8759 = vunpack.c.l.b16 %v8494
  %v8760 = vunpack.c.l.b16 %v8495
  %v8761 = vunpack.c.l.b16 %v8496
  %v8762 = vunpack.c.l.b16 %v8497
  %v8763 = vunpack.c.l.b16 %v8498
  %v8764 = vunpack.c.l.b16 %v8499
  %v8765 = vunpack.c.l.b16 %v8500
  %v8766 = vunpack.c.l.b16 %v8501
  %v8767 = vunpack.c.l.b16 %v8502
  %v8768 = vunpack.c.l.b16 %v8503
  %v8769 = vunpack.c.l.b16 %v8504
  %v8770 = vunpack.c.l.b16 %v8505
  %v8771 = vunpack.c.l.b16 %v8506
  %v8772 = vunpack.c.l.b16 %v8507
  %v8773 = vunpack.c.l.b16 %v8508
  %v8774 = vunpack.c.l.b16 %v8509
  %v8775 = vunpack.c.l.b16 %v8510
  %v8776 = vunpack.c.l.b16 %v8511
  %v8777 = vunpack.c.l.b16 %v8512
  %v8778 = vunpack.c.l.b16 %v8513
  %v8779 = vunpack.c.l.b16 %v8514
  %v8780 = vunpack.c.l.b16 %v8515
  %v8781 = vunpack.c.l.b16 %v8516
  %v8782 = vunpack.c.l.b16 %v8517
  %v8783 = vunpack.c.l.b16 %v8518
  %v8784 = vunpack.c.l.b16 %v8519
  %v8785 = vunpack.c.l.b16 %v8520
  %v8786 = vunpack.c.l.b16 %v8521
  %v8787 = vunpack.c.l.b16 %v8522
  %v8788 = vunpack.c.l.b16 %v8523
  %v8789 = vunpack.c.l.b16 %v8524
  %v8790 = vpack.c.b16 %v8719, %v8718
  %v8791 = vpack.c.b16 %v8721, %v8720
  %v8792 = vpack.c.b16 %v8723, %v8722
  %v8793 = vpack.c.b16 %v8725, %v8724
  %v8794 = vpack.c.b16 %v8727, %v8726
  %v8795 = vpack.c.b16 %v8729, %v8728
  %v8796 = vpack.c.b16 %v8731, %v8730
  %v8797 = vpack.c.b16 %v8733, %v8732
  %v8798 = vpack.c.b16 %v8735, %v8734
  %v8799 = vpack.c.b16 %v8737, %v8736
  %v8800 = vpack.c.b16 %v8739, %v8738
  %v8801 = vpack.c.b16 %v8741, %v8740
  %v8802 = vpack.c.b16 %v8743, %v8742
  %v8803 = vpack.c.b16 %v8745, %v8744
  %v8804 = vpack.c.b16 %v8747, %v8746
  %v8805 = vpack.c.b16 %v8749, %v8748
  %v8806 = vpack.c.b16 %v8751, %v8750
  %v8807 = vpack.c.b16 %v8753, %v8752
  %v8808 = vpack.c.b16 %v8755, %v8754
  %v8809 = vpack.c.b16 %v8757, %v8756
  %v8810 = vpack.c.b16 %v8759, %v8758
  %v8811 = vpack.c.b16 %v8761, %v8760
  %v8812 = vpack.c.b16 %v8763, %v8762
  %v8813 = vpack.c.b16 %v8765, %v8764
  %v8814 = vpack.c.b16 %v8767, %v8766
  %v8815 = vpack.c.b16 %v8769, %v8768
  %v8816 = vpack.c.b16 %v8771, %v8770
  %v8817 = vpack.c.b16 %v8773, %v8772
  %v8818 = vpack.c.b16 %v8775, %v8774
  %v8819 = vpack.c.b16 %v8777, %v8776
  %v8820 = vpack.c.b16 %v8779, %v8778
  %v8821 = vpack.c.b16 %v8781, %v8780
  %v8822 = vpack.c.b16 %v8783, %v8782
  %v8823 = vpack.c.b16 %v8785, %v8784
  %v8824 = vpack.c.b16 %v8787, %v8786
  %v8825 = vpack.c.b16 %v8789, %v8788
  %v8863 = vsel %vm6597, %v8584, 0
  %v8866 = vsel %vm6597, %v8637, 0
  %8868 = vmatprep.subr.bf16.mxu0 0
  %8869 = vmatpush1.bf16.msra.mxu0 %v8790
  %8870 = vmatprep.subr.bf16.mxu0 0
  %8871 = vmatpush1.bf16.msra.mxu0 %v8791
  %8872 = vmatprep.subr.bf16.mxu0 0
  %8873 = vmatpush1.bf16.msra.mxu0 %v8792
  %8874 = vmatprep.subr.bf16.mxu0 0
  %8875 = vmatpush1.bf16.msra.mxu0 %v8793
  %8876 = vmatprep.subr.bf16.mxu0 0
  %8877 = vmatpush1.bf16.msra.mxu0 %v8794
  %8878 = vmatprep.subr.bf16.mxu0 0
  %8879 = vmatpush1.bf16.msra.mxu0 %v8795
  %8880 = vmatprep.subr.bf16.mxu0 0
  %8881 = vmatpush1.bf16.msra.mxu0 %v8796
  %8882 = vmatprep.subr.bf16.mxu0 0
  %8883 = vmatpush1.bf16.msra.mxu0 %v8797
  %8884 = vmatprep.subr.bf16.mxu0 0
  %8885 = vmatpush1.bf16.msra.mxu0 %v8798
  %8886 = vmatprep.subr.bf16.mxu0 0
  %8887 = vmatpush1.bf16.msra.mxu0 %v8799
  %8888 = vmatprep.subr.bf16.mxu0 0
  %8889 = vmatpush1.bf16.msra.mxu0 %v8800
  %8890 = vmatprep.subr.bf16.mxu0 0
  %8891 = vmatpush1.bf16.msra.mxu0 %v8801
  %8892 = vmatprep.subr.bf16.mxu0 0
  %8893 = vmatpush1.bf16.msra.mxu0 %v8802
  %8894 = vmatprep.subr.bf16.mxu0 0
  %8895 = vmatpush1.bf16.msra.mxu0 %v8803
  %8896 = vmatprep.subr.bf16.mxu0 0
  %8897 = vmatpush1.bf16.msra.mxu0 %v8804
  %8898 = vmatprep.subr.bf16.mxu0 0
  %8899 = vmatpush1.bf16.msra.mxu0 %v8805
  %8900 = vmatprep.mubr.bf16.mxu0 %v8565
  %8901 = vmatmul.mubr.bf16.gmra.mrb[0].mxu0 %v8564
  %v8902 = vpop.f32.mrb[0].mxu0
  %v8903 = vadd.f32 %v8530, %v8902
  %v8904 = vpop.f32.mrb[0].mxu0
  %v8905 = vpop.f32.mrb[0].mxu0
  %v8906 = vadd.f32 %v8530, %v8905
  %v8907 = vpop.f32.mrb[0].mxu0
  %8908 = vmatprep.mubr.bf16.mxu0 %v8618
  %8909 = vmatmul.mubr.bf16.gmra.mrb[0].mxu0 %v8617
  %v8910 = vpop.f32.mrb[0].mxu0
  %v8911 = vadd.f32 %v8530, %v8910
  %v8912 = vpop.f32.mrb[0].mxu0
  %v8913 = vpop.f32.mrb[0].mxu0
  %v8914 = vadd.f32 %v8530, %v8913
  %v8915 = vpop.f32.mrb[0].mxu0
  %8916 = vdwg.mxu0
  %8917 = vmatprep.subr.bf16.mxu0 0
  %8918 = vmatpush1.bf16.msra.mxu0 %v8806
  %8919 = vmatprep.subr.bf16.mxu0 0
  %8920 = vmatpush1.bf16.msra.mxu0 %v8807
  %8921 = vmatprep.subr.bf16.mxu0 0
  %8922 = vmatpush1.bf16.msra.mxu0 %v8808
  %8923 = vmatprep.subr.bf16.mxu0 0
  %8924 = vmatpush1.bf16.msra.mxu0 %v8809
  %8925 = vmatprep.subr.bf16.mxu0 0
  %8926 = vmatpush1.bf16.msra.mxu0 %v8810
  %8927 = vmatprep.subr.bf16.mxu0 0
  %8928 = vmatpush1.bf16.msra.mxu0 %v8811
  %8929 = vmatprep.subr.bf16.mxu0 0
  %8930 = vmatpush1.bf16.msra.mxu0 %v8812
  %8931 = vmatprep.subr.bf16.mxu0 0
  %8932 = vmatpush1.bf16.msra.mxu0 %v8813
  %8933 = vmatprep.subr.bf16.mxu0 0
  %8934 = vmatpush1.bf16.msra.mxu0 %v8814
  %8935 = vmatprep.subr.bf16.mxu0 0
  %8936 = vmatpush1.bf16.msra.mxu0 %v8815
  %8937 = vmatprep.subr.bf16.mxu0 0
  %8938 = vmatpush1.bf16.msra.mxu0 %v8816
  %8939 = vmatprep.subr.bf16.mxu0 0
  %8940 = vmatpush1.bf16.msra.mxu0 %v8817
  %8941 = vmatprep.subr.bf16.mxu0 0
  %8942 = vmatpush1.bf16.msra.mxu0 %v8818
  %8943 = vmatprep.subr.bf16.mxu0 0
  %8944 = vmatpush1.bf16.msra.mxu0 %v8819
  %8945 = vmatprep.subr.bf16.mxu0 0
  %8946 = vmatpush1.bf16.msra.mxu0 %v8820
  %8947 = vmatprep.subr.bf16.mxu0 0
  %8948 = vmatpush1.bf16.msra.mxu0 %v8821
  %8949 = vmatprep.mubr.bf16.mxu0 %v8567
  %8950 = vmatmul.mubr.bf16.gmra.mrb[0].mxu0 %v8566
  %v8951 = vpop.f32.mrb[0].mxu0
  %v8952 = vadd.f32 %v8903, %v8951
  %v8953 = vpop.f32.mrb[0].mxu0
  %v8954 = vpop.f32.mrb[0].mxu0
  %v8955 = vadd.f32 %v8906, %v8954
  %v8956 = vpop.f32.mrb[0].mxu0
  %8957 = vmatprep.mubr.bf16.mxu0 %v8620
  %8958 = vmatmul.mubr.bf16.gmra.mrb[0].mxu0 %v8619
  %v8959 = vpop.f32.mrb[0].mxu0
  %v8960 = vadd.f32 %v8911, %v8959
  %v8961 = vpop.f32.mrb[0].mxu0
  %v8962 = vpop.f32.mrb[0].mxu0
  %v8963 = vadd.f32 %v8914, %v8962
  %v8964 = vpop.f32.mrb[0].mxu0
  %8965 = vdwg.mxu0
  %8966 = vmatprep.subr.bf16.mxu0 0
  %8967 = vmatpush1.bf16.msra.mxu0 %v8822
  %8968 = vmatprep.subr.bf16.mxu0 0
  %8969 = vmatpush1.bf16.msra.mxu0 %v8823
  %8970 = vmatprep.subr.bf16.mxu0 0
  %8971 = vmatpush1.bf16.msra.mxu0 %v8824
  %8972 = vmatprep.subr.bf16.mxu0 0
  %8973 = vmatpush1.bf16.msra.mxu0 %v8825
  %8974 = vmatprep.subr.bf16.mxu0 0
  %8975 = vmatpush1.bf16.msra.mxu0 0
  %8976 = vmatprep.subr.bf16.mxu0 0
  %8977 = vmatpush1.bf16.msra.mxu0 0
  %8978 = vmatprep.subr.bf16.mxu0 0
  %8979 = vmatpush1.bf16.msra.mxu0 0
  %8980 = vmatprep.subr.bf16.mxu0 0
  %8981 = vmatpush1.bf16.msra.mxu0 0
  %8982 = vmatprep.subr.bf16.mxu0 0
  %8983 = vmatpush1.bf16.msra.mxu0 0
  %8984 = vmatprep.subr.bf16.mxu0 0
  %8985 = vmatpush1.bf16.msra.mxu0 0
  %8986 = vmatprep.subr.bf16.mxu0 0
  %8987 = vmatpush1.bf16.msra.mxu0 0
  %8988 = vmatprep.subr.bf16.mxu0 0
  %8989 = vmatpush1.bf16.msra.mxu0 0
  %8990 = vmatprep.subr.bf16.mxu0 0
  %8991 = vmatpush1.bf16.msra.mxu0 0
  %8992 = vmatprep.subr.bf16.mxu0 0
  %8993 = vmatpush1.bf16.msra.mxu0 0
  %8994 = vmatprep.subr.bf16.mxu0 0
  %8995 = vmatpush1.bf16.msra.mxu0 0
  %8996 = vmatprep.subr.bf16.mxu0 0
  %8997 = vmatpush1.bf16.msra.mxu0 0
  %8998 = vmatprep.mubr.bf16.mxu0 0
  %8999 = vmatmul.mubr.bf16.gmra.mrb[0].mxu0 %v8863
  %v9000 = vpop.f32.mrb[0].mxu0
  %v9001 = vadd.f32 %v8952, %v9000
  %v9002 = vpop.f32.mrb[0].mxu0
  %v9003 = vpop.f32.mrb[0].mxu0
  %v9004 = vadd.f32 %v8955, %v9003
  %v9005 = vpop.f32.mrb[0].mxu0
  %9006 = vmatprep.mubr.bf16.mxu0 0
  %9007 = vmatmul.mubr.bf16.gmra.mrb[0].mxu0 %v8866
  %v9008 = vpop.f32.mrb[0].mxu0
  %v9009 = vadd.f32 %v8960, %v9008
  %v9010 = vpop.f32.mrb[0].mxu0
  %v9011 = vpop.f32.mrb[0].mxu0
  %v9012 = vadd.f32 %v8963, %v9011
  %v9013 = vpop.f32.mrb[0].mxu0
  %9014 = vdwg.mxu0
  %v9015 = vmax.f32 %v9001, 0.0
  %v9016 = vmax.f32 %v9004, 0.0
  %v9017 = vmax.f32 %v9009, 0.0
  %v9018 = vmax.f32 %v9012, 0.0
  %v9023 = vrot.slane %v9015, 4
  %v9024 = vrot.slane %v9016, 4
  %v9025 = vrot.slane %v9017, 4
  %v9026 = vrot.slane %v9018, 4
  %v9031 = vmax.f32 %v9015, %v9023
  %v9032 = vmax.f32 %v9016, %v9024
  %v9033 = vmax.f32 %v9017, %v9025
  %v9034 = vmax.f32 %v9018, %v9026
  %v9040 = vunpack.c.l.s4 1983009808
  %v9041 = vunpack.c.0.s8 %v9040
  %v9042 = vlaneseq
  %v9043 = vshrl.u32 %v9042, 7
  %v9044 = vsub.s32 %v9041, %v9043
  %v9045 = vrot.slane %v9031, %v9044
  %v9046 = vcombine.high %v9045, %v9045
  %v9048 = vunpack.c.l.s4 1983009808
  %v9049 = vunpack.c.0.s8 %v9048
  %v9050 = vlaneseq
  %v9051 = vshrl.u32 %v9050, 7
  %v9052 = vsub.s32 %v9049, %v9051
  %v9053 = vrot.slane %v9032, %v9052
  %v9054 = vcombine.high %v9053, %v9053
  %v9056 = vunpack.c.l.s4 1983009808
  %v9057 = vunpack.c.0.s8 %v9056
  %v9058 = vlaneseq
  %v9059 = vshrl.u32 %v9058, 7
  %v9060 = vsub.s32 %v9057, %v9059
  %v9061 = vrot.slane %v9033, %v9060
  %v9062 = vcombine.high %v9061, %v9061
  %v9064 = vunpack.c.l.s4 1983009808
  %v9065 = vunpack.c.0.s8 %v9064
  %v9066 = vlaneseq
  %v9067 = vshrl.u32 %v9066, 7
  %v9068 = vsub.s32 %v9065, %v9067
  %v9069 = vrot.slane %v9034, %v9068
  %v9070 = vcombine.high %v9069, %v9069
  %v9079 = vrot.slane %v9045, 7
  %v9080 = vrot.slane %v9079, 2
  %v9081 = vrot.slane %v9046, 7
  %v9082 = vrot.slane %v9081, 2
  %v9083 = vrot.slane %v9053, 7
  %v9084 = vrot.slane %v9083, 2
  %v9085 = vrot.slane %v9054, 7
  %v9086 = vrot.slane %v9085, 2
  %v9087 = vrot.slane %v9061, 7
  %v9088 = vrot.slane %v9087, 2
  %v9089 = vrot.slane %v9062, 7
  %v9090 = vrot.slane %v9089, 2
  %v9091 = vrot.slane %v9069, 7
  %v9092 = vrot.slane %v9091, 2
  %v9093 = vrot.slane %v9070, 7
  %v9094 = vrot.slane %v9093, 2
  %v9103 = vmax.f32 %v9045, %v9080
  %v9104 = vmax.f32 %v9046, %v9082
  %v9105 = vmax.f32 %v9053, %v9084
  %v9106 = vmax.f32 %v9054, %v9086
  %v9107 = vmax.f32 %v9061, %v9088
  %v9108 = vmax.f32 %v9062, %v9090
  %v9109 = vmax.f32 %v9069, %v9092
  %v9110 = vmax.f32 %v9070, %v9094
  %v9111 = vpack.c.bf16 %v9103, %v9103
  %v9112 = vpack.c.bf16 %v9104, %v9104
  %v9113 = vpack.c.bf16 %v9105, %v9105
  %v9114 = vpack.c.bf16 %v9106, %v9106
  %v9115 = vpack.c.bf16 %v9107, %v9107
  %v9116 = vpack.c.bf16 %v9108, %v9108
  %v9117 = vpack.c.bf16 %v9109, %v9109
  %v9118 = vpack.c.bf16 %v9110, %v9110
  %9119 = vst [vmem:[#allocation5] sm:$0x3] 0
  %9120 = vst [vmem:[#allocation5 + $0x2] sm:$0x3] 0
  %9121 = vst [vmem:[#allocation5 + $0x4] sm:$0x3] 0
  %9122 = vst [vmem:[#allocation5 + $0x6] sm:$0x3] 0
  %9123 = vst [vmem:[#allocation5 + $0x8] sm:$0x3] 0
  %9124 = vst [vmem:[#allocation5 + $0xa] sm:$0x3] 0
  %9125 = vst [vmem:[#allocation5 + $0xc] sm:$0x3] 0
  %9126 = vst [vmem:[#allocation5 + $0xe] sm:$0x3] 0
  %v9136 = vunpack.c.l.s4 1983009808
  %v9137 = vunpack.c.0.s8 %v9136
  %v9138 = vlaneseq
  %v9139 = vshrl.u32 %v9138, 7
  %v9140 = vsub.s32 %v9137, %v9139
  %v9141 = vrot.slane %v9111, %v9140
  %v9143 = vunpack.c.l.s4 1983009808
  %v9144 = vunpack.c.0.s8 %v9143
  %v9145 = vlaneseq
  %v9146 = vshrl.u32 %v9145, 7
  %v9147 = vsub.s32 %v9144, %v9146
  %v9148 = vrot.slane %v9112, %v9147
  %v9150 = vunpack.c.l.s4 1983009808
  %v9151 = vunpack.c.0.s8 %v9150
  %v9152 = vlaneseq
  %v9153 = vshrl.u32 %v9152, 7
  %v9154 = vsub.s32 %v9151, %v9153
  %v9155 = vrot.slane %v9113, %v9154
  %v9157 = vunpack.c.l.s4 1983009808
  %v9158 = vunpack.c.0.s8 %v9157
  %v9159 = vlaneseq
  %v9160 = vshrl.u32 %v9159, 7
  %v9161 = vsub.s32 %v9158, %v9160
  %v9162 = vrot.slane %v9114, %v9161
  %v9164 = vunpack.c.l.s4 1983009808
  %v9165 = vunpack.c.0.s8 %v9164
  %v9166 = vlaneseq
  %v9167 = vshrl.u32 %v9166, 7
  %v9168 = vsub.s32 %v9165, %v9167
  %v9169 = vrot.slane %v9115, %v9168
  %v9171 = vunpack.c.l.s4 1983009808
  %v9172 = vunpack.c.0.s8 %v9171
  %v9173 = vlaneseq
  %v9174 = vshrl.u32 %v9173, 7
  %v9175 = vsub.s32 %v9172, %v9174
  %v9176 = vrot.slane %v9116, %v9175
  %v9178 = vunpack.c.l.s4 1983009808
  %v9179 = vunpack.c.0.s8 %v9178
  %v9180 = vlaneseq
  %v9181 = vshrl.u32 %v9180, 7
  %v9182 = vsub.s32 %v9179, %v9181
  %v9183 = vrot.slane %v9117, %v9182
  %v9185 = vunpack.c.l.s4 1983009808
  %v9186 = vunpack.c.0.s8 %v9185
  %v9187 = vlaneseq
  %v9188 = vshrl.u32 %v9187, 7
  %v9189 = vsub.s32 %v9186, %v9188
  %v9190 = vrot.slane %v9118, %v9189
  %v9192 = vunpack.c.l.s4 1983009808
  %v9193 = vunpack.c.0.s8 %v9192
  %v9194 = vlaneseq
  %v9195 = vshrl.u32 %v9194, 7
  %v9196 = vsub.s32 %v9193, %v9195
  %v9197 = vrot.slane %v9141, %v9196
  %v9199 = vunpack.c.l.s4 1983009808
  %v9200 = vunpack.c.0.s8 %v9199
  %v9201 = vlaneseq
  %v9202 = vshrl.u32 %v9201, 7
  %v9203 = vsub.s32 %v9200, %v9202
  %v9204 = vrot.slane %v9148, %v9203
  %v9206 = vunpack.c.l.s4 1983009808
  %v9207 = vunpack.c.0.s8 %v9206
  %v9208 = vlaneseq
  %v9209 = vshrl.u32 %v9208, 7
  %v9210 = vsub.s32 %v9207, %v9209
  %v9211 = vrot.slane %v9155, %v9210
  %v9213 = vunpack.c.l.s4 1983009808
  %v9214 = vunpack.c.0.s8 %v9213
  %v9215 = vlaneseq
  %v9216 = vshrl.u32 %v9215, 7
  %v9217 = vsub.s32 %v9214, %v9216
  %v9218 = vrot.slane %v9162, %v9217
  %v9220 = vunpack.c.l.s4 1983009808
  %v9221 = vunpack.c.0.s8 %v9220
  %v9222 = vlaneseq
  %v9223 = vshrl.u32 %v9222, 7
  %v9224 = vsub.s32 %v9221, %v9223
  %v9225 = vrot.slane %v9169, %v9224
  %v9227 = vunpack.c.l.s4 1983009808
  %v9228 = vunpack.c.0.s8 %v9227
  %v9229 = vlaneseq
  %v9230 = vshrl.u32 %v9229, 7
  %v9231 = vsub.s32 %v9228, %v9230
  %v9232 = vrot.slane %v9176, %v9231
  %v9234 = vunpack.c.l.s4 1983009808
  %v9235 = vunpack.c.0.s8 %v9234
  %v9236 = vlaneseq
  %v9237 = vshrl.u32 %v9236, 7
  %v9238 = vsub.s32 %v9235, %v9237
  %v9239 = vrot.slane %v9183, %v9238
  %v9241 = vunpack.c.l.s4 1983009808
  %v9242 = vunpack.c.0.s8 %v9241
  %v9243 = vlaneseq
  %v9244 = vshrl.u32 %v9243, 7
  %v9245 = vsub.s32 %v9242, %v9244
  %v9246 = vrot.slane %v9190, %v9245
  %v9247 = vunpack.c.l.b16 %v9197
  %v9248 = vunpack.c.l.b16 %v9204
  %v9249 = vunpack.c.l.b16 %v9211
  %v9250 = vunpack.c.l.b16 %v9218
  %v9251 = vunpack.c.l.b16 %v9225
  %v9252 = vunpack.c.l.b16 %v9232
  %v9253 = vunpack.c.l.b16 %v9239
  %v9254 = vunpack.c.l.b16 %v9246
  %v9255 = vrot.slane %v9247, 7
  %v9256 = vrot.slane %v9248, 6
  %v9257 = vsel %vm5581, %v9256, %v9255
  %v9258 = vrot.slane %v9249, 7
  %v9259 = vrot.slane %v9250, 6
  %v9260 = vsel %vm5581, %v9259, %v9258
  %v9261 = vrot.slane %v9251, 7
  %v9262 = vrot.slane %v9252, 6
  %v9263 = vsel %vm5581, %v9262, %v9261
  %v9264 = vrot.slane %v9253, 7
  %v9265 = vrot.slane %v9254, 6
  %v9266 = vsel %vm5581, %v9265, %v9264
  %v9267 = vpack.c.b16 %v9257, %v9257
  %v9268 = vpack.c.b16 %v9260, %v9260
  %v9269 = vpack.c.b16 %v9263, %v9263
  %v9270 = vpack.c.b16 %v9266, %v9266
  %v9272 = vunpack.c.l.s4 1983009808
  %v9273 = vunpack.c.0.s8 %v9272
  %v9274 = vlaneseq
  %v9275 = vshrl.u32 %v9274, 7
  %v9276 = vsub.s32 %v9273, %v9275
  %v9277 = vrot.slane %v9267, %v9276
  %v9279 = vunpack.c.l.s4 1983009808
  %v9280 = vunpack.c.0.s8 %v9279
  %v9281 = vlaneseq
  %v9282 = vshrl.u32 %v9281, 7
  %v9283 = vsub.s32 %v9280, %v9282
  %v9284 = vrot.slane %v9268, %v9283
  %v9286 = vunpack.c.l.s4 1983009808
  %v9287 = vunpack.c.0.s8 %v9286
  %v9288 = vlaneseq
  %v9289 = vshrl.u32 %v9288, 7
  %v9290 = vsub.s32 %v9287, %v9289
  %v9291 = vrot.slane %v9269, %v9290
  %v9293 = vunpack.c.l.s4 1983009808
  %v9294 = vunpack.c.0.s8 %v9293
  %v9295 = vlaneseq
  %v9296 = vshrl.u32 %v9295, 7
  %v9297 = vsub.s32 %v9294, %v9296
  %v9298 = vrot.slane %v9270, %v9297
  %s9303 = scalar_lea.vmem [#allocation5], 2
  %vm9304 = vcmask 1041408
  %vm9305 = vsmask.f32 1282
  %vm9306 = vmand %vm9304, %vm9305
  %v9307 = vld [vmem:[%s9303] sm:$0x3]
  %v9308 = vsel %vm9306, %v9277, %v9307
  %9309 = vst [vmem:[%s9303] sm:$0x3] %v9308
  %v9310 = vld [vmem:[%s9303 + $0x2] sm:$0x3]
  %v9311 = vsel %vm9306, %v9284, %v9310
  %9312 = vst [vmem:[%s9303 + $0x2] sm:$0x3] %v9311
  %v9313 = vld [vmem:[%s9303 + $0x8] sm:$0x3]
  %v9314 = vsel %vm9306, %v9291, %v9313
  %9315 = vst [vmem:[%s9303 + $0x8] sm:$0x3] %v9314
  %v9316 = vld [vmem:[%s9303 + $0xa] sm:$0x3]
  %v9317 = vsel %vm9306, %v9298, %v9316
  %9318 = vst [vmem:[%s9303 + $0xa] sm:$0x3] %v9317
  %v9319 = vld [vmem:[#allocation5] sm:$0x1]
  %v9320 = vld [vmem:[#allocation5 + $0x2] sm:$0x1]
  %v9321 = vld [vmem:[#allocation5 + $0x4] sm:$0x1]
  %v9322 = vld [vmem:[#allocation5 + $0x6] sm:$0x1]
  %v9323 = vld [vmem:[#allocation5 + $0x8] sm:$0x1]
  %v9324 = vld [vmem:[#allocation5 + $0xa] sm:$0x1]
  %v9325 = vld [vmem:[#allocation5 + $0xc] sm:$0x1]
  %v9326 = vld [vmem:[#allocation5 + $0xe] sm:$0x1]
  %v9327 = vld [vmem:[#allocation5] sm:$0x3]
  %v9328 = vld [vmem:[#allocation5 + $0x2] sm:$0x3]
  %v9329 = vld [vmem:[#allocation5 + $0x4] sm:$0x3]
  %v9330 = vld [vmem:[#allocation5 + $0x6] sm:$0x3]
  %v9331 = vld [vmem:[#allocation5 + $0x8] sm:$0x3]
  %v9332 = vld [vmem:[#allocation5 + $0xa] sm:$0x3]
  %v9333 = vld [vmem:[#allocation5 + $0xc] sm:$0x3]
  %v9334 = vld [vmem:[#allocation5 + $0xe] sm:$0x3]
  %v9335 = vld [vmem:[#allocation5] sm:$0x2]
  %v9336 = vld [vmem:[#allocation5 + $0x2] sm:$0x2]
  %v9337 = vld [vmem:[#allocation5 + $0x4] sm:$0x2]
  %v9338 = vld [vmem:[#allocation5 + $0x6] sm:$0x2]
  %v9339 = vld [vmem:[#allocation5 + $0x8] sm:$0x2]
  %v9340 = vld [vmem:[#allocation5 + $0xa] sm:$0x2]
  %v9341 = vld [vmem:[#allocation5 + $0xc] sm:$0x2]
  %v9342 = vld [vmem:[#allocation5 + $0xe] sm:$0x2]
  %v9348 = vunpack.c.l.s4 1983009808
  %v9349 = vunpack.c.0.s8 %v9348
  %v9350 = vlaneseq
  %v9351 = vshrl.u32 %v9350, 7
  %v9352 = vsub.s32 %v9349, %v9351
  %v9353 = vrot.slane %v9327, %v9352
  %v9355 = vunpack.c.l.s4 1983009808
  %v9356 = vunpack.c.0.s8 %v9355
  %v9357 = vlaneseq
  %v9358 = vshrl.u32 %v9357, 7
  %v9359 = vsub.s32 %v9356, %v9358
  %v9360 = vrot.slane %v9328, %v9359
  %v9362 = vunpack.c.l.s4 1983009808
  %v9363 = vunpack.c.0.s8 %v9362
  %v9364 = vlaneseq
  %v9365 = vshrl.u32 %v9364, 7
  %v9366 = vsub.s32 %v9363, %v9365
  %v9367 = vrot.slane %v9331, %v9366
  %v9369 = vunpack.c.l.s4 1983009808
  %v9370 = vunpack.c.0.s8 %v9369
  %v9371 = vlaneseq
  %v9372 = vshrl.u32 %v9371, 7
  %v9373 = vsub.s32 %v9370, %v9372
  %v9374 = vrot.slane %v9332, %v9373
  %v9376 = vshrl.u32 %v9353, 16
  %v9378 = vshll.u32 %v9353, 16
  %v9380 = vrot.slane %v9378, 1
  %v9381 = vor.u32 %v9376, %v9380
  %v9383 = vshrl.u32 %v9360, 16
  %v9385 = vshll.u32 %v9360, 16
  %v9387 = vrot.slane %v9385, 1
  %v9388 = vor.u32 %v9383, %v9387
  %v9390 = vshrl.u32 %v9367, 16
  %v9392 = vshll.u32 %v9367, 16
  %v9394 = vrot.slane %v9392, 1
  %v9395 = vor.u32 %v9390, %v9394
  %v9397 = vshrl.u32 %v9374, 16
  %v9399 = vshll.u32 %v9374, 16
  %v9401 = vrot.slane %v9399, 1
  %v9402 = vor.u32 %v9397, %v9401
  %v9408 = vunpack.c.l.s4 1983009808
  %v9409 = vunpack.c.0.s8 %v9408
  %v9410 = vlaneseq
  %v9411 = vshrl.u32 %v9410, 7
  %v9412 = vsub.s32 %v9409, %v9411
  %v9413 = vrot.slane %v9335, %v9412
  %v9415 = vunpack.c.l.s4 1983009808
  %v9416 = vunpack.c.0.s8 %v9415
  %v9417 = vlaneseq
  %v9418 = vshrl.u32 %v9417, 7
  %v9419 = vsub.s32 %v9416, %v9418
  %v9420 = vrot.slane %v9336, %v9419
  %v9422 = vunpack.c.l.s4 1983009808
  %v9423 = vunpack.c.0.s8 %v9422
  %v9424 = vlaneseq
  %v9425 = vshrl.u32 %v9424, 7
  %v9426 = vsub.s32 %v9423, %v9425
  %v9427 = vrot.slane %v9339, %v9426
  %v9429 = vunpack.c.l.s4 1983009808
  %v9430 = vunpack.c.0.s8 %v9429
  %v9431 = vlaneseq
  %v9432 = vshrl.u32 %v9431, 7
  %v9433 = vsub.s32 %v9430, %v9432
  %v9434 = vrot.slane %v9340, %v9433
  %v9435 = vrot.slane %v9413, 1
  %v9436 = vrot.slane %v9420, 1
  %v9437 = vrot.slane %v9427, 1
  %v9438 = vrot.slane %v9434, 1
  %v9442 = vunpack.c.l.s4 1983009808
  %v9443 = vunpack.c.0.s8 %v9442
  %v9444 = vlaneseq
  %v9445 = vshrl.u32 %v9444, 7
  %v9446 = vsub.s32 %v9443, %v9445
  %v9447 = vrot.slane %v9329, %v9446
  %v9449 = vunpack.c.l.s4 1983009808
  %v9450 = vunpack.c.0.s8 %v9449
  %v9451 = vlaneseq
  %v9452 = vshrl.u32 %v9451, 7
  %v9453 = vsub.s32 %v9450, %v9452
  %v9454 = vrot.slane %v9333, %v9453
  %v9456 = vshrl.u32 %v9447, 16
  %v9458 = vshll.u32 %v9447, 16
  %v9460 = vrot.slane %v9458, 1
  %v9461 = vor.u32 %v9456, %v9460
  %v9463 = vshrl.u32 %v9454, 16
  %v9465 = vshll.u32 %v9454, 16
  %v9467 = vrot.slane %v9465, 1
  %v9468 = vor.u32 %v9463, %v9467
  %v9472 = vunpack.c.l.s4 1983009808
  %v9473 = vunpack.c.0.s8 %v9472
  %v9474 = vlaneseq
  %v9475 = vshrl.u32 %v9474, 7
  %v9476 = vsub.s32 %v9473, %v9475
  %v9477 = vrot.slane %v9337, %v9476
  %v9479 = vunpack.c.l.s4 1983009808
  %v9480 = vunpack.c.0.s8 %v9479
  %v9481 = vlaneseq
  %v9482 = vshrl.u32 %v9481, 7
  %v9483 = vsub.s32 %v9480, %v9482
  %v9484 = vrot.slane %v9341, %v9483
  %v9485 = vrot.slane %v9477, 1
  %v9486 = vrot.slane %v9484, 1
  %v9490 = vunpack.c.l.s4 1983009808
  %v9491 = vunpack.c.0.s8 %v9490
  %v9492 = vlaneseq
  %v9493 = vshrl.u32 %v9492, 7
  %v9494 = vsub.s32 %v9491, %v9493
  %v9495 = vrot.slane %v9330, %v9494
  %v9497 = vunpack.c.l.s4 1983009808
  %v9498 = vunpack.c.0.s8 %v9497
  %v9499 = vlaneseq
  %v9500 = vshrl.u32 %v9499, 7
  %v9501 = vsub.s32 %v9498, %v9500
  %v9502 = vrot.slane %v9334, %v9501
  %v9504 = vshrl.u32 %v9495, 16
  %v9506 = vshll.u32 %v9495, 16
  %v9508 = vrot.slane %v9506, 1
  %v9509 = vor.u32 %v9504, %v9508
  %v9511 = vshrl.u32 %v9502, 16
  %v9513 = vshll.u32 %v9502, 16
  %v9515 = vrot.slane %v9513, 1
  %v9516 = vor.u32 %v9511, %v9515
  %v9520 = vunpack.c.l.s4 1983009808
  %v9521 = vunpack.c.0.s8 %v9520
  %v9522 = vlaneseq
  %v9523 = vshrl.u32 %v9522, 7
  %v9524 = vsub.s32 %v9521, %v9523
  %v9525 = vrot.slane %v9338, %v9524
  %v9527 = vunpack.c.l.s4 1983009808
  %v9528 = vunpack.c.0.s8 %v9527
  %v9529 = vlaneseq
  %v9530 = vshrl.u32 %v9529, 7
  %v9531 = vsub.s32 %v9528, %v9530
  %v9532 = vrot.slane %v9342, %v9531
  %v9533 = vrot.slane %v9525, 1
  %v9534 = vrot.slane %v9532, 1
  %v9543 = vcombine.low %v9319, %v9381
  %v9544 = vcombine.low %v9435, %v9320
  %v9545 = vcombine.low %v9388, %v9436
  %v9546 = vcombine.low %v9321, %v9461
  %v9548 = vunpack.c.l.s4 1966171168
  %v9549 = vunpack.c.0.s8 %v9548
  %v9550 = vlaneseq
  %v9551 = vshrl.u32 %v9550, 7
  %v9552 = vsub.s32 %v9549, %v9551
  %v9553 = vrot.slane %v9543, %v9552
  %v9555 = vunpack.c.l.s4 1966171168
  %v9556 = vunpack.c.0.s8 %v9555
  %v9557 = vlaneseq
  %v9558 = vshrl.u32 %v9557, 7
  %v9559 = vsub.s32 %v9556, %v9558
  %v9560 = vrot.slane %v9544, %v9559
  %v9562 = vunpack.c.l.s4 1966171168
  %v9563 = vunpack.c.0.s8 %v9562
  %v9564 = vlaneseq
  %v9565 = vshrl.u32 %v9564, 7
  %v9566 = vsub.s32 %v9563, %v9565
  %v9567 = vrot.slane %v9545, %v9566
  %v9569 = vunpack.c.l.s4 1966171168
  %v9570 = vunpack.c.0.s8 %v9569
  %v9571 = vlaneseq
  %v9572 = vshrl.u32 %v9571, 7
  %v9573 = vsub.s32 %v9570, %v9572
  %v9574 = vrot.slane %v9546, %v9573
  %v9575 = vcombine.low %v9553, %v9560
  %v9576 = vcombine.low %v9567, %v9574
  %v9578 = vunpack.c.l.s4 1966171168
  %v9579 = vunpack.c.0.s8 %v9578
  %v9580 = vlaneseq
  %v9581 = vshrl.u32 %v9580, 7
  %v9582 = vsub.s32 %v9579, %v9581
  %v9583 = vrot.slane %v9575, %v9582
  %v9585 = vunpack.c.l.s4 1966171168
  %v9586 = vunpack.c.0.s8 %v9585
  %v9587 = vlaneseq
  %v9588 = vshrl.u32 %v9587, 7
  %v9589 = vsub.s32 %v9586, %v9588
  %v9590 = vrot.slane %v9576, %v9589
  %v9591 = vcombine.low %v9583, %v9590
  %v9593 = vunpack.c.l.s4 1966171168
  %v9594 = vunpack.c.0.s8 %v9593
  %v9595 = vlaneseq
  %v9596 = vshrl.u32 %v9595, 7
  %v9597 = vsub.s32 %v9594, %v9596
  %v9598 = vrot.slane %v9485, %v9597
  %v9600 = vunpack.c.l.s4 1966171168
  %v9601 = vunpack.c.0.s8 %v9600
  %v9602 = vlaneseq
  %v9603 = vshrl.u32 %v9602, 7
  %v9604 = vsub.s32 %v9601, %v9603
  %v9605 = vrot.slane %v9598, %v9604
  %v9606 = vcombine.low %v9320, %v9388
  %v9607 = vcombine.low %v9436, %v9321
  %v9608 = vcombine.low %v9461, %v9485
  %v9609 = vcombine.low %v9322, %v9509
  %v9611 = vunpack.c.l.s4 1966171168
  %v9612 = vunpack.c.0.s8 %v9611
  %v9613 = vlaneseq
  %v9614 = vshrl.u32 %v9613, 7
  %v9615 = vsub.s32 %v9612, %v9614
  %v9616 = vrot.slane %v9606, %v9615
  %v9618 = vunpack.c.l.s4 1966171168
  %v9619 = vunpack.c.0.s8 %v9618
  %v9620 = vlaneseq
  %v9621 = vshrl.u32 %v9620, 7
  %v9622 = vsub.s32 %v9619, %v9621
  %v9623 = vrot.slane %v9607, %v9622
  %v9625 = vunpack.c.l.s4 1966171168
  %v9626 = vunpack.c.0.s8 %v9625
  %v9627 = vlaneseq
  %v9628 = vshrl.u32 %v9627, 7
  %v9629 = vsub.s32 %v9626, %v9628
  %v9630 = vrot.slane %v9608, %v9629
  %v9632 = vunpack.c.l.s4 1966171168
  %v9633 = vunpack.c.0.s8 %v9632
  %v9634 = vlaneseq
  %v9635 = vshrl.u32 %v9634, 7
  %v9636 = vsub.s32 %v9633, %v9635
  %v9637 = vrot.slane %v9609, %v9636
  %v9638 = vcombine.low %v9616, %v9623
  %v9639 = vcombine.low %v9630, %v9637
  %v9641 = vunpack.c.l.s4 1966171168
  %v9642 = vunpack.c.0.s8 %v9641
  %v9643 = vlaneseq
  %v9644 = vshrl.u32 %v9643, 7
  %v9645 = vsub.s32 %v9642, %v9644
  %v9646 = vrot.slane %v9638, %v9645
  %v9648 = vunpack.c.l.s4 1966171168
  %v9649 = vunpack.c.0.s8 %v9648
  %v9650 = vlaneseq
  %v9651 = vshrl.u32 %v9650, 7
  %v9652 = vsub.s32 %v9649, %v9651
  %v9653 = vrot.slane %v9639, %v9652
  %v9654 = vcombine.low %v9646, %v9653
  %v9656 = vunpack.c.l.s4 1966171168
  %v9657 = vunpack.c.0.s8 %v9656
  %v9658 = vlaneseq
  %v9659 = vshrl.u32 %v9658, 7
  %v9660 = vsub.s32 %v9657, %v9659
  %v9661 = vrot.slane %v9533, %v9660
  %v9663 = vunpack.c.l.s4 1966171168
  %v9664 = vunpack.c.0.s8 %v9663
  %v9665 = vlaneseq
  %v9666 = vshrl.u32 %v9665, 7
  %v9667 = vsub.s32 %v9664, %v9666
  %v9668 = vrot.slane %v9661, %v9667
  %v9669 = vcombine.low %v9323, %v9395
  %v9670 = vcombine.low %v9437, %v9324
  %v9671 = vcombine.low %v9402, %v9438
  %v9672 = vcombine.low %v9325, %v9468
  %v9674 = vunpack.c.l.s4 1966171168
  %v9675 = vunpack.c.0.s8 %v9674
  %v9676 = vlaneseq
  %v9677 = vshrl.u32 %v9676, 7
  %v9678 = vsub.s32 %v9675, %v9677
  %v9679 = vrot.slane %v9669, %v9678
  %v9681 = vunpack.c.l.s4 1966171168
  %v9682 = vunpack.c.0.s8 %v9681
  %v9683 = vlaneseq
  %v9684 = vshrl.u32 %v9683, 7
  %v9685 = vsub.s32 %v9682, %v9684
  %v9686 = vrot.slane %v9670, %v9685
  %v9688 = vunpack.c.l.s4 1966171168
  %v9689 = vunpack.c.0.s8 %v9688
  %v9690 = vlaneseq
  %v9691 = vshrl.u32 %v9690, 7
  %v9692 = vsub.s32 %v9689, %v9691
  %v9693 = vrot.slane %v9671, %v9692
  %v9695 = vunpack.c.l.s4 1966171168
  %v9696 = vunpack.c.0.s8 %v9695
  %v9697 = vlaneseq
  %v9698 = vshrl.u32 %v9697, 7
  %v9699 = vsub.s32 %v9696, %v9698
  %v9700 = vrot.slane %v9672, %v9699
  %v9701 = vcombine.low %v9679, %v9686
  %v9702 = vcombine.low %v9693, %v9700
  %v9704 = vunpack.c.l.s4 1966171168
  %v9705 = vunpack.c.0.s8 %v9704
  %v9706 = vlaneseq
  %v9707 = vshrl.u32 %v9706, 7
  %v9708 = vsub.s32 %v9705, %v9707
  %v9709 = vrot.slane %v9701, %v9708
  %v9711 = vunpack.c.l.s4 1966171168
  %v9712 = vunpack.c.0.s8 %v9711
  %v9713 = vlaneseq
  %v9714 = vshrl.u32 %v9713, 7
  %v9715 = vsub.s32 %v9712, %v9714
  %v9716 = vrot.slane %v9702, %v9715
  %v9717 = vcombine.low %v9709, %v9716
  %v9719 = vunpack.c.l.s4 1966171168
  %v9720 = vunpack.c.0.s8 %v9719
  %v9721 = vlaneseq
  %v9722 = vshrl.u32 %v9721, 7
  %v9723 = vsub.s32 %v9720, %v9722
  %v9724 = vrot.slane %v9486, %v9723
  %v9726 = vunpack.c.l.s4 1966171168
  %v9727 = vunpack.c.0.s8 %v9726
  %v9728 = vlaneseq
  %v9729 = vshrl.u32 %v9728, 7
  %v9730 = vsub.s32 %v9727, %v9729
  %v9731 = vrot.slane %v9724, %v9730
  %v9732 = vcombine.low %v9324, %v9402
  %v9733 = vcombine.low %v9438, %v9325
  %v9734 = vcombine.low %v9468, %v9486
  %v9735 = vcombine.low %v9326, %v9516
  %v9737 = vunpack.c.l.s4 1966171168
  %v9738 = vunpack.c.0.s8 %v9737
  %v9739 = vlaneseq
  %v9740 = vshrl.u32 %v9739, 7
  %v9741 = vsub.s32 %v9738, %v9740
  %v9742 = vrot.slane %v9732, %v9741
  %v9744 = vunpack.c.l.s4 1966171168
  %v9745 = vunpack.c.0.s8 %v9744
  %v9746 = vlaneseq
  %v9747 = vshrl.u32 %v9746, 7
  %v9748 = vsub.s32 %v9745, %v9747
  %v9749 = vrot.slane %v9733, %v9748
  %v9751 = vunpack.c.l.s4 1966171168
  %v9752 = vunpack.c.0.s8 %v9751
  %v9753 = vlaneseq
  %v9754 = vshrl.u32 %v9753, 7
  %v9755 = vsub.s32 %v9752, %v9754
  %v9756 = vrot.slane %v9734, %v9755
  %v9758 = vunpack.c.l.s4 1966171168
  %v9759 = vunpack.c.0.s8 %v9758
  %v9760 = vlaneseq
  %v9761 = vshrl.u32 %v9760, 7
  %v9762 = vsub.s32 %v9759, %v9761
  %v9763 = vrot.slane %v9735, %v9762
  %v9764 = vcombine.low %v9742, %v9749
  %v9765 = vcombine.low %v9756, %v9763
  %v9767 = vunpack.c.l.s4 1966171168
  %v9768 = vunpack.c.0.s8 %v9767
  %v9769 = vlaneseq
  %v9770 = vshrl.u32 %v9769, 7
  %v9771 = vsub.s32 %v9768, %v9770
  %v9772 = vrot.slane %v9764, %v9771
  %v9774 = vunpack.c.l.s4 1966171168
  %v9775 = vunpack.c.0.s8 %v9774
  %v9776 = vlaneseq
  %v9777 = vshrl.u32 %v9776, 7
  %v9778 = vsub.s32 %v9775, %v9777
  %v9779 = vrot.slane %v9765, %v9778
  %v9780 = vcombine.low %v9772, %v9779
  %v9782 = vunpack.c.l.s4 1966171168
  %v9783 = vunpack.c.0.s8 %v9782
  %v9784 = vlaneseq
  %v9785 = vshrl.u32 %v9784, 7
  %v9786 = vsub.s32 %v9783, %v9785
  %v9787 = vrot.slane %v9534, %v9786
  %v9789 = vunpack.c.l.s4 1966171168
  %v9790 = vunpack.c.0.s8 %v9789
  %v9791 = vlaneseq
  %v9792 = vshrl.u32 %v9791, 7
  %v9793 = vsub.s32 %v9790, %v9792
  %v9794 = vrot.slane %v9787, %v9793
  %v9795 = vld [vmem:[%s7] sm:$0xff]
  %v9796 = vld [vmem:[%s7 + $0x8] sm:$0xff]
  %v9797 = vld [vmem:[%s7 + $0x10] sm:$0xff]
  %v9798 = vld [vmem:[%s7 + $0x18] sm:$0xff]
  %v9799 = vld [vmem:[%s7 + $0x20] sm:$0xff]
  %v9800 = vld [vmem:[%s7 + $0x28] sm:$0xff]
  %v9801 = vld [vmem:[%s7 + $0x30] sm:$0xff]
  %v9802 = vld [vmem:[%s7 + $0x38] sm:$0xff]
  %v9803 = vld [vmem:[%s7 + $0x40] sm:$0xff]
  %v9804 = vld [vmem:[%s7 + $0x48] sm:$0xff]
  %v9805 = vld [vmem:[%s7 + $0x50] sm:$0xff]
  %v9806 = vld [vmem:[%s7 + $0x58] sm:$0xff]
  %v9807 = vld [vmem:[%s7 + $0x60] sm:$0xff]
  %v9808 = vld [vmem:[%s7 + $0x68] sm:$0xff]
  %v9809 = vld [vmem:[%s7 + $0x70] sm:$0xff]
  %v9810 = vld [vmem:[%s7 + $0x78] sm:$0xff]
  %v9811 = vld [vmem:[%s7 + $0x80] sm:$0xff]
  %v9812 = vld [vmem:[%s7 + $0x88] sm:$0xff]
  %v9813 = vld [vmem:[%s7 + $0x90] sm:$0xff]
  %v9814 = vld [vmem:[%s7 + $0x98] sm:$0xff]
  %v9815 = vld [vmem:[%s7 + $0xa0] sm:$0xff]
  %v9816 = vld [vmem:[%s7 + $0xa8] sm:$0xff]
  %v9817 = vld [vmem:[%s7 + $0xb0] sm:$0xff]
  %v9818 = vld [vmem:[%s7 + $0xb8] sm:$0xff]
  %v9819 = vld [vmem:[%s7 + $0xc0] sm:$0xff]
  %v9820 = vld [vmem:[%s7 + $0xc8] sm:$0xff]
  %v9821 = vld [vmem:[%s7 + $0xd0] sm:$0xff]
  %v9822 = vld [vmem:[%s7 + $0xd8] sm:$0xff]
  %v9823 = vld [vmem:[%s7 + $0xe0] sm:$0xff]
  %v9824 = vld [vmem:[%s7 + $0xe8] sm:$0xff]
  %v9825 = vld [vmem:[%s7 + $0xf0] sm:$0xff]
  %v9826 = vld [vmem:[%s7 + $0xf8] sm:$0xff]
  %v9827 = vld [vmem:[%s7 + $0x100] sm:$0xff]
  %v9828 = vld [vmem:[%s7 + $0x108] sm:$0xff]
  %v9829 = vld [vmem:[%s7 + $0x110] sm:$0xff]
  %v9830 = vld [vmem:[%s7 + $0x118] sm:$0xff]
  %v9831 = vld [vmem:[%s7 + $0x120] sm:$0xff]
  %v9832 = vld [vmem:[%s7 + $0x128] sm:$0xff]
  %v9833 = vld [vmem:[%s7 + $0x130] sm:$0xff]
  %v9834 = vld [vmem:[%s7 + $0x138] sm:$0xff]
  %v9835 = vld [vmem:[%s7 + $0x140] sm:$0xff]
  %v9836 = vld [vmem:[%s7 + $0x148] sm:$0xff]
  %v9837 = vld [vmem:[%s7 + $0x150] sm:$0xff]
  %v9838 = vld [vmem:[%s7 + $0x158] sm:$0xff]
  %v9839 = vld [vmem:[%s7 + $0x160] sm:$0xff]
  %v9840 = vld [vmem:[%s7 + $0x168] sm:$0xff]
  %v9841 = vld [vmem:[%s7 + $0x170] sm:$0xff]
  %v9842 = vld [vmem:[%s7 + $0x178] sm:$0xff]
  %v9843 = vld [vmem:[%s7 + $0x180] sm:$0xff]
  %v9844 = vld [vmem:[%s7 + $0x188] sm:$0xff]
  %v9845 = vld [vmem:[%s7 + $0x190] sm:$0xff]
  %v9846 = vld [vmem:[%s7 + $0x198] sm:$0xff]
  %v9847 = vld [vmem:[%s7 + $0x1a0] sm:$0xff]
  %v9848 = vld [vmem:[%s7 + $0x1a8] sm:$0xff]
  %v9849 = vld [vmem:[%s7 + $0x1b0] sm:$0xff]
  %v9850 = vld [vmem:[%s7 + $0x1b8] sm:$0xff]
  %v9851 = vld [vmem:[%s7 + $0x1c0] sm:$0xff]
  %v9852 = vld [vmem:[%s7 + $0x1c8] sm:$0xff]
  %v9853 = vld [vmem:[%s7 + $0x1d0] sm:$0xff]
  %v9854 = vld [vmem:[%s7 + $0x1d8] sm:$0xff]
  %v9855 = vld [vmem:[%s7 + $0x1e0] sm:$0xff]
  %v9856 = vld [vmem:[%s7 + $0x1e8] sm:$0xff]
  %v9857 = vld [vmem:[%s7 + $0x1f0] sm:$0xff]
  %v9858 = vld [vmem:[%s7 + $0x1f8] sm:$0xff]
  %v9859 = vld [vmem:[%s7 + $0x200] sm:$0xff]
  %v9860 = vld [vmem:[%s7 + $0x208] sm:$0xff]
  %v9861 = vld [vmem:[%s7 + $0x210] sm:$0xff]
  %v9862 = vld [vmem:[%s7 + $0x218] sm:$0xff]
  %v9863 = vld [vmem:[%s7 + $0x220] sm:$0xff]
  %v9864 = vld [vmem:[%s7 + $0x228] sm:$0xff]
  %v9865 = vld [vmem:[%s7 + $0x230] sm:$0xff]
  %v9866 = vld [vmem:[%s7 + $0x238] sm:$0xff]
  %v9867 = vld [vmem:[%s7 + $0x240] sm:$0xff]
  %v9868 = vld [vmem:[%s7 + $0x248] sm:$0xff]
  %v9869 = vld [vmem:[%s7 + $0x250] sm:$0xff]
  %v9870 = vld [vmem:[%s7 + $0x258] sm:$0xff]
  %v9871 = vld [vmem:[%s7 + $0x260] sm:$0xff]
  %v9872 = vld [vmem:[%s7 + $0x268] sm:$0xff]
  %v9873 = vld [vmem:[%s7 + $0x270] sm:$0xff]
  %v9874 = vld [vmem:[%s7 + $0x278] sm:$0xff]
  %v9875 = vld [vmem:[%s7 + $0x280] sm:$0xff]
  %v9876 = vld [vmem:[%s7 + $0x288] sm:$0xff]
  %v9877 = vld [vmem:[%s7 + $0x290] sm:$0xff]
  %v9878 = vld [vmem:[%s7 + $0x298] sm:$0xff]
  %v9879 = vld [vmem:[%s7 + $0x2a0] sm:$0xff]
  %v9880 = vld [vmem:[%s7 + $0x2a8] sm:$0xff]
  %v9881 = vld [vmem:[%s7 + $0x2b0] sm:$0xff]
  %v9882 = vld [vmem:[%s7 + $0x2b8] sm:$0xff]
  %v9883 = vld [vmem:[%s7 + $0x2c0] sm:$0xff]
  %v9884 = vld [vmem:[%s7 + $0x2c8] sm:$0xff]
  %v9885 = vld [vmem:[%s7 + $0x2d0] sm:$0xff]
  %v9886 = vld [vmem:[%s7 + $0x2d8] sm:$0xff]
  %v9887 = vld [vmem:[%s7 + $0x2e0] sm:$0xff]
  %v9888 = vld [vmem:[%s7 + $0x2e8] sm:$0xff]
  %v9889 = vld [vmem:[%s7 + $0x2f0] sm:$0xff]
  %v9890 = vld [vmem:[%s7 + $0x2f8] sm:$0xff]
  %v9891 = vld [vmem:[%s7 + $0x300] sm:$0xff]
  %v9892 = vld [vmem:[%s7 + $0x308] sm:$0xff]
  %v9893 = vld [vmem:[%s7 + $0x310] sm:$0xff]
  %v9894 = vld [vmem:[%s7 + $0x318] sm:$0xff]
  %v9895 = vld [vmem:[%s7 + $0x320] sm:$0xff]
  %v9896 = vld [vmem:[%s7 + $0x328] sm:$0xff]
  %v9897 = vld [vmem:[%s7 + $0x330] sm:$0xff]
  %v9898 = vld [vmem:[%s7 + $0x338] sm:$0xff]
  %v9899 = vld [vmem:[%s7 + $0x340] sm:$0xff]
  %v9900 = vld [vmem:[%s7 + $0x348] sm:$0xff]
  %v9901 = vld [vmem:[%s7 + $0x350] sm:$0xff]
  %v9902 = vld [vmem:[%s7 + $0x358] sm:$0xff]
  %v9903 = vld [vmem:[%s7 + $0x360] sm:$0xff]
  %v9904 = vld [vmem:[%s7 + $0x368] sm:$0xff]
  %v9905 = vld [vmem:[%s7 + $0x370] sm:$0xff]
  %v9906 = vld [vmem:[%s7 + $0x378] sm:$0xff]
  %v9907 = vld [vmem:[%s7 + $0x380] sm:$0xff]
  %v9908 = vld [vmem:[%s7 + $0x388] sm:$0xff]
  %v9909 = vld [vmem:[%s7 + $0x390] sm:$0xff]
  %v9910 = vld [vmem:[%s7 + $0x398] sm:$0xff]
  %v9911 = vld [vmem:[%s7 + $0x3a0] sm:$0xff]
  %v9912 = vld [vmem:[%s7 + $0x3a8] sm:$0xff]
  %v9913 = vld [vmem:[%s7 + $0x3b0] sm:$0xff]
  %v9914 = vld [vmem:[%s7 + $0x3b8] sm:$0xff]
  %v9915 = vld [vmem:[%s7 + $0x3c0] sm:$0xff]
  %v9916 = vld [vmem:[%s7 + $0x3c8] sm:$0xff]
  %v9917 = vld [vmem:[%s7 + $0x3d0] sm:$0xff]
  %v9918 = vld [vmem:[%s7 + $0x3d8] sm:$0xff]
  %v9919 = vld [vmem:[%s7 + $0x3e0] sm:$0xff]
  %v9920 = vld [vmem:[%s7 + $0x3e8] sm:$0xff]
  %v9921 = vld [vmem:[%s7 + $0x3f0] sm:$0xff]
  %v9922 = vld [vmem:[%s7 + $0x3f8] sm:$0xff]
  %v9923 = vld [vmem:[%s7 + $0x400] sm:$0xff]
  %v9924 = vld [vmem:[%s7 + $0x408] sm:$0xff]
  %v9925 = vld [vmem:[%s7 + $0x410] sm:$0xff]
  %v9926 = vld [vmem:[%s7 + $0x418] sm:$0xff]
  %v9927 = vld [vmem:[%s7 + $0x420] sm:$0xff]
  %v9928 = vld [vmem:[%s7 + $0x428] sm:$0xff]
  %v9929 = vld [vmem:[%s7 + $0x430] sm:$0xff]
  %v9930 = vld [vmem:[%s7 + $0x438] sm:$0xff]
  %v9931 = vld [vmem:[%s7 + $0x440] sm:$0xff]
  %v9932 = vld [vmem:[%s7 + $0x448] sm:$0xff]
  %v9933 = vld [vmem:[%s7 + $0x450] sm:$0xff]
  %v9934 = vld [vmem:[%s7 + $0x458] sm:$0xff]
  %v9935 = vld [vmem:[%s7 + $0x460] sm:$0xff]
  %v9936 = vld [vmem:[%s7 + $0x468] sm:$0xff]
  %v9937 = vld [vmem:[%s7 + $0x470] sm:$0xff]
  %v9938 = vld [vmem:[%s7 + $0x478] sm:$0xff]
  %v9939 = vld [vmem:[%s8] sm:$0x3]
  %v9941 = vlaneseq
  %v9942 = vshrl.u32 %v9941, 7
  %v9943 = vsub.s32 0, %v9942
  %v9944 = vrot.slane %v9939, %v9943
  %v9945 = vlaneseq
  %v9946 = vshrl.u32 %v9945, 7
  %v9947 = vsub.s32 1, %v9946
  %v9948 = vrot.slane %v9939, %v9947
  %v9951 = vcombine.low %v9591, %v9654
  %v9952 = vcombine.high %v9591, %v9654
  %v9953 = vcombine.low %v9717, %v9780
  %v9954 = vcombine.high %v9717, %v9780
  %v9956 = vunpack.c.l.s4 1966171168
  %v9957 = vunpack.c.0.s8 %v9956
  %v9958 = vlaneseq
  %v9959 = vshrl.u32 %v9958, 7
  %v9960 = vsub.s32 %v9957, %v9959
  %v9961 = vrot.slane %v9951, %v9960
  %v9963 = vunpack.c.l.s4 1966171168
  %v9964 = vunpack.c.0.s8 %v9963
  %v9965 = vlaneseq
  %v9966 = vshrl.u32 %v9965, 7
  %v9967 = vsub.s32 %v9964, %v9966
  %v9968 = vrot.slane %v9952, %v9967
  %v9970 = vunpack.c.l.s4 1966171168
  %v9971 = vunpack.c.0.s8 %v9970
  %v9972 = vlaneseq
  %v9973 = vshrl.u32 %v9972, 7
  %v9974 = vsub.s32 %v9971, %v9973
  %v9975 = vrot.slane %v9953, %v9974
  %v9977 = vunpack.c.l.s4 1966171168
  %v9978 = vunpack.c.0.s8 %v9977
  %v9979 = vlaneseq
  %v9980 = vshrl.u32 %v9979, 7
  %v9981 = vsub.s32 %v9978, %v9980
  %v9982 = vrot.slane %v9954, %v9981
  %v9983 = vcombine.low %v9961, %v9975
  %v9984 = vcombine.high %v9961, %v9975
  %v9985 = vcombine.low %v9968, %v9982
  %v9986 = vcombine.high %v9968, %v9982
  %v9988 = vunpack.c.l.s4 1966171168
  %v9989 = vunpack.c.0.s8 %v9988
  %v9990 = vlaneseq
  %v9991 = vshrl.u32 %v9990, 7
  %v9992 = vsub.s32 %v9989, %v9991
  %v9993 = vrot.slane %v9983, %v9992
  %v9995 = vunpack.c.l.s4 1966171168
  %v9996 = vunpack.c.0.s8 %v9995
  %v9997 = vlaneseq
  %v9998 = vshrl.u32 %v9997, 7
  %v9999 = vsub.s32 %v9996, %v9998
  %v10000 = vrot.slane %v9985, %v9999
  %v10002 = vunpack.c.l.s4 1966171168
  %v10003 = vunpack.c.0.s8 %v10002
  %v10004 = vlaneseq
  %v10005 = vshrl.u32 %v10004, 7
  %v10006 = vsub.s32 %v10003, %v10005
  %v10007 = vrot.slane %v9984, %v10006
  %v10009 = vunpack.c.l.s4 1966171168
  %v10010 = vunpack.c.0.s8 %v10009
  %v10011 = vlaneseq
  %v10012 = vshrl.u32 %v10011, 7
  %v10013 = vsub.s32 %v10010, %v10012
  %v10014 = vrot.slane %v9986, %v10013
  %v10015 = vcombine.high %v9993, %v9993
  %v10016 = vcombine.high %v10000, %v10000
  %v10017 = vcombine.high %v10007, %v10007
  %v10018 = vcombine.high %v10014, %v10014
  %v10019 = vcombine.low %v9605, %v9668
  %v10020 = vcombine.low %v9731, %v9794
  %v10022 = vunpack.c.l.s4 1966171168
  %v10023 = vunpack.c.0.s8 %v10022
  %v10024 = vlaneseq
  %v10025 = vshrl.u32 %v10024, 7
  %v10026 = vsub.s32 %v10023, %v10025
  %v10027 = vrot.slane %v10019, %v10026
  %v10029 = vunpack.c.l.s4 1966171168
  %v10030 = vunpack.c.0.s8 %v10029
  %v10031 = vlaneseq
  %v10032 = vshrl.u32 %v10031, 7
  %v10033 = vsub.s32 %v10030, %v10032
  %v10034 = vrot.slane %v10020, %v10033
  %v10035 = vcombine.low %v10027, %v10034
  %v10037 = vunpack.c.l.s4 1966171168
  %v10038 = vunpack.c.0.s8 %v10037
  %v10039 = vlaneseq
  %v10040 = vshrl.u32 %v10039, 7
  %v10041 = vsub.s32 %v10038, %v10040
  %v10042 = vrot.slane %v10035, %v10041
  %v10196 = vunpack.c.l.b16 %v9795
  %v10197 = vunpack.c.h.b16 %v9795
  %v10198 = vunpack.c.l.b16 %v9796
  %v10199 = vunpack.c.h.b16 %v9796
  %v10200 = vunpack.c.l.b16 %v9797
  %v10201 = vunpack.c.h.b16 %v9797
  %v10202 = vunpack.c.l.b16 %v9798
  %v10203 = vunpack.c.h.b16 %v9798
  %v10204 = vunpack.c.l.b16 %v9799
  %v10205 = vunpack.c.h.b16 %v9799
  %v10206 = vunpack.c.l.b16 %v9800
  %v10207 = vunpack.c.h.b16 %v9800
  %v10208 = vunpack.c.l.b16 %v9801
  %v10209 = vunpack.c.h.b16 %v9801
  %v10210 = vunpack.c.l.b16 %v9802
  %v10211 = vunpack.c.h.b16 %v9802
  %v10212 = vunpack.c.l.b16 %v9803
  %v10213 = vunpack.c.h.b16 %v9803
  %v10214 = vunpack.c.l.b16 %v9804
  %v10215 = vunpack.c.h.b16 %v9804
  %v10216 = vunpack.c.l.b16 %v9805
  %v10217 = vunpack.c.h.b16 %v9805
  %v10218 = vunpack.c.l.b16 %v9806
  %v10219 = vunpack.c.h.b16 %v9806
  %v10220 = vunpack.c.l.b16 %v9807
  %v10221 = vunpack.c.h.b16 %v9807
  %v10222 = vunpack.c.l.b16 %v9808
  %v10223 = vunpack.c.h.b16 %v9808
  %v10224 = vunpack.c.l.b16 %v9809
  %v10225 = vunpack.c.h.b16 %v9809
  %v10226 = vunpack.c.l.b16 %v9810
  %v10227 = vunpack.c.h.b16 %v9810
  %v10228 = vunpack.c.l.b16 %v9811
  %v10229 = vunpack.c.h.b16 %v9811
  %v10230 = vunpack.c.l.b16 %v9812
  %v10231 = vunpack.c.h.b16 %v9812
  %v10232 = vunpack.c.l.b16 %v9813
  %v10233 = vunpack.c.h.b16 %v9813
  %v10234 = vunpack.c.l.b16 %v9814
  %v10235 = vunpack.c.h.b16 %v9814
  %v10236 = vunpack.c.l.b16 %v9815
  %v10237 = vunpack.c.h.b16 %v9815
  %v10238 = vunpack.c.l.b16 %v9816
  %v10239 = vunpack.c.h.b16 %v9816
  %v10240 = vunpack.c.l.b16 %v9817
  %v10241 = vunpack.c.h.b16 %v9817
  %v10242 = vunpack.c.l.b16 %v9818
  %v10243 = vunpack.c.h.b16 %v9818
  %v10244 = vunpack.c.l.b16 %v9819
  %v10245 = vunpack.c.h.b16 %v9819
  %v10246 = vunpack.c.l.b16 %v9820
  %v10247 = vunpack.c.h.b16 %v9820
  %v10248 = vunpack.c.l.b16 %v9821
  %v10249 = vunpack.c.h.b16 %v9821
  %v10250 = vunpack.c.l.b16 %v9822
  %v10251 = vunpack.c.h.b16 %v9822
  %v10252 = vunpack.c.l.b16 %v9823
  %v10253 = vunpack.c.h.b16 %v9823
  %v10254 = vunpack.c.l.b16 %v9824
  %v10255 = vunpack.c.h.b16 %v9824
  %v10256 = vunpack.c.l.b16 %v9825
  %v10257 = vunpack.c.h.b16 %v9825
  %v10258 = vunpack.c.l.b16 %v9826
  %v10259 = vunpack.c.h.b16 %v9826
  %v10260 = vunpack.c.l.b16 %v9827
  %v10261 = vunpack.c.h.b16 %v9827
  %v10262 = vunpack.c.l.b16 %v9828
  %v10263 = vunpack.c.h.b16 %v9828
  %v10264 = vunpack.c.l.b16 %v9829
  %v10265 = vunpack.c.h.b16 %v9829
  %v10266 = vunpack.c.l.b16 %v9830
  %v10267 = vunpack.c.h.b16 %v9830
  %v10268 = vunpack.c.l.b16 %v9831
  %v10269 = vunpack.c.h.b16 %v9831
  %v10270 = vunpack.c.l.b16 %v9832
  %v10271 = vunpack.c.h.b16 %v9832
  %v10272 = vunpack.c.l.b16 %v9833
  %v10273 = vunpack.c.h.b16 %v9833
  %v10274 = vunpack.c.l.b16 %v9834
  %v10275 = vunpack.c.h.b16 %v9834
  %v10276 = vunpack.c.l.b16 %v9835
  %v10277 = vunpack.c.h.b16 %v9835
  %v10278 = vunpack.c.l.b16 %v9836
  %v10279 = vunpack.c.h.b16 %v9836
  %v10280 = vunpack.c.l.b16 %v9837
  %v10281 = vunpack.c.h.b16 %v9837
  %v10282 = vunpack.c.l.b16 %v9838
  %v10283 = vunpack.c.h.b16 %v9838
  %v10284 = vunpack.c.l.b16 %v9839
  %v10285 = vunpack.c.h.b16 %v9839
  %v10286 = vunpack.c.l.b16 %v9840
  %v10287 = vunpack.c.h.b16 %v9840
  %v10288 = vunpack.c.l.b16 %v9841
  %v10289 = vunpack.c.h.b16 %v9841
  %v10290 = vunpack.c.l.b16 %v9842
  %v10291 = vunpack.c.h.b16 %v9842
  %v10292 = vunpack.c.l.b16 %v9843
  %v10293 = vunpack.c.h.b16 %v9843
  %v10294 = vunpack.c.l.b16 %v9844
  %v10295 = vunpack.c.h.b16 %v9844
  %v10296 = vunpack.c.l.b16 %v9845
  %v10297 = vunpack.c.h.b16 %v9845
  %v10298 = vunpack.c.l.b16 %v9846
  %v10299 = vunpack.c.h.b16 %v9846
  %v10300 = vunpack.c.l.b16 %v9847
  %v10301 = vunpack.c.h.b16 %v9847
  %v10302 = vunpack.c.l.b16 %v9848
  %v10303 = vunpack.c.h.b16 %v9848
  %v10304 = vunpack.c.l.b16 %v9849
  %v10305 = vunpack.c.h.b16 %v9849
  %v10306 = vunpack.c.l.b16 %v9850
  %v10307 = vunpack.c.h.b16 %v9850
  %v10308 = vunpack.c.l.b16 %v9851
  %v10309 = vunpack.c.h.b16 %v9851
  %v10310 = vunpack.c.l.b16 %v9852
  %v10311 = vunpack.c.h.b16 %v9852
  %v10312 = vunpack.c.l.b16 %v9853
  %v10313 = vunpack.c.h.b16 %v9853
  %v10314 = vunpack.c.l.b16 %v9854
  %v10315 = vunpack.c.h.b16 %v9854
  %v10316 = vunpack.c.l.b16 %v9855
  %v10317 = vunpack.c.h.b16 %v9855
  %v10318 = vunpack.c.l.b16 %v9856
  %v10319 = vunpack.c.h.b16 %v9856
  %v10320 = vunpack.c.l.b16 %v9857
  %v10321 = vunpack.c.h.b16 %v9857
  %v10322 = vunpack.c.l.b16 %v9858
  %v10323 = vunpack.c.h.b16 %v9858
  %v10324 = vunpack.c.l.b16 %v9859
  %v10325 = vunpack.c.h.b16 %v9859
  %v10326 = vunpack.c.l.b16 %v9860
  %v10327 = vunpack.c.h.b16 %v9860
  %v10328 = vunpack.c.l.b16 %v9861
  %v10329 = vunpack.c.h.b16 %v9861
  %v10330 = vunpack.c.l.b16 %v9862
  %v10331 = vunpack.c.h.b16 %v9862
  %v10332 = vunpack.c.l.b16 %v9863
  %v10333 = vunpack.c.h.b16 %v9863
  %v10334 = vunpack.c.l.b16 %v9864
  %v10335 = vunpack.c.h.b16 %v9864
  %v10336 = vunpack.c.l.b16 %v9865
  %v10337 = vunpack.c.h.b16 %v9865
  %v10338 = vunpack.c.l.b16 %v9866
  %v10339 = vunpack.c.h.b16 %v9866
  %v10340 = vunpack.c.l.b16 %v9867
  %v10341 = vunpack.c.h.b16 %v9867
  %v10342 = vunpack.c.l.b16 %v9868
  %v10343 = vunpack.c.h.b16 %v9868
  %v10344 = vunpack.c.l.b16 %v9869
  %v10345 = vunpack.c.h.b16 %v9869
  %v10346 = vunpack.c.l.b16 %v9870
  %v10347 = vunpack.c.h.b16 %v9870
  %v10348 = vunpack.c.l.b16 %v9871
  %v10349 = vunpack.c.h.b16 %v9871
  %v10350 = vunpack.c.l.b16 %v9872
  %v10351 = vunpack.c.h.b16 %v9872
  %v10352 = vunpack.c.l.b16 %v9873
  %v10353 = vunpack.c.h.b16 %v9873
  %v10354 = vunpack.c.l.b16 %v9874
  %v10355 = vunpack.c.h.b16 %v9874
  %v10356 = vunpack.c.l.b16 %v9875
  %v10357 = vunpack.c.h.b16 %v9875
  %v10358 = vunpack.c.l.b16 %v9876
  %v10359 = vunpack.c.h.b16 %v9876
  %v10360 = vunpack.c.l.b16 %v9877
  %v10361 = vunpack.c.h.b16 %v9877
  %v10362 = vunpack.c.l.b16 %v9878
  %v10363 = vunpack.c.h.b16 %v9878
  %v10364 = vunpack.c.l.b16 %v9879
  %v10365 = vunpack.c.h.b16 %v9879
  %v10366 = vunpack.c.l.b16 %v9880
  %v10367 = vunpack.c.h.b16 %v9880
  %v10368 = vunpack.c.l.b16 %v9881
  %v10369 = vunpack.c.h.b16 %v9881
  %v10370 = vunpack.c.l.b16 %v9882
  %v10371 = vunpack.c.h.b16 %v9882
  %v10372 = vunpack.c.l.b16 %v9883
  %v10373 = vunpack.c.h.b16 %v9883
  %v10374 = vunpack.c.l.b16 %v9884
  %v10375 = vunpack.c.h.b16 %v9884
  %v10376 = vunpack.c.l.b16 %v9885
  %v10377 = vunpack.c.h.b16 %v9885
  %v10378 = vunpack.c.l.b16 %v9886
  %v10379 = vunpack.c.h.b16 %v9886
  %v10380 = vunpack.c.l.b16 %v9887
  %v10381 = vunpack.c.h.b16 %v9887
  %v10382 = vunpack.c.l.b16 %v9888
  %v10383 = vunpack.c.h.b16 %v9888
  %v10384 = vunpack.c.l.b16 %v9889
  %v10385 = vunpack.c.h.b16 %v9889
  %v10386 = vunpack.c.l.b16 %v9890
  %v10387 = vunpack.c.h.b16 %v9890
  %v10388 = vunpack.c.l.b16 %v9891
  %v10389 = vunpack.c.h.b16 %v9891
  %v10390 = vunpack.c.l.b16 %v9892
  %v10391 = vunpack.c.h.b16 %v9892
  %v10392 = vunpack.c.l.b16 %v9893
  %v10393 = vunpack.c.h.b16 %v9893
  %v10394 = vunpack.c.l.b16 %v9894
  %v10395 = vunpack.c.h.b16 %v9894
  %v10396 = vunpack.c.l.b16 %v9895
  %v10397 = vunpack.c.h.b16 %v9895
  %v10398 = vunpack.c.l.b16 %v9896
  %v10399 = vunpack.c.h.b16 %v9896
  %v10400 = vunpack.c.l.b16 %v9897
  %v10401 = vunpack.c.h.b16 %v9897
  %v10402 = vunpack.c.l.b16 %v9898
  %v10403 = vunpack.c.h.b16 %v9898
  %v10404 = vunpack.c.l.b16 %v9899
  %v10405 = vunpack.c.h.b16 %v9899
  %v10406 = vunpack.c.l.b16 %v9900
  %v10407 = vunpack.c.h.b16 %v9900
  %v10408 = vunpack.c.l.b16 %v9901
  %v10409 = vunpack.c.h.b16 %v9901
  %v10410 = vunpack.c.l.b16 %v9902
  %v10411 = vunpack.c.h.b16 %v9902
  %v10412 = vunpack.c.l.b16 %v9903
  %v10413 = vunpack.c.h.b16 %v9903
  %v10414 = vunpack.c.l.b16 %v9904
  %v10415 = vunpack.c.h.b16 %v9904
  %v10416 = vunpack.c.l.b16 %v9905
  %v10417 = vunpack.c.h.b16 %v9905
  %v10418 = vunpack.c.l.b16 %v9906
  %v10419 = vunpack.c.h.b16 %v9906
  %v10420 = vunpack.c.l.b16 %v9907
  %v10421 = vunpack.c.h.b16 %v9907
  %v10422 = vunpack.c.l.b16 %v9908
  %v10423 = vunpack.c.h.b16 %v9908
  %v10424 = vunpack.c.l.b16 %v9909
  %v10425 = vunpack.c.h.b16 %v9909
  %v10426 = vunpack.c.l.b16 %v9910
  %v10427 = vunpack.c.h.b16 %v9910
  %v10428 = vunpack.c.l.b16 %v9911
  %v10429 = vunpack.c.h.b16 %v9911
  %v10430 = vunpack.c.l.b16 %v9912
  %v10431 = vunpack.c.h.b16 %v9912
  %v10432 = vunpack.c.l.b16 %v9913
  %v10433 = vunpack.c.h.b16 %v9913
  %v10434 = vunpack.c.l.b16 %v9914
  %v10435 = vunpack.c.h.b16 %v9914
  %v10436 = vunpack.c.l.b16 %v9915
  %v10437 = vunpack.c.h.b16 %v9915
  %v10438 = vunpack.c.l.b16 %v9916
  %v10439 = vunpack.c.h.b16 %v9916
  %v10440 = vunpack.c.l.b16 %v9917
  %v10441 = vunpack.c.h.b16 %v9917
  %v10442 = vunpack.c.l.b16 %v9918
  %v10443 = vunpack.c.h.b16 %v9918
  %v10444 = vunpack.c.l.b16 %v9919
  %v10445 = vunpack.c.h.b16 %v9919
  %v10446 = vunpack.c.l.b16 %v9920
  %v10447 = vunpack.c.h.b16 %v9920
  %v10448 = vunpack.c.l.b16 %v9921
  %v10449 = vunpack.c.h.b16 %v9921
  %v10450 = vunpack.c.l.b16 %v9922
  %v10451 = vunpack.c.h.b16 %v9922
  %v10452 = vunpack.c.l.b16 %v9923
  %v10453 = vunpack.c.h.b16 %v9923
  %v10454 = vunpack.c.l.b16 %v9924
  %v10455 = vunpack.c.h.b16 %v9924
  %v10456 = vunpack.c.l.b16 %v9925
  %v10457 = vunpack.c.h.b16 %v9925
  %v10458 = vunpack.c.l.b16 %v9926
  %v10459 = vunpack.c.h.b16 %v9926
  %v10460 = vunpack.c.l.b16 %v9927
  %v10461 = vunpack.c.h.b16 %v9927
  %v10462 = vunpack.c.l.b16 %v9928
  %v10463 = vunpack.c.h.b16 %v9928
  %v10464 = vunpack.c.l.b16 %v9929
  %v10465 = vunpack.c.h.b16 %v9929
  %v10466 = vunpack.c.l.b16 %v9930
  %v10467 = vunpack.c.h.b16 %v9930
  %v10468 = vunpack.c.l.b16 %v9931
  %v10469 = vunpack.c.h.b16 %v9931
  %v10470 = vunpack.c.l.b16 %v9932
  %v10471 = vunpack.c.h.b16 %v9932
  %v10472 = vunpack.c.l.b16 %v9933
  %v10473 = vunpack.c.h.b16 %v9933
  %v10474 = vunpack.c.l.b16 %v9934
  %v10475 = vunpack.c.h.b16 %v9934
  %v10476 = vunpack.c.l.b16 %v9935
  %v10477 = vunpack.c.h.b16 %v9935
  %v10478 = vunpack.c.l.b16 %v9936
  %v10479 = vunpack.c.h.b16 %v9936
  %v10480 = vunpack.c.l.b16 %v9937
  %v10481 = vunpack.c.h.b16 %v9937
  %v10482 = vunpack.c.l.b16 %v9938
  %v10483 = vunpack.c.h.b16 %v9938
  %v10484 = vpack.c.b16 %v10198, %v10196
  %v10485 = vpack.c.b16 %v10199, %v10197
  %v10486 = vpack.c.b16 %v10202, %v10200
  %v10487 = vpack.c.b16 %v10203, %v10201
  %v10488 = vpack.c.b16 %v10206, %v10204
  %v10489 = vpack.c.b16 %v10207, %v10205
  %v10490 = vpack.c.b16 %v10210, %v10208
  %v10491 = vpack.c.b16 %v10211, %v10209
  %v10492 = vpack.c.b16 %v10214, %v10212
  %v10493 = vpack.c.b16 %v10215, %v10213
  %v10494 = vpack.c.b16 %v10218, %v10216
  %v10495 = vpack.c.b16 %v10219, %v10217
  %v10496 = vpack.c.b16 %v10222, %v10220
  %v10497 = vpack.c.b16 %v10223, %v10221
  %v10498 = vpack.c.b16 %v10226, %v10224
  %v10499 = vpack.c.b16 %v10227, %v10225
  %v10500 = vpack.c.b16 %v10230, %v10228
  %v10501 = vpack.c.b16 %v10231, %v10229
  %v10502 = vpack.c.b16 %v10234, %v10232
  %v10503 = vpack.c.b16 %v10235, %v10233
  %v10504 = vpack.c.b16 %v10238, %v10236
  %v10505 = vpack.c.b16 %v10239, %v10237
  %v10506 = vpack.c.b16 %v10242, %v10240
  %v10507 = vpack.c.b16 %v10243, %v10241
  %v10508 = vpack.c.b16 %v10246, %v10244
  %v10509 = vpack.c.b16 %v10247, %v10245
  %v10510 = vpack.c.b16 %v10250, %v10248
  %v10511 = vpack.c.b16 %v10251, %v10249
  %v10512 = vpack.c.b16 %v10254, %v10252
  %v10513 = vpack.c.b16 %v10255, %v10253
  %v10514 = vpack.c.b16 %v10258, %v10256
  %v10515 = vpack.c.b16 %v10259, %v10257
  %v10516 = vpack.c.b16 %v10262, %v10260
  %v10517 = vpack.c.b16 %v10263, %v10261
  %v10518 = vpack.c.b16 %v10266, %v10264
  %v10519 = vpack.c.b16 %v10267, %v10265
  %v10520 = vpack.c.b16 %v10270, %v10268
  %v10521 = vpack.c.b16 %v10271, %v10269
  %v10522 = vpack.c.b16 %v10274, %v10272
  %v10523 = vpack.c.b16 %v10275, %v10273
  %v10524 = vpack.c.b16 %v10278, %v10276
  %v10525 = vpack.c.b16 %v10279, %v10277
  %v10526 = vpack.c.b16 %v10282, %v10280
  %v10527 = vpack.c.b16 %v10283, %v10281
  %v10528 = vpack.c.b16 %v10286, %v10284
  %v10529 = vpack.c.b16 %v10287, %v10285
  %v10530 = vpack.c.b16 %v10290, %v10288
  %v10531 = vpack.c.b16 %v10291, %v10289
  %v10532 = vpack.c.b16 %v10294, %v10292
  %v10533 = vpack.c.b16 %v10295, %v10293
  %v10534 = vpack.c.b16 %v10298, %v10296
  %v10535 = vpack.c.b16 %v10299, %v10297
  %v10536 = vpack.c.b16 %v10302, %v10300
  %v10537 = vpack.c.b16 %v10303, %v10301
  %v10538 = vpack.c.b16 %v10306, %v10304
  %v10539 = vpack.c.b16 %v10307, %v10305
  %v10540 = vpack.c.b16 %v10310, %v10308
  %v10541 = vpack.c.b16 %v10311, %v10309
  %v10542 = vpack.c.b16 %v10314, %v10312
  %v10543 = vpack.c.b16 %v10315, %v10313
  %v10544 = vpack.c.b16 %v10318, %v10316
  %v10545 = vpack.c.b16 %v10319, %v10317
  %v10546 = vpack.c.b16 %v10322, %v10320
  %v10547 = vpack.c.b16 %v10323, %v10321
  %v10548 = vpack.c.b16 %v10326, %v10324
  %v10549 = vpack.c.b16 %v10327, %v10325
  %v10550 = vpack.c.b16 %v10330, %v10328
  %v10551 = vpack.c.b16 %v10331, %v10329
  %v10552 = vpack.c.b16 %v10334, %v10332
  %v10553 = vpack.c.b16 %v10335, %v10333
  %v10554 = vpack.c.b16 %v10338, %v10336
  %v10555 = vpack.c.b16 %v10339, %v10337
  %v10556 = vpack.c.b16 %v10342, %v10340
  %v10557 = vpack.c.b16 %v10343, %v10341
  %v10558 = vpack.c.b16 %v10346, %v10344
  %v10559 = vpack.c.b16 %v10347, %v10345
  %v10560 = vpack.c.b16 %v10350, %v10348
  %v10561 = vpack.c.b16 %v10351, %v10349
  %v10562 = vpack.c.b16 %v10354, %v10352
  %v10563 = vpack.c.b16 %v10355, %v10353
  %v10564 = vpack.c.b16 %v10358, %v10356
  %v10565 = vpack.c.b16 %v10359, %v10357
  %v10566 = vpack.c.b16 %v10362, %v10360
  %v10567 = vpack.c.b16 %v10363, %v10361
  %v10568 = vpack.c.b16 %v10366, %v10364
  %v10569 = vpack.c.b16 %v10367, %v10365
  %v10570 = vpack.c.b16 %v10370, %v10368
  %v10571 = vpack.c.b16 %v10371, %v10369
  %v10572 = vpack.c.b16 %v10374, %v10372
  %v10573 = vpack.c.b16 %v10375, %v10373
  %v10574 = vpack.c.b16 %v10378, %v10376
  %v10575 = vpack.c.b16 %v10379, %v10377
  %v10576 = vpack.c.b16 %v10382, %v10380
  %v10577 = vpack.c.b16 %v10383, %v10381
  %v10578 = vpack.c.b16 %v10386, %v10384
  %v10579 = vpack.c.b16 %v10387, %v10385
  %v10580 = vpack.c.b16 %v10390, %v10388
  %v10581 = vpack.c.b16 %v10391, %v10389
  %v10582 = vpack.c.b16 %v10394, %v10392
  %v10583 = vpack.c.b16 %v10395, %v10393
  %v10584 = vpack.c.b16 %v10398, %v10396
  %v10585 = vpack.c.b16 %v10399, %v10397
  %v10586 = vpack.c.b16 %v10402, %v10400
  %v10587 = vpack.c.b16 %v10403, %v10401
  %v10588 = vpack.c.b16 %v10406, %v10404
  %v10589 = vpack.c.b16 %v10407, %v10405
  %v10590 = vpack.c.b16 %v10410, %v10408
  %v10591 = vpack.c.b16 %v10411, %v10409
  %v10592 = vpack.c.b16 %v10414, %v10412
  %v10593 = vpack.c.b16 %v10415, %v10413
  %v10594 = vpack.c.b16 %v10418, %v10416
  %v10595 = vpack.c.b16 %v10419, %v10417
  %v10596 = vpack.c.b16 %v10422, %v10420
  %v10597 = vpack.c.b16 %v10423, %v10421
  %v10598 = vpack.c.b16 %v10426, %v10424
  %v10599 = vpack.c.b16 %v10427, %v10425
  %v10600 = vpack.c.b16 %v10430, %v10428
  %v10601 = vpack.c.b16 %v10431, %v10429
  %v10602 = vpack.c.b16 %v10434, %v10432
  %v10603 = vpack.c.b16 %v10435, %v10433
  %v10604 = vpack.c.b16 %v10438, %v10436
  %v10605 = vpack.c.b16 %v10439, %v10437
  %v10606 = vpack.c.b16 %v10442, %v10440
  %v10607 = vpack.c.b16 %v10443, %v10441
  %v10608 = vpack.c.b16 %v10446, %v10444
  %v10609 = vpack.c.b16 %v10447, %v10445
  %v10610 = vpack.c.b16 %v10450, %v10448
  %v10611 = vpack.c.b16 %v10451, %v10449
  %v10612 = vpack.c.b16 %v10454, %v10452
  %v10613 = vpack.c.b16 %v10455, %v10453
  %v10614 = vpack.c.b16 %v10458, %v10456
  %v10615 = vpack.c.b16 %v10459, %v10457
  %v10616 = vpack.c.b16 %v10462, %v10460
  %v10617 = vpack.c.b16 %v10463, %v10461
  %v10618 = vpack.c.b16 %v10466, %v10464
  %v10619 = vpack.c.b16 %v10467, %v10465
  %v10620 = vpack.c.b16 %v10470, %v10468
  %v10621 = vpack.c.b16 %v10471, %v10469
  %v10622 = vpack.c.b16 %v10474, %v10472
  %v10623 = vpack.c.b16 %v10475, %v10473
  %v10624 = vpack.c.b16 %v10478, %v10476
  %v10625 = vpack.c.b16 %v10479, %v10477
  %v10626 = vpack.c.b16 %v10482, %v10480
  %v10627 = vpack.c.b16 %v10483, %v10481
  %10772 = vmatprep.subr.bf16.mxu0 %v10485
  %10773 = vmatpush1.bf16.msra.mxu0 %v10484
  %10774 = vmatprep.subr.bf16.mxu0 %v10487
  %10775 = vmatpush1.bf16.msra.mxu0 %v10486
  %10776 = vmatprep.subr.bf16.mxu0 %v10489
  %10777 = vmatpush1.bf16.msra.mxu0 %v10488
  %10778 = vmatprep.subr.bf16.mxu0 %v10491
  %10779 = vmatpush1.bf16.msra.mxu0 %v10490
  %10780 = vmatprep.subr.bf16.mxu0 %v10493
  %10781 = vmatpush1.bf16.msra.mxu0 %v10492
  %10782 = vmatprep.subr.bf16.mxu0 %v10495
  %10783 = vmatpush1.bf16.msra.mxu0 %v10494
  %10784 = vmatprep.subr.bf16.mxu0 %v10497
  %10785 = vmatpush1.bf16.msra.mxu0 %v10496
  %10786 = vmatprep.subr.bf16.mxu0 %v10499
  %10787 = vmatpush1.bf16.msra.mxu0 %v10498
  %10788 = vmatprep.subr.bf16.mxu0 %v10501
  %10789 = vmatpush1.bf16.msra.mxu0 %v10500
  %10790 = vmatprep.subr.bf16.mxu0 %v10503
  %10791 = vmatpush1.bf16.msra.mxu0 %v10502
  %10792 = vmatprep.subr.bf16.mxu0 %v10505
  %10793 = vmatpush1.bf16.msra.mxu0 %v10504
  %10794 = vmatprep.subr.bf16.mxu0 %v10507
  %10795 = vmatpush1.bf16.msra.mxu0 %v10506
  %10796 = vmatprep.subr.bf16.mxu0 %v10509
  %10797 = vmatpush1.bf16.msra.mxu0 %v10508
  %10798 = vmatprep.subr.bf16.mxu0 %v10511
  %10799 = vmatpush1.bf16.msra.mxu0 %v10510
  %10800 = vmatprep.subr.bf16.mxu0 %v10513
  %10801 = vmatpush1.bf16.msra.mxu0 %v10512
  %10802 = vmatprep.subr.bf16.mxu0 %v10515
  %10803 = vmatpush1.bf16.msra.mxu0 %v10514
  %10804 = vmatprep.mubr.bf16.mxu0 %v10007
  %10805 = vmatmul.mubr.bf16.gmra.mrb[0].mxu0 %v9993
  %v10806 = vpop.f32.mrb[0].mxu0
  %v10807 = vadd.f32 %v9944, %v10806
  %v10808 = vpop.f32.mrb[0].mxu0
  %v10809 = vadd.f32 %v9948, %v10808
  %v10810 = vpop.f32.mrb[0].mxu0
  %v10811 = vpop.f32.mrb[0].mxu0
  %10812 = vdwg.mxu0
  %10813 = vmatprep.subr.bf16.mxu0 %v10517
  %10814 = vmatpush1.bf16.msra.mxu0 %v10516
  %10815 = vmatprep.subr.bf16.mxu0 %v10519
  %10816 = vmatpush1.bf16.msra.mxu0 %v10518
  %10817 = vmatprep.subr.bf16.mxu0 %v10521
  %10818 = vmatpush1.bf16.msra.mxu0 %v10520
  %10819 = vmatprep.subr.bf16.mxu0 %v10523
  %10820 = vmatpush1.bf16.msra.mxu0 %v10522
  %10821 = vmatprep.subr.bf16.mxu0 %v10525
  %10822 = vmatpush1.bf16.msra.mxu0 %v10524
  %10823 = vmatprep.subr.bf16.mxu0 %v10527
  %10824 = vmatpush1.bf16.msra.mxu0 %v10526
  %10825 = vmatprep.subr.bf16.mxu0 %v10529
  %10826 = vmatpush1.bf16.msra.mxu0 %v10528
  %10827 = vmatprep.subr.bf16.mxu0 %v10531
  %10828 = vmatpush1.bf16.msra.mxu0 %v10530
  %10829 = vmatprep.subr.bf16.mxu0 %v10533
  %10830 = vmatpush1.bf16.msra.mxu0 %v10532
  %10831 = vmatprep.subr.bf16.mxu0 %v10535
  %10832 = vmatpush1.bf16.msra.mxu0 %v10534
  %10833 = vmatprep.subr.bf16.mxu0 %v10537
  %10834 = vmatpush1.bf16.msra.mxu0 %v10536
  %10835 = vmatprep.subr.bf16.mxu0 %v10539
  %10836 = vmatpush1.bf16.msra.mxu0 %v10538
  %10837 = vmatprep.subr.bf16.mxu0 %v10541
  %10838 = vmatpush1.bf16.msra.mxu0 %v10540
  %10839 = vmatprep.subr.bf16.mxu0 %v10543
  %10840 = vmatpush1.bf16.msra.mxu0 %v10542
  %10841 = vmatprep.subr.bf16.mxu0 %v10545
  %10842 = vmatpush1.bf16.msra.mxu0 %v10544
  %10843 = vmatprep.subr.bf16.mxu0 %v10547
  %10844 = vmatpush1.bf16.msra.mxu0 %v10546
  %10845 = vmatprep.mubr.bf16.mxu0 %v10017
  %10846 = vmatmul.mubr.bf16.gmra.mrb[0].mxu0 %v10015
  %v10847 = vpop.f32.mrb[0].mxu0
  %v10848 = vadd.f32 %v10807, %v10847
  %v10849 = vpop.f32.mrb[0].mxu0
  %v10850 = vadd.f32 %v10809, %v10849
  %v10851 = vpop.f32.mrb[0].mxu0
  %v10852 = vpop.f32.mrb[0].mxu0
  %10853 = vdwg.mxu0
  %10854 = vmatprep.subr.bf16.mxu0 %v10549
  %10855 = vmatpush1.bf16.msra.mxu0 %v10548
  %10856 = vmatprep.subr.bf16.mxu0 %v10551
  %10857 = vmatpush1.bf16.msra.mxu0 %v10550
  %10858 = vmatprep.subr.bf16.mxu0 %v10553
  %10859 = vmatpush1.bf16.msra.mxu0 %v10552
  %10860 = vmatprep.subr.bf16.mxu0 %v10555
  %10861 = vmatpush1.bf16.msra.mxu0 %v10554
  %10862 = vmatprep.subr.bf16.mxu0 %v10557
  %10863 = vmatpush1.bf16.msra.mxu0 %v10556
  %10864 = vmatprep.subr.bf16.mxu0 %v10559
  %10865 = vmatpush1.bf16.msra.mxu0 %v10558
  %10866 = vmatprep.subr.bf16.mxu0 %v10561
  %10867 = vmatpush1.bf16.msra.mxu0 %v10560
  %10868 = vmatprep.subr.bf16.mxu0 %v10563
  %10869 = vmatpush1.bf16.msra.mxu0 %v10562
  %10870 = vmatprep.subr.bf16.mxu0 %v10565
  %10871 = vmatpush1.bf16.msra.mxu0 %v10564
  %10872 = vmatprep.subr.bf16.mxu0 %v10567
  %10873 = vmatpush1.bf16.msra.mxu0 %v10566
  %10874 = vmatprep.subr.bf16.mxu0 %v10569
  %10875 = vmatpush1.bf16.msra.mxu0 %v10568
  %10876 = vmatprep.subr.bf16.mxu0 %v10571
  %10877 = vmatpush1.bf16.msra.mxu0 %v10570
  %10878 = vmatprep.subr.bf16.mxu0 %v10573
  %10879 = vmatpush1.bf16.msra.mxu0 %v10572
  %10880 = vmatprep.subr.bf16.mxu0 %v10575
  %10881 = vmatpush1.bf16.msra.mxu0 %v10574
  %10882 = vmatprep.subr.bf16.mxu0 %v10577
  %10883 = vmatpush1.bf16.msra.mxu0 %v10576
  %10884 = vmatprep.subr.bf16.mxu0 %v10579
  %10885 = vmatpush1.bf16.msra.mxu0 %v10578
  %10886 = vmatprep.mubr.bf16.mxu0 %v10014
  %10887 = vmatmul.mubr.bf16.gmra.mrb[0].mxu0 %v10000
  %v10888 = vpop.f32.mrb[0].mxu0
  %v10889 = vadd.f32 %v10848, %v10888
  %v10890 = vpop.f32.mrb[0].mxu0
  %v10891 = vadd.f32 %v10850, %v10890
  %v10892 = vpop.f32.mrb[0].mxu0
  %v10893 = vpop.f32.mrb[0].mxu0
  %10894 = vdwg.mxu0
  %10895 = vmatprep.subr.bf16.mxu0 %v10581
  %10896 = vmatpush1.bf16.msra.mxu0 %v10580
  %10897 = vmatprep.subr.bf16.mxu0 %v10583
  %10898 = vmatpush1.bf16.msra.mxu0 %v10582
  %10899 = vmatprep.subr.bf16.mxu0 %v10585
  %10900 = vmatpush1.bf16.msra.mxu0 %v10584
  %10901 = vmatprep.subr.bf16.mxu0 %v10587
  %10902 = vmatpush1.bf16.msra.mxu0 %v10586
  %10903 = vmatprep.subr.bf16.mxu0 %v10589
  %10904 = vmatpush1.bf16.msra.mxu0 %v10588
  %10905 = vmatprep.subr.bf16.mxu0 %v10591
  %10906 = vmatpush1.bf16.msra.mxu0 %v10590
  %10907 = vmatprep.subr.bf16.mxu0 %v10593
  %10908 = vmatpush1.bf16.msra.mxu0 %v10592
  %10909 = vmatprep.subr.bf16.mxu0 %v10595
  %10910 = vmatpush1.bf16.msra.mxu0 %v10594
  %10911 = vmatprep.subr.bf16.mxu0 %v10597
  %10912 = vmatpush1.bf16.msra.mxu0 %v10596
  %10913 = vmatprep.subr.bf16.mxu0 %v10599
  %10914 = vmatpush1.bf16.msra.mxu0 %v10598
  %10915 = vmatprep.subr.bf16.mxu0 %v10601
  %10916 = vmatpush1.bf16.msra.mxu0 %v10600
  %10917 = vmatprep.subr.bf16.mxu0 %v10603
  %10918 = vmatpush1.bf16.msra.mxu0 %v10602
  %10919 = vmatprep.subr.bf16.mxu0 %v10605
  %10920 = vmatpush1.bf16.msra.mxu0 %v10604
  %10921 = vmatprep.subr.bf16.mxu0 %v10607
  %10922 = vmatpush1.bf16.msra.mxu0 %v10606
  %10923 = vmatprep.subr.bf16.mxu0 %v10609
  %10924 = vmatpush1.bf16.msra.mxu0 %v10608
  %10925 = vmatprep.subr.bf16.mxu0 %v10611
  %10926 = vmatpush1.bf16.msra.mxu0 %v10610
  %10927 = vmatprep.mubr.bf16.mxu0 %v10018
  %10928 = vmatmul.mubr.bf16.gmra.mrb[0].mxu0 %v10016
  %v10929 = vpop.f32.mrb[0].mxu0
  %v10930 = vadd.f32 %v10889, %v10929
  %v10931 = vpop.f32.mrb[0].mxu0
  %v10932 = vadd.f32 %v10891, %v10931
  %v10933 = vpop.f32.mrb[0].mxu0
  %v10934 = vpop.f32.mrb[0].mxu0
  %10935 = vdwg.mxu0
  %10936 = vmatprep.subr.bf16.mxu0 %v10613
  %10937 = vmatpush1.bf16.msra.mxu0 %v10612
  %10938 = vmatprep.subr.bf16.mxu0 %v10615
  %10939 = vmatpush1.bf16.msra.mxu0 %v10614
  %10940 = vmatprep.subr.bf16.mxu0 %v10617
  %10941 = vmatpush1.bf16.msra.mxu0 %v10616
  %10942 = vmatprep.subr.bf16.mxu0 %v10619
  %10943 = vmatpush1.bf16.msra.mxu0 %v10618
  %10944 = vmatprep.subr.bf16.mxu0 %v10621
  %10945 = vmatpush1.bf16.msra.mxu0 %v10620
  %10946 = vmatprep.subr.bf16.mxu0 %v10623
  %10947 = vmatpush1.bf16.msra.mxu0 %v10622
  %10948 = vmatprep.subr.bf16.mxu0 %v10625
  %10949 = vmatpush1.bf16.msra.mxu0 %v10624
  %10950 = vmatprep.subr.bf16.mxu0 %v10627
  %10951 = vmatpush1.bf16.msra.mxu0 %v10626
  %10952 = vmatprep.subr.bf16.mxu0 0
  %10953 = vmatpush1.bf16.msra.mxu0 0
  %10954 = vmatprep.subr.bf16.mxu0 0
  %10955 = vmatpush1.bf16.msra.mxu0 0
  %10956 = vmatprep.subr.bf16.mxu0 0
  %10957 = vmatpush1.bf16.msra.mxu0 0
  %10958 = vmatprep.subr.bf16.mxu0 0
  %10959 = vmatpush1.bf16.msra.mxu0 0
  %10960 = vmatprep.subr.bf16.mxu0 0
  %10961 = vmatpush1.bf16.msra.mxu0 0
  %10962 = vmatprep.subr.bf16.mxu0 0
  %10963 = vmatpush1.bf16.msra.mxu0 0
  %10964 = vmatprep.subr.bf16.mxu0 0
  %10965 = vmatpush1.bf16.msra.mxu0 0
  %10966 = vmatprep.subr.bf16.mxu0 0
  %10967 = vmatpush1.bf16.msra.mxu0 0
  %10968 = vmatprep.mubr.bf16.mxu0 0
  %10969 = vmatmul.mubr.bf16.gmra.mrb[0].mxu0 %v10042
  %v10970 = vpop.f32.mrb[0].mxu0
  %v10971 = vadd.f32 %v10930, %v10970
  %v10972 = vpop.f32.mrb[0].mxu0
  %v10973 = vadd.f32 %v10932, %v10972
  %v10974 = vpop.f32.mrb[0].mxu0
  %v10975 = vpop.f32.mrb[0].mxu0
  %10976 = vdwg.mxu0
  %v10977 = vmax.f32 %v10971, 0.0
  %v10978 = vmax.f32 %v10973, 0.0
  %v10981 = vcombine.low %v10977, %v10978
  %v10982 = vcombine.high %v10977, %v10978
  %v10985 = vcombine.high %v10981, %v10981
  %v10986 = vcombine.high %v10982, %v10982
  %vm10989 = vcmask 1043456
  %v10990 = vsel %vm10989, %v10981, 0.0
  %v10991 = vrot.slane %v10990, 4
  %v10992 = vadd.f32 %v10990, %v10991
  %v10993 = vrot.slane %v10992, 2
  %v10994 = vadd.f32 %v10992, %v10993
  %v10995 = vrot.slane %v10994, 1
  %v10996 = vadd.f32 %v10994, %v10995
  %v10997 = vsel %vm10989, %v10985, 0.0
  %v10998 = vrot.slane %v10997, 4
  %v10999 = vadd.f32 %v10997, %v10998
  %v11000 = vrot.slane %v10999, 2
  %v11001 = vadd.f32 %v10999, %v11000
  %v11002 = vrot.slane %v11001, 1
  %v11003 = vadd.f32 %v11001, %v11002
  %v11004 = vsel %vm10989, %v10982, 0.0
  %v11005 = vrot.slane %v11004, 4
  %v11006 = vadd.f32 %v11004, %v11005
  %v11007 = vrot.slane %v11006, 2
  %v11008 = vadd.f32 %v11006, %v11007
  %v11009 = vrot.slane %v11008, 1
  %v11010 = vadd.f32 %v11008, %v11009
  %v11011 = vsel %vm10989, %v10986, 0.0
  %v11012 = vrot.slane %v11011, 4
  %v11013 = vadd.f32 %v11011, %v11012
  %v11014 = vrot.slane %v11013, 2
  %v11015 = vadd.f32 %v11013, %v11014
  %v11016 = vrot.slane %v11015, 1
  %v11017 = vadd.f32 %v11015, %v11016
  %v11018 = vmul.f32 %v10996, 0.25
  %v11019 = vmul.f32 %v11003, 0.25
  %v11020 = vmul.f32 %v11010, 0.25
  %v11021 = vmul.f32 %v11017, 0.25
  %v11022 = vld [vmem:[%s9] sm:$0x3]
  %v11024 = vlaneseq
  %v11025 = vshrl.u32 %v11024, 7
  %v11026 = vsub.s32 0, %v11025
  %v11027 = vrot.slane %v11022, %v11026
  %v11028 = vlaneseq
  %v11029 = vshrl.u32 %v11028, 7
  %v11030 = vsub.s32 1, %v11029
  %v11031 = vrot.slane %v11022, %v11030
  %v11034 = vmul.f32 %v11018, %v11027
  %v11035 = vmul.f32 %v11019, %v11031
  %v11036 = vmul.f32 %v11020, %v11027
  %v11037 = vmul.f32 %v11021, %v11031
  %v11042 = vrot.slane %v11036, 7
  %vm11043 = vcmask 1041409
  %v11044 = vsel %vm11043, %v11042, %v11034
  %v11045 = vrot.slane %v11037, 7
  %v11046 = vsel %vm11043, %v11045, %v11035
  %vm11049 = vcmask 1041408
  %v11050 = vsel %vm11049, %v11044, 0.0
  %v11051 = vsel %vm11049, %v11046, 0.0
  %v11052 = vadd.f32 %v11050, %v11051
  %11053 = vadd.xlane.f32.xlu0 %v11052
  %v11054 = vpop.xlane.xlu0 %11053
  %v11055 = vld [vmem:[#allocation6] sm:$0x1]
  %v11057 = vlaneseq
  %v11058 = vshrl.u32 %v11057, 7
  %v11059 = vsub.s32 0, %v11058
  %v11060 = vrot.slane %v11055, %v11059
  %v11062 = vadd.f32 %v11054, %v11060
  %v11063 = vsub.f32 0.0, %v11062
  %v11064 = vmul.f32 %v11063, 1.442695
  %v11065 = vpow.pop %v11064
  %v11066 = vadd.f32 %v11065, 1.0
  %v11067 = vrcp.pop %v11066
  %v11068 = vmul.f32 1.0, %v11067
  %vm11069 = vcmask 1024
  %11070 = vst.msk [vmem:[%s11] sm:$0x3] %vm11069, %v11068
  // Predicated region
  $region46: #{smile_detector_forward.1} parent=0 // pred_check
    _
  $region47: #{smile_detector_forward.1} parent=0 // pred_check_branch
    %11072 = sbr.rel (0) target = $region49
  $region48: #{smile_detector_forward.1} parent=0 // pred_region
    _
  $region49: #{smile_detector_forward.1} parent=0 // pred_fallthru
    _
  // Predicated region
  $region50: #{smile_detector_forward.1} parent=0 // pred_check
    _
  $region51: #{smile_detector_forward.1} parent=0 // pred_check_branch
    %11074 = sbr.rel (0) target = $region53
  $region52: #{smile_detector_forward.1} parent=0 // pred_region
    _
  $region53: #{smile_detector_forward.1} parent=0 // pred_fallthru
    _

</llo_original>
